<compile_context>
chip_gen: v5e
topology: v5e:2x2
jax: 0.10.0
libtpu: 0.0.40
codegen_flags: <defaults>
</compile_context>

<pallas_src>
import functools

import jax
import jax.numpy as jnp
from jax.experimental import pallas as pl
from jax.experimental.pallas import tpu as pltpu


VMEM_LIMIT = 48 * 1024 * 1024   # < 64 MiB physical per-TC VMEM on v7x


# ----------------------------------------------------------------------------
# small helpers
# ----------------------------------------------------------------------------
def _round_up(n, m):
    return ((n + m - 1) // m) * m


def _pad_to(v, n):
    return jnp.pad(v, (0, n - v.shape[0]))


def _pick_rows(m, cap):
    """Row tile <= cap; prefer full dim or a multiple-of-8 divisor of m."""
    cap = max(8, cap - cap % 8)
    if m <= cap:
        return m                      # full-dim block is always legal
    if m % 8 == 0:
        for t in range(cap, 7, -8):
            if m % t == 0 and t >= 64:
                return t
    return cap                        # caller pads + masks


def _pick_tile(n, cap):
    """(tile, padded_n) for an elementwise HW axis."""
    if n <= cap:
        return n, n
    best = max(8, cap - cap % 8)
    for t in range(best, 7, -8):
        if n % t == 0:
            return t, n
    return best, _round_up(n, best)


def _mm_row_cap(k, ntot, budget=32 << 20):
    """Row-tile cap so weight + double-buffered in/out tiles stay in budget."""
    fixed = k * ntot * 2                       # resident bf16 weight
    per_row = 2 * k * 4 + 2 * ntot * 2         # 2x f32 input + 2x bf16 output
    avail = max(budget - fixed, per_row * 8)
    return max(8, min(512, avail // per_row))


def _fold_from_stats(ssum, ssq, count, gamma, beta, eps=1e-5):
    """Per-channel BN scale/bias from (sum, sum-of-squares, count)."""
    mean = ssum / count
    var = jnp.maximum(ssq / count - mean * mean, 0.0)
    scale = gamma / jnp.sqrt(var + eps)
    bias = beta - mean * scale
    return scale, bias


# ----------------------------------------------------------------------------
# Kernel 0: single-pass per-column [sum, sum-of-squares]  (BN batch stats)
# ----------------------------------------------------------------------------
def _colstats_kernel(x_ref, st_ref):
    x = x_ref[...].astype(jnp.float32)
    s1 = jnp.sum(x, axis=0, keepdims=True)
    s2 = jnp.sum(x * x, axis=0, keepdims=True)
    st_ref[...] = jnp.concatenate([s1, s2], axis=0).reshape(1, 2, -1)


def column_stats(x):
    """x: (M, K) -> (2, K) f32 [sum, sum_sq], one HBM pass."""
    M, K = x.shape
    cap = max(8, min(1024, (24 << 20) // (2 * 4 * K)))
    tm = _pick_rows(M, cap)
    Mpad = _round_up(M, tm)
    if Mpad != M:
        x = jnp.pad(x, ((0, Mpad - M), (0, 0)))    # zero rows don't bias sums
    grid = Mpad // tm
    st = pl.pallas_call(
        _colstats_kernel,
        out_shape=jax.ShapeDtypeStruct((grid, 2, K), jnp.float32),
        grid=(grid,),
        in_specs=[pl.BlockSpec((tm, K), lambda i: (i, 0))],
        out_specs=pl.BlockSpec((1, 2, K), lambda i: (i, 0, 0)),
        compiler_params=pltpu.CompilerParams(
            dimension_semantics=("parallel",),
            vmem_limit_bytes=VMEM_LIMIT),
    )(x)
    return jnp.sum(st, axis=0)


# ----------------------------------------------------------------------------
# Kernel 1: fused  relu(x*scale + bias) @ [W_0 | W_1 | ...]   (BN + ReLU + 1x1
#           conv, optionally fused with the projection shortcut).  bf16 MXU,
#           bf16 lane-dense split outputs + optional BN stats of segment 0.
# ----------------------------------------------------------------------------
def _bn_relu_mm_kernel(m_real, tm, seg_sizes, with_stats,
                       x_ref, s_ref, b_ref, w_ref, *out_refs):
    nseg = len(seg_sizes)
    o_refs = out_refs[:nseg]
    st_ref = out_refs[nseg] if with_stats else None

    x = x_ref[...].astype(jnp.float32)                          # (tm, K)
    a = jnp.maximum(x * s_ref[...] + b_ref[...], 0.0)
    if m_real % tm != 0:
        # zero padded rows so they pollute neither the stats nor the output
        row = (pl.program_id(0) * tm
               + jax.lax.broadcasted_iota(jnp.int32, a.shape, 0))
        a = jnp.where(row < m_real, a, 0.0)
    y = jnp.dot(a.astype(jnp.bfloat16), w_ref[...],
                preferred_element_type=jnp.float32)             # (tm, Ntot)

    off = 0
    for r, sz in zip(o_refs, seg_sizes):                        # 128-aligned splits
        r[...] = y[:, off:off + sz].astype(jnp.bfloat16)
        off += sz

    if with_stats:                                              # stats of segment 0
        y0 = y[:, :seg_sizes[0]]
        s1 = jnp.sum(y0, axis=0, keepdims=True)
        s2 = jnp.sum(y0 * y0, axis=0, keepdims=True)
        st_ref[...] = jnp.concatenate([s1, s2], axis=0).reshape(1, 2, -1)


def fused_bn_relu_matmul(x, scale, bias, weights, with_stats=True):
    """relu(x*scale+bias) @ concat(weights, axis=1).

    x: (M, K); scale/bias: (K,); weights: list of (K, Ni).
    Returns ([out_i: (M, round_up(Ni,128)) bf16, ...],
             stats: (2, round_up(N0,128)) f32 of out_0, or None).
    """
    M, K = x.shape
    seg = [_round_up(w.shape[1], 128) for w in weights]
    wps = [jnp.pad(w, ((0, 0), (0, s - w.shape[1]))).astype(jnp.bfloat16)
           for w, s in zip(weights, seg)]
    wcat = jnp.concatenate(wps, axis=1) if len(wps) > 1 else wps[0]
    Ntot = sum(seg)

    tm = _pick_rows(M, _mm_row_cap(K, Ntot))
    Mpad = _round_up(M, tm)
    grid = Mpad // tm
    if Mpad != M:
        x = jnp.pad(x, ((0, Mpad - M), (0, 0)))

    out_shapes = [jax.ShapeDtypeStruct((Mpad, s), jnp.bfloat16) for s in seg]
    out_specs = [pl.BlockSpec((tm, s), lambda i: (i, 0)) for s in seg]
    if with_stats:
        out_shapes.append(jax.ShapeDtypeStruct((grid, 2, seg[0]), jnp.float32))
        out_specs.append(pl.BlockSpec((1, 2, seg[0]), lambda i: (i, 0, 0)))

    # TODO(synk): add a K grid axis ('arbitrary') with an f32 VMEM accumulator
    # for very large K so tm can stay large within the v7x VMEM budget.
    kernel = functools.partial(_bn_relu_mm_kernel, M, tm, tuple(seg), with_stats)
    res = pl.pallas_call(
        kernel,
        out_shape=tuple(out_shapes),
        grid=(grid,),
        in_specs=[
            pl.BlockSpec((tm, K), lambda i: (i, 0)),
            pl.BlockSpec((1, K), lambda i: (0, 0)),
            pl.BlockSpec((1, K), lambda i: (0, 0)),
            # TODO(synk): pipeline_mode=pl.Buffered(1) once single-buffering of
            # constant-index blocks is verified on the target toolchain.
            pl.BlockSpec((K, Ntot), lambda i: (0, 0)),
        ],
        out_specs=tuple(out_specs),
        compiler_params=pltpu.CompilerParams(
            dimension_semantics=("parallel",),
            vmem_limit_bytes=VMEM_LIMIT),
    )(x, scale.reshape(1, K).astype(jnp.float32),
      bias.reshape(1, K).astype(jnp.float32), wcat)

    outs = [o if Mpad == M else o[:M] for o in res[:len(seg)]]
    stats = jnp.sum(res[len(seg)], axis=0) if with_stats else None
    return outs, stats


# ----------------------------------------------------------------------------
# Kernel 2: fused  BN + ReLU + 3x3 conv (stride-1, padding=1), no im2col.
#           Zero-padded activation lives in a VMEM scratch; 9 shifted
#           (H*W, Cin) x (Cin, Cout) MXU matmuls accumulate in f32.
# ----------------------------------------------------------------------------
def _bn_relu_conv3x3_kernel(with_stats, x_ref, s_ref, b_ref, w_ref, o_ref, *rest):
    if with_stats:
        st_ref, pad_ref = rest
    else:
        (pad_ref,) = rest
    _, H, W, Cin = x_ref.shape
    Cout = w_ref.shape[2]

    x = x_ref[0].astype(jnp.float32)                            # (H, W, Cin)
    a = jnp.maximum(x * s_ref[...] + b_ref[...], 0.0)

    # re-zero only the border each step (cheap, megacore-safe), write interior
    zrow = jnp.zeros((1, W + 2, Cin), jnp.float32)
    zcol = jnp.zeros((H + 2, 1, Cin), jnp.float32)
    pad_ref[0:1, :, :] = zrow
    pad_ref[H + 1:H + 2, :, :] = zrow
    pad_ref[:, 0:1, :] = zcol
    pad_ref[:, W + 1:W + 2, :] = zcol
    pad_ref[1:H + 1, 1:W + 1, :] = a

    acc = jnp.zeros((H * W, Cout), jnp.float32)
    for t in range(9):                                          # unrolled taps
        dh, dw = divmod(t, 3)
        patch = pad_ref[dh:dh + H, dw:dw + W, :].reshape(H * W, Cin)
        # TODO(synk): keep the padded scratch in bf16 once unaligned packed
        # sublane stores are verified on the target toolchain (removes 9 casts).
        acc = acc + jnp.dot(patch.astype(jnp.bfloat16), w_ref[t],
                            preferred_element_type=jnp.float32)

    o_ref[...] = acc.reshape(1, H, W, Cout).astype(o_ref.dtype)
    if with_stats:
        s1 = jnp.sum(acc, axis=0, keepdims=True)
        s2 = jnp.sum(acc * acc, axis=0, keepdims=True)
        st_ref[...] = jnp.concatenate([s1, s2], axis=0).reshape(1, 2, Cout)


def bn_relu_conv3x3(x_nhwc, scale, bias, w9, with_stats=True):
    """conv3x3(relu(x*scale+bias)), stride 1, 'same' padding.

    x: (N, H, W, Cin); scale/bias: (Cin,); w9: (9, Cin, Cout).
    Returns (out: (N, H, W, Cpad) bf16 with Cpad = round_up(Cout, 128),
             stats: (2, Cpad) f32 or None).
    """
    N, H, W, Cin = x_nhwc.shape
    Cout = w9.shape[-1]
    Cpad = _round_up(Cout, 128)
    wp = jnp.pad(w9, ((0, 0), (0, 0), (0, Cpad - Cout))).astype(jnp.bfloat16)

    out_shapes = [jax.ShapeDtypeStruct((N, H, W, Cpad), jnp.bfloat16)]
    out_specs = [pl.BlockSpec((1, H, W, Cpad), lambda i: (i, 0, 0, 0))]
    if with_stats:
        out_shapes.append(jax.ShapeDtypeStruct((N, 2, Cpad), jnp.float32))
        out_specs.append(pl.BlockSpec((1, 2, Cpad), lambda i: (i, 0, 0)))

    # TODO(synk): tile over row strips (2-row halo) for very large H*W*C maps.
    res = pl.pallas_call(
        functools.partial(_bn_relu_conv3x3_kernel, with_stats),
        out_shape=tuple(out_shapes),
        grid=(N,),
        in_specs=[
            pl.BlockSpec((1, H, W, Cin), lambda i: (i, 0, 0, 0)),
            pl.BlockSpec((1, Cin), lambda i: (0, 0)),
            pl.BlockSpec((1, Cin), lambda i: (0, 0)),
            pl.BlockSpec((9, Cin, Cpad), lambda i: (0, 0, 0)),
        ],
        out_specs=tuple(out_specs),
        scratch_shapes=[pltpu.VMEM((H + 2, W + 2, Cin), jnp.float32)],
        compiler_params=pltpu.CompilerParams(
            dimension_semantics=("parallel",),
            vmem_limit_bytes=VMEM_LIMIT),
    )(x_nhwc, scale.reshape(1, Cin).astype(jnp.float32),
      bias.reshape(1, Cin).astype(jnp.float32), wp)
    out = res[0]
    stats = jnp.sum(res[1], axis=0) if with_stats else None
    return out, stats


# ----------------------------------------------------------------------------
# Kernel 3: MGPooling reductions (adaptive avg/max pool to 1x1 and 2x2).
#   output rows (padded to 16): [avg1, avg2 q00..q11, max1, max2 q00..q11, 0x6]
#   NOTE: matches PyTorch adaptive pooling only for even H and W.
# ----------------------------------------------------------------------------
def _mgpool_kernel(x_ref, o_ref):
    x = x_ref[0].astype(jnp.float32)                            # (H, W, C)
    H, W, C = x.shape
    h2, w2 = H // 2, W // 2
    sums, maxs = [], []
    for i in range(2):
        for j in range(2):
            blk = x[i * h2:(i + 1) * h2, j * w2:(j + 1) * w2, :]
            sums.append(jnp.sum(blk, axis=(0, 1)).reshape(1, C))
            maxs.append(jnp.max(blk, axis=(0, 1)).reshape(1, C))
    qsum = jnp.concatenate(sums, axis=0)                        # (4, C)
    qmax = jnp.concatenate(maxs, axis=0)                        # (4, C)
    qavg = qsum * (1.0 / (h2 * w2))
    avg1 = jnp.mean(qavg, axis=0, keepdims=True)                # global mean
    max1 = jnp.max(qmax, axis=0, keepdims=True)                 # global max
    rows = jnp.concatenate(
        [avg1, qavg, max1, qmax, jnp.zeros((6, C), jnp.float32)], axis=0)
    o_ref[...] = rows.reshape(1, 16, C)


def mg_pool(x_nhwc):
    # TODO(synk): tile over H rows with quadrant accumulators for huge maps.
    N, H, W, C = x_nhwc.shape
    return pl.pallas_call(
        _mgpool_kernel,
        out_shape=jax.ShapeDtypeStruct((N, 16, C), jnp.float32),
        grid=(N,),
        in_specs=[pl.BlockSpec((1, H, W, C), lambda i: (i, 0, 0, 0))],
        out_specs=pl.BlockSpec((1, 16, C), lambda i: (i, 0, 0)),
        compiler_params=pltpu.CompilerParams(
            dimension_semantics=("parallel",),
            vmem_limit_bytes=VMEM_LIMIT),
    )(x_nhwc)


# ----------------------------------------------------------------------------
# Kernel 4: SE gating + residual add:  out = x * gate + shortcut  (HW-tiled)
# ----------------------------------------------------------------------------
def _se_add_kernel(x_ref, g_ref, s_ref, o_ref):
    o_ref[...] = (x_ref[...].astype(jnp.float32) * g_ref[...]
                  + s_ref[...].astype(jnp.float32))


def se_scale_add(x, gate, shortcut):
    """x, shortcut: (N, HW, C) (any float dtype); gate: (N, C).  Returns f32."""
    N, HW, C = x.shape
    cap = max(8, min(1024, (36 << 20) // (24 * C)))   # VMEM-budget-derived tile
    thw, HWpad = _pick_tile(HW, cap)
    if HWpad != HW:
        x = jnp.pad(x, ((0, 0), (0, HWpad - HW), (0, 0)))
        shortcut = jnp.pad(shortcut, ((0, 0), (0, HWpad - HW), (0, 0)))
    gate3 = gate.reshape(N, 1, C).astype(jnp.float32)
    out = pl.pallas_call(
        _se_add_kernel,
        out_shape=jax.ShapeDtypeStruct((N, HWpad, C), jnp.float32),
        grid=(N, HWpad // thw),
        in_specs=[
            pl.BlockSpec((1, thw, C), lambda i, j: (i, j, 0)),
            pl.BlockSpec((1, 1, C), lambda i, j: (i, 0, 0)),
            pl.BlockSpec((1, thw, C), lambda i, j: (i, j, 0)),
        ],
        out_specs=pl.BlockSpec((1, thw, C), lambda i, j: (i, j, 0)),
        compiler_params=pltpu.CompilerParams(
            dimension_semantics=("parallel", "parallel"),
            vmem_limit_bytes=VMEM_LIMIT),
    )(x, gate3, shortcut)
    return out[:, :HW] if HWpad != HW else out


# ----------------------------------------------------------------------------
# Full forward pass
# ----------------------------------------------------------------------------
@functools.partial(jax.jit, static_argnames=("stride",))
def spp_se_preact_bottleneck(x_nchw, p, stride=1):
    eps = 1e-5
    x = jnp.transpose(x_nchw, (0, 2, 3, 1)).astype(jnp.float32)   # NHWC
    N, H, W, Cin = x.shape
    planes = p["w1"].shape[0]
    Cexp = 4 * planes
    Ppad = _round_up(planes, 128)
    Epad = _round_up(Cexp, 128)
    M = N * H * W
    x_flat = x.reshape(M, Cin)

    # ---- BN1 batch stats: single fused sum / sum-of-squares pass ----
    st0 = column_stats(x_flat)
    s1, b1 = _fold_from_stats(st0[0], st0[1], float(M), p["g1"], p["beta1"], eps)

    w1m = p["w1"][:, :, 0, 0].T                                   # (Cin, planes)
    has_sc = (stride != 1) or (Cin != Cexp)

    # ---- conv1 (+ projection shortcut fused when stride == 1) ----
    if has_sc and stride == 1:
        wscm = p["wsc"][:, :, 0, 0].T                             # (Cin, Cexp)
        (o1p, sc_pad), st1 = fused_bn_relu_matmul(x_flat, s1, b1, [w1m, wscm])
    else:
        (o1p,), st1 = fused_bn_relu_matmul(x_flat, s1, b1, [w1m])
        if has_sc:                                                # stride != 1
            xs = x[:, ::stride, ::stride, :]
            (sc_pad,), _ = fused_bn_relu_matmul(
                xs.reshape(-1, Cin), s1, b1, [p["wsc"][:, :, 0, 0].T],
                with_stats=False)
        else:                                                     # identity
            sc_pad = jnp.pad(x_flat, ((0, 0), (0, Epad - Cexp)))

    # ---- bn2 folded from conv1's fused per-channel stats ----
    s2, b2 = _fold_from_stats(st1[0], st1[1], float(M),
                              _pad_to(p["g2"], Ppad), _pad_to(p["beta2"], Ppad), eps)

    # ---- conv2: fused bn2+relu+3x3 (scratch-padded, bf16 in/out) ----
    o1n = o1p.reshape(N, H, W, Ppad)
    w2m = jnp.transpose(p["w2"], (2, 3, 1, 0)).reshape(9, planes, planes)
    w2m = jnp.pad(w2m, ((0, 0), (0, Ppad - planes), (0, 0)))      # pad input chans
    o2p, st2 = bn_relu_conv3x3(o1n, s2, b2, w2m, with_stats=(stride == 1))

    if stride != 1:
        # TODO(synk): emit strided taps inside the conv2 kernel; subsampling the
        # dense stride-1 output is correct but 4x wasteful in MXU FLOPs.
        o2p = o2p[:, ::stride, ::stride, :]
    _, Ho, Wo, _ = o2p.shape
    M3 = N * Ho * Wo
    o2_flat = o2p.reshape(M3, Ppad)

    # ---- bn3 ----
    g3p, be3p = _pad_to(p["g3"], Ppad), _pad_to(p["beta3"], Ppad)
    if stride == 1:
        s3, b3 = _fold_from_stats(st2[0], st2[1], float(M3), g3p, be3p, eps)
    else:
        st3 = column_stats(o2_flat)
        s3, b3 = _fold_from_stats(st3[0], st3[1], float(M3), g3p, be3p, eps)

    # ---- conv3: fused bn3+relu+1x1 (no stats needed) ----
    w3m = jnp.pad(p["w3"][:, :, 0, 0].T, ((0, Ppad - planes), (0, 0)))
    (o3p,), _ = fused_bn_relu_matmul(o2_flat, s3, b3, [w3m], with_stats=False)
    o3n = o3p.reshape(N, Ho, Wo, Epad)    # 128-padded channels through SE tail

    # ---- MGPooling SE ----
    pooled = mg_pool(o3n)                                         # (N, 16, Epad)
    pc = pooled[:, :, :Cexp]
    avg1 = pc[:, 0, :]
    avg2 = jnp.transpose(pc[:, 1:5, :], (0, 2, 1)).reshape(N, 4 * Cexp)
    max1 = pc[:, 5, :]
    max2 = jnp.transpose(pc[:, 6:10, :], (0, 2, 1)).reshape(N, 4 * Cexp)
    y = jnp.concatenate([avg1, avg2, max1, max2], axis=1)         # (N, 10*Cexp)
    # tiny SE fc (10C -> C//r -> C) kept as plain JAX glue (negligible FLOPs)
    h = jnp.maximum(y @ p["wfc1"].T, 0.0)
    gate = jax.nn.sigmoid(h @ p["wfc2"].T)                        # (N, Cexp)
    gate_pad = jnp.pad(gate, ((0, 0), (0, Epad - Cexp)))

    # ---- gate + residual add (lane-dense over Epad, sliced only at the end) ----
    out_flat = se_scale_add(o3n.reshape(N, Ho * Wo, Epad), gate_pad,
                            sc_pad.reshape(N, Ho * Wo, Epad))
    out = out_flat.reshape(N, Ho, Wo, Epad)[..., :Cexp]
    return jnp.transpose(out, (0, 3, 1, 2))                       # back to NCHW


# ----------------------------------------------------------------------------
# Deterministic parameter construction + demo
# ----------------------------------------------------------------------------
def make_params(key, in_planes, planes, reduction):
    Cexp = 4 * planes
    hidden = Cexp // reduction
    ks = jax.random.split(key, 12)
    nrm = lambda k, s, sc: (sc * jax.random.normal(k, s, jnp.float32))
    return {
        "g1": 1.0 + 0.1 * jax.random.normal(ks[0], (in_planes,), jnp.float32),
        "beta1": 0.1 * jax.random.normal(ks[1], (in_planes,), jnp.float32),
        "g2": 1.0 + 0.1 * jax.random.normal(ks[2], (planes,), jnp.float32),
        "beta2": 0.1 * jax.random.normal(ks[3], (planes,), jnp.float32),
        "g3": 1.0 + 0.1 * jax.random.normal(ks[4], (planes,), jnp.float32),
        "beta3": 0.1 * jax.random.normal(ks[5], (planes,), jnp.float32),
        "w1": nrm(ks[6], (planes, in_planes, 1, 1), 0.2),
        "w2": nrm(ks[7], (planes, planes, 3, 3), 0.2),
        "w3": nrm(ks[8], (Cexp, planes, 1, 1), 0.2),
        "wsc": nrm(ks[9], (Cexp, in_planes, 1, 1), 0.2),
        "wfc1": nrm(ks[10], (hidden, 10 * Cexp), 0.2),
        "wfc2": nrm(ks[11], (Cexp, hidden), 0.2),
    }


if __name__ == "__main__":
    key = jax.random.PRNGKey(0)
    N, in_planes, planes, H, W = 2, 8, 4, 16, 16
    stride, reduction = 1, 16

    kx, kp = jax.random.split(key)
    x = jax.random.normal(kx, (N, in_planes, H, W), jnp.float32)   # NCHW like PyTorch
    params = make_params(kp, in_planes, planes, reduction)

    out = spp_se_preact_bottleneck(x, params, stride=stride)
    jax.block_until_ready(out)
    assert out.shape == (N, 4 * planes, H // stride, W // stride)
    assert bool(jnp.all(jnp.isfinite(out)))
    print("KERNEL_OK")
</pallas_src>

<mosaic_0001>
module attributes {stable_mosaic.version = 11 : i64} {
  func.func @_colstats_kernel(%arg0: i32, %arg1: memref<512x8xf32, #tpu.memory_space<vmem>>, %arg2: memref<1x2x8xf32, #tpu.memory_space<vmem>>) attributes {dimension_semantics = [#tpu.dimension_semantics<parallel>], iteration_bounds = array<i64: 1>, scalar_prefetch = 0 : i64, scratch_operands = 0 : i64, tpu.core_type = #tpu.core_type<tc>, window_params = [{transform_indices = @transform_0, window_bounds = array<i64: 512, 8>}, {transform_indices = @transform_1, window_bounds = array<i64: 1, 2, 8>}]} {
    %c0 = arith.constant 0 : index
    %c0_0 = arith.constant 0 : index
    %0 = vector.load %arg1[%c0, %c0_0] : memref<512x8xf32, #tpu.memory_space<vmem>>, vector<512x8xf32>
    %cst = arith.constant dense<0.000000e+00> : vector<8xf32>
    %1 = vector.multi_reduction <add>, %0, %cst [0] : vector<512x8xf32> to vector<8xf32>
    %2 = vector.shape_cast %1 : vector<8xf32> to vector<1x8xf32>
    %3 = arith.mulf %0, %0 : vector<512x8xf32>
    %cst_1 = arith.constant dense<0.000000e+00> : vector<8xf32>
    %4 = vector.multi_reduction <add>, %3, %cst_1 [0] : vector<512x8xf32> to vector<8xf32>
    %5 = vector.shape_cast %4 : vector<8xf32> to vector<1x8xf32>
    %6 = tpu.concatenate %2, %5 in 0 : vector<1x8xf32>, vector<1x8xf32> -> vector<2x8xf32>
    %7 = vector.shape_cast %6 : vector<2x8xf32> to vector<1x2x8xf32>
    %c0_2 = arith.constant 0 : index
    %c0_3 = arith.constant 0 : index
    %c0_4 = arith.constant 0 : index
    %8 = vector.load %arg2[%c0_2, %c0_3, %c0_4] : memref<1x2x8xf32, #tpu.memory_space<vmem>>, vector<1x2x8xf32>
    tpu.vector_store %arg2[%c0_2, %c0_3, %c0_4], %7 {strides = array<i32>} : memref<1x2x8xf32, #tpu.memory_space<vmem>>, vector<1x2x8xf32>,
    return
  }
  func.func @transform_0(%arg0: i32) -> (i32, i32) {
    %c0_i32 = arith.constant 0 : i32
    %c0_i32_0 = arith.constant 0 : i32
    return %arg0, %c0_i32 : i32, i32
  }
  func.func @transform_1(%arg0: i32) -> (i32, i32, i32) {
    %c0_i32 = arith.constant 0 : i32
    %c0_i32_0 = arith.constant 0 : i32
    %c0_i32_1 = arith.constant 0 : i32
    return %arg0, %c0_i32, %c0_i32_0 : i32, i32, i32
  }
}

module attributes {stable_mosaic.version = 11 : i64} {
  func.func @_bn_relu_mm_kernel(%arg0: i32, %arg1: memref<512x8xf32, #tpu.memory_space<vmem>>, %arg2: memref<1x8xf32, #tpu.memory_space<vmem>>, %arg3: memref<1x8xf32, #tpu.memory_space<vmem>>, %arg4: memref<8x256xbf16, #tpu.memory_space<vmem>>, %arg5: memref<512x128xbf16, #tpu.memory_space<vmem>>, %arg6: memref<512x128xbf16, #tpu.memory_space<vmem>>, %arg7: memref<1x2x128xf32, #tpu.memory_space<vmem>>) attributes {dimension_semantics = [#tpu.dimension_semantics<parallel>], iteration_bounds = array<i64: 1>, scalar_prefetch = 0 : i64, scratch_operands = 0 : i64, tpu.core_type = #tpu.core_type<tc>, window_params = [{transform_indices = @transform_0, window_bounds = array<i64: 512, 8>}, {pipeline_mode = #tpu.pipeline_mode<synchronous>, transform_indices = @transform_1, window_bounds = array<i64: 1, 8>}, {pipeline_mode = #tpu.pipeline_mode<synchronous>, transform_indices = @transform_2, window_bounds = array<i64: 1, 8>}, {pipeline_mode = #tpu.pipeline_mode<synchronous>, transform_indices = @transform_3, window_bounds = array<i64: 8, 256>}, {transform_indices = @transform_4, window_bounds = array<i64: 512, 128>}, {transform_indices = @transform_5, window_bounds = array<i64: 512, 128>}, {transform_indices = @transform_6, window_bounds = array<i64: 1, 2, 128>}]} {
    %c0 = arith.constant 0 : index
    %c0_0 = arith.constant 0 : index
    %0 = vector.load %arg1[%c0, %c0_0] : memref<512x8xf32, #tpu.memory_space<vmem>>, vector<512x8xf32>
    %c0_1 = arith.constant 0 : index
    %c0_2 = arith.constant 0 : index
    %1 = vector.load %arg2[%c0_1, %c0_2] : memref<1x8xf32, #tpu.memory_space<vmem>>, vector<1x8xf32>
    %2 = vector.broadcast %1 : vector<1x8xf32> to vector<512x8xf32>
    %3 = arith.mulf %0, %2 : vector<512x8xf32>
    %c0_3 = arith.constant 0 : index
    %c0_4 = arith.constant 0 : index
    %4 = vector.load %arg3[%c0_3, %c0_4] : memref<1x8xf32, #tpu.memory_space<vmem>>, vector<1x8xf32>
    %5 = vector.broadcast %4 : vector<1x8xf32> to vector<512x8xf32>
    %6 = arith.addf %3, %5 : vector<512x8xf32>
    %cst = arith.constant 0.000000e+00 : f32
    %7 = vector.broadcast %cst : f32 to vector<512x8xf32>
    %8 = arith.maximumf %6, %7 : vector<512x8xf32>
    %9 = arith.truncf %8 : vector<512x8xf32> to vector<512x8xbf16>
    %c0_5 = arith.constant 0 : index
    %c0_6 = arith.constant 0 : index
    %10 = vector.load %arg4[%c0_5, %c0_6] : memref<8x256xbf16, #tpu.memory_space<vmem>>, vector<8x256xbf16>
    %cst_7 = arith.constant dense<0.000000e+00> : vector<512x256xf32>
    %11 = tpu.matmul %9, %10, %cst_7 {dimension_numbers = #tpu.dot_dimension_numbers<[1], [0], [0], [1], [0, 0, 1, 1], [], []>} : vector<512x8xbf16>, vector<8x256xbf16>, vector<512x256xf32> -> vector<512x256xf32>
    %12 = vector.extract_strided_slice %11 {offsets = [0, 0], sizes = [512, 128], strides = [1, 1]} : vector<512x256xf32> to vector<512x128xf32>
    %13 = arith.truncf %12 : vector<512x128xf32> to vector<512x128xbf16>
    %c0_8 = arith.constant 0 : index
    %c0_9 = arith.constant 0 : index
    %14 = vector.load %arg5[%c0_8, %c0_9] : memref<512x128xbf16, #tpu.memory_space<vmem>>, vector<512x128xbf16>
    tpu.vector_store %arg5[%c0_8, %c0_9], %13 {strides = array<i32>} : memref<512x128xbf16, #tpu.memory_space<vmem>>, vector<512x128xbf16>,
    %15 = vector.extract_strided_slice %11 {offsets = [0, 128], sizes = [512, 128], strides = [1, 1]} : vector<512x256xf32> to vector<512x128xf32>
    %16 = arith.truncf %15 : vector<512x128xf32> to vector<512x128xbf16>
    %c0_10 = arith.constant 0 : index
    %c0_11 = arith.constant 0 : index
    %17 = vector.load %arg6[%c0_10, %c0_11] : memref<512x128xbf16, #tpu.memory_space<vmem>>, vector<512x128xbf16>
    tpu.vector_store %arg6[%c0_10, %c0_11], %16 {strides = array<i32>} : memref<512x128xbf16, #tpu.memory_space<vmem>>, vector<512x128xbf16>,
    %18 = vector.extract_strided_slice %11 {offsets = [0, 0], sizes = [512, 128], strides = [1, 1]} : vector<512x256xf32> to vector<512x128xf32>
    %cst_12 = arith.constant dense<0.000000e+00> : vector<128xf32>
    %19 = vector.multi_reduction <add>, %18, %cst_12 [0] : vector<512x128xf32> to vector<128xf32>
    %20 = vector.shape_cast %19 : vector<128xf32> to vector<1x128xf32>
    %21 = arith.mulf %18, %18 : vector<512x128xf32>
    %cst_13 = arith.constant dense<0.000000e+00> : vector<128xf32>
    %22 = vector.multi_reduction <add>, %21, %cst_13 [0] : vector<512x128xf32> to vector<128xf32>
    %23 = vector.shape_cast %22 : vector<128xf32> to vector<1x128xf32>
    %24 = tpu.concatenate %20, %23 in 0 : vector<1x128xf32>, vector<1x128xf32> -> vector<2x128xf32>
    %25 = vector.shape_cast %24 : vector<2x128xf32> to vector<1x2x128xf32>
    %c0_14 = arith.constant 0 : index
    %c0_15 = arith.constant 0 : index
    %c0_16 = arith.constant 0 : index
    %26 = vector.load %arg7[%c0_14, %c0_15, %c0_16] : memref<1x2x128xf32, #tpu.memory_space<vmem>>, vector<1x2x128xf32>
    tpu.vector_store %arg7[%c0_14, %c0_15, %c0_16], %25 {strides = array<i32>} : memref<1x2x128xf32, #tpu.memory_space<vmem>>, vector<1x2x128xf32>,
    return
  }
  func.func @transform_0(%arg0: i32) -> (i32, i32) {
    %c0_i32 = arith.constant 0 : i32
    %c0_i32_0 = arith.constant 0 : i32
    return %arg0, %c0_i32 : i32, i32
  }
  func.func @transform_1(%arg0: i32) -> (i32, i32) {
    %c0_i32 = arith.constant 0 : i32
    %c0_i32_0 = arith.constant 0 : i32
    %c0_i32_1 = arith.constant 0 : i32
    return %c0_i32, %c0_i32_0 : i32, i32
  }
  func.func @transform_2(%arg0: i32) -> (i32, i32) {
    %c0_i32 = arith.constant 0 : i32
    %c0_i32_0 = arith.constant 0 : i32
    %c0_i32_1 = arith.constant 0 : i32
    return %c0_i32, %c0_i32_0 : i32, i32
  }
  func.func @transform_3(%arg0: i32) -> (i32, i32) {
    %c0_i32 = arith.constant 0 : i32
    %c0_i32_0 = arith.constant 0 : i32
    %c0_i32_1 = arith.constant 0 : i32
    return %c0_i32, %c0_i32_0 : i32, i32
  }
  func.func @transform_4(%arg0: i32) -> (i32, i32) {
    %c0_i32 = arith.constant 0 : i32
    %c0_i32_0 = arith.constant 0 : i32
    return %arg0, %c0_i32 : i32, i32
  }
  func.func @transform_5(%arg0: i32) -> (i32, i32) {
    %c0_i32 = arith.constant 0 : i32
    %c0_i32_0 = arith.constant 0 : i32
    return %arg0, %c0_i32 : i32, i32
  }
  func.func @transform_6(%arg0: i32) -> (i32, i32, i32) {
    %c0_i32 = arith.constant 0 : i32
    %c0_i32_0 = arith.constant 0 : i32
    %c0_i32_1 = arith.constant 0 : i32
    return %arg0, %c0_i32, %c0_i32_0 : i32, i32, i32
  }
}

module attributes {stable_mosaic.version = 11 : i64} {
  func.func @_bn_relu_conv3x3_kernel(%arg0: i32, %arg1: memref<1x16x16x128xbf16, #tpu.memory_space<vmem>>, %arg2: memref<1x128xf32, #tpu.memory_space<vmem>>, %arg3: memref<1x128xf32, #tpu.memory_space<vmem>>, %arg4: memref<9x128x128xbf16, #tpu.memory_space<vmem>>, %arg5: memref<1x16x16x128xbf16, #tpu.memory_space<vmem>>, %arg6: memref<1x2x128xf32, #tpu.memory_space<vmem>>, %arg7: memref<18x18x128xf32, #tpu.memory_space<vmem>>) attributes {dimension_semantics = [#tpu.dimension_semantics<parallel>], iteration_bounds = array<i64: 2>, scalar_prefetch = 0 : i64, scratch_operands = 1 : i64, tpu.core_type = #tpu.core_type<tc>, window_params = [{transform_indices = @transform_0, window_bounds = array<i64: 1, 16, 16, 128>}, {pipeline_mode = #tpu.pipeline_mode<synchronous>, transform_indices = @transform_1, window_bounds = array<i64: 1, 128>}, {pipeline_mode = #tpu.pipeline_mode<synchronous>, transform_indices = @transform_2, window_bounds = array<i64: 1, 128>}, {pipeline_mode = #tpu.pipeline_mode<synchronous>, transform_indices = @transform_3, window_bounds = array<i64: 9, 128, 128>}, {transform_indices = @transform_4, window_bounds = array<i64: 1, 16, 16, 128>}, {transform_indices = @transform_5, window_bounds = array<i64: 1, 2, 128>}]} {
    %c0 = arith.constant 0 : index
    %c0_0 = arith.constant 0 : index
    %c0_1 = arith.constant 0 : index
    %c0_2 = arith.constant 0 : index
    %0 = vector.load %arg1[%c0, %c0_0, %c0_1, %c0_2] : memref<1x16x16x128xbf16, #tpu.memory_space<vmem>>, vector<1x16x16x128xbf16>
    %1 = vector.shape_cast %0 : vector<1x16x16x128xbf16> to vector<16x16x128xbf16>
    %2 = arith.extf %1 : vector<16x16x128xbf16> to vector<16x16x128xf32>
    %c0_3 = arith.constant 0 : index
    %c0_4 = arith.constant 0 : index
    %3 = vector.load %arg2[%c0_3, %c0_4] : memref<1x128xf32, #tpu.memory_space<vmem>>, vector<1x128xf32>
    %4 = vector.shape_cast %3 : vector<1x128xf32> to vector<1x1x128xf32>
    %5 = vector.broadcast %4 : vector<1x1x128xf32> to vector<16x16x128xf32>
    %6 = arith.mulf %2, %5 : vector<16x16x128xf32>
    %c0_5 = arith.constant 0 : index
    %c0_6 = arith.constant 0 : index
    %7 = vector.load %arg3[%c0_5, %c0_6] : memref<1x128xf32, #tpu.memory_space<vmem>>, vector<1x128xf32>
    %8 = vector.shape_cast %7 : vector<1x128xf32> to vector<1x1x128xf32>
    %9 = vector.broadcast %8 : vector<1x1x128xf32> to vector<16x16x128xf32>
    %10 = arith.addf %6, %9 : vector<16x16x128xf32>
    %cst = arith.constant 0.000000e+00 : f32
    %11 = vector.broadcast %cst : f32 to vector<16x16x128xf32>
    %12 = arith.maximumf %10, %11 : vector<16x16x128xf32>
    %cst_7 = arith.constant 0.000000e+00 : f32
    %13 = vector.broadcast %cst_7 : f32 to vector<1x18x128xf32>
    %cst_8 = arith.constant 0.000000e+00 : f32
    %14 = vector.broadcast %cst_8 : f32 to vector<18x1x128xf32>
    %c0_9 = arith.constant 0 : index
    %c0_10 = arith.constant 0 : index
    %c0_11 = arith.constant 0 : index
    %15 = vector.load %arg7[%c0_9, %c0_10, %c0_11] : memref<18x18x128xf32, #tpu.memory_space<vmem>>, vector<1x18x128xf32>
    tpu.vector_store %arg7[%c0_9, %c0_10, %c0_11], %13 {strides = array<i32>} : memref<18x18x128xf32, #tpu.memory_space<vmem>>, vector<1x18x128xf32>,
    %c17 = arith.constant 17 : index
    %c0_12 = arith.constant 0 : index
    %c0_13 = arith.constant 0 : index
    %16 = vector.load %arg7[%c17, %c0_12, %c0_13] : memref<18x18x128xf32, #tpu.memory_space<vmem>>, vector<1x18x128xf32>
    tpu.vector_store %arg7[%c17, %c0_12, %c0_13], %13 {strides = array<i32>} : memref<18x18x128xf32, #tpu.memory_space<vmem>>, vector<1x18x128xf32>,
    %c0_14 = arith.constant 0 : index
    %c0_15 = arith.constant 0 : index
    %c0_16 = arith.constant 0 : index
    %17 = vector.load %arg7[%c0_14, %c0_15, %c0_16] : memref<18x18x128xf32, #tpu.memory_space<vmem>>, vector<18x1x128xf32>
    tpu.vector_store %arg7[%c0_14, %c0_15, %c0_16], %14 {strides = array<i32>} : memref<18x18x128xf32, #tpu.memory_space<vmem>>, vector<18x1x128xf32>,
    %c0_17 = arith.constant 0 : index
    %c17_18 = arith.constant 17 : index
    %c0_19 = arith.constant 0 : index
    %18 = vector.load %arg7[%c0_17, %c17_18, %c0_19] : memref<18x18x128xf32, #tpu.memory_space<vmem>>, vector<18x1x128xf32>
    tpu.vector_store %arg7[%c0_17, %c17_18, %c0_19], %14 {strides = array<i32>} : memref<18x18x128xf32, #tpu.memory_space<vmem>>, vector<18x1x128xf32>,
    %c1 = arith.constant 1 : index
    %c1_20 = arith.constant 1 : index
    %c0_21 = arith.constant 0 : index
    %19 = vector.load %arg7[%c1, %c1_20, %c0_21] : memref<18x18x128xf32, #tpu.memory_space<vmem>>, vector<16x16x128xf32>
    tpu.vector_store %arg7[%c1, %c1_20, %c0_21], %12 {strides = array<i32>} : memref<18x18x128xf32, #tpu.memory_space<vmem>>, vector<16x16x128xf32>,
    %cst_22 = arith.constant 0.000000e+00 : f32
    %20 = vector.broadcast %cst_22 : f32 to vector<256x128xf32>
    %c0_23 = arith.constant 0 : index
    %c0_24 = arith.constant 0 : index
    %c0_25 = arith.constant 0 : index
    %21 = vector.load %arg7[%c0_23, %c0_24, %c0_25] : memref<18x18x128xf32, #tpu.memory_space<vmem>>, vector<16x16x128xf32>
    %22 = vector.shape_cast %21 : vector<16x16x128xf32> to vector<256x128xf32>
    %23 = arith.truncf %22 : vector<256x128xf32> to vector<256x128xbf16>
    %c0_26 = arith.constant 0 : index
    %c0_27 = arith.constant 0 : index
    %c0_28 = arith.constant 0 : index
    %24 = vector.load %arg4[%c0_26, %c0_27, %c0_28] : memref<9x128x128xbf16, #tpu.memory_space<vmem>>, vector<1x128x128xbf16>
    %25 = vector.shape_cast %24 : vector<1x128x128xbf16> to vector<128x128xbf16>
    %cst_29 = arith.constant dense<0.000000e+00> : vector<256x128xf32>
    %26 = tpu.matmul %23, %25, %cst_29 {dimension_numbers = #tpu.dot_dimension_numbers<[1], [0], [0], [1], [0, 0, 1, 1], [], []>} : vector<256x128xbf16>, vector<128x128xbf16>, vector<256x128xf32> -> vector<256x128xf32>
    %27 = arith.addf %20, %26 : vector<256x128xf32>
    %c0_30 = arith.constant 0 : index
    %c1_31 = arith.constant 1 : index
    %c0_32 = arith.constant 0 : index
    %28 = vector.load %arg7[%c0_30, %c1_31, %c0_32] : memref<18x18x128xf32, #tpu.memory_space<vmem>>, vector<16x16x128xf32>
    %29 = vector.shape_cast %28 : vector<16x16x128xf32> to vector<256x128xf32>
    %30 = arith.truncf %29 : vector<256x128xf32> to vector<256x128xbf16>
    %c1_33 = arith.constant 1 : index
    %c0_34 = arith.constant 0 : index
    %c0_35 = arith.constant 0 : index
    %31 = vector.load %arg4[%c1_33, %c0_34, %c0_35] : memref<9x128x128xbf16, #tpu.memory_space<vmem>>, vector<1x128x128xbf16>
    %32 = vector.shape_cast %31 : vector<1x128x128xbf16> to vector<128x128xbf16>
    %cst_36 = arith.constant dense<0.000000e+00> : vector<256x128xf32>
    %33 = tpu.matmul %30, %32, %cst_36 {dimension_numbers = #tpu.dot_dimension_numbers<[1], [0], [0], [1], [0, 0, 1, 1], [], []>} : vector<256x128xbf16>, vector<128x128xbf16>, vector<256x128xf32> -> vector<256x128xf32>
    %34 = arith.addf %27, %33 : vector<256x128xf32>
    %c0_37 = arith.constant 0 : index
    %c2 = arith.constant 2 : index
    %c0_38 = arith.constant 0 : index
    %35 = vector.load %arg7[%c0_37, %c2, %c0_38] : memref<18x18x128xf32, #tpu.memory_space<vmem>>, vector<16x16x128xf32>
    %36 = vector.shape_cast %35 : vector<16x16x128xf32> to vector<256x128xf32>
    %37 = arith.truncf %36 : vector<256x128xf32> to vector<256x128xbf16>
    %c2_39 = arith.constant 2 : index
    %c0_40 = arith.constant 0 : index
    %c0_41 = arith.constant 0 : index
    %38 = vector.load %arg4[%c2_39, %c0_40, %c0_41] : memref<9x128x128xbf16, #tpu.memory_space<vmem>>, vector<1x128x128xbf16>
    %39 = vector.shape_cast %38 : vector<1x128x128xbf16> to vector<128x128xbf16>
    %cst_42 = arith.constant dense<0.000000e+00> : vector<256x128xf32>
    %40 = tpu.matmul %37, %39, %cst_42 {dimension_numbers = #tpu.dot_dimension_numbers<[1], [0], [0], [1], [0, 0, 1, 1], [], []>} : vector<256x128xbf16>, vector<128x128xbf16>, vector<256x128xf32> -> vector<256x128xf32>
    %41 = arith.addf %34, %40 : vector<256x128xf32>
    %c1_43 = arith.constant 1 : index
    %c0_44 = arith.constant 0 : index
    %c0_45 = arith.constant 0 : index
    %42 = vector.load %arg7[%c1_43, %c0_44, %c0_45] : memref<18x18x128xf32, #tpu.memory_space<vmem>>, vector<16x16x128xf32>
    %43 = vector.shape_cast %42 : vector<16x16x128xf32> to vector<256x128xf32>
    %44 = arith.truncf %43 : vector<256x128xf32> to vector<256x128xbf16>
    %c3 = arith.constant 3 : index
    %c0_46 = arith.constant 0 : index
    %c0_47 = arith.constant 0 : index
    %45 = vector.load %arg4[%c3, %c0_46, %c0_47] : memref<9x128x128xbf16, #tpu.memory_space<vmem>>, vector<1x128x128xbf16>
    %46 = vector.shape_cast %45 : vector<1x128x128xbf16> to vector<128x128xbf16>
    %cst_48 = arith.constant dense<0.000000e+00> : vector<256x128xf32>
    %47 = tpu.matmul %44, %46, %cst_48 {dimension_numbers = #tpu.dot_dimension_numbers<[1], [0], [0], [1], [0, 0, 1, 1], [], []>} : vector<256x128xbf16>, vector<128x128xbf16>, vector<256x128xf32> -> vector<256x128xf32>
    %48 = arith.addf %41, %47 : vector<256x128xf32>
    %c1_49 = arith.constant 1 : index
    %c1_50 = arith.constant 1 : index
    %c0_51 = arith.constant 0 : index
    %49 = vector.load %arg7[%c1_49, %c1_50, %c0_51] : memref<18x18x128xf32, #tpu.memory_space<vmem>>, vector<16x16x128xf32>
    %50 = vector.shape_cast %49 : vector<16x16x128xf32> to vector<256x128xf32>
    %51 = arith.truncf %50 : vector<256x128xf32> to vector<256x128xbf16>
    %c4 = arith.constant 4 : index
    %c0_52 = arith.constant 0 : index
    %c0_53 = arith.constant 0 : index
    %52 = vector.load %arg4[%c4, %c0_52, %c0_53] : memref<9x128x128xbf16, #tpu.memory_space<vmem>>, vector<1x128x128xbf16>
    %53 = vector.shape_cast %52 : vector<1x128x128xbf16> to vector<128x128xbf16>
    %cst_54 = arith.constant dense<0.000000e+00> : vector<256x128xf32>
    %54 = tpu.matmul %51, %53, %cst_54 {dimension_numbers = #tpu.dot_dimension_numbers<[1], [0], [0], [1], [0, 0, 1, 1], [], []>} : vector<256x128xbf16>, vector<128x128xbf16>, vector<256x128xf32> -> vector<256x128xf32>
    %55 = arith.addf %48, %54 : vector<256x128xf32>
    %c1_55 = arith.constant 1 : index
    %c2_56 = arith.constant 2 : index
    %c0_57 = arith.constant 0 : index
    %56 = vector.load %arg7[%c1_55, %c2_56, %c0_57] : memref<18x18x128xf32, #tpu.memory_space<vmem>>, vector<16x16x128xf32>
    %57 = vector.shape_cast %56 : vector<16x16x128xf32> to vector<256x128xf32>
    %58 = arith.truncf %57 : vector<256x128xf32> to vector<256x128xbf16>
    %c5 = arith.constant 5 : index
    %c0_58 = arith.constant 0 : index
    %c0_59 = arith.constant 0 : index
    %59 = vector.load %arg4[%c5, %c0_58, %c0_59] : memref<9x128x128xbf16, #tpu.memory_space<vmem>>, vector<1x128x128xbf16>
    %60 = vector.shape_cast %59 : vector<1x128x128xbf16> to vector<128x128xbf16>
    %cst_60 = arith.constant dense<0.000000e+00> : vector<256x128xf32>
    %61 = tpu.matmul %58, %60, %cst_60 {dimension_numbers = #tpu.dot_dimension_numbers<[1], [0], [0], [1], [0, 0, 1, 1], [], []>} : vector<256x128xbf16>, vector<128x128xbf16>, vector<256x128xf32> -> vector<256x128xf32>
    %62 = arith.addf %55, %61 : vector<256x128xf32>
    %c2_61 = arith.constant 2 : index
    %c0_62 = arith.constant 0 : index
    %c0_63 = arith.constant 0 : index
    %63 = vector.load %arg7[%c2_61, %c0_62, %c0_63] : memref<18x18x128xf32, #tpu.memory_space<vmem>>, vector<16x16x128xf32>
    %64 = vector.shape_cast %63 : vector<16x16x128xf32> to vector<256x128xf32>
    %65 = arith.truncf %64 : vector<256x128xf32> to vector<256x128xbf16>
    %c6 = arith.constant 6 : index
    %c0_64 = arith.constant 0 : index
    %c0_65 = arith.constant 0 : index
    %66 = vector.load %arg4[%c6, %c0_64, %c0_65] : memref<9x128x128xbf16, #tpu.memory_space<vmem>>, vector<1x128x128xbf16>
    %67 = vector.shape_cast %66 : vector<1x128x128xbf16> to vector<128x128xbf16>
    %cst_66 = arith.constant dense<0.000000e+00> : vector<256x128xf32>
    %68 = tpu.matmul %65, %67, %cst_66 {dimension_numbers = #tpu.dot_dimension_numbers<[1], [0], [0], [1], [0, 0, 1, 1], [], []>} : vector<256x128xbf16>, vector<128x128xbf16>, vector<256x128xf32> -> vector<256x128xf32>
    %69 = arith.addf %62, %68 : vector<256x128xf32>
    %c2_67 = arith.constant 2 : index
    %c1_68 = arith.constant 1 : index
    %c0_69 = arith.constant 0 : index
    %70 = vector.load %arg7[%c2_67, %c1_68, %c0_69] : memref<18x18x128xf32, #tpu.memory_space<vmem>>, vector<16x16x128xf32>
    %71 = vector.shape_cast %70 : vector<16x16x128xf32> to vector<256x128xf32>
    %72 = arith.truncf %71 : vector<256x128xf32> to vector<256x128xbf16>
    %c7 = arith.constant 7 : index
    %c0_70 = arith.constant 0 : index
    %c0_71 = arith.constant 0 : index
    %73 = vector.load %arg4[%c7, %c0_70, %c0_71] : memref<9x128x128xbf16, #tpu.memory_space<vmem>>, vector<1x128x128xbf16>
    %74 = vector.shape_cast %73 : vector<1x128x128xbf16> to vector<128x128xbf16>
    %cst_72 = arith.constant dense<0.000000e+00> : vector<256x128xf32>
    %75 = tpu.matmul %72, %74, %cst_72 {dimension_numbers = #tpu.dot_dimension_numbers<[1], [0], [0], [1], [0, 0, 1, 1], [], []>} : vector<256x128xbf16>, vector<128x128xbf16>, vector<256x128xf32> -> vector<256x128xf32>
    %76 = arith.addf %69, %75 : vector<256x128xf32>
    %c2_73 = arith.constant 2 : index
    %c2_74 = arith.constant 2 : index
    %c0_75 = arith.constant 0 : index
    %77 = vector.load %arg7[%c2_73, %c2_74, %c0_75] : memref<18x18x128xf32, #tpu.memory_space<vmem>>, vector<16x16x128xf32>
    %78 = vector.shape_cast %77 : vector<16x16x128xf32> to vector<256x128xf32>
    %79 = arith.truncf %78 : vector<256x128xf32> to vector<256x128xbf16>
    %c8 = arith.constant 8 : index
    %c0_76 = arith.constant 0 : index
    %c0_77 = arith.constant 0 : index
    %80 = vector.load %arg4[%c8, %c0_76, %c0_77] : memref<9x128x128xbf16, #tpu.memory_space<vmem>>, vector<1x128x128xbf16>
    %81 = vector.shape_cast %80 : vector<1x128x128xbf16> to vector<128x128xbf16>
    %cst_78 = arith.constant dense<0.000000e+00> : vector<256x128xf32>
    %82 = tpu.matmul %79, %81, %cst_78 {dimension_numbers = #tpu.dot_dimension_numbers<[1], [0], [0], [1], [0, 0, 1, 1], [], []>} : vector<256x128xbf16>, vector<128x128xbf16>, vector<256x128xf32> -> vector<256x128xf32>
    %83 = arith.addf %76, %82 : vector<256x128xf32>
    %84 = vector.shape_cast %83 : vector<256x128xf32> to vector<1x16x16x128xf32>
    %85 = arith.truncf %84 : vector<1x16x16x128xf32> to vector<1x16x16x128xbf16>
    %c0_79 = arith.constant 0 : index
    %c0_80 = arith.constant 0 : index
    %c0_81 = arith.constant 0 : index
    %c0_82 = arith.constant 0 : index
    %86 = vector.load %arg5[%c0_79, %c0_80, %c0_81, %c0_82] : memref<1x16x16x128xbf16, #tpu.memory_space<vmem>>, vector<1x16x16x128xbf16>
    tpu.vector_store %arg5[%c0_79, %c0_80, %c0_81, %c0_82], %85 {strides = array<i32>} : memref<1x16x16x128xbf16, #tpu.memory_space<vmem>>, vector<1x16x16x128xbf16>,
    %cst_83 = arith.constant dense<0.000000e+00> : vector<128xf32>
    %87 = vector.multi_reduction <add>, %83, %cst_83 [0] : vector<256x128xf32> to vector<128xf32>
    %88 = vector.shape_cast %87 : vector<128xf32> to vector<1x128xf32>
    %89 = arith.mulf %83, %83 : vector<256x128xf32>
    %cst_84 = arith.constant dense<0.000000e+00> : vector<128xf32>
    %90 = vector.multi_reduction <add>, %89, %cst_84 [0] : vector<256x128xf32> to vector<128xf32>
    %91 = vector.shape_cast %90 : vector<128xf32> to vector<1x128xf32>
    %92 = tpu.concatenate %88, %91 in 0 : vector<1x128xf32>, vector<1x128xf32> -> vector<2x128xf32>
    %93 = vector.shape_cast %92 : vector<2x128xf32> to vector<1x2x128xf32>
    %c0_85 = arith.constant 0 : index
    %c0_86 = arith.constant 0 : index
    %c0_87 = arith.constant 0 : index
    %94 = vector.load %arg6[%c0_85, %c0_86, %c0_87] : memref<1x2x128xf32, #tpu.memory_space<vmem>>, vector<1x2x128xf32>
    tpu.vector_store %arg6[%c0_85, %c0_86, %c0_87], %93 {strides = array<i32>} : memref<1x2x128xf32, #tpu.memory_space<vmem>>, vector<1x2x128xf32>,
    return
  }
  func.func @transform_0(%arg0: i32) -> (i32, i32, i32, i32) {
    %c0_i32 = arith.constant 0 : i32
    %c0_i32_0 = arith.constant 0 : i32
    %c0_i32_1 = arith.constant 0 : i32
    %c0_i32_2 = arith.constant 0 : i32
    return %arg0, %c0_i32, %c0_i32_0, %c0_i32_1 : i32, i32, i32, i32
  }
  func.func @transform_1(%arg0: i32) -> (i32, i32) {
    %c0_i32 = arith.constant 0 : i32
    %c0_i32_0 = arith.constant 0 : i32
    %c0_i32_1 = arith.constant 0 : i32
    return %c0_i32, %c0_i32_0 : i32, i32
  }
  func.func @transform_2(%arg0: i32) -> (i32, i32) {
    %c0_i32 = arith.constant 0 : i32
    %c0_i32_0 = arith.constant 0 : i32
    %c0_i32_1 = arith.constant 0 : i32
    return %c0_i32, %c0_i32_0 : i32, i32
  }
  func.func @transform_3(%arg0: i32) -> (i32, i32, i32) {
    %c0_i32 = arith.constant 0 : i32
    %c0_i32_0 = arith.constant 0 : i32
    %c0_i32_1 = arith.constant 0 : i32
    %c0_i32_2 = arith.constant 0 : i32
    return %c0_i32, %c0_i32_0, %c0_i32_1 : i32, i32, i32
  }
  func.func @transform_4(%arg0: i32) -> (i32, i32, i32, i32) {
    %c0_i32 = arith.constant 0 : i32
    %c0_i32_0 = arith.constant 0 : i32
    %c0_i32_1 = arith.constant 0 : i32
    %c0_i32_2 = arith.constant 0 : i32
    return %arg0, %c0_i32, %c0_i32_0, %c0_i32_1 : i32, i32, i32, i32
  }
  func.func @transform_5(%arg0: i32) -> (i32, i32, i32) {
    %c0_i32 = arith.constant 0 : i32
    %c0_i32_0 = arith.constant 0 : i32
    %c0_i32_1 = arith.constant 0 : i32
    return %arg0, %c0_i32, %c0_i32_0 : i32, i32, i32
  }
}

module attributes {stable_mosaic.version = 11 : i64} {
  func.func @_bn_relu_mm_kernel(%arg0: i32, %arg1: memref<512x128xbf16, #tpu.memory_space<vmem>>, %arg2: memref<1x128xf32, #tpu.memory_space<vmem>>, %arg3: memref<1x128xf32, #tpu.memory_space<vmem>>, %arg4: memref<128x128xbf16, #tpu.memory_space<vmem>>, %arg5: memref<512x128xbf16, #tpu.memory_space<vmem>>) attributes {dimension_semantics = [#tpu.dimension_semantics<parallel>], iteration_bounds = array<i64: 1>, scalar_prefetch = 0 : i64, scratch_operands = 0 : i64, tpu.core_type = #tpu.core_type<tc>, window_params = [{transform_indices = @transform_0, window_bounds = array<i64: 512, 128>}, {pipeline_mode = #tpu.pipeline_mode<synchronous>, transform_indices = @transform_1, window_bounds = array<i64: 1, 128>}, {pipeline_mode = #tpu.pipeline_mode<synchronous>, transform_indices = @transform_2, window_bounds = array<i64: 1, 128>}, {pipeline_mode = #tpu.pipeline_mode<synchronous>, transform_indices = @transform_3, window_bounds = array<i64: 128, 128>}, {transform_indices = @transform_4, window_bounds = array<i64: 512, 128>}]} {
    %c0 = arith.constant 0 : index
    %c0_0 = arith.constant 0 : index
    %0 = vector.load %arg1[%c0, %c0_0] : memref<512x128xbf16, #tpu.memory_space<vmem>>, vector<512x128xbf16>
    %1 = arith.extf %0 : vector<512x128xbf16> to vector<512x128xf32>
    %c0_1 = arith.constant 0 : index
    %c0_2 = arith.constant 0 : index
    %2 = vector.load %arg2[%c0_1, %c0_2] : memref<1x128xf32, #tpu.memory_space<vmem>>, vector<1x128xf32>
    %3 = vector.broadcast %2 : vector<1x128xf32> to vector<512x128xf32>
    %4 = arith.mulf %1, %3 : vector<512x128xf32>
    %c0_3 = arith.constant 0 : index
    %c0_4 = arith.constant 0 : index
    %5 = vector.load %arg3[%c0_3, %c0_4] : memref<1x128xf32, #tpu.memory_space<vmem>>, vector<1x128xf32>
    %6 = vector.broadcast %5 : vector<1x128xf32> to vector<512x128xf32>
    %7 = arith.addf %4, %6 : vector<512x128xf32>
    %cst = arith.constant 0.000000e+00 : f32
    %8 = vector.broadcast %cst : f32 to vector<512x128xf32>
    %9 = arith.maximumf %7, %8 : vector<512x128xf32>
    %10 = arith.truncf %9 : vector<512x128xf32> to vector<512x128xbf16>
    %c0_5 = arith.constant 0 : index
    %c0_6 = arith.constant 0 : index
    %11 = vector.load %arg4[%c0_5, %c0_6] : memref<128x128xbf16, #tpu.memory_space<vmem>>, vector<128x128xbf16>
    %cst_7 = arith.constant dense<0.000000e+00> : vector<512x128xf32>
    %12 = tpu.matmul %10, %11, %cst_7 {dimension_numbers = #tpu.dot_dimension_numbers<[1], [0], [0], [1], [0, 0, 1, 1], [], []>} : vector<512x128xbf16>, vector<128x128xbf16>, vector<512x128xf32> -> vector<512x128xf32>
    %13 = arith.truncf %12 : vector<512x128xf32> to vector<512x128xbf16>
    %c0_8 = arith.constant 0 : index
    %c0_9 = arith.constant 0 : index
    %14 = vector.load %arg5[%c0_8, %c0_9] : memref<512x128xbf16, #tpu.memory_space<vmem>>, vector<512x128xbf16>
    tpu.vector_store %arg5[%c0_8, %c0_9], %13 {strides = array<i32>} : memref<512x128xbf16, #tpu.memory_space<vmem>>, vector<512x128xbf16>,
    return
  }
  func.func @transform_0(%arg0: i32) -> (i32, i32) {
    %c0_i32 = arith.constant 0 : i32
    %c0_i32_0 = arith.constant 0 : i32
    return %arg0, %c0_i32 : i32, i32
  }
  func.func @transform_1(%arg0: i32) -> (i32, i32) {
    %c0_i32 = arith.constant 0 : i32
    %c0_i32_0 = arith.constant 0 : i32
    %c0_i32_1 = arith.constant 0 : i32
    return %c0_i32, %c0_i32_0 : i32, i32
  }
  func.func @transform_2(%arg0: i32) -> (i32, i32) {
    %c0_i32 = arith.constant 0 : i32
    %c0_i32_0 = arith.constant 0 : i32
    %c0_i32_1 = arith.constant 0 : i32
    return %c0_i32, %c0_i32_0 : i32, i32
  }
  func.func @transform_3(%arg0: i32) -> (i32, i32) {
    %c0_i32 = arith.constant 0 : i32
    %c0_i32_0 = arith.constant 0 : i32
    %c0_i32_1 = arith.constant 0 : i32
    return %c0_i32, %c0_i32_0 : i32, i32
  }
  func.func @transform_4(%arg0: i32) -> (i32, i32) {
    %c0_i32 = arith.constant 0 : i32
    %c0_i32_0 = arith.constant 0 : i32
    return %arg0, %c0_i32 : i32, i32
  }
}

module attributes {stable_mosaic.version = 11 : i64} {
  func.func @_mgpool_kernel(%arg0: i32, %arg1: memref<1x16x16x128xbf16, #tpu.memory_space<vmem>>, %arg2: memref<1x16x128xf32, #tpu.memory_space<vmem>>) attributes {dimension_semantics = [#tpu.dimension_semantics<parallel>], iteration_bounds = array<i64: 2>, scalar_prefetch = 0 : i64, scratch_operands = 0 : i64, tpu.core_type = #tpu.core_type<tc>, window_params = [{transform_indices = @transform_0, window_bounds = array<i64: 1, 16, 16, 128>}, {transform_indices = @transform_1, window_bounds = array<i64: 1, 16, 128>}]} {
    %c0 = arith.constant 0 : index
    %c0_0 = arith.constant 0 : index
    %c0_1 = arith.constant 0 : index
    %c0_2 = arith.constant 0 : index
    %0 = vector.load %arg1[%c0, %c0_0, %c0_1, %c0_2] : memref<1x16x16x128xbf16, #tpu.memory_space<vmem>>, vector<1x16x16x128xbf16>
    %1 = vector.shape_cast %0 : vector<1x16x16x128xbf16> to vector<16x16x128xbf16>
    %2 = arith.extf %1 : vector<16x16x128xbf16> to vector<16x16x128xf32>
    %3 = vector.extract_strided_slice %2 {offsets = [0, 0, 0], sizes = [8, 8, 128], strides = [1, 1, 1]} : vector<16x16x128xf32> to vector<8x8x128xf32>
    %cst = arith.constant dense<0.000000e+00> : vector<128xf32>
    %4 = vector.multi_reduction <add>, %3, %cst [0, 1] : vector<8x8x128xf32> to vector<128xf32>
    %5 = vector.shape_cast %4 : vector<128xf32> to vector<1x128xf32>
    %cst_3 = arith.constant dense<0xFF800000> : vector<128xf32>
    %6 = vector.multi_reduction <maximumf>, %3, %cst_3 [0, 1] : vector<8x8x128xf32> to vector<128xf32>
    %7 = vector.shape_cast %6 : vector<128xf32> to vector<1x128xf32>
    %8 = vector.extract_strided_slice %2 {offsets = [0, 8, 0], sizes = [8, 8, 128], strides = [1, 1, 1]} : vector<16x16x128xf32> to vector<8x8x128xf32>
    %cst_4 = arith.constant dense<0.000000e+00> : vector<128xf32>
    %9 = vector.multi_reduction <add>, %8, %cst_4 [0, 1] : vector<8x8x128xf32> to vector<128xf32>
    %10 = vector.shape_cast %9 : vector<128xf32> to vector<1x128xf32>
    %cst_5 = arith.constant dense<0xFF800000> : vector<128xf32>
    %11 = vector.multi_reduction <maximumf>, %8, %cst_5 [0, 1] : vector<8x8x128xf32> to vector<128xf32>
    %12 = vector.shape_cast %11 : vector<128xf32> to vector<1x128xf32>
    %13 = vector.extract_strided_slice %2 {offsets = [8, 0, 0], sizes = [8, 8, 128], strides = [1, 1, 1]} : vector<16x16x128xf32> to vector<8x8x128xf32>
    %cst_6 = arith.constant dense<0.000000e+00> : vector<128xf32>
    %14 = vector.multi_reduction <add>, %13, %cst_6 [0, 1] : vector<8x8x128xf32> to vector<128xf32>
    %15 = vector.shape_cast %14 : vector<128xf32> to vector<1x128xf32>
    %cst_7 = arith.constant dense<0xFF800000> : vector<128xf32>
    %16 = vector.multi_reduction <maximumf>, %13, %cst_7 [0, 1] : vector<8x8x128xf32> to vector<128xf32>
    %17 = vector.shape_cast %16 : vector<128xf32> to vector<1x128xf32>
    %18 = vector.extract_strided_slice %2 {offsets = [8, 8, 0], sizes = [8, 8, 128], strides = [1, 1, 1]} : vector<16x16x128xf32> to vector<8x8x128xf32>
    %cst_8 = arith.constant dense<0.000000e+00> : vector<128xf32>
    %19 = vector.multi_reduction <add>, %18, %cst_8 [0, 1] : vector<8x8x128xf32> to vector<128xf32>
    %20 = vector.shape_cast %19 : vector<128xf32> to vector<1x128xf32>
    %cst_9 = arith.constant dense<0xFF800000> : vector<128xf32>
    %21 = vector.multi_reduction <maximumf>, %18, %cst_9 [0, 1] : vector<8x8x128xf32> to vector<128xf32>
    %22 = vector.shape_cast %21 : vector<128xf32> to vector<1x128xf32>
    %23 = tpu.concatenate %5, %10, %15, %20 in 0 : vector<1x128xf32>, vector<1x128xf32>, vector<1x128xf32>, vector<1x128xf32> -> vector<4x128xf32>
    %24 = tpu.concatenate %7, %12, %17, %22 in 0 : vector<1x128xf32>, vector<1x128xf32>, vector<1x128xf32>, vector<1x128xf32> -> vector<4x128xf32>
    %cst_10 = arith.constant 1.562500e-02 : f32
    %25 = vector.broadcast %cst_10 : f32 to vector<4x128xf32>
    %26 = arith.mulf %23, %25 : vector<4x128xf32>
    %cst_11 = arith.constant dense<0.000000e+00> : vector<128xf32>
    %27 = vector.multi_reduction <add>, %26, %cst_11 [0] : vector<4x128xf32> to vector<128xf32>
    %28 = vector.shape_cast %27 : vector<128xf32> to vector<1x128xf32>
    %cst_12 = arith.constant 4.000000e+00 : f32
    %29 = vector.broadcast %cst_12 : f32 to vector<1x128xf32>
    %30 = arith.divf %28, %29 : vector<1x128xf32>
    %cst_13 = arith.constant dense<0xFF800000> : vector<128xf32>
    %31 = vector.multi_reduction <maximumf>, %24, %cst_13 [0] : vector<4x128xf32> to vector<128xf32>
    %32 = vector.shape_cast %31 : vector<128xf32> to vector<1x128xf32>
    %cst_14 = arith.constant 0.000000e+00 : f32
    %33 = vector.broadcast %cst_14 : f32 to vector<6x128xf32>
    %34 = tpu.concatenate %30, %26, %32, %24, %33 in 0 : vector<1x128xf32>, vector<4x128xf32>, vector<1x128xf32>, vector<4x128xf32>, vector<6x128xf32> -> vector<16x128xf32>
    %35 = vector.shape_cast %34 : vector<16x128xf32> to vector<1x16x128xf32>
    %c0_15 = arith.constant 0 : index
    %c0_16 = arith.constant 0 : index
    %c0_17 = arith.constant 0 : index
    %36 = vector.load %arg2[%c0_15, %c0_16, %c0_17] : memref<1x16x128xf32, #tpu.memory_space<vmem>>, vector<1x16x128xf32>
    tpu.vector_store %arg2[%c0_15, %c0_16, %c0_17], %35 {strides = array<i32>} : memref<1x16x128xf32, #tpu.memory_space<vmem>>, vector<1x16x128xf32>,
    return
  }
  func.func @transform_0(%arg0: i32) -> (i32, i32, i32, i32) {
    %c0_i32 = arith.constant 0 : i32
    %c0_i32_0 = arith.constant 0 : i32
    %c0_i32_1 = arith.constant 0 : i32
    %c0_i32_2 = arith.constant 0 : i32
    return %arg0, %c0_i32, %c0_i32_0, %c0_i32_1 : i32, i32, i32, i32
  }
  func.func @transform_1(%arg0: i32) -> (i32, i32, i32) {
    %c0_i32 = arith.constant 0 : i32
    %c0_i32_0 = arith.constant 0 : i32
    %c0_i32_1 = arith.constant 0 : i32
    return %arg0, %c0_i32, %c0_i32_0 : i32, i32, i32
  }
}

module attributes {stable_mosaic.version = 11 : i64} {
  func.func @_se_add_kernel(%arg0: i32, %arg1: i32, %arg2: memref<1x256x128xbf16, #tpu.memory_space<vmem>>, %arg3: memref<1x1x128xf32, #tpu.memory_space<vmem>>, %arg4: memref<1x256x128xbf16, #tpu.memory_space<vmem>>, %arg5: memref<1x256x128xf32, #tpu.memory_space<vmem>>) attributes {dimension_semantics = [#tpu.dimension_semantics<parallel>, #tpu.dimension_semantics<parallel>], iteration_bounds = array<i64: 2, 1>, scalar_prefetch = 0 : i64, scratch_operands = 0 : i64, tpu.core_type = #tpu.core_type<tc>, window_params = [{transform_indices = @transform_0, window_bounds = array<i64: 1, 256, 128>}, {transform_indices = @transform_1, window_bounds = array<i64: 1, 1, 128>}, {transform_indices = @transform_2, window_bounds = array<i64: 1, 256, 128>}, {transform_indices = @transform_3, window_bounds = array<i64: 1, 256, 128>}]} {
    %c0 = arith.constant 0 : index
    %c0_0 = arith.constant 0 : index
    %c0_1 = arith.constant 0 : index
    %0 = vector.load %arg2[%c0, %c0_0, %c0_1] : memref<1x256x128xbf16, #tpu.memory_space<vmem>>, vector<1x256x128xbf16>
    %1 = arith.extf %0 : vector<1x256x128xbf16> to vector<1x256x128xf32>
    %c0_2 = arith.constant 0 : index
    %c0_3 = arith.constant 0 : index
    %c0_4 = arith.constant 0 : index
    %2 = vector.load %arg3[%c0_2, %c0_3, %c0_4] : memref<1x1x128xf32, #tpu.memory_space<vmem>>, vector<1x1x128xf32>
    %3 = vector.broadcast %2 : vector<1x1x128xf32> to vector<1x256x128xf32>
    %4 = arith.mulf %1, %3 : vector<1x256x128xf32>
    %c0_5 = arith.constant 0 : index
    %c0_6 = arith.constant 0 : index
    %c0_7 = arith.constant 0 : index
    %5 = vector.load %arg4[%c0_5, %c0_6, %c0_7] : memref<1x256x128xbf16, #tpu.memory_space<vmem>>, vector<1x256x128xbf16>
    %6 = arith.extf %5 : vector<1x256x128xbf16> to vector<1x256x128xf32>
    %7 = arith.addf %4, %6 : vector<1x256x128xf32>
    %c0_8 = arith.constant 0 : index
    %c0_9 = arith.constant 0 : index
    %c0_10 = arith.constant 0 : index
    %8 = vector.load %arg5[%c0_8, %c0_9, %c0_10] : memref<1x256x128xf32, #tpu.memory_space<vmem>>, vector<1x256x128xf32>
    tpu.vector_store %arg5[%c0_8, %c0_9, %c0_10], %7 {strides = array<i32>} : memref<1x256x128xf32, #tpu.memory_space<vmem>>, vector<1x256x128xf32>,
    return
  }
  func.func @transform_0(%arg0: i32, %arg1: i32) -> (i32, i32, i32) {
    %c0_i32 = arith.constant 0 : i32
    %c0_i32_0 = arith.constant 0 : i32
    return %arg0, %arg1, %c0_i32 : i32, i32, i32
  }
  func.func @transform_1(%arg0: i32, %arg1: i32) -> (i32, i32, i32) {
    %c0_i32 = arith.constant 0 : i32
    %c0_i32_0 = arith.constant 0 : i32
    %c0_i32_1 = arith.constant 0 : i32
    return %arg0, %c0_i32, %c0_i32_0 : i32, i32, i32
  }
  func.func @transform_2(%arg0: i32, %arg1: i32) -> (i32, i32, i32) {
    %c0_i32 = arith.constant 0 : i32
    %c0_i32_0 = arith.constant 0 : i32
    return %arg0, %arg1, %c0_i32 : i32, i32, i32
  }
  func.func @transform_3(%arg0: i32, %arg1: i32) -> (i32, i32, i32) {
    %c0_i32 = arith.constant 0 : i32
    %c0_i32_0 = arith.constant 0 : i32
    return %arg0, %arg1, %c0_i32 : i32, i32, i32
  }
}

</mosaic_0001>

<llo_original>
// kernel: spp_se_preact_bottleneck.6
$region0: #{spp_se_preact_bottleneck.6}
  #allocation0 [shape = 'u32[]', space=smem, size = 0x4, offset = 0x4, fixed_abs, tag = 'smem constant byte address 0x4 - core index']
  #allocation1 [shape = 'u32[72,128]{1,0:T(1,128)}', space=vmem, size = 0x9000, scoped, tag = 'internal scratch']
  %s0 = inlined_call_operand.vmem [shape: f32[512,8], index: 0, kind: input, shape index: {}]
  %s1 = inlined_call_operand.vmem [shape: f32[1,2,8], index: 1, kind: output, shape index: {}]
  %s2 = sld [smem:[#allocation0]]
  $region14: #{spp_se_preact_bottleneck.6} parent=0
    _
  %s4 = ssub.s32 1, %s2
  %s5 = scalar_select 0, %s4, %s2
  // Predicated region
  $region2: #{spp_se_preact_bottleneck.6} parent=0 // pred_check
    _
  $region3: #{spp_se_preact_bottleneck.6} parent=0 // pred_check_branch
    %7 = sbr.rel (0) target = $region5
  $region4: #{spp_se_preact_bottleneck.6} parent=0 // pred_region
    _
  $region5: #{spp_se_preact_bottleneck.6} parent=0 // pred_fallthru
    _
  %v8 = vld [vmem:[%s0] sm:$0xff]
  %v9 = vld [vmem:[%s0 + $0x8] sm:$0xff]
  %v10 = vld [vmem:[%s0 + $0x10] sm:$0xff]
  %v11 = vld [vmem:[%s0 + $0x18] sm:$0xff]
  %v12 = vld [vmem:[%s0 + $0x20] sm:$0xff]
  %v13 = vld [vmem:[%s0 + $0x28] sm:$0xff]
  %v14 = vld [vmem:[%s0 + $0x30] sm:$0xff]
  %v15 = vld [vmem:[%s0 + $0x38] sm:$0xff]
  %v16 = vld [vmem:[%s0 + $0x40] sm:$0xff]
  %v17 = vld [vmem:[%s0 + $0x48] sm:$0xff]
  %v18 = vld [vmem:[%s0 + $0x50] sm:$0xff]
  %v19 = vld [vmem:[%s0 + $0x58] sm:$0xff]
  %v20 = vld [vmem:[%s0 + $0x60] sm:$0xff]
  %v21 = vld [vmem:[%s0 + $0x68] sm:$0xff]
  %v22 = vld [vmem:[%s0 + $0x70] sm:$0xff]
  %v23 = vld [vmem:[%s0 + $0x78] sm:$0xff]
  %v24 = vld [vmem:[%s0 + $0x80] sm:$0xff]
  %v25 = vld [vmem:[%s0 + $0x88] sm:$0xff]
  %v26 = vld [vmem:[%s0 + $0x90] sm:$0xff]
  %v27 = vld [vmem:[%s0 + $0x98] sm:$0xff]
  %v28 = vld [vmem:[%s0 + $0xa0] sm:$0xff]
  %v29 = vld [vmem:[%s0 + $0xa8] sm:$0xff]
  %v30 = vld [vmem:[%s0 + $0xb0] sm:$0xff]
  %v31 = vld [vmem:[%s0 + $0xb8] sm:$0xff]
  %v32 = vld [vmem:[%s0 + $0xc0] sm:$0xff]
  %v33 = vld [vmem:[%s0 + $0xc8] sm:$0xff]
  %v34 = vld [vmem:[%s0 + $0xd0] sm:$0xff]
  %v35 = vld [vmem:[%s0 + $0xd8] sm:$0xff]
  %v36 = vld [vmem:[%s0 + $0xe0] sm:$0xff]
  %v37 = vld [vmem:[%s0 + $0xe8] sm:$0xff]
  %v38 = vld [vmem:[%s0 + $0xf0] sm:$0xff]
  %v39 = vld [vmem:[%s0 + $0xf8] sm:$0xff]
  %v40 = vld [vmem:[%s0 + $0x100] sm:$0xff]
  %v41 = vld [vmem:[%s0 + $0x108] sm:$0xff]
  %v42 = vld [vmem:[%s0 + $0x110] sm:$0xff]
  %v43 = vld [vmem:[%s0 + $0x118] sm:$0xff]
  %v44 = vld [vmem:[%s0 + $0x120] sm:$0xff]
  %v45 = vld [vmem:[%s0 + $0x128] sm:$0xff]
  %v46 = vld [vmem:[%s0 + $0x130] sm:$0xff]
  %v47 = vld [vmem:[%s0 + $0x138] sm:$0xff]
  %v48 = vld [vmem:[%s0 + $0x140] sm:$0xff]
  %v49 = vld [vmem:[%s0 + $0x148] sm:$0xff]
  %v50 = vld [vmem:[%s0 + $0x150] sm:$0xff]
  %v51 = vld [vmem:[%s0 + $0x158] sm:$0xff]
  %v52 = vld [vmem:[%s0 + $0x160] sm:$0xff]
  %v53 = vld [vmem:[%s0 + $0x168] sm:$0xff]
  %v54 = vld [vmem:[%s0 + $0x170] sm:$0xff]
  %v55 = vld [vmem:[%s0 + $0x178] sm:$0xff]
  %v56 = vld [vmem:[%s0 + $0x180] sm:$0xff]
  %v57 = vld [vmem:[%s0 + $0x188] sm:$0xff]
  %v58 = vld [vmem:[%s0 + $0x190] sm:$0xff]
  %v59 = vld [vmem:[%s0 + $0x198] sm:$0xff]
  %v60 = vld [vmem:[%s0 + $0x1a0] sm:$0xff]
  %v61 = vld [vmem:[%s0 + $0x1a8] sm:$0xff]
  %v62 = vld [vmem:[%s0 + $0x1b0] sm:$0xff]
  %v63 = vld [vmem:[%s0 + $0x1b8] sm:$0xff]
  %v64 = vld [vmem:[%s0 + $0x1c0] sm:$0xff]
  %v65 = vld [vmem:[%s0 + $0x1c8] sm:$0xff]
  %v66 = vld [vmem:[%s0 + $0x1d0] sm:$0xff]
  %v67 = vld [vmem:[%s0 + $0x1d8] sm:$0xff]
  %v68 = vld [vmem:[%s0 + $0x1e0] sm:$0xff]
  %v69 = vld [vmem:[%s0 + $0x1e8] sm:$0xff]
  %v70 = vld [vmem:[%s0 + $0x1f0] sm:$0xff]
  %v71 = vld [vmem:[%s0 + $0x1f8] sm:$0xff]
  %vm72 = vcmask 64512
  %v73 = vsel %vm72, %v8, 0.0
  %v74 = vsel %vm72, %v9, 0.0
  %v75 = vadd.f32 %v73, %v74
  %v76 = vsel %vm72, %v10, 0.0
  %v77 = vadd.f32 %v75, %v76
  %v78 = vsel %vm72, %v11, 0.0
  %v79 = vadd.f32 %v77, %v78
  %v80 = vsel %vm72, %v12, 0.0
  %v81 = vadd.f32 %v79, %v80
  %v82 = vsel %vm72, %v13, 0.0
  %v83 = vadd.f32 %v81, %v82
  %v84 = vsel %vm72, %v14, 0.0
  %v85 = vadd.f32 %v83, %v84
  %v86 = vsel %vm72, %v15, 0.0
  %v87 = vadd.f32 %v85, %v86
  %v88 = vsel %vm72, %v16, 0.0
  %v89 = vadd.f32 %v87, %v88
  %v90 = vsel %vm72, %v17, 0.0
  %v91 = vadd.f32 %v89, %v90
  %v92 = vsel %vm72, %v18, 0.0
  %v93 = vadd.f32 %v91, %v92
  %v94 = vsel %vm72, %v19, 0.0
  %v95 = vadd.f32 %v93, %v94
  %v96 = vsel %vm72, %v20, 0.0
  %v97 = vadd.f32 %v95, %v96
  %v98 = vsel %vm72, %v21, 0.0
  %v99 = vadd.f32 %v97, %v98
  %v100 = vsel %vm72, %v22, 0.0
  %v101 = vadd.f32 %v99, %v100
  %v102 = vsel %vm72, %v23, 0.0
  %v103 = vadd.f32 %v101, %v102
  %v104 = vsel %vm72, %v24, 0.0
  %v105 = vadd.f32 %v103, %v104
  %v106 = vsel %vm72, %v25, 0.0
  %v107 = vadd.f32 %v105, %v106
  %v108 = vsel %vm72, %v26, 0.0
  %v109 = vadd.f32 %v107, %v108
  %v110 = vsel %vm72, %v27, 0.0
  %v111 = vadd.f32 %v109, %v110
  %v112 = vsel %vm72, %v28, 0.0
  %v113 = vadd.f32 %v111, %v112
  %v114 = vsel %vm72, %v29, 0.0
  %v115 = vadd.f32 %v113, %v114
  %v116 = vsel %vm72, %v30, 0.0
  %v117 = vadd.f32 %v115, %v116
  %v118 = vsel %vm72, %v31, 0.0
  %v119 = vadd.f32 %v117, %v118
  %v120 = vsel %vm72, %v32, 0.0
  %v121 = vadd.f32 %v119, %v120
  %v122 = vsel %vm72, %v33, 0.0
  %v123 = vadd.f32 %v121, %v122
  %v124 = vsel %vm72, %v34, 0.0
  %v125 = vadd.f32 %v123, %v124
  %v126 = vsel %vm72, %v35, 0.0
  %v127 = vadd.f32 %v125, %v126
  %v128 = vsel %vm72, %v36, 0.0
  %v129 = vadd.f32 %v127, %v128
  %v130 = vsel %vm72, %v37, 0.0
  %v131 = vadd.f32 %v129, %v130
  %v132 = vsel %vm72, %v38, 0.0
  %v133 = vadd.f32 %v131, %v132
  %v134 = vsel %vm72, %v39, 0.0
  %v135 = vadd.f32 %v133, %v134
  %v136 = vsel %vm72, %v40, 0.0
  %v137 = vadd.f32 %v135, %v136
  %v138 = vsel %vm72, %v41, 0.0
  %v139 = vadd.f32 %v137, %v138
  %v140 = vsel %vm72, %v42, 0.0
  %v141 = vadd.f32 %v139, %v140
  %v142 = vsel %vm72, %v43, 0.0
  %v143 = vadd.f32 %v141, %v142
  %v144 = vsel %vm72, %v44, 0.0
  %v145 = vadd.f32 %v143, %v144
  %v146 = vsel %vm72, %v45, 0.0
  %v147 = vadd.f32 %v145, %v146
  %v148 = vsel %vm72, %v46, 0.0
  %v149 = vadd.f32 %v147, %v148
  %v150 = vsel %vm72, %v47, 0.0
  %v151 = vadd.f32 %v149, %v150
  %v152 = vsel %vm72, %v48, 0.0
  %v153 = vadd.f32 %v151, %v152
  %v154 = vsel %vm72, %v49, 0.0
  %v155 = vadd.f32 %v153, %v154
  %v156 = vsel %vm72, %v50, 0.0
  %v157 = vadd.f32 %v155, %v156
  %v158 = vsel %vm72, %v51, 0.0
  %v159 = vadd.f32 %v157, %v158
  %v160 = vsel %vm72, %v52, 0.0
  %v161 = vadd.f32 %v159, %v160
  %v162 = vsel %vm72, %v53, 0.0
  %v163 = vadd.f32 %v161, %v162
  %v164 = vsel %vm72, %v54, 0.0
  %v165 = vadd.f32 %v163, %v164
  %v166 = vsel %vm72, %v55, 0.0
  %v167 = vadd.f32 %v165, %v166
  %v168 = vsel %vm72, %v56, 0.0
  %v169 = vadd.f32 %v167, %v168
  %v170 = vsel %vm72, %v57, 0.0
  %v171 = vadd.f32 %v169, %v170
  %v172 = vsel %vm72, %v58, 0.0
  %v173 = vadd.f32 %v171, %v172
  %v174 = vsel %vm72, %v59, 0.0
  %v175 = vadd.f32 %v173, %v174
  %v176 = vsel %vm72, %v60, 0.0
  %v177 = vadd.f32 %v175, %v176
  %v178 = vsel %vm72, %v61, 0.0
  %v179 = vadd.f32 %v177, %v178
  %v180 = vsel %vm72, %v62, 0.0
  %v181 = vadd.f32 %v179, %v180
  %v182 = vsel %vm72, %v63, 0.0
  %v183 = vadd.f32 %v181, %v182
  %v184 = vsel %vm72, %v64, 0.0
  %v185 = vadd.f32 %v183, %v184
  %v186 = vsel %vm72, %v65, 0.0
  %v187 = vadd.f32 %v185, %v186
  %v188 = vsel %vm72, %v66, 0.0
  %v189 = vadd.f32 %v187, %v188
  %v190 = vsel %vm72, %v67, 0.0
  %v191 = vadd.f32 %v189, %v190
  %v192 = vsel %vm72, %v68, 0.0
  %v193 = vadd.f32 %v191, %v192
  %v194 = vsel %vm72, %v69, 0.0
  %v195 = vadd.f32 %v193, %v194
  %v196 = vsel %vm72, %v70, 0.0
  %v197 = vadd.f32 %v195, %v196
  %v198 = vsel %vm72, %v71, 0.0
  %v199 = vadd.f32 %v197, %v198
  %v200 = vrot.slane %v199, 4
  %v201 = vadd.f32 %v199, %v200
  %v202 = vrot.slane %v201, 2
  %v203 = vadd.f32 %v201, %v202
  %v204 = vrot.slane %v203, 1
  %v205 = vadd.f32 %v203, %v204
  %v206 = vmul.f32 %v8, %v8
  %v207 = vmul.f32 %v9, %v9
  %v208 = vmul.f32 %v10, %v10
  %v209 = vmul.f32 %v11, %v11
  %v210 = vmul.f32 %v12, %v12
  %v211 = vmul.f32 %v13, %v13
  %v212 = vmul.f32 %v14, %v14
  %v213 = vmul.f32 %v15, %v15
  %v214 = vmul.f32 %v16, %v16
  %v215 = vmul.f32 %v17, %v17
  %v216 = vmul.f32 %v18, %v18
  %v217 = vmul.f32 %v19, %v19
  %v218 = vmul.f32 %v20, %v20
  %v219 = vmul.f32 %v21, %v21
  %v220 = vmul.f32 %v22, %v22
  %v221 = vmul.f32 %v23, %v23
  %v222 = vmul.f32 %v24, %v24
  %v223 = vmul.f32 %v25, %v25
  %v224 = vmul.f32 %v26, %v26
  %v225 = vmul.f32 %v27, %v27
  %v226 = vmul.f32 %v28, %v28
  %v227 = vmul.f32 %v29, %v29
  %v228 = vmul.f32 %v30, %v30
  %v229 = vmul.f32 %v31, %v31
  %v230 = vmul.f32 %v32, %v32
  %v231 = vmul.f32 %v33, %v33
  %v232 = vmul.f32 %v34, %v34
  %v233 = vmul.f32 %v35, %v35
  %v234 = vmul.f32 %v36, %v36
  %v235 = vmul.f32 %v37, %v37
  %v236 = vmul.f32 %v38, %v38
  %v237 = vmul.f32 %v39, %v39
  %v238 = vmul.f32 %v40, %v40
  %v239 = vmul.f32 %v41, %v41
  %v240 = vmul.f32 %v42, %v42
  %v241 = vmul.f32 %v43, %v43
  %v242 = vmul.f32 %v44, %v44
  %v243 = vmul.f32 %v45, %v45
  %v244 = vmul.f32 %v46, %v46
  %v245 = vmul.f32 %v47, %v47
  %v246 = vmul.f32 %v48, %v48
  %v247 = vmul.f32 %v49, %v49
  %v248 = vmul.f32 %v50, %v50
  %v249 = vmul.f32 %v51, %v51
  %v250 = vmul.f32 %v52, %v52
  %v251 = vmul.f32 %v53, %v53
  %v252 = vmul.f32 %v54, %v54
  %v253 = vmul.f32 %v55, %v55
  %v254 = vmul.f32 %v56, %v56
  %v255 = vmul.f32 %v57, %v57
  %v256 = vmul.f32 %v58, %v58
  %v257 = vmul.f32 %v59, %v59
  %v258 = vmul.f32 %v60, %v60
  %v259 = vmul.f32 %v61, %v61
  %v260 = vmul.f32 %v62, %v62
  %v261 = vmul.f32 %v63, %v63
  %v262 = vmul.f32 %v64, %v64
  %v263 = vmul.f32 %v65, %v65
  %v264 = vmul.f32 %v66, %v66
  %v265 = vmul.f32 %v67, %v67
  %v266 = vmul.f32 %v68, %v68
  %v267 = vmul.f32 %v69, %v69
  %v268 = vmul.f32 %v70, %v70
  %v269 = vmul.f32 %v71, %v71
  %v270 = vsel %vm72, %v206, 0.0
  %v271 = vsel %vm72, %v207, 0.0
  %v272 = vadd.f32 %v270, %v271
  %v273 = vsel %vm72, %v208, 0.0
  %v274 = vadd.f32 %v272, %v273
  %v275 = vsel %vm72, %v209, 0.0
  %v276 = vadd.f32 %v274, %v275
  %v277 = vsel %vm72, %v210, 0.0
  %v278 = vadd.f32 %v276, %v277
  %v279 = vsel %vm72, %v211, 0.0
  %v280 = vadd.f32 %v278, %v279
  %v281 = vsel %vm72, %v212, 0.0
  %v282 = vadd.f32 %v280, %v281
  %v283 = vsel %vm72, %v213, 0.0
  %v284 = vadd.f32 %v282, %v283
  %v285 = vsel %vm72, %v214, 0.0
  %v286 = vadd.f32 %v284, %v285
  %v287 = vsel %vm72, %v215, 0.0
  %v288 = vadd.f32 %v286, %v287
  %v289 = vsel %vm72, %v216, 0.0
  %v290 = vadd.f32 %v288, %v289
  %v291 = vsel %vm72, %v217, 0.0
  %v292 = vadd.f32 %v290, %v291
  %v293 = vsel %vm72, %v218, 0.0
  %v294 = vadd.f32 %v292, %v293
  %v295 = vsel %vm72, %v219, 0.0
  %v296 = vadd.f32 %v294, %v295
  %v297 = vsel %vm72, %v220, 0.0
  %v298 = vadd.f32 %v296, %v297
  %v299 = vsel %vm72, %v221, 0.0
  %v300 = vadd.f32 %v298, %v299
  %v301 = vsel %vm72, %v222, 0.0
  %v302 = vadd.f32 %v300, %v301
  %v303 = vsel %vm72, %v223, 0.0
  %v304 = vadd.f32 %v302, %v303
  %v305 = vsel %vm72, %v224, 0.0
  %v306 = vadd.f32 %v304, %v305
  %v307 = vsel %vm72, %v225, 0.0
  %v308 = vadd.f32 %v306, %v307
  %v309 = vsel %vm72, %v226, 0.0
  %v310 = vadd.f32 %v308, %v309
  %v311 = vsel %vm72, %v227, 0.0
  %v312 = vadd.f32 %v310, %v311
  %v313 = vsel %vm72, %v228, 0.0
  %v314 = vadd.f32 %v312, %v313
  %v315 = vsel %vm72, %v229, 0.0
  %v316 = vadd.f32 %v314, %v315
  %v317 = vsel %vm72, %v230, 0.0
  %v318 = vadd.f32 %v316, %v317
  %v319 = vsel %vm72, %v231, 0.0
  %v320 = vadd.f32 %v318, %v319
  %v321 = vsel %vm72, %v232, 0.0
  %v322 = vadd.f32 %v320, %v321
  %v323 = vsel %vm72, %v233, 0.0
  %v324 = vadd.f32 %v322, %v323
  %v325 = vsel %vm72, %v234, 0.0
  %v326 = vadd.f32 %v324, %v325
  %v327 = vsel %vm72, %v235, 0.0
  %v328 = vadd.f32 %v326, %v327
  %v329 = vsel %vm72, %v236, 0.0
  %v330 = vadd.f32 %v328, %v329
  %v331 = vsel %vm72, %v237, 0.0
  %v332 = vadd.f32 %v330, %v331
  %v333 = vsel %vm72, %v238, 0.0
  %v334 = vadd.f32 %v332, %v333
  %v335 = vsel %vm72, %v239, 0.0
  %v336 = vadd.f32 %v334, %v335
  %v337 = vsel %vm72, %v240, 0.0
  %v338 = vadd.f32 %v336, %v337
  %v339 = vsel %vm72, %v241, 0.0
  %v340 = vadd.f32 %v338, %v339
  %v341 = vsel %vm72, %v242, 0.0
  %v342 = vadd.f32 %v340, %v341
  %v343 = vsel %vm72, %v243, 0.0
  %v344 = vadd.f32 %v342, %v343
  %v345 = vsel %vm72, %v244, 0.0
  %v346 = vadd.f32 %v344, %v345
  %v347 = vsel %vm72, %v245, 0.0
  %v348 = vadd.f32 %v346, %v347
  %v349 = vsel %vm72, %v246, 0.0
  %v350 = vadd.f32 %v348, %v349
  %v351 = vsel %vm72, %v247, 0.0
  %v352 = vadd.f32 %v350, %v351
  %v353 = vsel %vm72, %v248, 0.0
  %v354 = vadd.f32 %v352, %v353
  %v355 = vsel %vm72, %v249, 0.0
  %v356 = vadd.f32 %v354, %v355
  %v357 = vsel %vm72, %v250, 0.0
  %v358 = vadd.f32 %v356, %v357
  %v359 = vsel %vm72, %v251, 0.0
  %v360 = vadd.f32 %v358, %v359
  %v361 = vsel %vm72, %v252, 0.0
  %v362 = vadd.f32 %v360, %v361
  %v363 = vsel %vm72, %v253, 0.0
  %v364 = vadd.f32 %v362, %v363
  %v365 = vsel %vm72, %v254, 0.0
  %v366 = vadd.f32 %v364, %v365
  %v367 = vsel %vm72, %v255, 0.0
  %v368 = vadd.f32 %v366, %v367
  %v369 = vsel %vm72, %v256, 0.0
  %v370 = vadd.f32 %v368, %v369
  %v371 = vsel %vm72, %v257, 0.0
  %v372 = vadd.f32 %v370, %v371
  %v373 = vsel %vm72, %v258, 0.0
  %v374 = vadd.f32 %v372, %v373
  %v375 = vsel %vm72, %v259, 0.0
  %v376 = vadd.f32 %v374, %v375
  %v377 = vsel %vm72, %v260, 0.0
  %v378 = vadd.f32 %v376, %v377
  %v379 = vsel %vm72, %v261, 0.0
  %v380 = vadd.f32 %v378, %v379
  %v381 = vsel %vm72, %v262, 0.0
  %v382 = vadd.f32 %v380, %v381
  %v383 = vsel %vm72, %v263, 0.0
  %v384 = vadd.f32 %v382, %v383
  %v385 = vsel %vm72, %v264, 0.0
  %v386 = vadd.f32 %v384, %v385
  %v387 = vsel %vm72, %v265, 0.0
  %v388 = vadd.f32 %v386, %v387
  %v389 = vsel %vm72, %v266, 0.0
  %v390 = vadd.f32 %v388, %v389
  %v391 = vsel %vm72, %v267, 0.0
  %v392 = vadd.f32 %v390, %v391
  %v393 = vsel %vm72, %v268, 0.0
  %v394 = vadd.f32 %v392, %v393
  %v395 = vsel %vm72, %v269, 0.0
  %v396 = vadd.f32 %v394, %v395
  %v397 = vrot.slane %v396, 4
  %v398 = vadd.f32 %v396, %v397
  %v399 = vrot.slane %v398, 2
  %v400 = vadd.f32 %v398, %v399
  %v401 = vrot.slane %v400, 1
  %v402 = vadd.f32 %v400, %v401
  %vm403 = vcmask 1040384
  %v404 = vsel %vm403, %v205, %v402
  %vm405 = vcmask 58368
  %406 = vst.msk [vmem:[%s1] sm:$0x3] %vm405, %v404
  // Predicated region
  $region6: #{spp_se_preact_bottleneck.6} parent=0 // pred_check
    _
  $region7: #{spp_se_preact_bottleneck.6} parent=0 // pred_check_branch
    %408 = sbr.rel (0) target = $region9
  $region8: #{spp_se_preact_bottleneck.6} parent=0 // pred_region
    _
  $region9: #{spp_se_preact_bottleneck.6} parent=0 // pred_fallthru
    _
  // Predicated region
  $region10: #{spp_se_preact_bottleneck.6} parent=0 // pred_check
    _
  $region11: #{spp_se_preact_bottleneck.6} parent=0 // pred_check_branch
    %410 = sbr.rel (0) target = $region13
  $region12: #{spp_se_preact_bottleneck.6} parent=0 // pred_region
    _
  $region13: #{spp_se_preact_bottleneck.6} parent=0 // pred_fallthru
    _

// kernel: spp_se_preact_bottleneck.7
$region0: #{spp_se_preact_bottleneck.7}
  #allocation0 [shape = 'u32[]', space=smem, size = 0x4, offset = 0x4, fixed_abs, tag = 'smem constant byte address 0x4 - core index']
  #allocation1 [shape = 'u32[72,128]{1,0:T(1,128)}', space=vmem, size = 0x9000, scoped, tag = 'internal scratch']
  %s0 = inlined_call_operand.vmem [shape: f32[512,8], index: 0, kind: input, shape index: {}]
  %s1 = inlined_call_operand.vmem [shape: f32[1,8], index: 1, kind: input, shape index: {}]
  %s2 = inlined_call_operand.vmem [shape: f32[1,8], index: 2, kind: input, shape index: {}]
  %s3 = inlined_call_operand.vmem [shape: bf16[8,256], index: 3, kind: input, shape index: {}]
  %s4 = inlined_call_operand.vmem [shape: bf16[512,128], index: 4, kind: output, shape index: {0}]
  %s5 = inlined_call_operand.vmem [shape: bf16[512,128], index: 5, kind: output, shape index: {1}]
  %s6 = inlined_call_operand.vmem [shape: f32[1,2,128], index: 6, kind: output, shape index: {2}]
  %7 = xla_tuple %s4, %s5, %s6
  %s8 = sld [smem:[#allocation0]]
  $region42: #{spp_se_preact_bottleneck.7} parent=0
    _
  %s10 = ssub.s32 1, %s8
  %s11 = scalar_select 0, %s10, %s8
  // Predicated region
  $region2: #{spp_se_preact_bottleneck.7} parent=0 // pred_check
    _
  $region3: #{spp_se_preact_bottleneck.7} parent=0 // pred_check_branch
    %13 = sbr.rel (0) target = $region5
  $region4: #{spp_se_preact_bottleneck.7} parent=0 // pred_region
    _
  $region5: #{spp_se_preact_bottleneck.7} parent=0 // pred_fallthru
    _
  // Predicated region
  $region6: #{spp_se_preact_bottleneck.7} parent=0 // pred_check
    _
  $region7: #{spp_se_preact_bottleneck.7} parent=0 // pred_check_branch
    %15 = sbr.rel (0) target = $region9
  $region8: #{spp_se_preact_bottleneck.7} parent=0 // pred_region
    _
  $region9: #{spp_se_preact_bottleneck.7} parent=0 // pred_fallthru
    _
  // Predicated region
  $region10: #{spp_se_preact_bottleneck.7} parent=0 // pred_check
    _
  $region11: #{spp_se_preact_bottleneck.7} parent=0 // pred_check_branch
    %17 = sbr.rel (0) target = $region13
  $region12: #{spp_se_preact_bottleneck.7} parent=0 // pred_region
    _
  $region13: #{spp_se_preact_bottleneck.7} parent=0 // pred_fallthru
    _
  // Predicated region
  $region14: #{spp_se_preact_bottleneck.7} parent=0 // pred_check
    _
  $region15: #{spp_se_preact_bottleneck.7} parent=0 // pred_check_branch
    %19 = sbr.rel (0) target = $region17
  $region16: #{spp_se_preact_bottleneck.7} parent=0 // pred_region
    _
  $region17: #{spp_se_preact_bottleneck.7} parent=0 // pred_fallthru
    _
  %v21 = vld [vmem:[%s0] sm:$0xff]
  %v22 = vld [vmem:[%s0 + $0x8] sm:$0xff]
  %v23 = vld [vmem:[%s0 + $0x10] sm:$0xff]
  %v24 = vld [vmem:[%s0 + $0x18] sm:$0xff]
  %v25 = vld [vmem:[%s0 + $0x20] sm:$0xff]
  %v26 = vld [vmem:[%s0 + $0x28] sm:$0xff]
  %v27 = vld [vmem:[%s0 + $0x30] sm:$0xff]
  %v28 = vld [vmem:[%s0 + $0x38] sm:$0xff]
  %v29 = vld [vmem:[%s0 + $0x40] sm:$0xff]
  %v30 = vld [vmem:[%s0 + $0x48] sm:$0xff]
  %v31 = vld [vmem:[%s0 + $0x50] sm:$0xff]
  %v32 = vld [vmem:[%s0 + $0x58] sm:$0xff]
  %v33 = vld [vmem:[%s0 + $0x60] sm:$0xff]
  %v34 = vld [vmem:[%s0 + $0x68] sm:$0xff]
  %v35 = vld [vmem:[%s0 + $0x70] sm:$0xff]
  %v36 = vld [vmem:[%s0 + $0x78] sm:$0xff]
  %v37 = vld [vmem:[%s0 + $0x80] sm:$0xff]
  %v38 = vld [vmem:[%s0 + $0x88] sm:$0xff]
  %v39 = vld [vmem:[%s0 + $0x90] sm:$0xff]
  %v40 = vld [vmem:[%s0 + $0x98] sm:$0xff]
  %v41 = vld [vmem:[%s0 + $0xa0] sm:$0xff]
  %v42 = vld [vmem:[%s0 + $0xa8] sm:$0xff]
  %v43 = vld [vmem:[%s0 + $0xb0] sm:$0xff]
  %v44 = vld [vmem:[%s0 + $0xb8] sm:$0xff]
  %v45 = vld [vmem:[%s0 + $0xc0] sm:$0xff]
  %v46 = vld [vmem:[%s0 + $0xc8] sm:$0xff]
  %v47 = vld [vmem:[%s0 + $0xd0] sm:$0xff]
  %v48 = vld [vmem:[%s0 + $0xd8] sm:$0xff]
  %v49 = vld [vmem:[%s0 + $0xe0] sm:$0xff]
  %v50 = vld [vmem:[%s0 + $0xe8] sm:$0xff]
  %v51 = vld [vmem:[%s0 + $0xf0] sm:$0xff]
  %v52 = vld [vmem:[%s0 + $0xf8] sm:$0xff]
  %v53 = vld [vmem:[%s0 + $0x100] sm:$0xff]
  %v54 = vld [vmem:[%s0 + $0x108] sm:$0xff]
  %v55 = vld [vmem:[%s0 + $0x110] sm:$0xff]
  %v56 = vld [vmem:[%s0 + $0x118] sm:$0xff]
  %v57 = vld [vmem:[%s0 + $0x120] sm:$0xff]
  %v58 = vld [vmem:[%s0 + $0x128] sm:$0xff]
  %v59 = vld [vmem:[%s0 + $0x130] sm:$0xff]
  %v60 = vld [vmem:[%s0 + $0x138] sm:$0xff]
  %v61 = vld [vmem:[%s0 + $0x140] sm:$0xff]
  %v62 = vld [vmem:[%s0 + $0x148] sm:$0xff]
  %v63 = vld [vmem:[%s0 + $0x150] sm:$0xff]
  %v64 = vld [vmem:[%s0 + $0x158] sm:$0xff]
  %v65 = vld [vmem:[%s0 + $0x160] sm:$0xff]
  %v66 = vld [vmem:[%s0 + $0x168] sm:$0xff]
  %v67 = vld [vmem:[%s0 + $0x170] sm:$0xff]
  %v68 = vld [vmem:[%s0 + $0x178] sm:$0xff]
  %v69 = vld [vmem:[%s0 + $0x180] sm:$0xff]
  %v70 = vld [vmem:[%s0 + $0x188] sm:$0xff]
  %v71 = vld [vmem:[%s0 + $0x190] sm:$0xff]
  %v72 = vld [vmem:[%s0 + $0x198] sm:$0xff]
  %v73 = vld [vmem:[%s0 + $0x1a0] sm:$0xff]
  %v74 = vld [vmem:[%s0 + $0x1a8] sm:$0xff]
  %v75 = vld [vmem:[%s0 + $0x1b0] sm:$0xff]
  %v76 = vld [vmem:[%s0 + $0x1b8] sm:$0xff]
  %v77 = vld [vmem:[%s0 + $0x1c0] sm:$0xff]
  %v78 = vld [vmem:[%s0 + $0x1c8] sm:$0xff]
  %v79 = vld [vmem:[%s0 + $0x1d0] sm:$0xff]
  %v80 = vld [vmem:[%s0 + $0x1d8] sm:$0xff]
  %v81 = vld [vmem:[%s0 + $0x1e0] sm:$0xff]
  %v82 = vld [vmem:[%s0 + $0x1e8] sm:$0xff]
  %v83 = vld [vmem:[%s0 + $0x1f0] sm:$0xff]
  %v84 = vld [vmem:[%s0 + $0x1f8] sm:$0xff]
  %v85 = vld [vmem:[%s1] sm:$0x1]
  %v87 = vperm.slane %v85, 0
  %v89 = vmul.f32 %v21, %v87
  %v90 = vmul.f32 %v22, %v87
  %v91 = vmul.f32 %v23, %v87
  %v92 = vmul.f32 %v24, %v87
  %v93 = vmul.f32 %v25, %v87
  %v94 = vmul.f32 %v26, %v87
  %v95 = vmul.f32 %v27, %v87
  %v96 = vmul.f32 %v28, %v87
  %v97 = vmul.f32 %v29, %v87
  %v98 = vmul.f32 %v30, %v87
  %v99 = vmul.f32 %v31, %v87
  %v100 = vmul.f32 %v32, %v87
  %v101 = vmul.f32 %v33, %v87
  %v102 = vmul.f32 %v34, %v87
  %v103 = vmul.f32 %v35, %v87
  %v104 = vmul.f32 %v36, %v87
  %v105 = vmul.f32 %v37, %v87
  %v106 = vmul.f32 %v38, %v87
  %v107 = vmul.f32 %v39, %v87
  %v108 = vmul.f32 %v40, %v87
  %v109 = vmul.f32 %v41, %v87
  %v110 = vmul.f32 %v42, %v87
  %v111 = vmul.f32 %v43, %v87
  %v112 = vmul.f32 %v44, %v87
  %v113 = vmul.f32 %v45, %v87
  %v114 = vmul.f32 %v46, %v87
  %v115 = vmul.f32 %v47, %v87
  %v116 = vmul.f32 %v48, %v87
  %v117 = vmul.f32 %v49, %v87
  %v118 = vmul.f32 %v50, %v87
  %v119 = vmul.f32 %v51, %v87
  %v120 = vmul.f32 %v52, %v87
  %v121 = vmul.f32 %v53, %v87
  %v122 = vmul.f32 %v54, %v87
  %v123 = vmul.f32 %v55, %v87
  %v124 = vmul.f32 %v56, %v87
  %v125 = vmul.f32 %v57, %v87
  %v126 = vmul.f32 %v58, %v87
  %v127 = vmul.f32 %v59, %v87
  %v128 = vmul.f32 %v60, %v87
  %v129 = vmul.f32 %v61, %v87
  %v130 = vmul.f32 %v62, %v87
  %v131 = vmul.f32 %v63, %v87
  %v132 = vmul.f32 %v64, %v87
  %v133 = vmul.f32 %v65, %v87
  %v134 = vmul.f32 %v66, %v87
  %v135 = vmul.f32 %v67, %v87
  %v136 = vmul.f32 %v68, %v87
  %v137 = vmul.f32 %v69, %v87
  %v138 = vmul.f32 %v70, %v87
  %v139 = vmul.f32 %v71, %v87
  %v140 = vmul.f32 %v72, %v87
  %v141 = vmul.f32 %v73, %v87
  %v142 = vmul.f32 %v74, %v87
  %v143 = vmul.f32 %v75, %v87
  %v144 = vmul.f32 %v76, %v87
  %v145 = vmul.f32 %v77, %v87
  %v146 = vmul.f32 %v78, %v87
  %v147 = vmul.f32 %v79, %v87
  %v148 = vmul.f32 %v80, %v87
  %v149 = vmul.f32 %v81, %v87
  %v150 = vmul.f32 %v82, %v87
  %v151 = vmul.f32 %v83, %v87
  %v152 = vmul.f32 %v84, %v87
  %v153 = vld [vmem:[%s2] sm:$0x1]
  %v155 = vperm.slane %v153, 0
  %v157 = vadd.f32 %v89, %v155
  %v158 = vadd.f32 %v90, %v155
  %v159 = vadd.f32 %v91, %v155
  %v160 = vadd.f32 %v92, %v155
  %v161 = vadd.f32 %v93, %v155
  %v162 = vadd.f32 %v94, %v155
  %v163 = vadd.f32 %v95, %v155
  %v164 = vadd.f32 %v96, %v155
  %v165 = vadd.f32 %v97, %v155
  %v166 = vadd.f32 %v98, %v155
  %v167 = vadd.f32 %v99, %v155
  %v168 = vadd.f32 %v100, %v155
  %v169 = vadd.f32 %v101, %v155
  %v170 = vadd.f32 %v102, %v155
  %v171 = vadd.f32 %v103, %v155
  %v172 = vadd.f32 %v104, %v155
  %v173 = vadd.f32 %v105, %v155
  %v174 = vadd.f32 %v106, %v155
  %v175 = vadd.f32 %v107, %v155
  %v176 = vadd.f32 %v108, %v155
  %v177 = vadd.f32 %v109, %v155
  %v178 = vadd.f32 %v110, %v155
  %v179 = vadd.f32 %v111, %v155
  %v180 = vadd.f32 %v112, %v155
  %v181 = vadd.f32 %v113, %v155
  %v182 = vadd.f32 %v114, %v155
  %v183 = vadd.f32 %v115, %v155
  %v184 = vadd.f32 %v116, %v155
  %v185 = vadd.f32 %v117, %v155
  %v186 = vadd.f32 %v118, %v155
  %v187 = vadd.f32 %v119, %v155
  %v188 = vadd.f32 %v120, %v155
  %v189 = vadd.f32 %v121, %v155
  %v190 = vadd.f32 %v122, %v155
  %v191 = vadd.f32 %v123, %v155
  %v192 = vadd.f32 %v124, %v155
  %v193 = vadd.f32 %v125, %v155
  %v194 = vadd.f32 %v126, %v155
  %v195 = vadd.f32 %v127, %v155
  %v196 = vadd.f32 %v128, %v155
  %v197 = vadd.f32 %v129, %v155
  %v198 = vadd.f32 %v130, %v155
  %v199 = vadd.f32 %v131, %v155
  %v200 = vadd.f32 %v132, %v155
  %v201 = vadd.f32 %v133, %v155
  %v202 = vadd.f32 %v134, %v155
  %v203 = vadd.f32 %v135, %v155
  %v204 = vadd.f32 %v136, %v155
  %v205 = vadd.f32 %v137, %v155
  %v206 = vadd.f32 %v138, %v155
  %v207 = vadd.f32 %v139, %v155
  %v208 = vadd.f32 %v140, %v155
  %v209 = vadd.f32 %v141, %v155
  %v210 = vadd.f32 %v142, %v155
  %v211 = vadd.f32 %v143, %v155
  %v212 = vadd.f32 %v144, %v155
  %v213 = vadd.f32 %v145, %v155
  %v214 = vadd.f32 %v146, %v155
  %v215 = vadd.f32 %v147, %v155
  %v216 = vadd.f32 %v148, %v155
  %v217 = vadd.f32 %v149, %v155
  %v218 = vadd.f32 %v150, %v155
  %v219 = vadd.f32 %v151, %v155
  %v220 = vadd.f32 %v152, %v155
  %v221 = vmax.f32 %v157, 0.0
  %v222 = vmax.f32 %v158, 0.0
  %v223 = vmax.f32 %v159, 0.0
  %v224 = vmax.f32 %v160, 0.0
  %v225 = vmax.f32 %v161, 0.0
  %v226 = vmax.f32 %v162, 0.0
  %v227 = vmax.f32 %v163, 0.0
  %v228 = vmax.f32 %v164, 0.0
  %v229 = vmax.f32 %v165, 0.0
  %v230 = vmax.f32 %v166, 0.0
  %v231 = vmax.f32 %v167, 0.0
  %v232 = vmax.f32 %v168, 0.0
  %v233 = vmax.f32 %v169, 0.0
  %v234 = vmax.f32 %v170, 0.0
  %v235 = vmax.f32 %v171, 0.0
  %v236 = vmax.f32 %v172, 0.0
  %v237 = vmax.f32 %v173, 0.0
  %v238 = vmax.f32 %v174, 0.0
  %v239 = vmax.f32 %v175, 0.0
  %v240 = vmax.f32 %v176, 0.0
  %v241 = vmax.f32 %v177, 0.0
  %v242 = vmax.f32 %v178, 0.0
  %v243 = vmax.f32 %v179, 0.0
  %v244 = vmax.f32 %v180, 0.0
  %v245 = vmax.f32 %v181, 0.0
  %v246 = vmax.f32 %v182, 0.0
  %v247 = vmax.f32 %v183, 0.0
  %v248 = vmax.f32 %v184, 0.0
  %v249 = vmax.f32 %v185, 0.0
  %v250 = vmax.f32 %v186, 0.0
  %v251 = vmax.f32 %v187, 0.0
  %v252 = vmax.f32 %v188, 0.0
  %v253 = vmax.f32 %v189, 0.0
  %v254 = vmax.f32 %v190, 0.0
  %v255 = vmax.f32 %v191, 0.0
  %v256 = vmax.f32 %v192, 0.0
  %v257 = vmax.f32 %v193, 0.0
  %v258 = vmax.f32 %v194, 0.0
  %v259 = vmax.f32 %v195, 0.0
  %v260 = vmax.f32 %v196, 0.0
  %v261 = vmax.f32 %v197, 0.0
  %v262 = vmax.f32 %v198, 0.0
  %v263 = vmax.f32 %v199, 0.0
  %v264 = vmax.f32 %v200, 0.0
  %v265 = vmax.f32 %v201, 0.0
  %v266 = vmax.f32 %v202, 0.0
  %v267 = vmax.f32 %v203, 0.0
  %v268 = vmax.f32 %v204, 0.0
  %v269 = vmax.f32 %v205, 0.0
  %v270 = vmax.f32 %v206, 0.0
  %v271 = vmax.f32 %v207, 0.0
  %v272 = vmax.f32 %v208, 0.0
  %v273 = vmax.f32 %v209, 0.0
  %v274 = vmax.f32 %v210, 0.0
  %v275 = vmax.f32 %v211, 0.0
  %v276 = vmax.f32 %v212, 0.0
  %v277 = vmax.f32 %v213, 0.0
  %v278 = vmax.f32 %v214, 0.0
  %v279 = vmax.f32 %v215, 0.0
  %v280 = vmax.f32 %v216, 0.0
  %v281 = vmax.f32 %v217, 0.0
  %v282 = vmax.f32 %v218, 0.0
  %v283 = vmax.f32 %v219, 0.0
  %v284 = vmax.f32 %v220, 0.0
  %v285 = vpack.c.bf16 %v222, %v221
  %v286 = vpack.c.bf16 %v224, %v223
  %v287 = vpack.c.bf16 %v226, %v225
  %v288 = vpack.c.bf16 %v228, %v227
  %v289 = vpack.c.bf16 %v230, %v229
  %v290 = vpack.c.bf16 %v232, %v231
  %v291 = vpack.c.bf16 %v234, %v233
  %v292 = vpack.c.bf16 %v236, %v235
  %v293 = vpack.c.bf16 %v238, %v237
  %v294 = vpack.c.bf16 %v240, %v239
  %v295 = vpack.c.bf16 %v242, %v241
  %v296 = vpack.c.bf16 %v244, %v243
  %v297 = vpack.c.bf16 %v246, %v245
  %v298 = vpack.c.bf16 %v248, %v247
  %v299 = vpack.c.bf16 %v250, %v249
  %v300 = vpack.c.bf16 %v252, %v251
  %v301 = vpack.c.bf16 %v254, %v253
  %v302 = vpack.c.bf16 %v256, %v255
  %v303 = vpack.c.bf16 %v258, %v257
  %v304 = vpack.c.bf16 %v260, %v259
  %v305 = vpack.c.bf16 %v262, %v261
  %v306 = vpack.c.bf16 %v264, %v263
  %v307 = vpack.c.bf16 %v266, %v265
  %v308 = vpack.c.bf16 %v268, %v267
  %v309 = vpack.c.bf16 %v270, %v269
  %v310 = vpack.c.bf16 %v272, %v271
  %v311 = vpack.c.bf16 %v274, %v273
  %v312 = vpack.c.bf16 %v276, %v275
  %v313 = vpack.c.bf16 %v278, %v277
  %v314 = vpack.c.bf16 %v280, %v279
  %v315 = vpack.c.bf16 %v282, %v281
  %v316 = vpack.c.bf16 %v284, %v283
  %v317 = vld [vmem:[%s3] sm:$0xff]
  %v319 = vunpack.c.l.b16 %v317
  %v320 = vunpack.c.h.b16 %v317
  %v321 = vpack.c.b16 %v319, %v319
  %v322 = vpack.c.b16 %v320, %v320
  %vm323 = vcmask 64512
  %v325 = vsel %vm323, %v285, 0
  %v328 = vsel %vm323, %v286, 0
  %v331 = vsel %vm323, %v287, 0
  %v334 = vsel %vm323, %v288, 0
  %v337 = vsel %vm323, %v289, 0
  %v340 = vsel %vm323, %v290, 0
  %v343 = vsel %vm323, %v291, 0
  %v346 = vsel %vm323, %v292, 0
  %v349 = vsel %vm323, %v293, 0
  %v352 = vsel %vm323, %v294, 0
  %v355 = vsel %vm323, %v295, 0
  %v358 = vsel %vm323, %v296, 0
  %v361 = vsel %vm323, %v297, 0
  %v364 = vsel %vm323, %v298, 0
  %v367 = vsel %vm323, %v299, 0
  %v370 = vsel %vm323, %v300, 0
  %v373 = vsel %vm323, %v301, 0
  %v376 = vsel %vm323, %v302, 0
  %v379 = vsel %vm323, %v303, 0
  %v382 = vsel %vm323, %v304, 0
  %v385 = vsel %vm323, %v305, 0
  %v388 = vsel %vm323, %v306, 0
  %v391 = vsel %vm323, %v307, 0
  %v394 = vsel %vm323, %v308, 0
  %v397 = vsel %vm323, %v309, 0
  %v400 = vsel %vm323, %v310, 0
  %v403 = vsel %vm323, %v311, 0
  %v406 = vsel %vm323, %v312, 0
  %v409 = vsel %vm323, %v313, 0
  %v412 = vsel %vm323, %v314, 0
  %v415 = vsel %vm323, %v315, 0
  %v418 = vsel %vm323, %v316, 0
  %vm420 = vcmask 1043456
  %v422 = vsel %vm420, %v321, 0
  %v425 = vsel %vm420, %v322, 0
  %427 = vmatpush.bf16.msra.mxu0 0
  %428 = vmatpush.bf16.msra.mxu0 0
  %429 = vmatpush.bf16.msra.mxu0 0
  %430 = vmatpush.bf16.msra.mxu0 0
  %431 = vmatpush.bf16.msra.mxu0 0
  %432 = vmatpush.bf16.msra.mxu0 0
  %433 = vmatpush.bf16.msra.mxu0 0
  %434 = vmatpush.bf16.msra.mxu0 %v422
  %435 = vmatmul.bf16.gmra.mxu0 %v325
  %v436 = vpop.f32.mrf.mxu0
  %v437 = vadd.f32 0.0, %v436
  %v438 = vpop.f32.mrf.mxu0
  %v439 = vadd.f32 0.0, %v438
  %440 = vmatmul.bf16.gmra.mxu0 %v328
  %v441 = vpop.f32.mrf.mxu0
  %v442 = vadd.f32 0.0, %v441
  %v443 = vpop.f32.mrf.mxu0
  %v444 = vadd.f32 0.0, %v443
  %445 = vmatmul.bf16.gmra.mxu0 %v331
  %v446 = vpop.f32.mrf.mxu0
  %v447 = vadd.f32 0.0, %v446
  %v448 = vpop.f32.mrf.mxu0
  %v449 = vadd.f32 0.0, %v448
  %450 = vmatmul.bf16.gmra.mxu0 %v334
  %v451 = vpop.f32.mrf.mxu0
  %v452 = vadd.f32 0.0, %v451
  %v453 = vpop.f32.mrf.mxu0
  %v454 = vadd.f32 0.0, %v453
  %455 = vmatmul.bf16.gmra.mxu0 %v337
  %v456 = vpop.f32.mrf.mxu0
  %v457 = vadd.f32 0.0, %v456
  %v458 = vpop.f32.mrf.mxu0
  %v459 = vadd.f32 0.0, %v458
  %460 = vmatmul.bf16.gmra.mxu0 %v340
  %v461 = vpop.f32.mrf.mxu0
  %v462 = vadd.f32 0.0, %v461
  %v463 = vpop.f32.mrf.mxu0
  %v464 = vadd.f32 0.0, %v463
  %465 = vmatmul.bf16.gmra.mxu0 %v343
  %v466 = vpop.f32.mrf.mxu0
  %v467 = vadd.f32 0.0, %v466
  %v468 = vpop.f32.mrf.mxu0
  %v469 = vadd.f32 0.0, %v468
  %470 = vmatmul.bf16.gmra.mxu0 %v346
  %v471 = vpop.f32.mrf.mxu0
  %v472 = vadd.f32 0.0, %v471
  %v473 = vpop.f32.mrf.mxu0
  %v474 = vadd.f32 0.0, %v473
  %475 = vmatmul.bf16.gmra.mxu0 %v349
  %v476 = vpop.f32.mrf.mxu0
  %v477 = vadd.f32 0.0, %v476
  %v478 = vpop.f32.mrf.mxu0
  %v479 = vadd.f32 0.0, %v478
  %480 = vmatmul.bf16.gmra.mxu0 %v352
  %v481 = vpop.f32.mrf.mxu0
  %v482 = vadd.f32 0.0, %v481
  %v483 = vpop.f32.mrf.mxu0
  %v484 = vadd.f32 0.0, %v483
  %485 = vmatmul.bf16.gmra.mxu0 %v355
  %v486 = vpop.f32.mrf.mxu0
  %v487 = vadd.f32 0.0, %v486
  %v488 = vpop.f32.mrf.mxu0
  %v489 = vadd.f32 0.0, %v488
  %490 = vmatmul.bf16.gmra.mxu0 %v358
  %v491 = vpop.f32.mrf.mxu0
  %v492 = vadd.f32 0.0, %v491
  %v493 = vpop.f32.mrf.mxu0
  %v494 = vadd.f32 0.0, %v493
  %495 = vmatmul.bf16.gmra.mxu0 %v361
  %v496 = vpop.f32.mrf.mxu0
  %v497 = vadd.f32 0.0, %v496
  %v498 = vpop.f32.mrf.mxu0
  %v499 = vadd.f32 0.0, %v498
  %500 = vmatmul.bf16.gmra.mxu0 %v364
  %v501 = vpop.f32.mrf.mxu0
  %v502 = vadd.f32 0.0, %v501
  %v503 = vpop.f32.mrf.mxu0
  %v504 = vadd.f32 0.0, %v503
  %505 = vmatmul.bf16.gmra.mxu0 %v367
  %v506 = vpop.f32.mrf.mxu0
  %v507 = vadd.f32 0.0, %v506
  %v508 = vpop.f32.mrf.mxu0
  %v509 = vadd.f32 0.0, %v508
  %510 = vmatmul.bf16.gmra.mxu0 %v370
  %v511 = vpop.f32.mrf.mxu0
  %v512 = vadd.f32 0.0, %v511
  %v513 = vpop.f32.mrf.mxu0
  %v514 = vadd.f32 0.0, %v513
  %515 = vmatmul.bf16.gmra.mxu0 %v373
  %v516 = vpop.f32.mrf.mxu0
  %v517 = vadd.f32 0.0, %v516
  %v518 = vpop.f32.mrf.mxu0
  %v519 = vadd.f32 0.0, %v518
  %520 = vmatmul.bf16.gmra.mxu0 %v376
  %v521 = vpop.f32.mrf.mxu0
  %v522 = vadd.f32 0.0, %v521
  %v523 = vpop.f32.mrf.mxu0
  %v524 = vadd.f32 0.0, %v523
  %525 = vmatmul.bf16.gmra.mxu0 %v379
  %v526 = vpop.f32.mrf.mxu0
  %v527 = vadd.f32 0.0, %v526
  %v528 = vpop.f32.mrf.mxu0
  %v529 = vadd.f32 0.0, %v528
  %530 = vmatmul.bf16.gmra.mxu0 %v382
  %v531 = vpop.f32.mrf.mxu0
  %v532 = vadd.f32 0.0, %v531
  %v533 = vpop.f32.mrf.mxu0
  %v534 = vadd.f32 0.0, %v533
  %535 = vmatmul.bf16.gmra.mxu0 %v385
  %v536 = vpop.f32.mrf.mxu0
  %v537 = vadd.f32 0.0, %v536
  %v538 = vpop.f32.mrf.mxu0
  %v539 = vadd.f32 0.0, %v538
  %540 = vmatmul.bf16.gmra.mxu0 %v388
  %v541 = vpop.f32.mrf.mxu0
  %v542 = vadd.f32 0.0, %v541
  %v543 = vpop.f32.mrf.mxu0
  %v544 = vadd.f32 0.0, %v543
  %545 = vmatmul.bf16.gmra.mxu0 %v391
  %v546 = vpop.f32.mrf.mxu0
  %v547 = vadd.f32 0.0, %v546
  %v548 = vpop.f32.mrf.mxu0
  %v549 = vadd.f32 0.0, %v548
  %550 = vmatmul.bf16.gmra.mxu0 %v394
  %v551 = vpop.f32.mrf.mxu0
  %v552 = vadd.f32 0.0, %v551
  %v553 = vpop.f32.mrf.mxu0
  %v554 = vadd.f32 0.0, %v553
  %555 = vmatmul.bf16.gmra.mxu0 %v397
  %v556 = vpop.f32.mrf.mxu0
  %v557 = vadd.f32 0.0, %v556
  %v558 = vpop.f32.mrf.mxu0
  %v559 = vadd.f32 0.0, %v558
  %560 = vmatmul.bf16.gmra.mxu0 %v400
  %v561 = vpop.f32.mrf.mxu0
  %v562 = vadd.f32 0.0, %v561
  %v563 = vpop.f32.mrf.mxu0
  %v564 = vadd.f32 0.0, %v563
  %565 = vmatmul.bf16.gmra.mxu0 %v403
  %v566 = vpop.f32.mrf.mxu0
  %v567 = vadd.f32 0.0, %v566
  %v568 = vpop.f32.mrf.mxu0
  %v569 = vadd.f32 0.0, %v568
  %570 = vmatmul.bf16.gmra.mxu0 %v406
  %v571 = vpop.f32.mrf.mxu0
  %v572 = vadd.f32 0.0, %v571
  %v573 = vpop.f32.mrf.mxu0
  %v574 = vadd.f32 0.0, %v573
  %575 = vmatmul.bf16.gmra.mxu0 %v409
  %v576 = vpop.f32.mrf.mxu0
  %v577 = vadd.f32 0.0, %v576
  %v578 = vpop.f32.mrf.mxu0
  %v579 = vadd.f32 0.0, %v578
  %580 = vmatmul.bf16.gmra.mxu0 %v412
  %v581 = vpop.f32.mrf.mxu0
  %v582 = vadd.f32 0.0, %v581
  %v583 = vpop.f32.mrf.mxu0
  %v584 = vadd.f32 0.0, %v583
  %585 = vmatmul.bf16.gmra.mxu0 %v415
  %v586 = vpop.f32.mrf.mxu0
  %v587 = vadd.f32 0.0, %v586
  %v588 = vpop.f32.mrf.mxu0
  %v589 = vadd.f32 0.0, %v588
  %590 = vmatmul.bf16.gmra.mxu0 %v418
  %v591 = vpop.f32.mrf.mxu0
  %v592 = vadd.f32 0.0, %v591
  %v593 = vpop.f32.mrf.mxu0
  %v594 = vadd.f32 0.0, %v593
  %595 = vdwg.mxu0
  %596 = vmatpush.bf16.msra.mxu0 0
  %597 = vmatpush.bf16.msra.mxu0 0
  %598 = vmatpush.bf16.msra.mxu0 0
  %599 = vmatpush.bf16.msra.mxu0 0
  %600 = vmatpush.bf16.msra.mxu0 0
  %601 = vmatpush.bf16.msra.mxu0 0
  %602 = vmatpush.bf16.msra.mxu0 0
  %603 = vmatpush.bf16.msra.mxu0 %v425
  %604 = vmatmul.bf16.gmra.mxu0 %v325
  %v605 = vpop.f32.mrf.mxu0
  %v606 = vadd.f32 0.0, %v605
  %v607 = vpop.f32.mrf.mxu0
  %v608 = vadd.f32 0.0, %v607
  %609 = vmatmul.bf16.gmra.mxu0 %v328
  %v610 = vpop.f32.mrf.mxu0
  %v611 = vadd.f32 0.0, %v610
  %v612 = vpop.f32.mrf.mxu0
  %v613 = vadd.f32 0.0, %v612
  %614 = vmatmul.bf16.gmra.mxu0 %v331
  %v615 = vpop.f32.mrf.mxu0
  %v616 = vadd.f32 0.0, %v615
  %v617 = vpop.f32.mrf.mxu0
  %v618 = vadd.f32 0.0, %v617
  %619 = vmatmul.bf16.gmra.mxu0 %v334
  %v620 = vpop.f32.mrf.mxu0
  %v621 = vadd.f32 0.0, %v620
  %v622 = vpop.f32.mrf.mxu0
  %v623 = vadd.f32 0.0, %v622
  %624 = vmatmul.bf16.gmra.mxu0 %v337
  %v625 = vpop.f32.mrf.mxu0
  %v626 = vadd.f32 0.0, %v625
  %v627 = vpop.f32.mrf.mxu0
  %v628 = vadd.f32 0.0, %v627
  %629 = vmatmul.bf16.gmra.mxu0 %v340
  %v630 = vpop.f32.mrf.mxu0
  %v631 = vadd.f32 0.0, %v630
  %v632 = vpop.f32.mrf.mxu0
  %v633 = vadd.f32 0.0, %v632
  %634 = vmatmul.bf16.gmra.mxu0 %v343
  %v635 = vpop.f32.mrf.mxu0
  %v636 = vadd.f32 0.0, %v635
  %v637 = vpop.f32.mrf.mxu0
  %v638 = vadd.f32 0.0, %v637
  %639 = vmatmul.bf16.gmra.mxu0 %v346
  %v640 = vpop.f32.mrf.mxu0
  %v641 = vadd.f32 0.0, %v640
  %v642 = vpop.f32.mrf.mxu0
  %v643 = vadd.f32 0.0, %v642
  %644 = vmatmul.bf16.gmra.mxu0 %v349
  %v645 = vpop.f32.mrf.mxu0
  %v646 = vadd.f32 0.0, %v645
  %v647 = vpop.f32.mrf.mxu0
  %v648 = vadd.f32 0.0, %v647
  %649 = vmatmul.bf16.gmra.mxu0 %v352
  %v650 = vpop.f32.mrf.mxu0
  %v651 = vadd.f32 0.0, %v650
  %v652 = vpop.f32.mrf.mxu0
  %v653 = vadd.f32 0.0, %v652
  %654 = vmatmul.bf16.gmra.mxu0 %v355
  %v655 = vpop.f32.mrf.mxu0
  %v656 = vadd.f32 0.0, %v655
  %v657 = vpop.f32.mrf.mxu0
  %v658 = vadd.f32 0.0, %v657
  %659 = vmatmul.bf16.gmra.mxu0 %v358
  %v660 = vpop.f32.mrf.mxu0
  %v661 = vadd.f32 0.0, %v660
  %v662 = vpop.f32.mrf.mxu0
  %v663 = vadd.f32 0.0, %v662
  %664 = vmatmul.bf16.gmra.mxu0 %v361
  %v665 = vpop.f32.mrf.mxu0
  %v666 = vadd.f32 0.0, %v665
  %v667 = vpop.f32.mrf.mxu0
  %v668 = vadd.f32 0.0, %v667
  %669 = vmatmul.bf16.gmra.mxu0 %v364
  %v670 = vpop.f32.mrf.mxu0
  %v671 = vadd.f32 0.0, %v670
  %v672 = vpop.f32.mrf.mxu0
  %v673 = vadd.f32 0.0, %v672
  %674 = vmatmul.bf16.gmra.mxu0 %v367
  %v675 = vpop.f32.mrf.mxu0
  %v676 = vadd.f32 0.0, %v675
  %v677 = vpop.f32.mrf.mxu0
  %v678 = vadd.f32 0.0, %v677
  %679 = vmatmul.bf16.gmra.mxu0 %v370
  %v680 = vpop.f32.mrf.mxu0
  %v681 = vadd.f32 0.0, %v680
  %v682 = vpop.f32.mrf.mxu0
  %v683 = vadd.f32 0.0, %v682
  %684 = vmatmul.bf16.gmra.mxu0 %v373
  %v685 = vpop.f32.mrf.mxu0
  %v686 = vadd.f32 0.0, %v685
  %v687 = vpop.f32.mrf.mxu0
  %v688 = vadd.f32 0.0, %v687
  %689 = vmatmul.bf16.gmra.mxu0 %v376
  %v690 = vpop.f32.mrf.mxu0
  %v691 = vadd.f32 0.0, %v690
  %v692 = vpop.f32.mrf.mxu0
  %v693 = vadd.f32 0.0, %v692
  %694 = vmatmul.bf16.gmra.mxu0 %v379
  %v695 = vpop.f32.mrf.mxu0
  %v696 = vadd.f32 0.0, %v695
  %v697 = vpop.f32.mrf.mxu0
  %v698 = vadd.f32 0.0, %v697
  %699 = vmatmul.bf16.gmra.mxu0 %v382
  %v700 = vpop.f32.mrf.mxu0
  %v701 = vadd.f32 0.0, %v700
  %v702 = vpop.f32.mrf.mxu0
  %v703 = vadd.f32 0.0, %v702
  %704 = vmatmul.bf16.gmra.mxu0 %v385
  %v705 = vpop.f32.mrf.mxu0
  %v706 = vadd.f32 0.0, %v705
  %v707 = vpop.f32.mrf.mxu0
  %v708 = vadd.f32 0.0, %v707
  %709 = vmatmul.bf16.gmra.mxu0 %v388
  %v710 = vpop.f32.mrf.mxu0
  %v711 = vadd.f32 0.0, %v710
  %v712 = vpop.f32.mrf.mxu0
  %v713 = vadd.f32 0.0, %v712
  %714 = vmatmul.bf16.gmra.mxu0 %v391
  %v715 = vpop.f32.mrf.mxu0
  %v716 = vadd.f32 0.0, %v715
  %v717 = vpop.f32.mrf.mxu0
  %v718 = vadd.f32 0.0, %v717
  %719 = vmatmul.bf16.gmra.mxu0 %v394
  %v720 = vpop.f32.mrf.mxu0
  %v721 = vadd.f32 0.0, %v720
  %v722 = vpop.f32.mrf.mxu0
  %v723 = vadd.f32 0.0, %v722
  %724 = vmatmul.bf16.gmra.mxu0 %v397
  %v725 = vpop.f32.mrf.mxu0
  %v726 = vadd.f32 0.0, %v725
  %v727 = vpop.f32.mrf.mxu0
  %v728 = vadd.f32 0.0, %v727
  %729 = vmatmul.bf16.gmra.mxu0 %v400
  %v730 = vpop.f32.mrf.mxu0
  %v731 = vadd.f32 0.0, %v730
  %v732 = vpop.f32.mrf.mxu0
  %v733 = vadd.f32 0.0, %v732
  %734 = vmatmul.bf16.gmra.mxu0 %v403
  %v735 = vpop.f32.mrf.mxu0
  %v736 = vadd.f32 0.0, %v735
  %v737 = vpop.f32.mrf.mxu0
  %v738 = vadd.f32 0.0, %v737
  %739 = vmatmul.bf16.gmra.mxu0 %v406
  %v740 = vpop.f32.mrf.mxu0
  %v741 = vadd.f32 0.0, %v740
  %v742 = vpop.f32.mrf.mxu0
  %v743 = vadd.f32 0.0, %v742
  %744 = vmatmul.bf16.gmra.mxu0 %v409
  %v745 = vpop.f32.mrf.mxu0
  %v746 = vadd.f32 0.0, %v745
  %v747 = vpop.f32.mrf.mxu0
  %v748 = vadd.f32 0.0, %v747
  %749 = vmatmul.bf16.gmra.mxu0 %v412
  %v750 = vpop.f32.mrf.mxu0
  %v751 = vadd.f32 0.0, %v750
  %v752 = vpop.f32.mrf.mxu0
  %v753 = vadd.f32 0.0, %v752
  %754 = vmatmul.bf16.gmra.mxu0 %v415
  %v755 = vpop.f32.mrf.mxu0
  %v756 = vadd.f32 0.0, %v755
  %v757 = vpop.f32.mrf.mxu0
  %v758 = vadd.f32 0.0, %v757
  %759 = vmatmul.bf16.gmra.mxu0 %v418
  %v760 = vpop.f32.mrf.mxu0
  %v761 = vadd.f32 0.0, %v760
  %v762 = vpop.f32.mrf.mxu0
  %v763 = vadd.f32 0.0, %v762
  %764 = vdwg.mxu0
  %v765 = vpack.c.bf16 %v437, %v437
  %v766 = vpack.c.bf16 %v439, %v439
  %v767 = vpack.c.bf16 %v442, %v442
  %v768 = vpack.c.bf16 %v444, %v444
  %v769 = vpack.c.bf16 %v447, %v447
  %v770 = vpack.c.bf16 %v449, %v449
  %v771 = vpack.c.bf16 %v452, %v452
  %v772 = vpack.c.bf16 %v454, %v454
  %v773 = vpack.c.bf16 %v457, %v457
  %v774 = vpack.c.bf16 %v459, %v459
  %v775 = vpack.c.bf16 %v462, %v462
  %v776 = vpack.c.bf16 %v464, %v464
  %v777 = vpack.c.bf16 %v467, %v467
  %v778 = vpack.c.bf16 %v469, %v469
  %v779 = vpack.c.bf16 %v472, %v472
  %v780 = vpack.c.bf16 %v474, %v474
  %v781 = vpack.c.bf16 %v477, %v477
  %v782 = vpack.c.bf16 %v479, %v479
  %v783 = vpack.c.bf16 %v482, %v482
  %v784 = vpack.c.bf16 %v484, %v484
  %v785 = vpack.c.bf16 %v487, %v487
  %v786 = vpack.c.bf16 %v489, %v489
  %v787 = vpack.c.bf16 %v492, %v492
  %v788 = vpack.c.bf16 %v494, %v494
  %v789 = vpack.c.bf16 %v497, %v497
  %v790 = vpack.c.bf16 %v499, %v499
  %v791 = vpack.c.bf16 %v502, %v502
  %v792 = vpack.c.bf16 %v504, %v504
  %v793 = vpack.c.bf16 %v507, %v507
  %v794 = vpack.c.bf16 %v509, %v509
  %v795 = vpack.c.bf16 %v512, %v512
  %v796 = vpack.c.bf16 %v514, %v514
  %v797 = vpack.c.bf16 %v517, %v517
  %v798 = vpack.c.bf16 %v519, %v519
  %v799 = vpack.c.bf16 %v522, %v522
  %v800 = vpack.c.bf16 %v524, %v524
  %v801 = vpack.c.bf16 %v527, %v527
  %v802 = vpack.c.bf16 %v529, %v529
  %v803 = vpack.c.bf16 %v532, %v532
  %v804 = vpack.c.bf16 %v534, %v534
  %v805 = vpack.c.bf16 %v537, %v537
  %v806 = vpack.c.bf16 %v539, %v539
  %v807 = vpack.c.bf16 %v542, %v542
  %v808 = vpack.c.bf16 %v544, %v544
  %v809 = vpack.c.bf16 %v547, %v547
  %v810 = vpack.c.bf16 %v549, %v549
  %v811 = vpack.c.bf16 %v552, %v552
  %v812 = vpack.c.bf16 %v554, %v554
  %v813 = vpack.c.bf16 %v557, %v557
  %v814 = vpack.c.bf16 %v559, %v559
  %v815 = vpack.c.bf16 %v562, %v562
  %v816 = vpack.c.bf16 %v564, %v564
  %v817 = vpack.c.bf16 %v567, %v567
  %v818 = vpack.c.bf16 %v569, %v569
  %v819 = vpack.c.bf16 %v572, %v572
  %v820 = vpack.c.bf16 %v574, %v574
  %v821 = vpack.c.bf16 %v577, %v577
  %v822 = vpack.c.bf16 %v579, %v579
  %v823 = vpack.c.bf16 %v582, %v582
  %v824 = vpack.c.bf16 %v584, %v584
  %v825 = vpack.c.bf16 %v587, %v587
  %v826 = vpack.c.bf16 %v589, %v589
  %v827 = vpack.c.bf16 %v592, %v592
  %v828 = vpack.c.bf16 %v594, %v594
  %829 = vst [vmem:[%s4] sm:$0xf] %v765
  %830 = vst [vmem:[%s4 + $0x4] sm:$0xf] %v766
  %831 = vst [vmem:[%s4 + $0x8] sm:$0xf] %v767
  %832 = vst [vmem:[%s4 + $0xc] sm:$0xf] %v768
  %833 = vst [vmem:[%s4 + $0x10] sm:$0xf] %v769
  %834 = vst [vmem:[%s4 + $0x14] sm:$0xf] %v770
  %835 = vst [vmem:[%s4 + $0x18] sm:$0xf] %v771
  %836 = vst [vmem:[%s4 + $0x1c] sm:$0xf] %v772
  %837 = vst [vmem:[%s4 + $0x20] sm:$0xf] %v773
  %838 = vst [vmem:[%s4 + $0x24] sm:$0xf] %v774
  %839 = vst [vmem:[%s4 + $0x28] sm:$0xf] %v775
  %840 = vst [vmem:[%s4 + $0x2c] sm:$0xf] %v776
  %841 = vst [vmem:[%s4 + $0x30] sm:$0xf] %v777
  %842 = vst [vmem:[%s4 + $0x34] sm:$0xf] %v778
  %843 = vst [vmem:[%s4 + $0x38] sm:$0xf] %v779
  %844 = vst [vmem:[%s4 + $0x3c] sm:$0xf] %v780
  %845 = vst [vmem:[%s4 + $0x40] sm:$0xf] %v781
  %846 = vst [vmem:[%s4 + $0x44] sm:$0xf] %v782
  %847 = vst [vmem:[%s4 + $0x48] sm:$0xf] %v783
  %848 = vst [vmem:[%s4 + $0x4c] sm:$0xf] %v784
  %849 = vst [vmem:[%s4 + $0x50] sm:$0xf] %v785
  %850 = vst [vmem:[%s4 + $0x54] sm:$0xf] %v786
  %851 = vst [vmem:[%s4 + $0x58] sm:$0xf] %v787
  %852 = vst [vmem:[%s4 + $0x5c] sm:$0xf] %v788
  %853 = vst [vmem:[%s4 + $0x60] sm:$0xf] %v789
  %854 = vst [vmem:[%s4 + $0x64] sm:$0xf] %v790
  %855 = vst [vmem:[%s4 + $0x68] sm:$0xf] %v791
  %856 = vst [vmem:[%s4 + $0x6c] sm:$0xf] %v792
  %857 = vst [vmem:[%s4 + $0x70] sm:$0xf] %v793
  %858 = vst [vmem:[%s4 + $0x74] sm:$0xf] %v794
  %859 = vst [vmem:[%s4 + $0x78] sm:$0xf] %v795
  %860 = vst [vmem:[%s4 + $0x7c] sm:$0xf] %v796
  %861 = vst [vmem:[%s4 + $0x80] sm:$0xf] %v797
  %862 = vst [vmem:[%s4 + $0x84] sm:$0xf] %v798
  %863 = vst [vmem:[%s4 + $0x88] sm:$0xf] %v799
  %864 = vst [vmem:[%s4 + $0x8c] sm:$0xf] %v800
  %865 = vst [vmem:[%s4 + $0x90] sm:$0xf] %v801
  %866 = vst [vmem:[%s4 + $0x94] sm:$0xf] %v802
  %867 = vst [vmem:[%s4 + $0x98] sm:$0xf] %v803
  %868 = vst [vmem:[%s4 + $0x9c] sm:$0xf] %v804
  %869 = vst [vmem:[%s4 + $0xa0] sm:$0xf] %v805
  %870 = vst [vmem:[%s4 + $0xa4] sm:$0xf] %v806
  %871 = vst [vmem:[%s4 + $0xa8] sm:$0xf] %v807
  %872 = vst [vmem:[%s4 + $0xac] sm:$0xf] %v808
  %873 = vst [vmem:[%s4 + $0xb0] sm:$0xf] %v809
  %874 = vst [vmem:[%s4 + $0xb4] sm:$0xf] %v810
  %875 = vst [vmem:[%s4 + $0xb8] sm:$0xf] %v811
  %876 = vst [vmem:[%s4 + $0xbc] sm:$0xf] %v812
  %877 = vst [vmem:[%s4 + $0xc0] sm:$0xf] %v813
  %878 = vst [vmem:[%s4 + $0xc4] sm:$0xf] %v814
  %879 = vst [vmem:[%s4 + $0xc8] sm:$0xf] %v815
  %880 = vst [vmem:[%s4 + $0xcc] sm:$0xf] %v816
  %881 = vst [vmem:[%s4 + $0xd0] sm:$0xf] %v817
  %882 = vst [vmem:[%s4 + $0xd4] sm:$0xf] %v818
  %883 = vst [vmem:[%s4 + $0xd8] sm:$0xf] %v819
  %884 = vst [vmem:[%s4 + $0xdc] sm:$0xf] %v820
  %885 = vst [vmem:[%s4 + $0xe0] sm:$0xf] %v821
  %886 = vst [vmem:[%s4 + $0xe4] sm:$0xf] %v822
  %887 = vst [vmem:[%s4 + $0xe8] sm:$0xf] %v823
  %888 = vst [vmem:[%s4 + $0xec] sm:$0xf] %v824
  %889 = vst [vmem:[%s4 + $0xf0] sm:$0xf] %v825
  %890 = vst [vmem:[%s4 + $0xf4] sm:$0xf] %v826
  %891 = vst [vmem:[%s4 + $0xf8] sm:$0xf] %v827
  %892 = vst [vmem:[%s4 + $0xfc] sm:$0xf] %v828
  %v893 = vpack.c.bf16 %v606, %v606
  %v894 = vpack.c.bf16 %v608, %v608
  %v895 = vpack.c.bf16 %v611, %v611
  %v896 = vpack.c.bf16 %v613, %v613
  %v897 = vpack.c.bf16 %v616, %v616
  %v898 = vpack.c.bf16 %v618, %v618
  %v899 = vpack.c.bf16 %v621, %v621
  %v900 = vpack.c.bf16 %v623, %v623
  %v901 = vpack.c.bf16 %v626, %v626
  %v902 = vpack.c.bf16 %v628, %v628
  %v903 = vpack.c.bf16 %v631, %v631
  %v904 = vpack.c.bf16 %v633, %v633
  %v905 = vpack.c.bf16 %v636, %v636
  %v906 = vpack.c.bf16 %v638, %v638
  %v907 = vpack.c.bf16 %v641, %v641
  %v908 = vpack.c.bf16 %v643, %v643
  %v909 = vpack.c.bf16 %v646, %v646
  %v910 = vpack.c.bf16 %v648, %v648
  %v911 = vpack.c.bf16 %v651, %v651
  %v912 = vpack.c.bf16 %v653, %v653
  %v913 = vpack.c.bf16 %v656, %v656
  %v914 = vpack.c.bf16 %v658, %v658
  %v915 = vpack.c.bf16 %v661, %v661
  %v916 = vpack.c.bf16 %v663, %v663
  %v917 = vpack.c.bf16 %v666, %v666
  %v918 = vpack.c.bf16 %v668, %v668
  %v919 = vpack.c.bf16 %v671, %v671
  %v920 = vpack.c.bf16 %v673, %v673
  %v921 = vpack.c.bf16 %v676, %v676
  %v922 = vpack.c.bf16 %v678, %v678
  %v923 = vpack.c.bf16 %v681, %v681
  %v924 = vpack.c.bf16 %v683, %v683
  %v925 = vpack.c.bf16 %v686, %v686
  %v926 = vpack.c.bf16 %v688, %v688
  %v927 = vpack.c.bf16 %v691, %v691
  %v928 = vpack.c.bf16 %v693, %v693
  %v929 = vpack.c.bf16 %v696, %v696
  %v930 = vpack.c.bf16 %v698, %v698
  %v931 = vpack.c.bf16 %v701, %v701
  %v932 = vpack.c.bf16 %v703, %v703
  %v933 = vpack.c.bf16 %v706, %v706
  %v934 = vpack.c.bf16 %v708, %v708
  %v935 = vpack.c.bf16 %v711, %v711
  %v936 = vpack.c.bf16 %v713, %v713
  %v937 = vpack.c.bf16 %v716, %v716
  %v938 = vpack.c.bf16 %v718, %v718
  %v939 = vpack.c.bf16 %v721, %v721
  %v940 = vpack.c.bf16 %v723, %v723
  %v941 = vpack.c.bf16 %v726, %v726
  %v942 = vpack.c.bf16 %v728, %v728
  %v943 = vpack.c.bf16 %v731, %v731
  %v944 = vpack.c.bf16 %v733, %v733
  %v945 = vpack.c.bf16 %v736, %v736
  %v946 = vpack.c.bf16 %v738, %v738
  %v947 = vpack.c.bf16 %v741, %v741
  %v948 = vpack.c.bf16 %v743, %v743
  %v949 = vpack.c.bf16 %v746, %v746
  %v950 = vpack.c.bf16 %v748, %v748
  %v951 = vpack.c.bf16 %v751, %v751
  %v952 = vpack.c.bf16 %v753, %v753
  %v953 = vpack.c.bf16 %v756, %v756
  %v954 = vpack.c.bf16 %v758, %v758
  %v955 = vpack.c.bf16 %v761, %v761
  %v956 = vpack.c.bf16 %v763, %v763
  %957 = vst [vmem:[%s5] sm:$0xf] %v893
  %958 = vst [vmem:[%s5 + $0x4] sm:$0xf] %v894
  %959 = vst [vmem:[%s5 + $0x8] sm:$0xf] %v895
  %960 = vst [vmem:[%s5 + $0xc] sm:$0xf] %v896
  %961 = vst [vmem:[%s5 + $0x10] sm:$0xf] %v897
  %962 = vst [vmem:[%s5 + $0x14] sm:$0xf] %v898
  %963 = vst [vmem:[%s5 + $0x18] sm:$0xf] %v899
  %964 = vst [vmem:[%s5 + $0x1c] sm:$0xf] %v900
  %965 = vst [vmem:[%s5 + $0x20] sm:$0xf] %v901
  %966 = vst [vmem:[%s5 + $0x24] sm:$0xf] %v902
  %967 = vst [vmem:[%s5 + $0x28] sm:$0xf] %v903
  %968 = vst [vmem:[%s5 + $0x2c] sm:$0xf] %v904
  %969 = vst [vmem:[%s5 + $0x30] sm:$0xf] %v905
  %970 = vst [vmem:[%s5 + $0x34] sm:$0xf] %v906
  %971 = vst [vmem:[%s5 + $0x38] sm:$0xf] %v907
  %972 = vst [vmem:[%s5 + $0x3c] sm:$0xf] %v908
  %973 = vst [vmem:[%s5 + $0x40] sm:$0xf] %v909
  %974 = vst [vmem:[%s5 + $0x44] sm:$0xf] %v910
  %975 = vst [vmem:[%s5 + $0x48] sm:$0xf] %v911
  %976 = vst [vmem:[%s5 + $0x4c] sm:$0xf] %v912
  %977 = vst [vmem:[%s5 + $0x50] sm:$0xf] %v913
  %978 = vst [vmem:[%s5 + $0x54] sm:$0xf] %v914
  %979 = vst [vmem:[%s5 + $0x58] sm:$0xf] %v915
  %980 = vst [vmem:[%s5 + $0x5c] sm:$0xf] %v916
  %981 = vst [vmem:[%s5 + $0x60] sm:$0xf] %v917
  %982 = vst [vmem:[%s5 + $0x64] sm:$0xf] %v918
  %983 = vst [vmem:[%s5 + $0x68] sm:$0xf] %v919
  %984 = vst [vmem:[%s5 + $0x6c] sm:$0xf] %v920
  %985 = vst [vmem:[%s5 + $0x70] sm:$0xf] %v921
  %986 = vst [vmem:[%s5 + $0x74] sm:$0xf] %v922
  %987 = vst [vmem:[%s5 + $0x78] sm:$0xf] %v923
  %988 = vst [vmem:[%s5 + $0x7c] sm:$0xf] %v924
  %989 = vst [vmem:[%s5 + $0x80] sm:$0xf] %v925
  %990 = vst [vmem:[%s5 + $0x84] sm:$0xf] %v926
  %991 = vst [vmem:[%s5 + $0x88] sm:$0xf] %v927
  %992 = vst [vmem:[%s5 + $0x8c] sm:$0xf] %v928
  %993 = vst [vmem:[%s5 + $0x90] sm:$0xf] %v929
  %994 = vst [vmem:[%s5 + $0x94] sm:$0xf] %v930
  %995 = vst [vmem:[%s5 + $0x98] sm:$0xf] %v931
  %996 = vst [vmem:[%s5 + $0x9c] sm:$0xf] %v932
  %997 = vst [vmem:[%s5 + $0xa0] sm:$0xf] %v933
  %998 = vst [vmem:[%s5 + $0xa4] sm:$0xf] %v934
  %999 = vst [vmem:[%s5 + $0xa8] sm:$0xf] %v935
  %1000 = vst [vmem:[%s5 + $0xac] sm:$0xf] %v936
  %1001 = vst [vmem:[%s5 + $0xb0] sm:$0xf] %v937
  %1002 = vst [vmem:[%s5 + $0xb4] sm:$0xf] %v938
  %1003 = vst [vmem:[%s5 + $0xb8] sm:$0xf] %v939
  %1004 = vst [vmem:[%s5 + $0xbc] sm:$0xf] %v940
  %1005 = vst [vmem:[%s5 + $0xc0] sm:$0xf] %v941
  %1006 = vst [vmem:[%s5 + $0xc4] sm:$0xf] %v942
  %1007 = vst [vmem:[%s5 + $0xc8] sm:$0xf] %v943
  %1008 = vst [vmem:[%s5 + $0xcc] sm:$0xf] %v944
  %1009 = vst [vmem:[%s5 + $0xd0] sm:$0xf] %v945
  %1010 = vst [vmem:[%s5 + $0xd4] sm:$0xf] %v946
  %1011 = vst [vmem:[%s5 + $0xd8] sm:$0xf] %v947
  %1012 = vst [vmem:[%s5 + $0xdc] sm:$0xf] %v948
  %1013 = vst [vmem:[%s5 + $0xe0] sm:$0xf] %v949
  %1014 = vst [vmem:[%s5 + $0xe4] sm:$0xf] %v950
  %1015 = vst [vmem:[%s5 + $0xe8] sm:$0xf] %v951
  %1016 = vst [vmem:[%s5 + $0xec] sm:$0xf] %v952
  %1017 = vst [vmem:[%s5 + $0xf0] sm:$0xf] %v953
  %1018 = vst [vmem:[%s5 + $0xf4] sm:$0xf] %v954
  %1019 = vst [vmem:[%s5 + $0xf8] sm:$0xf] %v955
  %1020 = vst [vmem:[%s5 + $0xfc] sm:$0xf] %v956
  %v1021 = vadd.f32 %v437, %v439
  %v1022 = vadd.f32 %v1021, %v442
  %v1023 = vadd.f32 %v1022, %v444
  %v1024 = vadd.f32 %v1023, %v447
  %v1025 = vadd.f32 %v1024, %v449
  %v1026 = vadd.f32 %v1025, %v452
  %v1027 = vadd.f32 %v1026, %v454
  %v1028 = vadd.f32 %v1027, %v457
  %v1029 = vadd.f32 %v1028, %v459
  %v1030 = vadd.f32 %v1029, %v462
  %v1031 = vadd.f32 %v1030, %v464
  %v1032 = vadd.f32 %v1031, %v467
  %v1033 = vadd.f32 %v1032, %v469
  %v1034 = vadd.f32 %v1033, %v472
  %v1035 = vadd.f32 %v1034, %v474
  %v1036 = vadd.f32 %v1035, %v477
  %v1037 = vadd.f32 %v1036, %v479
  %v1038 = vadd.f32 %v1037, %v482
  %v1039 = vadd.f32 %v1038, %v484
  %v1040 = vadd.f32 %v1039, %v487
  %v1041 = vadd.f32 %v1040, %v489
  %v1042 = vadd.f32 %v1041, %v492
  %v1043 = vadd.f32 %v1042, %v494
  %v1044 = vadd.f32 %v1043, %v497
  %v1045 = vadd.f32 %v1044, %v499
  %v1046 = vadd.f32 %v1045, %v502
  %v1047 = vadd.f32 %v1046, %v504
  %v1048 = vadd.f32 %v1047, %v507
  %v1049 = vadd.f32 %v1048, %v509
  %v1050 = vadd.f32 %v1049, %v512
  %v1051 = vadd.f32 %v1050, %v514
  %v1052 = vadd.f32 %v1051, %v517
  %v1053 = vadd.f32 %v1052, %v519
  %v1054 = vadd.f32 %v1053, %v522
  %v1055 = vadd.f32 %v1054, %v524
  %v1056 = vadd.f32 %v1055, %v527
  %v1057 = vadd.f32 %v1056, %v529
  %v1058 = vadd.f32 %v1057, %v532
  %v1059 = vadd.f32 %v1058, %v534
  %v1060 = vadd.f32 %v1059, %v537
  %v1061 = vadd.f32 %v1060, %v539
  %v1062 = vadd.f32 %v1061, %v542
  %v1063 = vadd.f32 %v1062, %v544
  %v1064 = vadd.f32 %v1063, %v547
  %v1065 = vadd.f32 %v1064, %v549
  %v1066 = vadd.f32 %v1065, %v552
  %v1067 = vadd.f32 %v1066, %v554
  %v1068 = vadd.f32 %v1067, %v557
  %v1069 = vadd.f32 %v1068, %v559
  %v1070 = vadd.f32 %v1069, %v562
  %v1071 = vadd.f32 %v1070, %v564
  %v1072 = vadd.f32 %v1071, %v567
  %v1073 = vadd.f32 %v1072, %v569
  %v1074 = vadd.f32 %v1073, %v572
  %v1075 = vadd.f32 %v1074, %v574
  %v1076 = vadd.f32 %v1075, %v577
  %v1077 = vadd.f32 %v1076, %v579
  %v1078 = vadd.f32 %v1077, %v582
  %v1079 = vadd.f32 %v1078, %v584
  %v1080 = vadd.f32 %v1079, %v587
  %v1081 = vadd.f32 %v1080, %v589
  %v1082 = vadd.f32 %v1081, %v592
  %v1083 = vadd.f32 %v1082, %v594
  %v1084 = vrot.slane %v1083, 4
  %v1085 = vadd.f32 %v1083, %v1084
  %v1086 = vrot.slane %v1085, 2
  %v1087 = vadd.f32 %v1085, %v1086
  %v1088 = vrot.slane %v1087, 1
  %v1089 = vadd.f32 %v1087, %v1088
  %v1090 = vmul.f32 %v437, %v437
  %v1091 = vmul.f32 %v439, %v439
  %v1092 = vmul.f32 %v442, %v442
  %v1093 = vmul.f32 %v444, %v444
  %v1094 = vmul.f32 %v447, %v447
  %v1095 = vmul.f32 %v449, %v449
  %v1096 = vmul.f32 %v452, %v452
  %v1097 = vmul.f32 %v454, %v454
  %v1098 = vmul.f32 %v457, %v457
  %v1099 = vmul.f32 %v459, %v459
  %v1100 = vmul.f32 %v462, %v462
  %v1101 = vmul.f32 %v464, %v464
  %v1102 = vmul.f32 %v467, %v467
  %v1103 = vmul.f32 %v469, %v469
  %v1104 = vmul.f32 %v472, %v472
  %v1105 = vmul.f32 %v474, %v474
  %v1106 = vmul.f32 %v477, %v477
  %v1107 = vmul.f32 %v479, %v479
  %v1108 = vmul.f32 %v482, %v482
  %v1109 = vmul.f32 %v484, %v484
  %v1110 = vmul.f32 %v487, %v487
  %v1111 = vmul.f32 %v489, %v489
  %v1112 = vmul.f32 %v492, %v492
  %v1113 = vmul.f32 %v494, %v494
  %v1114 = vmul.f32 %v497, %v497
  %v1115 = vmul.f32 %v499, %v499
  %v1116 = vmul.f32 %v502, %v502
  %v1117 = vmul.f32 %v504, %v504
  %v1118 = vmul.f32 %v507, %v507
  %v1119 = vmul.f32 %v509, %v509
  %v1120 = vmul.f32 %v512, %v512
  %v1121 = vmul.f32 %v514, %v514
  %v1122 = vmul.f32 %v517, %v517
  %v1123 = vmul.f32 %v519, %v519
  %v1124 = vmul.f32 %v522, %v522
  %v1125 = vmul.f32 %v524, %v524
  %v1126 = vmul.f32 %v527, %v527
  %v1127 = vmul.f32 %v529, %v529
  %v1128 = vmul.f32 %v532, %v532
  %v1129 = vmul.f32 %v534, %v534
  %v1130 = vmul.f32 %v537, %v537
  %v1131 = vmul.f32 %v539, %v539
  %v1132 = vmul.f32 %v542, %v542
  %v1133 = vmul.f32 %v544, %v544
  %v1134 = vmul.f32 %v547, %v547
  %v1135 = vmul.f32 %v549, %v549
  %v1136 = vmul.f32 %v552, %v552
  %v1137 = vmul.f32 %v554, %v554
  %v1138 = vmul.f32 %v557, %v557
  %v1139 = vmul.f32 %v559, %v559
  %v1140 = vmul.f32 %v562, %v562
  %v1141 = vmul.f32 %v564, %v564
  %v1142 = vmul.f32 %v567, %v567
  %v1143 = vmul.f32 %v569, %v569
  %v1144 = vmul.f32 %v572, %v572
  %v1145 = vmul.f32 %v574, %v574
  %v1146 = vmul.f32 %v577, %v577
  %v1147 = vmul.f32 %v579, %v579
  %v1148 = vmul.f32 %v582, %v582
  %v1149 = vmul.f32 %v584, %v584
  %v1150 = vmul.f32 %v587, %v587
  %v1151 = vmul.f32 %v589, %v589
  %v1152 = vmul.f32 %v592, %v592
  %v1153 = vmul.f32 %v594, %v594
  %v1154 = vadd.f32 %v1090, %v1091
  %v1155 = vadd.f32 %v1154, %v1092
  %v1156 = vadd.f32 %v1155, %v1093
  %v1157 = vadd.f32 %v1156, %v1094
  %v1158 = vadd.f32 %v1157, %v1095
  %v1159 = vadd.f32 %v1158, %v1096
  %v1160 = vadd.f32 %v1159, %v1097
  %v1161 = vadd.f32 %v1160, %v1098
  %v1162 = vadd.f32 %v1161, %v1099
  %v1163 = vadd.f32 %v1162, %v1100
  %v1164 = vadd.f32 %v1163, %v1101
  %v1165 = vadd.f32 %v1164, %v1102
  %v1166 = vadd.f32 %v1165, %v1103
  %v1167 = vadd.f32 %v1166, %v1104
  %v1168 = vadd.f32 %v1167, %v1105
  %v1169 = vadd.f32 %v1168, %v1106
  %v1170 = vadd.f32 %v1169, %v1107
  %v1171 = vadd.f32 %v1170, %v1108
  %v1172 = vadd.f32 %v1171, %v1109
  %v1173 = vadd.f32 %v1172, %v1110
  %v1174 = vadd.f32 %v1173, %v1111
  %v1175 = vadd.f32 %v1174, %v1112
  %v1176 = vadd.f32 %v1175, %v1113
  %v1177 = vadd.f32 %v1176, %v1114
  %v1178 = vadd.f32 %v1177, %v1115
  %v1179 = vadd.f32 %v1178, %v1116
  %v1180 = vadd.f32 %v1179, %v1117
  %v1181 = vadd.f32 %v1180, %v1118
  %v1182 = vadd.f32 %v1181, %v1119
  %v1183 = vadd.f32 %v1182, %v1120
  %v1184 = vadd.f32 %v1183, %v1121
  %v1185 = vadd.f32 %v1184, %v1122
  %v1186 = vadd.f32 %v1185, %v1123
  %v1187 = vadd.f32 %v1186, %v1124
  %v1188 = vadd.f32 %v1187, %v1125
  %v1189 = vadd.f32 %v1188, %v1126
  %v1190 = vadd.f32 %v1189, %v1127
  %v1191 = vadd.f32 %v1190, %v1128
  %v1192 = vadd.f32 %v1191, %v1129
  %v1193 = vadd.f32 %v1192, %v1130
  %v1194 = vadd.f32 %v1193, %v1131
  %v1195 = vadd.f32 %v1194, %v1132
  %v1196 = vadd.f32 %v1195, %v1133
  %v1197 = vadd.f32 %v1196, %v1134
  %v1198 = vadd.f32 %v1197, %v1135
  %v1199 = vadd.f32 %v1198, %v1136
  %v1200 = vadd.f32 %v1199, %v1137
  %v1201 = vadd.f32 %v1200, %v1138
  %v1202 = vadd.f32 %v1201, %v1139
  %v1203 = vadd.f32 %v1202, %v1140
  %v1204 = vadd.f32 %v1203, %v1141
  %v1205 = vadd.f32 %v1204, %v1142
  %v1206 = vadd.f32 %v1205, %v1143
  %v1207 = vadd.f32 %v1206, %v1144
  %v1208 = vadd.f32 %v1207, %v1145
  %v1209 = vadd.f32 %v1208, %v1146
  %v1210 = vadd.f32 %v1209, %v1147
  %v1211 = vadd.f32 %v1210, %v1148
  %v1212 = vadd.f32 %v1211, %v1149
  %v1213 = vadd.f32 %v1212, %v1150
  %v1214 = vadd.f32 %v1213, %v1151
  %v1215 = vadd.f32 %v1214, %v1152
  %v1216 = vadd.f32 %v1215, %v1153
  %v1217 = vrot.slane %v1216, 4
  %v1218 = vadd.f32 %v1216, %v1217
  %v1219 = vrot.slane %v1218, 2
  %v1220 = vadd.f32 %v1218, %v1219
  %v1221 = vrot.slane %v1220, 1
  %v1222 = vadd.f32 %v1220, %v1221
  %vm1223 = vcmask 1040384
  %v1224 = vsel %vm1223, %v1089, %v1222
  %1225 = vst [vmem:[%s6] sm:$0x3] %v1224
  // Predicated region
  $region18: #{spp_se_preact_bottleneck.7} parent=0 // pred_check
    _
  $region19: #{spp_se_preact_bottleneck.7} parent=0 // pred_check_branch
    %1227 = sbr.rel (0) target = $region21
  $region20: #{spp_se_preact_bottleneck.7} parent=0 // pred_region
    _
  $region21: #{spp_se_preact_bottleneck.7} parent=0 // pred_fallthru
    _
  // Predicated region
  $region22: #{spp_se_preact_bottleneck.7} parent=0 // pred_check
    _
  $region23: #{spp_se_preact_bottleneck.7} parent=0 // pred_check_branch
    %1229 = sbr.rel (0) target = $region25
  $region24: #{spp_se_preact_bottleneck.7} parent=0 // pred_region
    _
  $region25: #{spp_se_preact_bottleneck.7} parent=0 // pred_fallthru
    _
  // Predicated region
  $region26: #{spp_se_preact_bottleneck.7} parent=0 // pred_check
    _
  $region27: #{spp_se_preact_bottleneck.7} parent=0 // pred_check_branch
    %1231 = sbr.rel (0) target = $region29
  $region28: #{spp_se_preact_bottleneck.7} parent=0 // pred_region
    _
  $region29: #{spp_se_preact_bottleneck.7} parent=0 // pred_fallthru
    _
  // Predicated region
  $region30: #{spp_se_preact_bottleneck.7} parent=0 // pred_check
    _
  $region31: #{spp_se_preact_bottleneck.7} parent=0 // pred_check_branch
    %1233 = sbr.rel (0) target = $region33
  $region32: #{spp_se_preact_bottleneck.7} parent=0 // pred_region
    _
  $region33: #{spp_se_preact_bottleneck.7} parent=0 // pred_fallthru
    _
  // Predicated region
  $region34: #{spp_se_preact_bottleneck.7} parent=0 // pred_check
    _
  $region35: #{spp_se_preact_bottleneck.7} parent=0 // pred_check_branch
    %1235 = sbr.rel (0) target = $region37
  $region36: #{spp_se_preact_bottleneck.7} parent=0 // pred_region
    _
  $region37: #{spp_se_preact_bottleneck.7} parent=0 // pred_fallthru
    _
  // Predicated region
  $region38: #{spp_se_preact_bottleneck.7} parent=0 // pred_check
    _
  $region39: #{spp_se_preact_bottleneck.7} parent=0 // pred_check_branch
    %1237 = sbr.rel (0) target = $region41
  $region40: #{spp_se_preact_bottleneck.7} parent=0 // pred_region
    _
  $region41: #{spp_se_preact_bottleneck.7} parent=0 // pred_fallthru
    _

// kernel: spp_se_preact_bottleneck.9
$region0: #{spp_se_preact_bottleneck.9}
  #allocation0 [shape = 'u32[]', space=smem, size = 0x4, offset = 0x4, fixed_abs, tag = 'smem constant byte address 0x4 - core index']
  #allocation1 [shape = 'u32[72,128]{1,0:T(1,128)}', space=vmem, size = 0x9000, scoped, tag = 'internal scratch']
  %s0 = inlined_call_operand.vmem [shape: bf16[512,128], index: 0, kind: input, shape index: {}]
  %s1 = inlined_call_operand.vmem [shape: f32[1,128], index: 1, kind: input, shape index: {}]
  %s2 = inlined_call_operand.vmem [shape: f32[1,128], index: 2, kind: input, shape index: {}]
  %s3 = inlined_call_operand.vmem [shape: bf16[128,128], index: 3, kind: input, shape index: {}]
  %s4 = inlined_call_operand.vmem [shape: bf16[512,128], index: 4, kind: output, shape index: {}]
  %s5 = sld [smem:[#allocation0]]
  $region26: #{spp_se_preact_bottleneck.9} parent=0
    _
  %s7 = ssub.s32 1, %s5
  %s8 = scalar_select 0, %s7, %s5
  // Predicated region
  $region2: #{spp_se_preact_bottleneck.9} parent=0 // pred_check
    _
  $region3: #{spp_se_preact_bottleneck.9} parent=0 // pred_check_branch
    %10 = sbr.rel (0) target = $region5
  $region4: #{spp_se_preact_bottleneck.9} parent=0 // pred_region
    _
  $region5: #{spp_se_preact_bottleneck.9} parent=0 // pred_fallthru
    _
  // Predicated region
  $region6: #{spp_se_preact_bottleneck.9} parent=0 // pred_check
    _
  $region7: #{spp_se_preact_bottleneck.9} parent=0 // pred_check_branch
    %12 = sbr.rel (0) target = $region9
  $region8: #{spp_se_preact_bottleneck.9} parent=0 // pred_region
    _
  $region9: #{spp_se_preact_bottleneck.9} parent=0 // pred_fallthru
    _
  // Predicated region
  $region10: #{spp_se_preact_bottleneck.9} parent=0 // pred_check
    _
  $region11: #{spp_se_preact_bottleneck.9} parent=0 // pred_check_branch
    %14 = sbr.rel (0) target = $region13
  $region12: #{spp_se_preact_bottleneck.9} parent=0 // pred_region
    _
  $region13: #{spp_se_preact_bottleneck.9} parent=0 // pred_fallthru
    _
  // Predicated region
  $region14: #{spp_se_preact_bottleneck.9} parent=0 // pred_check
    _
  $region15: #{spp_se_preact_bottleneck.9} parent=0 // pred_check_branch
    %16 = sbr.rel (0) target = $region17
  $region16: #{spp_se_preact_bottleneck.9} parent=0 // pred_region
    _
  $region17: #{spp_se_preact_bottleneck.9} parent=0 // pred_fallthru
    _
  %v17 = vld [vmem:[%s0] sm:$0xf]
  %v18 = vld [vmem:[%s0 + $0x4] sm:$0xf]
  %v19 = vld [vmem:[%s0 + $0x8] sm:$0xf]
  %v20 = vld [vmem:[%s0 + $0xc] sm:$0xf]
  %v21 = vld [vmem:[%s0 + $0x10] sm:$0xf]
  %v22 = vld [vmem:[%s0 + $0x14] sm:$0xf]
  %v23 = vld [vmem:[%s0 + $0x18] sm:$0xf]
  %v24 = vld [vmem:[%s0 + $0x1c] sm:$0xf]
  %v25 = vld [vmem:[%s0 + $0x20] sm:$0xf]
  %v26 = vld [vmem:[%s0 + $0x24] sm:$0xf]
  %v27 = vld [vmem:[%s0 + $0x28] sm:$0xf]
  %v28 = vld [vmem:[%s0 + $0x2c] sm:$0xf]
  %v29 = vld [vmem:[%s0 + $0x30] sm:$0xf]
  %v30 = vld [vmem:[%s0 + $0x34] sm:$0xf]
  %v31 = vld [vmem:[%s0 + $0x38] sm:$0xf]
  %v32 = vld [vmem:[%s0 + $0x3c] sm:$0xf]
  %v33 = vld [vmem:[%s0 + $0x40] sm:$0xf]
  %v34 = vld [vmem:[%s0 + $0x44] sm:$0xf]
  %v35 = vld [vmem:[%s0 + $0x48] sm:$0xf]
  %v36 = vld [vmem:[%s0 + $0x4c] sm:$0xf]
  %v37 = vld [vmem:[%s0 + $0x50] sm:$0xf]
  %v38 = vld [vmem:[%s0 + $0x54] sm:$0xf]
  %v39 = vld [vmem:[%s0 + $0x58] sm:$0xf]
  %v40 = vld [vmem:[%s0 + $0x5c] sm:$0xf]
  %v41 = vld [vmem:[%s0 + $0x60] sm:$0xf]
  %v42 = vld [vmem:[%s0 + $0x64] sm:$0xf]
  %v43 = vld [vmem:[%s0 + $0x68] sm:$0xf]
  %v44 = vld [vmem:[%s0 + $0x6c] sm:$0xf]
  %v45 = vld [vmem:[%s0 + $0x70] sm:$0xf]
  %v46 = vld [vmem:[%s0 + $0x74] sm:$0xf]
  %v47 = vld [vmem:[%s0 + $0x78] sm:$0xf]
  %v48 = vld [vmem:[%s0 + $0x7c] sm:$0xf]
  %v49 = vld [vmem:[%s0 + $0x80] sm:$0xf]
  %v50 = vld [vmem:[%s0 + $0x84] sm:$0xf]
  %v51 = vld [vmem:[%s0 + $0x88] sm:$0xf]
  %v52 = vld [vmem:[%s0 + $0x8c] sm:$0xf]
  %v53 = vld [vmem:[%s0 + $0x90] sm:$0xf]
  %v54 = vld [vmem:[%s0 + $0x94] sm:$0xf]
  %v55 = vld [vmem:[%s0 + $0x98] sm:$0xf]
  %v56 = vld [vmem:[%s0 + $0x9c] sm:$0xf]
  %v57 = vld [vmem:[%s0 + $0xa0] sm:$0xf]
  %v58 = vld [vmem:[%s0 + $0xa4] sm:$0xf]
  %v59 = vld [vmem:[%s0 + $0xa8] sm:$0xf]
  %v60 = vld [vmem:[%s0 + $0xac] sm:$0xf]
  %v61 = vld [vmem:[%s0 + $0xb0] sm:$0xf]
  %v62 = vld [vmem:[%s0 + $0xb4] sm:$0xf]
  %v63 = vld [vmem:[%s0 + $0xb8] sm:$0xf]
  %v64 = vld [vmem:[%s0 + $0xbc] sm:$0xf]
  %v65 = vld [vmem:[%s0 + $0xc0] sm:$0xf]
  %v66 = vld [vmem:[%s0 + $0xc4] sm:$0xf]
  %v67 = vld [vmem:[%s0 + $0xc8] sm:$0xf]
  %v68 = vld [vmem:[%s0 + $0xcc] sm:$0xf]
  %v69 = vld [vmem:[%s0 + $0xd0] sm:$0xf]
  %v70 = vld [vmem:[%s0 + $0xd4] sm:$0xf]
  %v71 = vld [vmem:[%s0 + $0xd8] sm:$0xf]
  %v72 = vld [vmem:[%s0 + $0xdc] sm:$0xf]
  %v73 = vld [vmem:[%s0 + $0xe0] sm:$0xf]
  %v74 = vld [vmem:[%s0 + $0xe4] sm:$0xf]
  %v75 = vld [vmem:[%s0 + $0xe8] sm:$0xf]
  %v76 = vld [vmem:[%s0 + $0xec] sm:$0xf]
  %v77 = vld [vmem:[%s0 + $0xf0] sm:$0xf]
  %v78 = vld [vmem:[%s0 + $0xf4] sm:$0xf]
  %v79 = vld [vmem:[%s0 + $0xf8] sm:$0xf]
  %v80 = vld [vmem:[%s0 + $0xfc] sm:$0xf]
  %v81 = vunpack.c.l.bf16 %v17
  %v82 = vunpack.c.l.bf16 %v18
  %v83 = vunpack.c.l.bf16 %v19
  %v84 = vunpack.c.l.bf16 %v20
  %v85 = vunpack.c.l.bf16 %v21
  %v86 = vunpack.c.l.bf16 %v22
  %v87 = vunpack.c.l.bf16 %v23
  %v88 = vunpack.c.l.bf16 %v24
  %v89 = vunpack.c.l.bf16 %v25
  %v90 = vunpack.c.l.bf16 %v26
  %v91 = vunpack.c.l.bf16 %v27
  %v92 = vunpack.c.l.bf16 %v28
  %v93 = vunpack.c.l.bf16 %v29
  %v94 = vunpack.c.l.bf16 %v30
  %v95 = vunpack.c.l.bf16 %v31
  %v96 = vunpack.c.l.bf16 %v32
  %v97 = vunpack.c.l.bf16 %v33
  %v98 = vunpack.c.l.bf16 %v34
  %v99 = vunpack.c.l.bf16 %v35
  %v100 = vunpack.c.l.bf16 %v36
  %v101 = vunpack.c.l.bf16 %v37
  %v102 = vunpack.c.l.bf16 %v38
  %v103 = vunpack.c.l.bf16 %v39
  %v104 = vunpack.c.l.bf16 %v40
  %v105 = vunpack.c.l.bf16 %v41
  %v106 = vunpack.c.l.bf16 %v42
  %v107 = vunpack.c.l.bf16 %v43
  %v108 = vunpack.c.l.bf16 %v44
  %v109 = vunpack.c.l.bf16 %v45
  %v110 = vunpack.c.l.bf16 %v46
  %v111 = vunpack.c.l.bf16 %v47
  %v112 = vunpack.c.l.bf16 %v48
  %v113 = vunpack.c.l.bf16 %v49
  %v114 = vunpack.c.l.bf16 %v50
  %v115 = vunpack.c.l.bf16 %v51
  %v116 = vunpack.c.l.bf16 %v52
  %v117 = vunpack.c.l.bf16 %v53
  %v118 = vunpack.c.l.bf16 %v54
  %v119 = vunpack.c.l.bf16 %v55
  %v120 = vunpack.c.l.bf16 %v56
  %v121 = vunpack.c.l.bf16 %v57
  %v122 = vunpack.c.l.bf16 %v58
  %v123 = vunpack.c.l.bf16 %v59
  %v124 = vunpack.c.l.bf16 %v60
  %v125 = vunpack.c.l.bf16 %v61
  %v126 = vunpack.c.l.bf16 %v62
  %v127 = vunpack.c.l.bf16 %v63
  %v128 = vunpack.c.l.bf16 %v64
  %v129 = vunpack.c.l.bf16 %v65
  %v130 = vunpack.c.l.bf16 %v66
  %v131 = vunpack.c.l.bf16 %v67
  %v132 = vunpack.c.l.bf16 %v68
  %v133 = vunpack.c.l.bf16 %v69
  %v134 = vunpack.c.l.bf16 %v70
  %v135 = vunpack.c.l.bf16 %v71
  %v136 = vunpack.c.l.bf16 %v72
  %v137 = vunpack.c.l.bf16 %v73
  %v138 = vunpack.c.l.bf16 %v74
  %v139 = vunpack.c.l.bf16 %v75
  %v140 = vunpack.c.l.bf16 %v76
  %v141 = vunpack.c.l.bf16 %v77
  %v142 = vunpack.c.l.bf16 %v78
  %v143 = vunpack.c.l.bf16 %v79
  %v144 = vunpack.c.l.bf16 %v80
  %v145 = vld [vmem:[%s1] sm:$0x1]
  %v147 = vperm.slane %v145, 0
  %v149 = vmul.f32 %v81, %v147
  %v150 = vmul.f32 %v82, %v147
  %v151 = vmul.f32 %v83, %v147
  %v152 = vmul.f32 %v84, %v147
  %v153 = vmul.f32 %v85, %v147
  %v154 = vmul.f32 %v86, %v147
  %v155 = vmul.f32 %v87, %v147
  %v156 = vmul.f32 %v88, %v147
  %v157 = vmul.f32 %v89, %v147
  %v158 = vmul.f32 %v90, %v147
  %v159 = vmul.f32 %v91, %v147
  %v160 = vmul.f32 %v92, %v147
  %v161 = vmul.f32 %v93, %v147
  %v162 = vmul.f32 %v94, %v147
  %v163 = vmul.f32 %v95, %v147
  %v164 = vmul.f32 %v96, %v147
  %v165 = vmul.f32 %v97, %v147
  %v166 = vmul.f32 %v98, %v147
  %v167 = vmul.f32 %v99, %v147
  %v168 = vmul.f32 %v100, %v147
  %v169 = vmul.f32 %v101, %v147
  %v170 = vmul.f32 %v102, %v147
  %v171 = vmul.f32 %v103, %v147
  %v172 = vmul.f32 %v104, %v147
  %v173 = vmul.f32 %v105, %v147
  %v174 = vmul.f32 %v106, %v147
  %v175 = vmul.f32 %v107, %v147
  %v176 = vmul.f32 %v108, %v147
  %v177 = vmul.f32 %v109, %v147
  %v178 = vmul.f32 %v110, %v147
  %v179 = vmul.f32 %v111, %v147
  %v180 = vmul.f32 %v112, %v147
  %v181 = vmul.f32 %v113, %v147
  %v182 = vmul.f32 %v114, %v147
  %v183 = vmul.f32 %v115, %v147
  %v184 = vmul.f32 %v116, %v147
  %v185 = vmul.f32 %v117, %v147
  %v186 = vmul.f32 %v118, %v147
  %v187 = vmul.f32 %v119, %v147
  %v188 = vmul.f32 %v120, %v147
  %v189 = vmul.f32 %v121, %v147
  %v190 = vmul.f32 %v122, %v147
  %v191 = vmul.f32 %v123, %v147
  %v192 = vmul.f32 %v124, %v147
  %v193 = vmul.f32 %v125, %v147
  %v194 = vmul.f32 %v126, %v147
  %v195 = vmul.f32 %v127, %v147
  %v196 = vmul.f32 %v128, %v147
  %v197 = vmul.f32 %v129, %v147
  %v198 = vmul.f32 %v130, %v147
  %v199 = vmul.f32 %v131, %v147
  %v200 = vmul.f32 %v132, %v147
  %v201 = vmul.f32 %v133, %v147
  %v202 = vmul.f32 %v134, %v147
  %v203 = vmul.f32 %v135, %v147
  %v204 = vmul.f32 %v136, %v147
  %v205 = vmul.f32 %v137, %v147
  %v206 = vmul.f32 %v138, %v147
  %v207 = vmul.f32 %v139, %v147
  %v208 = vmul.f32 %v140, %v147
  %v209 = vmul.f32 %v141, %v147
  %v210 = vmul.f32 %v142, %v147
  %v211 = vmul.f32 %v143, %v147
  %v212 = vmul.f32 %v144, %v147
  %v213 = vld [vmem:[%s2] sm:$0x1]
  %v215 = vperm.slane %v213, 0
  %v217 = vadd.f32 %v149, %v215
  %v218 = vadd.f32 %v150, %v215
  %v219 = vadd.f32 %v151, %v215
  %v220 = vadd.f32 %v152, %v215
  %v221 = vadd.f32 %v153, %v215
  %v222 = vadd.f32 %v154, %v215
  %v223 = vadd.f32 %v155, %v215
  %v224 = vadd.f32 %v156, %v215
  %v225 = vadd.f32 %v157, %v215
  %v226 = vadd.f32 %v158, %v215
  %v227 = vadd.f32 %v159, %v215
  %v228 = vadd.f32 %v160, %v215
  %v229 = vadd.f32 %v161, %v215
  %v230 = vadd.f32 %v162, %v215
  %v231 = vadd.f32 %v163, %v215
  %v232 = vadd.f32 %v164, %v215
  %v233 = vadd.f32 %v165, %v215
  %v234 = vadd.f32 %v166, %v215
  %v235 = vadd.f32 %v167, %v215
  %v236 = vadd.f32 %v168, %v215
  %v237 = vadd.f32 %v169, %v215
  %v238 = vadd.f32 %v170, %v215
  %v239 = vadd.f32 %v171, %v215
  %v240 = vadd.f32 %v172, %v215
  %v241 = vadd.f32 %v173, %v215
  %v242 = vadd.f32 %v174, %v215
  %v243 = vadd.f32 %v175, %v215
  %v244 = vadd.f32 %v176, %v215
  %v245 = vadd.f32 %v177, %v215
  %v246 = vadd.f32 %v178, %v215
  %v247 = vadd.f32 %v179, %v215
  %v248 = vadd.f32 %v180, %v215
  %v249 = vadd.f32 %v181, %v215
  %v250 = vadd.f32 %v182, %v215
  %v251 = vadd.f32 %v183, %v215
  %v252 = vadd.f32 %v184, %v215
  %v253 = vadd.f32 %v185, %v215
  %v254 = vadd.f32 %v186, %v215
  %v255 = vadd.f32 %v187, %v215
  %v256 = vadd.f32 %v188, %v215
  %v257 = vadd.f32 %v189, %v215
  %v258 = vadd.f32 %v190, %v215
  %v259 = vadd.f32 %v191, %v215
  %v260 = vadd.f32 %v192, %v215
  %v261 = vadd.f32 %v193, %v215
  %v262 = vadd.f32 %v194, %v215
  %v263 = vadd.f32 %v195, %v215
  %v264 = vadd.f32 %v196, %v215
  %v265 = vadd.f32 %v197, %v215
  %v266 = vadd.f32 %v198, %v215
  %v267 = vadd.f32 %v199, %v215
  %v268 = vadd.f32 %v200, %v215
  %v269 = vadd.f32 %v201, %v215
  %v270 = vadd.f32 %v202, %v215
  %v271 = vadd.f32 %v203, %v215
  %v272 = vadd.f32 %v204, %v215
  %v273 = vadd.f32 %v205, %v215
  %v274 = vadd.f32 %v206, %v215
  %v275 = vadd.f32 %v207, %v215
  %v276 = vadd.f32 %v208, %v215
  %v277 = vadd.f32 %v209, %v215
  %v278 = vadd.f32 %v210, %v215
  %v279 = vadd.f32 %v211, %v215
  %v280 = vadd.f32 %v212, %v215
  %v281 = vmax.f32 %v217, 0.0
  %v282 = vmax.f32 %v218, 0.0
  %v283 = vmax.f32 %v219, 0.0
  %v284 = vmax.f32 %v220, 0.0
  %v285 = vmax.f32 %v221, 0.0
  %v286 = vmax.f32 %v222, 0.0
  %v287 = vmax.f32 %v223, 0.0
  %v288 = vmax.f32 %v224, 0.0
  %v289 = vmax.f32 %v225, 0.0
  %v290 = vmax.f32 %v226, 0.0
  %v291 = vmax.f32 %v227, 0.0
  %v292 = vmax.f32 %v228, 0.0
  %v293 = vmax.f32 %v229, 0.0
  %v294 = vmax.f32 %v230, 0.0
  %v295 = vmax.f32 %v231, 0.0
  %v296 = vmax.f32 %v232, 0.0
  %v297 = vmax.f32 %v233, 0.0
  %v298 = vmax.f32 %v234, 0.0
  %v299 = vmax.f32 %v235, 0.0
  %v300 = vmax.f32 %v236, 0.0
  %v301 = vmax.f32 %v237, 0.0
  %v302 = vmax.f32 %v238, 0.0
  %v303 = vmax.f32 %v239, 0.0
  %v304 = vmax.f32 %v240, 0.0
  %v305 = vmax.f32 %v241, 0.0
  %v306 = vmax.f32 %v242, 0.0
  %v307 = vmax.f32 %v243, 0.0
  %v308 = vmax.f32 %v244, 0.0
  %v309 = vmax.f32 %v245, 0.0
  %v310 = vmax.f32 %v246, 0.0
  %v311 = vmax.f32 %v247, 0.0
  %v312 = vmax.f32 %v248, 0.0
  %v313 = vmax.f32 %v249, 0.0
  %v314 = vmax.f32 %v250, 0.0
  %v315 = vmax.f32 %v251, 0.0
  %v316 = vmax.f32 %v252, 0.0
  %v317 = vmax.f32 %v253, 0.0
  %v318 = vmax.f32 %v254, 0.0
  %v319 = vmax.f32 %v255, 0.0
  %v320 = vmax.f32 %v256, 0.0
  %v321 = vmax.f32 %v257, 0.0
  %v322 = vmax.f32 %v258, 0.0
  %v323 = vmax.f32 %v259, 0.0
  %v324 = vmax.f32 %v260, 0.0
  %v325 = vmax.f32 %v261, 0.0
  %v326 = vmax.f32 %v262, 0.0
  %v327 = vmax.f32 %v263, 0.0
  %v328 = vmax.f32 %v264, 0.0
  %v329 = vmax.f32 %v265, 0.0
  %v330 = vmax.f32 %v266, 0.0
  %v331 = vmax.f32 %v267, 0.0
  %v332 = vmax.f32 %v268, 0.0
  %v333 = vmax.f32 %v269, 0.0
  %v334 = vmax.f32 %v270, 0.0
  %v335 = vmax.f32 %v271, 0.0
  %v336 = vmax.f32 %v272, 0.0
  %v337 = vmax.f32 %v273, 0.0
  %v338 = vmax.f32 %v274, 0.0
  %v339 = vmax.f32 %v275, 0.0
  %v340 = vmax.f32 %v276, 0.0
  %v341 = vmax.f32 %v277, 0.0
  %v342 = vmax.f32 %v278, 0.0
  %v343 = vmax.f32 %v279, 0.0
  %v344 = vmax.f32 %v280, 0.0
  %v345 = vpack.c.bf16 %v282, %v281
  %v346 = vpack.c.bf16 %v284, %v283
  %v347 = vpack.c.bf16 %v286, %v285
  %v348 = vpack.c.bf16 %v288, %v287
  %v349 = vpack.c.bf16 %v290, %v289
  %v350 = vpack.c.bf16 %v292, %v291
  %v351 = vpack.c.bf16 %v294, %v293
  %v352 = vpack.c.bf16 %v296, %v295
  %v353 = vpack.c.bf16 %v298, %v297
  %v354 = vpack.c.bf16 %v300, %v299
  %v355 = vpack.c.bf16 %v302, %v301
  %v356 = vpack.c.bf16 %v304, %v303
  %v357 = vpack.c.bf16 %v306, %v305
  %v358 = vpack.c.bf16 %v308, %v307
  %v359 = vpack.c.bf16 %v310, %v309
  %v360 = vpack.c.bf16 %v312, %v311
  %v361 = vpack.c.bf16 %v314, %v313
  %v362 = vpack.c.bf16 %v316, %v315
  %v363 = vpack.c.bf16 %v318, %v317
  %v364 = vpack.c.bf16 %v320, %v319
  %v365 = vpack.c.bf16 %v322, %v321
  %v366 = vpack.c.bf16 %v324, %v323
  %v367 = vpack.c.bf16 %v326, %v325
  %v368 = vpack.c.bf16 %v328, %v327
  %v369 = vpack.c.bf16 %v330, %v329
  %v370 = vpack.c.bf16 %v332, %v331
  %v371 = vpack.c.bf16 %v334, %v333
  %v372 = vpack.c.bf16 %v336, %v335
  %v373 = vpack.c.bf16 %v338, %v337
  %v374 = vpack.c.bf16 %v340, %v339
  %v375 = vpack.c.bf16 %v342, %v341
  %v376 = vpack.c.bf16 %v344, %v343
  %v377 = vld [vmem:[%s3] sm:$0xf]
  %v378 = vld [vmem:[%s3 + $0x4] sm:$0xf]
  %v379 = vld [vmem:[%s3 + $0x8] sm:$0xf]
  %v380 = vld [vmem:[%s3 + $0xc] sm:$0xf]
  %v381 = vld [vmem:[%s3 + $0x10] sm:$0xf]
  %v382 = vld [vmem:[%s3 + $0x14] sm:$0xf]
  %v383 = vld [vmem:[%s3 + $0x18] sm:$0xf]
  %v384 = vld [vmem:[%s3 + $0x1c] sm:$0xf]
  %v385 = vld [vmem:[%s3 + $0x20] sm:$0xf]
  %v386 = vld [vmem:[%s3 + $0x24] sm:$0xf]
  %v387 = vld [vmem:[%s3 + $0x28] sm:$0xf]
  %v388 = vld [vmem:[%s3 + $0x2c] sm:$0xf]
  %v389 = vld [vmem:[%s3 + $0x30] sm:$0xf]
  %v390 = vld [vmem:[%s3 + $0x34] sm:$0xf]
  %v391 = vld [vmem:[%s3 + $0x38] sm:$0xf]
  %v392 = vld [vmem:[%s3 + $0x3c] sm:$0xf]
  %v409 = vunpack.c.l.b16 %v377
  %v410 = vunpack.c.l.b16 %v378
  %v411 = vunpack.c.l.b16 %v379
  %v412 = vunpack.c.l.b16 %v380
  %v413 = vunpack.c.l.b16 %v381
  %v414 = vunpack.c.l.b16 %v382
  %v415 = vunpack.c.l.b16 %v383
  %v416 = vunpack.c.l.b16 %v384
  %v417 = vunpack.c.l.b16 %v385
  %v418 = vunpack.c.l.b16 %v386
  %v419 = vunpack.c.l.b16 %v387
  %v420 = vunpack.c.l.b16 %v388
  %v421 = vunpack.c.l.b16 %v389
  %v422 = vunpack.c.l.b16 %v390
  %v423 = vunpack.c.l.b16 %v391
  %v424 = vunpack.c.l.b16 %v392
  %v425 = vpack.c.b16 %v410, %v409
  %v426 = vpack.c.b16 %v412, %v411
  %v427 = vpack.c.b16 %v414, %v413
  %v428 = vpack.c.b16 %v416, %v415
  %v429 = vpack.c.b16 %v418, %v417
  %v430 = vpack.c.b16 %v420, %v419
  %v431 = vpack.c.b16 %v422, %v421
  %v432 = vpack.c.b16 %v424, %v423
  %441 = vmatpush.bf16.msra.mxu0 %v432
  %442 = vmatpush.bf16.msra.mxu0 %v431
  %443 = vmatpush.bf16.msra.mxu0 %v430
  %444 = vmatpush.bf16.msra.mxu0 %v429
  %445 = vmatpush.bf16.msra.mxu0 %v428
  %446 = vmatpush.bf16.msra.mxu0 %v427
  %447 = vmatpush.bf16.msra.mxu0 %v426
  %448 = vmatpush.bf16.msra.mxu0 %v425
  %449 = vmatmul.bf16.gmra.mxu0 %v345
  %v450 = vpop.f32.mrf.mxu0
  %v451 = vadd.f32 0.0, %v450
  %v452 = vpop.f32.mrf.mxu0
  %v453 = vadd.f32 0.0, %v452
  %454 = vmatmul.bf16.gmra.mxu0 %v346
  %v455 = vpop.f32.mrf.mxu0
  %v456 = vadd.f32 0.0, %v455
  %v457 = vpop.f32.mrf.mxu0
  %v458 = vadd.f32 0.0, %v457
  %459 = vmatmul.bf16.gmra.mxu0 %v347
  %v460 = vpop.f32.mrf.mxu0
  %v461 = vadd.f32 0.0, %v460
  %v462 = vpop.f32.mrf.mxu0
  %v463 = vadd.f32 0.0, %v462
  %464 = vmatmul.bf16.gmra.mxu0 %v348
  %v465 = vpop.f32.mrf.mxu0
  %v466 = vadd.f32 0.0, %v465
  %v467 = vpop.f32.mrf.mxu0
  %v468 = vadd.f32 0.0, %v467
  %469 = vmatmul.bf16.gmra.mxu0 %v349
  %v470 = vpop.f32.mrf.mxu0
  %v471 = vadd.f32 0.0, %v470
  %v472 = vpop.f32.mrf.mxu0
  %v473 = vadd.f32 0.0, %v472
  %474 = vmatmul.bf16.gmra.mxu0 %v350
  %v475 = vpop.f32.mrf.mxu0
  %v476 = vadd.f32 0.0, %v475
  %v477 = vpop.f32.mrf.mxu0
  %v478 = vadd.f32 0.0, %v477
  %479 = vmatmul.bf16.gmra.mxu0 %v351
  %v480 = vpop.f32.mrf.mxu0
  %v481 = vadd.f32 0.0, %v480
  %v482 = vpop.f32.mrf.mxu0
  %v483 = vadd.f32 0.0, %v482
  %484 = vmatmul.bf16.gmra.mxu0 %v352
  %v485 = vpop.f32.mrf.mxu0
  %v486 = vadd.f32 0.0, %v485
  %v487 = vpop.f32.mrf.mxu0
  %v488 = vadd.f32 0.0, %v487
  %489 = vmatmul.bf16.gmra.mxu0 %v353
  %v490 = vpop.f32.mrf.mxu0
  %v491 = vadd.f32 0.0, %v490
  %v492 = vpop.f32.mrf.mxu0
  %v493 = vadd.f32 0.0, %v492
  %494 = vmatmul.bf16.gmra.mxu0 %v354
  %v495 = vpop.f32.mrf.mxu0
  %v496 = vadd.f32 0.0, %v495
  %v497 = vpop.f32.mrf.mxu0
  %v498 = vadd.f32 0.0, %v497
  %499 = vmatmul.bf16.gmra.mxu0 %v355
  %v500 = vpop.f32.mrf.mxu0
  %v501 = vadd.f32 0.0, %v500
  %v502 = vpop.f32.mrf.mxu0
  %v503 = vadd.f32 0.0, %v502
  %504 = vmatmul.bf16.gmra.mxu0 %v356
  %v505 = vpop.f32.mrf.mxu0
  %v506 = vadd.f32 0.0, %v505
  %v507 = vpop.f32.mrf.mxu0
  %v508 = vadd.f32 0.0, %v507
  %509 = vmatmul.bf16.gmra.mxu0 %v357
  %v510 = vpop.f32.mrf.mxu0
  %v511 = vadd.f32 0.0, %v510
  %v512 = vpop.f32.mrf.mxu0
  %v513 = vadd.f32 0.0, %v512
  %514 = vmatmul.bf16.gmra.mxu0 %v358
  %v515 = vpop.f32.mrf.mxu0
  %v516 = vadd.f32 0.0, %v515
  %v517 = vpop.f32.mrf.mxu0
  %v518 = vadd.f32 0.0, %v517
  %519 = vmatmul.bf16.gmra.mxu0 %v359
  %v520 = vpop.f32.mrf.mxu0
  %v521 = vadd.f32 0.0, %v520
  %v522 = vpop.f32.mrf.mxu0
  %v523 = vadd.f32 0.0, %v522
  %524 = vmatmul.bf16.gmra.mxu0 %v360
  %v525 = vpop.f32.mrf.mxu0
  %v526 = vadd.f32 0.0, %v525
  %v527 = vpop.f32.mrf.mxu0
  %v528 = vadd.f32 0.0, %v527
  %529 = vmatmul.bf16.gmra.mxu0 %v361
  %v530 = vpop.f32.mrf.mxu0
  %v531 = vadd.f32 0.0, %v530
  %v532 = vpop.f32.mrf.mxu0
  %v533 = vadd.f32 0.0, %v532
  %534 = vmatmul.bf16.gmra.mxu0 %v362
  %v535 = vpop.f32.mrf.mxu0
  %v536 = vadd.f32 0.0, %v535
  %v537 = vpop.f32.mrf.mxu0
  %v538 = vadd.f32 0.0, %v537
  %539 = vmatmul.bf16.gmra.mxu0 %v363
  %v540 = vpop.f32.mrf.mxu0
  %v541 = vadd.f32 0.0, %v540
  %v542 = vpop.f32.mrf.mxu0
  %v543 = vadd.f32 0.0, %v542
  %544 = vmatmul.bf16.gmra.mxu0 %v364
  %v545 = vpop.f32.mrf.mxu0
  %v546 = vadd.f32 0.0, %v545
  %v547 = vpop.f32.mrf.mxu0
  %v548 = vadd.f32 0.0, %v547
  %549 = vmatmul.bf16.gmra.mxu0 %v365
  %v550 = vpop.f32.mrf.mxu0
  %v551 = vadd.f32 0.0, %v550
  %v552 = vpop.f32.mrf.mxu0
  %v553 = vadd.f32 0.0, %v552
  %554 = vmatmul.bf16.gmra.mxu0 %v366
  %v555 = vpop.f32.mrf.mxu0
  %v556 = vadd.f32 0.0, %v555
  %v557 = vpop.f32.mrf.mxu0
  %v558 = vadd.f32 0.0, %v557
  %559 = vmatmul.bf16.gmra.mxu0 %v367
  %v560 = vpop.f32.mrf.mxu0
  %v561 = vadd.f32 0.0, %v560
  %v562 = vpop.f32.mrf.mxu0
  %v563 = vadd.f32 0.0, %v562
  %564 = vmatmul.bf16.gmra.mxu0 %v368
  %v565 = vpop.f32.mrf.mxu0
  %v566 = vadd.f32 0.0, %v565
  %v567 = vpop.f32.mrf.mxu0
  %v568 = vadd.f32 0.0, %v567
  %569 = vmatmul.bf16.gmra.mxu0 %v369
  %v570 = vpop.f32.mrf.mxu0
  %v571 = vadd.f32 0.0, %v570
  %v572 = vpop.f32.mrf.mxu0
  %v573 = vadd.f32 0.0, %v572
  %574 = vmatmul.bf16.gmra.mxu0 %v370
  %v575 = vpop.f32.mrf.mxu0
  %v576 = vadd.f32 0.0, %v575
  %v577 = vpop.f32.mrf.mxu0
  %v578 = vadd.f32 0.0, %v577
  %579 = vmatmul.bf16.gmra.mxu0 %v371
  %v580 = vpop.f32.mrf.mxu0
  %v581 = vadd.f32 0.0, %v580
  %v582 = vpop.f32.mrf.mxu0
  %v583 = vadd.f32 0.0, %v582
  %584 = vmatmul.bf16.gmra.mxu0 %v372
  %v585 = vpop.f32.mrf.mxu0
  %v586 = vadd.f32 0.0, %v585
  %v587 = vpop.f32.mrf.mxu0
  %v588 = vadd.f32 0.0, %v587
  %589 = vmatmul.bf16.gmra.mxu0 %v373
  %v590 = vpop.f32.mrf.mxu0
  %v591 = vadd.f32 0.0, %v590
  %v592 = vpop.f32.mrf.mxu0
  %v593 = vadd.f32 0.0, %v592
  %594 = vmatmul.bf16.gmra.mxu0 %v374
  %v595 = vpop.f32.mrf.mxu0
  %v596 = vadd.f32 0.0, %v595
  %v597 = vpop.f32.mrf.mxu0
  %v598 = vadd.f32 0.0, %v597
  %599 = vmatmul.bf16.gmra.mxu0 %v375
  %v600 = vpop.f32.mrf.mxu0
  %v601 = vadd.f32 0.0, %v600
  %v602 = vpop.f32.mrf.mxu0
  %v603 = vadd.f32 0.0, %v602
  %604 = vmatmul.bf16.gmra.mxu0 %v376
  %v605 = vpop.f32.mrf.mxu0
  %v606 = vadd.f32 0.0, %v605
  %v607 = vpop.f32.mrf.mxu0
  %v608 = vadd.f32 0.0, %v607
  %609 = vdwg.mxu0
  %v610 = vpack.c.bf16 %v451, %v451
  %v611 = vpack.c.bf16 %v453, %v453
  %v612 = vpack.c.bf16 %v456, %v456
  %v613 = vpack.c.bf16 %v458, %v458
  %v614 = vpack.c.bf16 %v461, %v461
  %v615 = vpack.c.bf16 %v463, %v463
  %v616 = vpack.c.bf16 %v466, %v466
  %v617 = vpack.c.bf16 %v468, %v468
  %v618 = vpack.c.bf16 %v471, %v471
  %v619 = vpack.c.bf16 %v473, %v473
  %v620 = vpack.c.bf16 %v476, %v476
  %v621 = vpack.c.bf16 %v478, %v478
  %v622 = vpack.c.bf16 %v481, %v481
  %v623 = vpack.c.bf16 %v483, %v483
  %v624 = vpack.c.bf16 %v486, %v486
  %v625 = vpack.c.bf16 %v488, %v488
  %v626 = vpack.c.bf16 %v491, %v491
  %v627 = vpack.c.bf16 %v493, %v493
  %v628 = vpack.c.bf16 %v496, %v496
  %v629 = vpack.c.bf16 %v498, %v498
  %v630 = vpack.c.bf16 %v501, %v501
  %v631 = vpack.c.bf16 %v503, %v503
  %v632 = vpack.c.bf16 %v506, %v506
  %v633 = vpack.c.bf16 %v508, %v508
  %v634 = vpack.c.bf16 %v511, %v511
  %v635 = vpack.c.bf16 %v513, %v513
  %v636 = vpack.c.bf16 %v516, %v516
  %v637 = vpack.c.bf16 %v518, %v518
  %v638 = vpack.c.bf16 %v521, %v521
  %v639 = vpack.c.bf16 %v523, %v523
  %v640 = vpack.c.bf16 %v526, %v526
  %v641 = vpack.c.bf16 %v528, %v528
  %v642 = vpack.c.bf16 %v531, %v531
  %v643 = vpack.c.bf16 %v533, %v533
  %v644 = vpack.c.bf16 %v536, %v536
  %v645 = vpack.c.bf16 %v538, %v538
  %v646 = vpack.c.bf16 %v541, %v541
  %v647 = vpack.c.bf16 %v543, %v543
  %v648 = vpack.c.bf16 %v546, %v546
  %v649 = vpack.c.bf16 %v548, %v548
  %v650 = vpack.c.bf16 %v551, %v551
  %v651 = vpack.c.bf16 %v553, %v553
  %v652 = vpack.c.bf16 %v556, %v556
  %v653 = vpack.c.bf16 %v558, %v558
  %v654 = vpack.c.bf16 %v561, %v561
  %v655 = vpack.c.bf16 %v563, %v563
  %v656 = vpack.c.bf16 %v566, %v566
  %v657 = vpack.c.bf16 %v568, %v568
  %v658 = vpack.c.bf16 %v571, %v571
  %v659 = vpack.c.bf16 %v573, %v573
  %v660 = vpack.c.bf16 %v576, %v576
  %v661 = vpack.c.bf16 %v578, %v578
  %v662 = vpack.c.bf16 %v581, %v581
  %v663 = vpack.c.bf16 %v583, %v583
  %v664 = vpack.c.bf16 %v586, %v586
  %v665 = vpack.c.bf16 %v588, %v588
  %v666 = vpack.c.bf16 %v591, %v591
  %v667 = vpack.c.bf16 %v593, %v593
  %v668 = vpack.c.bf16 %v596, %v596
  %v669 = vpack.c.bf16 %v598, %v598
  %v670 = vpack.c.bf16 %v601, %v601
  %v671 = vpack.c.bf16 %v603, %v603
  %v672 = vpack.c.bf16 %v606, %v606
  %v673 = vpack.c.bf16 %v608, %v608
  %674 = vst [vmem:[%s4] sm:$0xf] %v610
  %675 = vst [vmem:[%s4 + $0x4] sm:$0xf] %v611
  %676 = vst [vmem:[%s4 + $0x8] sm:$0xf] %v612
  %677 = vst [vmem:[%s4 + $0xc] sm:$0xf] %v613
  %678 = vst [vmem:[%s4 + $0x10] sm:$0xf] %v614
  %679 = vst [vmem:[%s4 + $0x14] sm:$0xf] %v615
  %680 = vst [vmem:[%s4 + $0x18] sm:$0xf] %v616
  %681 = vst [vmem:[%s4 + $0x1c] sm:$0xf] %v617
  %682 = vst [vmem:[%s4 + $0x20] sm:$0xf] %v618
  %683 = vst [vmem:[%s4 + $0x24] sm:$0xf] %v619
  %684 = vst [vmem:[%s4 + $0x28] sm:$0xf] %v620
  %685 = vst [vmem:[%s4 + $0x2c] sm:$0xf] %v621
  %686 = vst [vmem:[%s4 + $0x30] sm:$0xf] %v622
  %687 = vst [vmem:[%s4 + $0x34] sm:$0xf] %v623
  %688 = vst [vmem:[%s4 + $0x38] sm:$0xf] %v624
  %689 = vst [vmem:[%s4 + $0x3c] sm:$0xf] %v625
  %690 = vst [vmem:[%s4 + $0x40] sm:$0xf] %v626
  %691 = vst [vmem:[%s4 + $0x44] sm:$0xf] %v627
  %692 = vst [vmem:[%s4 + $0x48] sm:$0xf] %v628
  %693 = vst [vmem:[%s4 + $0x4c] sm:$0xf] %v629
  %694 = vst [vmem:[%s4 + $0x50] sm:$0xf] %v630
  %695 = vst [vmem:[%s4 + $0x54] sm:$0xf] %v631
  %696 = vst [vmem:[%s4 + $0x58] sm:$0xf] %v632
  %697 = vst [vmem:[%s4 + $0x5c] sm:$0xf] %v633
  %698 = vst [vmem:[%s4 + $0x60] sm:$0xf] %v634
  %699 = vst [vmem:[%s4 + $0x64] sm:$0xf] %v635
  %700 = vst [vmem:[%s4 + $0x68] sm:$0xf] %v636
  %701 = vst [vmem:[%s4 + $0x6c] sm:$0xf] %v637
  %702 = vst [vmem:[%s4 + $0x70] sm:$0xf] %v638
  %703 = vst [vmem:[%s4 + $0x74] sm:$0xf] %v639
  %704 = vst [vmem:[%s4 + $0x78] sm:$0xf] %v640
  %705 = vst [vmem:[%s4 + $0x7c] sm:$0xf] %v641
  %706 = vst [vmem:[%s4 + $0x80] sm:$0xf] %v642
  %707 = vst [vmem:[%s4 + $0x84] sm:$0xf] %v643
  %708 = vst [vmem:[%s4 + $0x88] sm:$0xf] %v644
  %709 = vst [vmem:[%s4 + $0x8c] sm:$0xf] %v645
  %710 = vst [vmem:[%s4 + $0x90] sm:$0xf] %v646
  %711 = vst [vmem:[%s4 + $0x94] sm:$0xf] %v647
  %712 = vst [vmem:[%s4 + $0x98] sm:$0xf] %v648
  %713 = vst [vmem:[%s4 + $0x9c] sm:$0xf] %v649
  %714 = vst [vmem:[%s4 + $0xa0] sm:$0xf] %v650
  %715 = vst [vmem:[%s4 + $0xa4] sm:$0xf] %v651
  %716 = vst [vmem:[%s4 + $0xa8] sm:$0xf] %v652
  %717 = vst [vmem:[%s4 + $0xac] sm:$0xf] %v653
  %718 = vst [vmem:[%s4 + $0xb0] sm:$0xf] %v654
  %719 = vst [vmem:[%s4 + $0xb4] sm:$0xf] %v655
  %720 = vst [vmem:[%s4 + $0xb8] sm:$0xf] %v656
  %721 = vst [vmem:[%s4 + $0xbc] sm:$0xf] %v657
  %722 = vst [vmem:[%s4 + $0xc0] sm:$0xf] %v658
  %723 = vst [vmem:[%s4 + $0xc4] sm:$0xf] %v659
  %724 = vst [vmem:[%s4 + $0xc8] sm:$0xf] %v660
  %725 = vst [vmem:[%s4 + $0xcc] sm:$0xf] %v661
  %726 = vst [vmem:[%s4 + $0xd0] sm:$0xf] %v662
  %727 = vst [vmem:[%s4 + $0xd4] sm:$0xf] %v663
  %728 = vst [vmem:[%s4 + $0xd8] sm:$0xf] %v664
  %729 = vst [vmem:[%s4 + $0xdc] sm:$0xf] %v665
  %730 = vst [vmem:[%s4 + $0xe0] sm:$0xf] %v666
  %731 = vst [vmem:[%s4 + $0xe4] sm:$0xf] %v667
  %732 = vst [vmem:[%s4 + $0xe8] sm:$0xf] %v668
  %733 = vst [vmem:[%s4 + $0xec] sm:$0xf] %v669
  %734 = vst [vmem:[%s4 + $0xf0] sm:$0xf] %v670
  %735 = vst [vmem:[%s4 + $0xf4] sm:$0xf] %v671
  %736 = vst [vmem:[%s4 + $0xf8] sm:$0xf] %v672
  %737 = vst [vmem:[%s4 + $0xfc] sm:$0xf] %v673
  // Predicated region
  $region18: #{spp_se_preact_bottleneck.9} parent=0 // pred_check
    _
  $region19: #{spp_se_preact_bottleneck.9} parent=0 // pred_check_branch
    %739 = sbr.rel (0) target = $region21
  $region20: #{spp_se_preact_bottleneck.9} parent=0 // pred_region
    _
  $region21: #{spp_se_preact_bottleneck.9} parent=0 // pred_fallthru
    _
  // Predicated region
  $region22: #{spp_se_preact_bottleneck.9} parent=0 // pred_check
    _
  $region23: #{spp_se_preact_bottleneck.9} parent=0 // pred_check_branch
    %741 = sbr.rel (0) target = $region25
  $region24: #{spp_se_preact_bottleneck.9} parent=0 // pred_region
    _
  $region25: #{spp_se_preact_bottleneck.9} parent=0 // pred_fallthru
    _

// kernel: spp_se_preact_bottleneck.8
$region0: #{spp_se_preact_bottleneck.8}
  #allocation0 [shape = 'u32[]', space=smem, size = 0x4, offset = 0x4, fixed_abs, tag = 'smem constant byte address 0x4 - core index']
  #allocation1 [shape = 'u32[72,128]{1,0:T(1,128)}', space=vmem, size = 0x9000, scoped, tag = 'internal scratch']
  #allocation2 [shape = 'f32[18,18,128]{2,1,0:T(8,128)}', space=vmem, size = 0x36000, scoped, tag = 'scratch operand']
  %s0 = inlined_call_operand.vmem [shape: bf16[2,16,16,128], index: 0, kind: input, shape index: {}]
  %s1 = inlined_call_operand.vmem [shape: f32[1,128], index: 1, kind: input, shape index: {}]
  %s2 = inlined_call_operand.vmem [shape: f32[1,128], index: 2, kind: input, shape index: {}]
  %s3 = inlined_call_operand.vmem [shape: bf16[9,128,128], index: 3, kind: input, shape index: {}]
  %s4 = inlined_call_operand.vmem [shape: bf16[2,16,16,128], index: 4, kind: output, shape index: {0}]
  %s5 = inlined_call_operand.vmem [shape: f32[2,2,128], index: 5, kind: output, shape index: {1}]
  %6 = xla_tuple %s4, %s5
  %s7 = sld [smem:[#allocation0]]
  $region57: #{spp_se_preact_bottleneck.8} parent=0
    _
  %s9 = ssub.s32 1, %s7
  %s10 = scalar_select 0, %s9, %s7
  loop: start=0, step=1, limit=4
  $region2: #{spp_se_preact_bottleneck.8} parent=0 // loop_pre_header
    _
  $region3: #{spp_se_preact_bottleneck.8} parent=0 // loop_header
    %s12 = sphi 0, %s16
    %p13 = scmp.ge.s32.totalorder %s12, 4
    %s22 = sphi 0, %s24
    %s25 = sphi 0, %s22
    %s26 = sphi 0, %s25
    %s42 = sphi 0, %s26
    %s46 = sphi 0, %s46
    %s48 = sphi 0, %s46
    %s49 = sphi 0, %s48
    %s63 = sphi 0, %s49
    %s67 = sphi 0, %s67
    %s69 = sphi 0, %s67
    %s70 = sphi 0, %s69
    %s84 = sphi 0, %s70
    %s88 = sphi 0, %s88
    %s90 = sphi 0, %s88
    %s91 = sphi 0, %s90
    %s105 = sphi 0, %s91
    %s111 = sphi 0, %s113
    %s114 = sphi 0, %s111
    %s115 = sphi 0, %s114
    %s131 = sphi 0, %s115
    %s137 = sphi 0, %s139
    %s140 = sphi 0, %s137
    %s141 = sphi 0, %s140
    %s157 = sphi 0, %s141
  $region4: #{spp_se_preact_bottleneck.8} parent=0 // loop_header_branch
    %15 = sbr.rel (%p13) target = $region8
  $region5: #{spp_se_preact_bottleneck.8} parent=0 // loop_body
    %s17 = ssub.s32 %s12, 1
    %s18 = ssub.s32 %s12, 2
    %s19 = sadd.s32 %s12, 1
    %s20 = ssub.s32 %s12, %s19
    %p21 = scmp.eq.s32.totalorder %s20, 0
    %s23 = sadd.s32 %s22, 1
    %s24 = scalar_select %p21, %s22, %s23
    %p27 = pneg %p21
    %p28 = scmp.eq.s32.totalorder %s12, 1
    %p29 = por %p27, %p28
    %p30 = scmp.ne.s32.totalorder %s22, %s25
    %p31 = scmp.eq.s32.totalorder %s12, 0
    %p32 = por %p30, %p31
    %p33 = scmp.ne.s32.totalorder %s22, %s25
    %p34 = scmp.eq.s32.totalorder %s17, 1
    %p35 = por %p33, %p34
    %p36 = scmp.ne.s32.totalorder %s25, %s26
    %p37 = scmp.eq.s32.totalorder %s17, 0
    %p38 = por %p36, %p37
    %p39 = scmp.ne.s32.totalorder %s25, %s26
    %p40 = scmp.eq.s32.totalorder %s18, 1
    %p41 = por %p39, %p40
    %p43 = scmp.ne.s32.totalorder %s26, %s42
    %p44 = scmp.eq.s32.totalorder %s18, 0
    %p45 = por %p43, %p44
    %s47 = sadd.s32 %s46, 1
    %p50 = scmp.eq.s32.totalorder %s12, 1
    %p51 = scmp.ne.s32.totalorder %s46, %s48
    %p52 = scmp.eq.s32.totalorder %s12, 0
    %p53 = por %p51, %p52
    %p54 = scmp.ne.s32.totalorder %s46, %s48
    %p55 = scmp.eq.s32.totalorder %s17, 1
    %p56 = por %p54, %p55
    %p57 = scmp.ne.s32.totalorder %s48, %s49
    %p58 = scmp.eq.s32.totalorder %s17, 0
    %p59 = por %p57, %p58
    %p60 = scmp.ne.s32.totalorder %s48, %s49
    %p61 = scmp.eq.s32.totalorder %s18, 1
    %p62 = por %p60, %p61
    %p64 = scmp.ne.s32.totalorder %s49, %s63
    %p65 = scmp.eq.s32.totalorder %s18, 0
    %p66 = por %p64, %p65
    %s68 = sadd.s32 %s67, 1
    %p71 = scmp.eq.s32.totalorder %s12, 1
    %p72 = scmp.ne.s32.totalorder %s67, %s69
    %p73 = scmp.eq.s32.totalorder %s12, 0
    %p74 = por %p72, %p73
    %p75 = scmp.ne.s32.totalorder %s67, %s69
    %p76 = scmp.eq.s32.totalorder %s17, 1
    %p77 = por %p75, %p76
    %p78 = scmp.ne.s32.totalorder %s69, %s70
    %p79 = scmp.eq.s32.totalorder %s17, 0
    %p80 = por %p78, %p79
    %p81 = scmp.ne.s32.totalorder %s69, %s70
    %p82 = scmp.eq.s32.totalorder %s18, 1
    %p83 = por %p81, %p82
    %p85 = scmp.ne.s32.totalorder %s70, %s84
    %p86 = scmp.eq.s32.totalorder %s18, 0
    %p87 = por %p85, %p86
    %s89 = sadd.s32 %s88, 1
    %p92 = scmp.eq.s32.totalorder %s12, 1
    %p93 = scmp.ne.s32.totalorder %s88, %s90
    %p94 = scmp.eq.s32.totalorder %s12, 0
    %p95 = por %p93, %p94
    %p96 = scmp.ne.s32.totalorder %s88, %s90
    %p97 = scmp.eq.s32.totalorder %s17, 1
    %p98 = por %p96, %p97
    %p99 = scmp.ne.s32.totalorder %s90, %s91
    %p100 = scmp.eq.s32.totalorder %s17, 0
    %p101 = por %p99, %p100
    %p102 = scmp.ne.s32.totalorder %s90, %s91
    %p103 = scmp.eq.s32.totalorder %s18, 1
    %p104 = por %p102, %p103
    %p106 = scmp.ne.s32.totalorder %s91, %s105
    %p107 = scmp.eq.s32.totalorder %s18, 0
    %p108 = por %p106, %p107
    %s109 = ssub.s32 %s12, %s19
    %p110 = scmp.eq.s32.totalorder %s109, 0
    %s112 = sadd.s32 %s111, 1
    %s113 = scalar_select %p110, %s111, %s112
    %p116 = pneg %p110
    %p117 = scmp.eq.s32.totalorder %s12, 1
    %p118 = por %p116, %p117
    %p119 = scmp.ne.s32.totalorder %s111, %s114
    %p120 = scmp.eq.s32.totalorder %s12, 0
    %p121 = por %p119, %p120
    %p122 = scmp.ne.s32.totalorder %s111, %s114
    %p123 = scmp.eq.s32.totalorder %s17, 1
    %p124 = por %p122, %p123
    %p125 = scmp.ne.s32.totalorder %s114, %s115
    %p126 = scmp.eq.s32.totalorder %s17, 0
    %p127 = por %p125, %p126
    %p128 = scmp.ne.s32.totalorder %s114, %s115
    %p129 = scmp.eq.s32.totalorder %s18, 1
    %p130 = por %p128, %p129
    %p132 = scmp.ne.s32.totalorder %s115, %s131
    %p133 = scmp.eq.s32.totalorder %s18, 0
    %p134 = por %p132, %p133
    %s135 = ssub.s32 %s12, %s19
    %p136 = scmp.eq.s32.totalorder %s135, 0
    %s138 = sadd.s32 %s137, 1
    %s139 = scalar_select %p136, %s137, %s138
    %p142 = pneg %p136
    %p143 = scmp.eq.s32.totalorder %s12, 1
    %p144 = por %p142, %p143
    %p145 = scmp.ne.s32.totalorder %s137, %s140
    %p146 = scmp.eq.s32.totalorder %s12, 0
    %p147 = por %p145, %p146
    %p148 = scmp.ne.s32.totalorder %s137, %s140
    %p149 = scmp.eq.s32.totalorder %s17, 1
    %p150 = por %p148, %p149
    %p151 = scmp.ne.s32.totalorder %s140, %s141
    %p152 = scmp.eq.s32.totalorder %s17, 0
    %p153 = por %p151, %p152
    %p154 = scmp.ne.s32.totalorder %s140, %s141
    %p155 = scmp.eq.s32.totalorder %s18, 1
    %p156 = por %p154, %p155
    %p158 = scmp.ne.s32.totalorder %s141, %s157
    %p159 = scmp.eq.s32.totalorder %s18, 0
    %p160 = por %p158, %p159
    %p161 = scmp.le.s32.totalorder 1, %s12
    %p162 = scmp.lt.s32.totalorder %s12, 3
    %p163 = pnand %p161, %p162
    %p164 = pneg %p163
    // Predicated region
    $region9: #{spp_se_preact_bottleneck.8} parent=5 // pred_check
      _
    $region10: #{spp_se_preact_bottleneck.8} parent=5 // pred_check_branch
      %166 = sbr.rel (%p163) target = $region12
    $region11: #{spp_se_preact_bottleneck.8} parent=5 // pred_region
      %s167 = ssub.s32 %s12, 1
      // Predicated region
      $region13: #{spp_se_preact_bottleneck.8} parent=11 // pred_check
        %p168 = pneg %p59
      $region14: #{spp_se_preact_bottleneck.8} parent=11 // pred_check_branch
        %170 = sbr.rel (%p168) target = $region16
      $region15: #{spp_se_preact_bottleneck.8} parent=11 // pred_region
        _
      $region16: #{spp_se_preact_bottleneck.8} parent=11 // pred_fallthru
        _
      // Predicated region
      $region17: #{spp_se_preact_bottleneck.8} parent=11 // pred_check
        %p171 = pneg %p80
      $region18: #{spp_se_preact_bottleneck.8} parent=11 // pred_check_branch
        %173 = sbr.rel (%p171) target = $region20
      $region19: #{spp_se_preact_bottleneck.8} parent=11 // pred_region
        _
      $region20: #{spp_se_preact_bottleneck.8} parent=11 // pred_fallthru
        _
      // Predicated region
      $region21: #{spp_se_preact_bottleneck.8} parent=11 // pred_check
        %p174 = pneg %p101
      $region22: #{spp_se_preact_bottleneck.8} parent=11 // pred_check_branch
        %176 = sbr.rel (%p174) target = $region24
      $region23: #{spp_se_preact_bottleneck.8} parent=11 // pred_region
        _
      $region24: #{spp_se_preact_bottleneck.8} parent=11 // pred_fallthru
        _
    $region12: #{spp_se_preact_bottleneck.8} parent=5 // pred_fallthru
      _
    %p177 = scmp.lt.s32.totalorder %s12, 2
    // Predicated region
    $region25: #{spp_se_preact_bottleneck.8} parent=5 // pred_check
      %p178 = pneg %p177
    $region26: #{spp_se_preact_bottleneck.8} parent=5 // pred_check_branch
      %180 = sbr.rel (%p178) target = $region28
    $region27: #{spp_se_preact_bottleneck.8} parent=5 // pred_region
      // Predicated region
      $region29: #{spp_se_preact_bottleneck.8} parent=27 // pred_check
        %p181 = pneg %p32
      $region30: #{spp_se_preact_bottleneck.8} parent=27 // pred_check_branch
        %183 = sbr.rel (%p181) target = $region32
      $region31: #{spp_se_preact_bottleneck.8} parent=27 // pred_region
        %p184 = scmp.lt.s32.totalorder %s12, 1
        %s185 = scalar_select %p184, %s12, 1
        %s186 = smul.addr %s185, 32
        %s187 = smul.addr %s186, 4
        %s188 = scalar_lea.vmem %s0, %s187
      $region32: #{spp_se_preact_bottleneck.8} parent=27 // pred_fallthru
        _
    $region28: #{spp_se_preact_bottleneck.8} parent=5 // pred_fallthru
      _
    %p189 = scmp.le.s32.totalorder 1, %s12
    %p190 = scmp.lt.s32.totalorder %s12, 3
    %p191 = pnand %p189, %p190
    %p192 = pneg %p191
    // Predicated region
    $region33: #{spp_se_preact_bottleneck.8} parent=5 // pred_check
      _
    $region34: #{spp_se_preact_bottleneck.8} parent=5 // pred_check_branch
      %194 = sbr.rel (%p191) target = $region36
    $region35: #{spp_se_preact_bottleneck.8} parent=5 // pred_region
      %s195 = ssub.s32 %s12, 1
      %p196 = scmp.lt.s32.totalorder %s17, 1
      %s197 = scalar_select %p196, %s17, 1
      %s198 = smul.addr %s197, 32
      %s199 = smul.addr %s198, 4
      %s200 = scalar_lea.vmem %s0, %s199
      %p201 = pneg %p38
      %p202 = pneg %p35
      %p203 = pneg %p59
      %p204 = pneg %p56
      %p205 = pneg %p80
      %p206 = pneg %p77
      %p207 = pneg %p101
      %p208 = pneg %p98
      %p209 = pneg %p127
      %p210 = pneg %p124
      %p211 = scmp.lt.s32.totalorder %s17, 1
      %s212 = scalar_select %p211, %s17, 1
      %s213 = smul.addr %s212, 32
      %s214 = smul.addr %s213, 4
      %s215 = scalar_lea.vmem %s4, %s214
      %p216 = pneg %p153
      %p217 = pneg %p150
      %p218 = scmp.lt.s32.totalorder %s17, 1
      %s219 = scalar_select %p218, %s17, 1
      %s220 = smul.addr %s219, 2
      %s221 = scalar_lea.vmem %s5, %s220
      %p222 = scmp.lt.s32.totalorder %s17, 1
      %s223 = scalar_select %p222, %s17, 1
      %s224 = smul.addr %s223, 32
      %s225 = smul.addr %s224, 4
      %s226 = scalar_lea.vmem %s0, %s225
      %p227 = scmp.lt.s32.totalorder %s17, 1
      %s228 = scalar_select %p227, %s17, 1
      %s229 = smul.addr %s228, 32
      %s230 = smul.addr %s229, 4
      %s231 = scalar_lea.vmem %s4, %s230
      %p232 = scmp.lt.s32.totalorder %s17, 1
      %s233 = scalar_select %p232, %s17, 1
      %s234 = smul.addr %s233, 2
      %s235 = scalar_lea.vmem %s5, %s234
      %v236 = vld [vmem:[%s226] sm:$0xf]
      %v237 = vld [vmem:[%s226 + $0x4] sm:$0xf]
      %v238 = vld [vmem:[%s226 + $0x8] sm:$0xf]
      %v239 = vld [vmem:[%s226 + $0xc] sm:$0xf]
      %v240 = vld [vmem:[%s226 + $0x10] sm:$0xf]
      %v241 = vld [vmem:[%s226 + $0x14] sm:$0xf]
      %v242 = vld [vmem:[%s226 + $0x18] sm:$0xf]
      %v243 = vld [vmem:[%s226 + $0x1c] sm:$0xf]
      %v244 = vld [vmem:[%s226 + $0x20] sm:$0xf]
      %v245 = vld [vmem:[%s226 + $0x24] sm:$0xf]
      %v246 = vld [vmem:[%s226 + $0x28] sm:$0xf]
      %v247 = vld [vmem:[%s226 + $0x2c] sm:$0xf]
      %v248 = vld [vmem:[%s226 + $0x30] sm:$0xf]
      %v249 = vld [vmem:[%s226 + $0x34] sm:$0xf]
      %v250 = vld [vmem:[%s226 + $0x38] sm:$0xf]
      %v251 = vld [vmem:[%s226 + $0x3c] sm:$0xf]
      %v252 = vld [vmem:[%s226 + $0x40] sm:$0xf]
      %v253 = vld [vmem:[%s226 + $0x44] sm:$0xf]
      %v254 = vld [vmem:[%s226 + $0x48] sm:$0xf]
      %v255 = vld [vmem:[%s226 + $0x4c] sm:$0xf]
      %v256 = vld [vmem:[%s226 + $0x50] sm:$0xf]
      %v257 = vld [vmem:[%s226 + $0x54] sm:$0xf]
      %v258 = vld [vmem:[%s226 + $0x58] sm:$0xf]
      %v259 = vld [vmem:[%s226 + $0x5c] sm:$0xf]
      %v260 = vld [vmem:[%s226 + $0x60] sm:$0xf]
      %v261 = vld [vmem:[%s226 + $0x64] sm:$0xf]
      %v262 = vld [vmem:[%s226 + $0x68] sm:$0xf]
      %v263 = vld [vmem:[%s226 + $0x6c] sm:$0xf]
      %v264 = vld [vmem:[%s226 + $0x70] sm:$0xf]
      %v265 = vld [vmem:[%s226 + $0x74] sm:$0xf]
      %v266 = vld [vmem:[%s226 + $0x78] sm:$0xf]
      %v267 = vld [vmem:[%s226 + $0x7c] sm:$0xf]
      %v268 = vunpack.c.l.bf16 %v236
      %v269 = vunpack.c.l.bf16 %v237
      %v270 = vunpack.c.l.bf16 %v238
      %v271 = vunpack.c.l.bf16 %v239
      %v272 = vunpack.c.l.bf16 %v240
      %v273 = vunpack.c.l.bf16 %v241
      %v274 = vunpack.c.l.bf16 %v242
      %v275 = vunpack.c.l.bf16 %v243
      %v276 = vunpack.c.l.bf16 %v244
      %v277 = vunpack.c.l.bf16 %v245
      %v278 = vunpack.c.l.bf16 %v246
      %v279 = vunpack.c.l.bf16 %v247
      %v280 = vunpack.c.l.bf16 %v248
      %v281 = vunpack.c.l.bf16 %v249
      %v282 = vunpack.c.l.bf16 %v250
      %v283 = vunpack.c.l.bf16 %v251
      %v284 = vunpack.c.l.bf16 %v252
      %v285 = vunpack.c.l.bf16 %v253
      %v286 = vunpack.c.l.bf16 %v254
      %v287 = vunpack.c.l.bf16 %v255
      %v288 = vunpack.c.l.bf16 %v256
      %v289 = vunpack.c.l.bf16 %v257
      %v290 = vunpack.c.l.bf16 %v258
      %v291 = vunpack.c.l.bf16 %v259
      %v292 = vunpack.c.l.bf16 %v260
      %v293 = vunpack.c.l.bf16 %v261
      %v294 = vunpack.c.l.bf16 %v262
      %v295 = vunpack.c.l.bf16 %v263
      %v296 = vunpack.c.l.bf16 %v264
      %v297 = vunpack.c.l.bf16 %v265
      %v298 = vunpack.c.l.bf16 %v266
      %v299 = vunpack.c.l.bf16 %v267
      %v300 = vld [vmem:[%s1] sm:$0x1]
      %v302 = vperm.slane %v300, 0
      %v304 = vmul.f32 %v268, %v302
      %v305 = vmul.f32 %v269, %v302
      %v306 = vmul.f32 %v270, %v302
      %v307 = vmul.f32 %v271, %v302
      %v308 = vmul.f32 %v272, %v302
      %v309 = vmul.f32 %v273, %v302
      %v310 = vmul.f32 %v274, %v302
      %v311 = vmul.f32 %v275, %v302
      %v312 = vmul.f32 %v276, %v302
      %v313 = vmul.f32 %v277, %v302
      %v314 = vmul.f32 %v278, %v302
      %v315 = vmul.f32 %v279, %v302
      %v316 = vmul.f32 %v280, %v302
      %v317 = vmul.f32 %v281, %v302
      %v318 = vmul.f32 %v282, %v302
      %v319 = vmul.f32 %v283, %v302
      %v320 = vmul.f32 %v284, %v302
      %v321 = vmul.f32 %v285, %v302
      %v322 = vmul.f32 %v286, %v302
      %v323 = vmul.f32 %v287, %v302
      %v324 = vmul.f32 %v288, %v302
      %v325 = vmul.f32 %v289, %v302
      %v326 = vmul.f32 %v290, %v302
      %v327 = vmul.f32 %v291, %v302
      %v328 = vmul.f32 %v292, %v302
      %v329 = vmul.f32 %v293, %v302
      %v330 = vmul.f32 %v294, %v302
      %v331 = vmul.f32 %v295, %v302
      %v332 = vmul.f32 %v296, %v302
      %v333 = vmul.f32 %v297, %v302
      %v334 = vmul.f32 %v298, %v302
      %v335 = vmul.f32 %v299, %v302
      %v336 = vld [vmem:[%s2] sm:$0x1]
      %v338 = vperm.slane %v336, 0
      %v340 = vadd.f32 %v304, %v338
      %v341 = vadd.f32 %v305, %v338
      %v342 = vadd.f32 %v306, %v338
      %v343 = vadd.f32 %v307, %v338
      %v344 = vadd.f32 %v308, %v338
      %v345 = vadd.f32 %v309, %v338
      %v346 = vadd.f32 %v310, %v338
      %v347 = vadd.f32 %v311, %v338
      %v348 = vadd.f32 %v312, %v338
      %v349 = vadd.f32 %v313, %v338
      %v350 = vadd.f32 %v314, %v338
      %v351 = vadd.f32 %v315, %v338
      %v352 = vadd.f32 %v316, %v338
      %v353 = vadd.f32 %v317, %v338
      %v354 = vadd.f32 %v318, %v338
      %v355 = vadd.f32 %v319, %v338
      %v356 = vadd.f32 %v320, %v338
      %v357 = vadd.f32 %v321, %v338
      %v358 = vadd.f32 %v322, %v338
      %v359 = vadd.f32 %v323, %v338
      %v360 = vadd.f32 %v324, %v338
      %v361 = vadd.f32 %v325, %v338
      %v362 = vadd.f32 %v326, %v338
      %v363 = vadd.f32 %v327, %v338
      %v364 = vadd.f32 %v328, %v338
      %v365 = vadd.f32 %v329, %v338
      %v366 = vadd.f32 %v330, %v338
      %v367 = vadd.f32 %v331, %v338
      %v368 = vadd.f32 %v332, %v338
      %v369 = vadd.f32 %v333, %v338
      %v370 = vadd.f32 %v334, %v338
      %v371 = vadd.f32 %v335, %v338
      %v372 = vmax.f32 %v340, 0.0
      %v373 = vmax.f32 %v341, 0.0
      %v374 = vmax.f32 %v342, 0.0
      %v375 = vmax.f32 %v343, 0.0
      %v376 = vmax.f32 %v344, 0.0
      %v377 = vmax.f32 %v345, 0.0
      %v378 = vmax.f32 %v346, 0.0
      %v379 = vmax.f32 %v347, 0.0
      %v380 = vmax.f32 %v348, 0.0
      %v381 = vmax.f32 %v349, 0.0
      %v382 = vmax.f32 %v350, 0.0
      %v383 = vmax.f32 %v351, 0.0
      %v384 = vmax.f32 %v352, 0.0
      %v385 = vmax.f32 %v353, 0.0
      %v386 = vmax.f32 %v354, 0.0
      %v387 = vmax.f32 %v355, 0.0
      %v388 = vmax.f32 %v356, 0.0
      %v389 = vmax.f32 %v357, 0.0
      %v390 = vmax.f32 %v358, 0.0
      %v391 = vmax.f32 %v359, 0.0
      %v392 = vmax.f32 %v360, 0.0
      %v393 = vmax.f32 %v361, 0.0
      %v394 = vmax.f32 %v362, 0.0
      %v395 = vmax.f32 %v363, 0.0
      %v396 = vmax.f32 %v364, 0.0
      %v397 = vmax.f32 %v365, 0.0
      %v398 = vmax.f32 %v366, 0.0
      %v399 = vmax.f32 %v367, 0.0
      %v400 = vmax.f32 %v368, 0.0
      %v401 = vmax.f32 %v369, 0.0
      %v402 = vmax.f32 %v370, 0.0
      %v403 = vmax.f32 %v371, 0.0
      %404 = vst [vmem:[#allocation2] sm:$0xff] 0.0
      %405 = vst [vmem:[#allocation2 + $0x8] sm:$0xff] 0.0
      %406 = vst [vmem:[#allocation2 + $0x10] sm:$0x3] 0.0
      %s407 = scalar_lea.vmem [#allocation2], 408
      %408 = vst [vmem:[%s407] sm:$0xff] 0.0
      %409 = vst [vmem:[%s407 + $0x8] sm:$0xff] 0.0
      %410 = vst [vmem:[%s407 + $0x10] sm:$0x3] 0.0
      %411 = vst [vmem:[#allocation2] sm:$0x1] 0.0
      %412 = vst [vmem:[#allocation2 + $0x18] sm:$0x1] 0.0
      %413 = vst [vmem:[#allocation2 + $0x30] sm:$0x1] 0.0
      %414 = vst [vmem:[#allocation2 + $0x48] sm:$0x1] 0.0
      %415 = vst [vmem:[#allocation2 + $0x60] sm:$0x1] 0.0
      %416 = vst [vmem:[#allocation2 + $0x78] sm:$0x1] 0.0
      %417 = vst [vmem:[#allocation2 + $0x90] sm:$0x1] 0.0
      %418 = vst [vmem:[#allocation2 + $0xa8] sm:$0x1] 0.0
      %419 = vst [vmem:[#allocation2 + $0xc0] sm:$0x1] 0.0
      %420 = vst [vmem:[#allocation2 + $0xd8] sm:$0x1] 0.0
      %421 = vst [vmem:[#allocation2 + $0xf0] sm:$0x1] 0.0
      %422 = vst [vmem:[#allocation2 + $0x108] sm:$0x1] 0.0
      %423 = vst [vmem:[#allocation2 + $0x120] sm:$0x1] 0.0
      %424 = vst [vmem:[#allocation2 + $0x138] sm:$0x1] 0.0
      %425 = vst [vmem:[#allocation2 + $0x150] sm:$0x1] 0.0
      %426 = vst [vmem:[#allocation2 + $0x168] sm:$0x1] 0.0
      %427 = vst [vmem:[#allocation2 + $0x180] sm:$0x1] 0.0
      %428 = vst [vmem:[#allocation2 + $0x198] sm:$0x1] 0.0
      %429 = vst [vmem:[#allocation2 + $0x11] sm:$0x1] 0.0
      %430 = vst [vmem:[#allocation2 + $0x29] sm:$0x1] 0.0
      %431 = vst [vmem:[#allocation2 + $0x41] sm:$0x1] 0.0
      %432 = vst [vmem:[#allocation2 + $0x59] sm:$0x1] 0.0
      %433 = vst [vmem:[#allocation2 + $0x71] sm:$0x1] 0.0
      %434 = vst [vmem:[#allocation2 + $0x89] sm:$0x1] 0.0
      %435 = vst [vmem:[#allocation2 + $0xa1] sm:$0x1] 0.0
      %436 = vst [vmem:[#allocation2 + $0xb9] sm:$0x1] 0.0
      %437 = vst [vmem:[#allocation2 + $0xd1] sm:$0x1] 0.0
      %438 = vst [vmem:[#allocation2 + $0xe9] sm:$0x1] 0.0
      %439 = vst [vmem:[#allocation2 + $0x101] sm:$0x1] 0.0
      %440 = vst [vmem:[#allocation2 + $0x119] sm:$0x1] 0.0
      %441 = vst [vmem:[#allocation2 + $0x131] sm:$0x1] 0.0
      %442 = vst [vmem:[#allocation2 + $0x149] sm:$0x1] 0.0
      %443 = vst [vmem:[#allocation2 + $0x161] sm:$0x1] 0.0
      %444 = vst [vmem:[#allocation2 + $0x179] sm:$0x1] 0.0
      %445 = vst [vmem:[#allocation2 + $0x191] sm:$0x1] 0.0
      %446 = vst [vmem:[#allocation2 + $0x1a9] sm:$0x1] 0.0
      %s447 = scalar_lea.vmem [#allocation2], 24
      %448 = vst [vmem:[%s447 + $0x1] sm:$0xff] %v372
      %449 = vst [vmem:[%s447 + $0x9] sm:$0xff] %v373
      %450 = vst [vmem:[%s447 + $0x19] sm:$0xff] %v374
      %451 = vst [vmem:[%s447 + $0x21] sm:$0xff] %v375
      %452 = vst [vmem:[%s447 + $0x31] sm:$0xff] %v376
      %453 = vst [vmem:[%s447 + $0x39] sm:$0xff] %v377
      %454 = vst [vmem:[%s447 + $0x49] sm:$0xff] %v378
      %455 = vst [vmem:[%s447 + $0x51] sm:$0xff] %v379
      %456 = vst [vmem:[%s447 + $0x61] sm:$0xff] %v380
      %457 = vst [vmem:[%s447 + $0x69] sm:$0xff] %v381
      %458 = vst [vmem:[%s447 + $0x79] sm:$0xff] %v382
      %459 = vst [vmem:[%s447 + $0x81] sm:$0xff] %v383
      %460 = vst [vmem:[%s447 + $0x91] sm:$0xff] %v384
      %461 = vst [vmem:[%s447 + $0x99] sm:$0xff] %v385
      %462 = vst [vmem:[%s447 + $0xa9] sm:$0xff] %v386
      %463 = vst [vmem:[%s447 + $0xb1] sm:$0xff] %v387
      %464 = vst [vmem:[%s447 + $0xc1] sm:$0xff] %v388
      %465 = vst [vmem:[%s447 + $0xc9] sm:$0xff] %v389
      %466 = vst [vmem:[%s447 + $0xd9] sm:$0xff] %v390
      %467 = vst [vmem:[%s447 + $0xe1] sm:$0xff] %v391
      %468 = vst [vmem:[%s447 + $0xf1] sm:$0xff] %v392
      %469 = vst [vmem:[%s447 + $0xf9] sm:$0xff] %v393
      %470 = vst [vmem:[%s447 + $0x109] sm:$0xff] %v394
      %471 = vst [vmem:[%s447 + $0x111] sm:$0xff] %v395
      %472 = vst [vmem:[%s447 + $0x121] sm:$0xff] %v396
      %473 = vst [vmem:[%s447 + $0x129] sm:$0xff] %v397
      %474 = vst [vmem:[%s447 + $0x139] sm:$0xff] %v398
      %475 = vst [vmem:[%s447 + $0x141] sm:$0xff] %v399
      %476 = vst [vmem:[%s447 + $0x151] sm:$0xff] %v400
      %477 = vst [vmem:[%s447 + $0x159] sm:$0xff] %v401
      %478 = vst [vmem:[%s447 + $0x169] sm:$0xff] %v402
      %479 = vst [vmem:[%s447 + $0x171] sm:$0xff] %v403
      %v480 = vld [vmem:[#allocation2] sm:$0xff]
      %v481 = vld [vmem:[#allocation2 + $0x8] sm:$0xff]
      %v482 = vld [vmem:[#allocation2 + $0x18] sm:$0xff]
      %v483 = vld [vmem:[#allocation2 + $0x20] sm:$0xff]
      %v484 = vld [vmem:[#allocation2 + $0x30] sm:$0xff]
      %v485 = vld [vmem:[#allocation2 + $0x38] sm:$0xff]
      %v486 = vld [vmem:[#allocation2 + $0x48] sm:$0xff]
      %v487 = vld [vmem:[#allocation2 + $0x50] sm:$0xff]
      %v488 = vld [vmem:[#allocation2 + $0x60] sm:$0xff]
      %v489 = vld [vmem:[#allocation2 + $0x68] sm:$0xff]
      %v490 = vld [vmem:[#allocation2 + $0x78] sm:$0xff]
      %v491 = vld [vmem:[#allocation2 + $0x80] sm:$0xff]
      %v492 = vld [vmem:[#allocation2 + $0x90] sm:$0xff]
      %v493 = vld [vmem:[#allocation2 + $0x98] sm:$0xff]
      %v494 = vld [vmem:[#allocation2 + $0xa8] sm:$0xff]
      %v495 = vld [vmem:[#allocation2 + $0xb0] sm:$0xff]
      %v496 = vld [vmem:[#allocation2 + $0xc0] sm:$0xff]
      %v497 = vld [vmem:[#allocation2 + $0xc8] sm:$0xff]
      %v498 = vld [vmem:[#allocation2 + $0xd8] sm:$0xff]
      %v499 = vld [vmem:[#allocation2 + $0xe0] sm:$0xff]
      %v500 = vld [vmem:[#allocation2 + $0xf0] sm:$0xff]
      %v501 = vld [vmem:[#allocation2 + $0xf8] sm:$0xff]
      %v502 = vld [vmem:[#allocation2 + $0x108] sm:$0xff]
      %v503 = vld [vmem:[#allocation2 + $0x110] sm:$0xff]
      %v504 = vld [vmem:[#allocation2 + $0x120] sm:$0xff]
      %v505 = vld [vmem:[#allocation2 + $0x128] sm:$0xff]
      %v506 = vld [vmem:[#allocation2 + $0x138] sm:$0xff]
      %v507 = vld [vmem:[#allocation2 + $0x140] sm:$0xff]
      %v508 = vld [vmem:[#allocation2 + $0x150] sm:$0xff]
      %v509 = vld [vmem:[#allocation2 + $0x158] sm:$0xff]
      %v510 = vld [vmem:[#allocation2 + $0x168] sm:$0xff]
      %v511 = vld [vmem:[#allocation2 + $0x170] sm:$0xff]
      %v512 = vpack.c.bf16 %v481, %v480
      %v513 = vpack.c.bf16 %v483, %v482
      %v514 = vpack.c.bf16 %v485, %v484
      %v515 = vpack.c.bf16 %v487, %v486
      %v516 = vpack.c.bf16 %v489, %v488
      %v517 = vpack.c.bf16 %v491, %v490
      %v518 = vpack.c.bf16 %v493, %v492
      %v519 = vpack.c.bf16 %v495, %v494
      %v520 = vpack.c.bf16 %v497, %v496
      %v521 = vpack.c.bf16 %v499, %v498
      %v522 = vpack.c.bf16 %v501, %v500
      %v523 = vpack.c.bf16 %v503, %v502
      %v524 = vpack.c.bf16 %v505, %v504
      %v525 = vpack.c.bf16 %v507, %v506
      %v526 = vpack.c.bf16 %v509, %v508
      %v527 = vpack.c.bf16 %v511, %v510
      %v528 = vld [vmem:[%s3] sm:$0xf]
      %v529 = vld [vmem:[%s3 + $0x4] sm:$0xf]
      %v530 = vld [vmem:[%s3 + $0x8] sm:$0xf]
      %v531 = vld [vmem:[%s3 + $0xc] sm:$0xf]
      %v532 = vld [vmem:[%s3 + $0x10] sm:$0xf]
      %v533 = vld [vmem:[%s3 + $0x14] sm:$0xf]
      %v534 = vld [vmem:[%s3 + $0x18] sm:$0xf]
      %v535 = vld [vmem:[%s3 + $0x1c] sm:$0xf]
      %v536 = vld [vmem:[%s3 + $0x20] sm:$0xf]
      %v537 = vld [vmem:[%s3 + $0x24] sm:$0xf]
      %v538 = vld [vmem:[%s3 + $0x28] sm:$0xf]
      %v539 = vld [vmem:[%s3 + $0x2c] sm:$0xf]
      %v540 = vld [vmem:[%s3 + $0x30] sm:$0xf]
      %v541 = vld [vmem:[%s3 + $0x34] sm:$0xf]
      %v542 = vld [vmem:[%s3 + $0x38] sm:$0xf]
      %v543 = vld [vmem:[%s3 + $0x3c] sm:$0xf]
      %v544 = vld [vmem:[#allocation2 + $0x1] sm:$0xff]
      %v545 = vld [vmem:[#allocation2 + $0x9] sm:$0xff]
      %v546 = vld [vmem:[#allocation2 + $0x19] sm:$0xff]
      %v547 = vld [vmem:[#allocation2 + $0x21] sm:$0xff]
      %v548 = vld [vmem:[#allocation2 + $0x31] sm:$0xff]
      %v549 = vld [vmem:[#allocation2 + $0x39] sm:$0xff]
      %v550 = vld [vmem:[#allocation2 + $0x49] sm:$0xff]
      %v551 = vld [vmem:[#allocation2 + $0x51] sm:$0xff]
      %v552 = vld [vmem:[#allocation2 + $0x61] sm:$0xff]
      %v553 = vld [vmem:[#allocation2 + $0x69] sm:$0xff]
      %v554 = vld [vmem:[#allocation2 + $0x79] sm:$0xff]
      %v555 = vld [vmem:[#allocation2 + $0x81] sm:$0xff]
      %v556 = vld [vmem:[#allocation2 + $0x91] sm:$0xff]
      %v557 = vld [vmem:[#allocation2 + $0x99] sm:$0xff]
      %v558 = vld [vmem:[#allocation2 + $0xa9] sm:$0xff]
      %v559 = vld [vmem:[#allocation2 + $0xb1] sm:$0xff]
      %v560 = vld [vmem:[#allocation2 + $0xc1] sm:$0xff]
      %v561 = vld [vmem:[#allocation2 + $0xc9] sm:$0xff]
      %v562 = vld [vmem:[#allocation2 + $0xd9] sm:$0xff]
      %v563 = vld [vmem:[#allocation2 + $0xe1] sm:$0xff]
      %v564 = vld [vmem:[#allocation2 + $0xf1] sm:$0xff]
      %v565 = vld [vmem:[#allocation2 + $0xf9] sm:$0xff]
      %v566 = vld [vmem:[#allocation2 + $0x109] sm:$0xff]
      %v567 = vld [vmem:[#allocation2 + $0x111] sm:$0xff]
      %v568 = vld [vmem:[#allocation2 + $0x121] sm:$0xff]
      %v569 = vld [vmem:[#allocation2 + $0x129] sm:$0xff]
      %v570 = vld [vmem:[#allocation2 + $0x139] sm:$0xff]
      %v571 = vld [vmem:[#allocation2 + $0x141] sm:$0xff]
      %v572 = vld [vmem:[#allocation2 + $0x151] sm:$0xff]
      %v573 = vld [vmem:[#allocation2 + $0x159] sm:$0xff]
      %v574 = vld [vmem:[#allocation2 + $0x169] sm:$0xff]
      %v575 = vld [vmem:[#allocation2 + $0x171] sm:$0xff]
      %v576 = vpack.c.bf16 %v545, %v544
      %v577 = vpack.c.bf16 %v547, %v546
      %v578 = vpack.c.bf16 %v549, %v548
      %v579 = vpack.c.bf16 %v551, %v550
      %v580 = vpack.c.bf16 %v553, %v552
      %v581 = vpack.c.bf16 %v555, %v554
      %v582 = vpack.c.bf16 %v557, %v556
      %v583 = vpack.c.bf16 %v559, %v558
      %v584 = vpack.c.bf16 %v561, %v560
      %v585 = vpack.c.bf16 %v563, %v562
      %v586 = vpack.c.bf16 %v565, %v564
      %v587 = vpack.c.bf16 %v567, %v566
      %v588 = vpack.c.bf16 %v569, %v568
      %v589 = vpack.c.bf16 %v571, %v570
      %v590 = vpack.c.bf16 %v573, %v572
      %v591 = vpack.c.bf16 %v575, %v574
      %s592 = scalar_lea.vmem %s3, 64
      %v593 = vld [vmem:[%s592] sm:$0xf]
      %v594 = vld [vmem:[%s592 + $0x4] sm:$0xf]
      %v595 = vld [vmem:[%s592 + $0x8] sm:$0xf]
      %v596 = vld [vmem:[%s592 + $0xc] sm:$0xf]
      %v597 = vld [vmem:[%s592 + $0x10] sm:$0xf]
      %v598 = vld [vmem:[%s592 + $0x14] sm:$0xf]
      %v599 = vld [vmem:[%s592 + $0x18] sm:$0xf]
      %v600 = vld [vmem:[%s592 + $0x1c] sm:$0xf]
      %v601 = vld [vmem:[%s592 + $0x20] sm:$0xf]
      %v602 = vld [vmem:[%s592 + $0x24] sm:$0xf]
      %v603 = vld [vmem:[%s592 + $0x28] sm:$0xf]
      %v604 = vld [vmem:[%s592 + $0x2c] sm:$0xf]
      %v605 = vld [vmem:[%s592 + $0x30] sm:$0xf]
      %v606 = vld [vmem:[%s592 + $0x34] sm:$0xf]
      %v607 = vld [vmem:[%s592 + $0x38] sm:$0xf]
      %v608 = vld [vmem:[%s592 + $0x3c] sm:$0xf]
      %v625 = vunpack.c.l.b16 %v593
      %v626 = vunpack.c.l.b16 %v594
      %v627 = vunpack.c.l.b16 %v595
      %v628 = vunpack.c.l.b16 %v596
      %v629 = vunpack.c.l.b16 %v597
      %v630 = vunpack.c.l.b16 %v598
      %v631 = vunpack.c.l.b16 %v599
      %v632 = vunpack.c.l.b16 %v600
      %v633 = vunpack.c.l.b16 %v601
      %v634 = vunpack.c.l.b16 %v602
      %v635 = vunpack.c.l.b16 %v603
      %v636 = vunpack.c.l.b16 %v604
      %v637 = vunpack.c.l.b16 %v605
      %v638 = vunpack.c.l.b16 %v606
      %v639 = vunpack.c.l.b16 %v607
      %v640 = vunpack.c.l.b16 %v608
      %v641 = vpack.c.b16 %v626, %v625
      %v642 = vpack.c.b16 %v628, %v627
      %v643 = vpack.c.b16 %v630, %v629
      %v644 = vpack.c.b16 %v632, %v631
      %v645 = vpack.c.b16 %v634, %v633
      %v646 = vpack.c.b16 %v636, %v635
      %v647 = vpack.c.b16 %v638, %v637
      %v648 = vpack.c.b16 %v640, %v639
      %657 = vmatpush.bf16.msra.mxu0 %v648
      %658 = vmatpush.bf16.msra.mxu0 %v647
      %659 = vmatpush.bf16.msra.mxu0 %v646
      %660 = vmatpush.bf16.msra.mxu0 %v645
      %661 = vmatpush.bf16.msra.mxu0 %v644
      %662 = vmatpush.bf16.msra.mxu0 %v643
      %663 = vmatpush.bf16.msra.mxu0 %v642
      %664 = vmatpush.bf16.msra.mxu0 %v641
      %665 = vmatmul.bf16.gmra.mxu0 %v576
      %v666 = vpop.f32.mrf.mxu0
      %v667 = vadd.f32 0.0, %v666
      %v668 = vpop.f32.mrf.mxu0
      %v669 = vadd.f32 0.0, %v668
      %670 = vmatmul.bf16.gmra.mxu0 %v577
      %v671 = vpop.f32.mrf.mxu0
      %v672 = vadd.f32 0.0, %v671
      %v673 = vpop.f32.mrf.mxu0
      %v674 = vadd.f32 0.0, %v673
      %675 = vmatmul.bf16.gmra.mxu0 %v578
      %v676 = vpop.f32.mrf.mxu0
      %v677 = vadd.f32 0.0, %v676
      %v678 = vpop.f32.mrf.mxu0
      %v679 = vadd.f32 0.0, %v678
      %680 = vmatmul.bf16.gmra.mxu0 %v579
      %v681 = vpop.f32.mrf.mxu0
      %v682 = vadd.f32 0.0, %v681
      %v683 = vpop.f32.mrf.mxu0
      %v684 = vadd.f32 0.0, %v683
      %685 = vmatmul.bf16.gmra.mxu0 %v580
      %v686 = vpop.f32.mrf.mxu0
      %v687 = vadd.f32 0.0, %v686
      %v688 = vpop.f32.mrf.mxu0
      %v689 = vadd.f32 0.0, %v688
      %690 = vmatmul.bf16.gmra.mxu0 %v581
      %v691 = vpop.f32.mrf.mxu0
      %v692 = vadd.f32 0.0, %v691
      %v693 = vpop.f32.mrf.mxu0
      %v694 = vadd.f32 0.0, %v693
      %695 = vmatmul.bf16.gmra.mxu0 %v582
      %v696 = vpop.f32.mrf.mxu0
      %v697 = vadd.f32 0.0, %v696
      %v698 = vpop.f32.mrf.mxu0
      %v699 = vadd.f32 0.0, %v698
      %700 = vmatmul.bf16.gmra.mxu0 %v583
      %v701 = vpop.f32.mrf.mxu0
      %v702 = vadd.f32 0.0, %v701
      %v703 = vpop.f32.mrf.mxu0
      %v704 = vadd.f32 0.0, %v703
      %705 = vmatmul.bf16.gmra.mxu0 %v584
      %v706 = vpop.f32.mrf.mxu0
      %v707 = vadd.f32 0.0, %v706
      %v708 = vpop.f32.mrf.mxu0
      %v709 = vadd.f32 0.0, %v708
      %710 = vmatmul.bf16.gmra.mxu0 %v585
      %v711 = vpop.f32.mrf.mxu0
      %v712 = vadd.f32 0.0, %v711
      %v713 = vpop.f32.mrf.mxu0
      %v714 = vadd.f32 0.0, %v713
      %715 = vmatmul.bf16.gmra.mxu0 %v586
      %v716 = vpop.f32.mrf.mxu0
      %v717 = vadd.f32 0.0, %v716
      %v718 = vpop.f32.mrf.mxu0
      %v719 = vadd.f32 0.0, %v718
      %720 = vmatmul.bf16.gmra.mxu0 %v587
      %v721 = vpop.f32.mrf.mxu0
      %v722 = vadd.f32 0.0, %v721
      %v723 = vpop.f32.mrf.mxu0
      %v724 = vadd.f32 0.0, %v723
      %725 = vmatmul.bf16.gmra.mxu0 %v588
      %v726 = vpop.f32.mrf.mxu0
      %v727 = vadd.f32 0.0, %v726
      %v728 = vpop.f32.mrf.mxu0
      %v729 = vadd.f32 0.0, %v728
      %730 = vmatmul.bf16.gmra.mxu0 %v589
      %v731 = vpop.f32.mrf.mxu0
      %v732 = vadd.f32 0.0, %v731
      %v733 = vpop.f32.mrf.mxu0
      %v734 = vadd.f32 0.0, %v733
      %735 = vmatmul.bf16.gmra.mxu0 %v590
      %v736 = vpop.f32.mrf.mxu0
      %v737 = vadd.f32 0.0, %v736
      %v738 = vpop.f32.mrf.mxu0
      %v739 = vadd.f32 0.0, %v738
      %740 = vmatmul.bf16.gmra.mxu0 %v591
      %v741 = vpop.f32.mrf.mxu0
      %v742 = vadd.f32 0.0, %v741
      %v743 = vpop.f32.mrf.mxu0
      %v744 = vadd.f32 0.0, %v743
      %745 = vdwg.mxu0
      %v762 = vunpack.c.l.b16 %v528
      %v763 = vunpack.c.l.b16 %v529
      %v764 = vunpack.c.l.b16 %v530
      %v765 = vunpack.c.l.b16 %v531
      %v766 = vunpack.c.l.b16 %v532
      %v767 = vunpack.c.l.b16 %v533
      %v768 = vunpack.c.l.b16 %v534
      %v769 = vunpack.c.l.b16 %v535
      %v770 = vunpack.c.l.b16 %v536
      %v771 = vunpack.c.l.b16 %v537
      %v772 = vunpack.c.l.b16 %v538
      %v773 = vunpack.c.l.b16 %v539
      %v774 = vunpack.c.l.b16 %v540
      %v775 = vunpack.c.l.b16 %v541
      %v776 = vunpack.c.l.b16 %v542
      %v777 = vunpack.c.l.b16 %v543
      %v778 = vpack.c.b16 %v763, %v762
      %v779 = vpack.c.b16 %v765, %v764
      %v780 = vpack.c.b16 %v767, %v766
      %v781 = vpack.c.b16 %v769, %v768
      %v782 = vpack.c.b16 %v771, %v770
      %v783 = vpack.c.b16 %v773, %v772
      %v784 = vpack.c.b16 %v775, %v774
      %v785 = vpack.c.b16 %v777, %v776
      %794 = vmatpush.bf16.msra.mxu0 %v785
      %795 = vmatpush.bf16.msra.mxu0 %v784
      %796 = vmatpush.bf16.msra.mxu0 %v783
      %797 = vmatpush.bf16.msra.mxu0 %v782
      %798 = vmatpush.bf16.msra.mxu0 %v781
      %799 = vmatpush.bf16.msra.mxu0 %v780
      %800 = vmatpush.bf16.msra.mxu0 %v779
      %801 = vmatpush.bf16.msra.mxu0 %v778
      %802 = vmatmul.bf16.gmra.mxu0 %v512
      %v803 = vpop.f32.mrf.mxu0
      %v804 = vadd.f32 %v667, %v803
      %v805 = vpop.f32.mrf.mxu0
      %v806 = vadd.f32 %v669, %v805
      %807 = vmatmul.bf16.gmra.mxu0 %v513
      %v808 = vpop.f32.mrf.mxu0
      %v809 = vadd.f32 %v672, %v808
      %v810 = vpop.f32.mrf.mxu0
      %v811 = vadd.f32 %v674, %v810
      %812 = vmatmul.bf16.gmra.mxu0 %v514
      %v813 = vpop.f32.mrf.mxu0
      %v814 = vadd.f32 %v677, %v813
      %v815 = vpop.f32.mrf.mxu0
      %v816 = vadd.f32 %v679, %v815
      %817 = vmatmul.bf16.gmra.mxu0 %v515
      %v818 = vpop.f32.mrf.mxu0
      %v819 = vadd.f32 %v682, %v818
      %v820 = vpop.f32.mrf.mxu0
      %v821 = vadd.f32 %v684, %v820
      %822 = vmatmul.bf16.gmra.mxu0 %v516
      %v823 = vpop.f32.mrf.mxu0
      %v824 = vadd.f32 %v687, %v823
      %v825 = vpop.f32.mrf.mxu0
      %v826 = vadd.f32 %v689, %v825
      %827 = vmatmul.bf16.gmra.mxu0 %v517
      %v828 = vpop.f32.mrf.mxu0
      %v829 = vadd.f32 %v692, %v828
      %v830 = vpop.f32.mrf.mxu0
      %v831 = vadd.f32 %v694, %v830
      %832 = vmatmul.bf16.gmra.mxu0 %v518
      %v833 = vpop.f32.mrf.mxu0
      %v834 = vadd.f32 %v697, %v833
      %v835 = vpop.f32.mrf.mxu0
      %v836 = vadd.f32 %v699, %v835
      %837 = vmatmul.bf16.gmra.mxu0 %v519
      %v838 = vpop.f32.mrf.mxu0
      %v839 = vadd.f32 %v702, %v838
      %v840 = vpop.f32.mrf.mxu0
      %v841 = vadd.f32 %v704, %v840
      %842 = vmatmul.bf16.gmra.mxu0 %v520
      %v843 = vpop.f32.mrf.mxu0
      %v844 = vadd.f32 %v707, %v843
      %v845 = vpop.f32.mrf.mxu0
      %v846 = vadd.f32 %v709, %v845
      %847 = vmatmul.bf16.gmra.mxu0 %v521
      %v848 = vpop.f32.mrf.mxu0
      %v849 = vadd.f32 %v712, %v848
      %v850 = vpop.f32.mrf.mxu0
      %v851 = vadd.f32 %v714, %v850
      %852 = vmatmul.bf16.gmra.mxu0 %v522
      %v853 = vpop.f32.mrf.mxu0
      %v854 = vadd.f32 %v717, %v853
      %v855 = vpop.f32.mrf.mxu0
      %v856 = vadd.f32 %v719, %v855
      %857 = vmatmul.bf16.gmra.mxu0 %v523
      %v858 = vpop.f32.mrf.mxu0
      %v859 = vadd.f32 %v722, %v858
      %v860 = vpop.f32.mrf.mxu0
      %v861 = vadd.f32 %v724, %v860
      %862 = vmatmul.bf16.gmra.mxu0 %v524
      %v863 = vpop.f32.mrf.mxu0
      %v864 = vadd.f32 %v727, %v863
      %v865 = vpop.f32.mrf.mxu0
      %v866 = vadd.f32 %v729, %v865
      %867 = vmatmul.bf16.gmra.mxu0 %v525
      %v868 = vpop.f32.mrf.mxu0
      %v869 = vadd.f32 %v732, %v868
      %v870 = vpop.f32.mrf.mxu0
      %v871 = vadd.f32 %v734, %v870
      %872 = vmatmul.bf16.gmra.mxu0 %v526
      %v873 = vpop.f32.mrf.mxu0
      %v874 = vadd.f32 %v737, %v873
      %v875 = vpop.f32.mrf.mxu0
      %v876 = vadd.f32 %v739, %v875
      %877 = vmatmul.bf16.gmra.mxu0 %v527
      %v878 = vpop.f32.mrf.mxu0
      %v879 = vadd.f32 %v742, %v878
      %v880 = vpop.f32.mrf.mxu0
      %v881 = vadd.f32 %v744, %v880
      %882 = vdwg.mxu0
      %v883 = vld [vmem:[#allocation2 + $0x2] sm:$0xff]
      %v884 = vld [vmem:[#allocation2 + $0xa] sm:$0xff]
      %v885 = vld [vmem:[#allocation2 + $0x1a] sm:$0xff]
      %v886 = vld [vmem:[#allocation2 + $0x22] sm:$0xff]
      %v887 = vld [vmem:[#allocation2 + $0x32] sm:$0xff]
      %v888 = vld [vmem:[#allocation2 + $0x3a] sm:$0xff]
      %v889 = vld [vmem:[#allocation2 + $0x4a] sm:$0xff]
      %v890 = vld [vmem:[#allocation2 + $0x52] sm:$0xff]
      %v891 = vld [vmem:[#allocation2 + $0x62] sm:$0xff]
      %v892 = vld [vmem:[#allocation2 + $0x6a] sm:$0xff]
      %v893 = vld [vmem:[#allocation2 + $0x7a] sm:$0xff]
      %v894 = vld [vmem:[#allocation2 + $0x82] sm:$0xff]
      %v895 = vld [vmem:[#allocation2 + $0x92] sm:$0xff]
      %v896 = vld [vmem:[#allocation2 + $0x9a] sm:$0xff]
      %v897 = vld [vmem:[#allocation2 + $0xaa] sm:$0xff]
      %v898 = vld [vmem:[#allocation2 + $0xb2] sm:$0xff]
      %v899 = vld [vmem:[#allocation2 + $0xc2] sm:$0xff]
      %v900 = vld [vmem:[#allocation2 + $0xca] sm:$0xff]
      %v901 = vld [vmem:[#allocation2 + $0xda] sm:$0xff]
      %v902 = vld [vmem:[#allocation2 + $0xe2] sm:$0xff]
      %v903 = vld [vmem:[#allocation2 + $0xf2] sm:$0xff]
      %v904 = vld [vmem:[#allocation2 + $0xfa] sm:$0xff]
      %v905 = vld [vmem:[#allocation2 + $0x10a] sm:$0xff]
      %v906 = vld [vmem:[#allocation2 + $0x112] sm:$0xff]
      %v907 = vld [vmem:[#allocation2 + $0x122] sm:$0xff]
      %v908 = vld [vmem:[#allocation2 + $0x12a] sm:$0xff]
      %v909 = vld [vmem:[#allocation2 + $0x13a] sm:$0xff]
      %v910 = vld [vmem:[#allocation2 + $0x142] sm:$0xff]
      %v911 = vld [vmem:[#allocation2 + $0x152] sm:$0xff]
      %v912 = vld [vmem:[#allocation2 + $0x15a] sm:$0xff]
      %v913 = vld [vmem:[#allocation2 + $0x16a] sm:$0xff]
      %v914 = vld [vmem:[#allocation2 + $0x172] sm:$0xff]
      %v915 = vpack.c.bf16 %v884, %v883
      %v916 = vpack.c.bf16 %v886, %v885
      %v917 = vpack.c.bf16 %v888, %v887
      %v918 = vpack.c.bf16 %v890, %v889
      %v919 = vpack.c.bf16 %v892, %v891
      %v920 = vpack.c.bf16 %v894, %v893
      %v921 = vpack.c.bf16 %v896, %v895
      %v922 = vpack.c.bf16 %v898, %v897
      %v923 = vpack.c.bf16 %v900, %v899
      %v924 = vpack.c.bf16 %v902, %v901
      %v925 = vpack.c.bf16 %v904, %v903
      %v926 = vpack.c.bf16 %v906, %v905
      %v927 = vpack.c.bf16 %v908, %v907
      %v928 = vpack.c.bf16 %v910, %v909
      %v929 = vpack.c.bf16 %v912, %v911
      %v930 = vpack.c.bf16 %v914, %v913
      %s931 = scalar_lea.vmem %s3, 128
      %v932 = vld [vmem:[%s931] sm:$0xf]
      %v933 = vld [vmem:[%s931 + $0x4] sm:$0xf]
      %v934 = vld [vmem:[%s931 + $0x8] sm:$0xf]
      %v935 = vld [vmem:[%s931 + $0xc] sm:$0xf]
      %v936 = vld [vmem:[%s931 + $0x10] sm:$0xf]
      %v937 = vld [vmem:[%s931 + $0x14] sm:$0xf]
      %v938 = vld [vmem:[%s931 + $0x18] sm:$0xf]
      %v939 = vld [vmem:[%s931 + $0x1c] sm:$0xf]
      %v940 = vld [vmem:[%s931 + $0x20] sm:$0xf]
      %v941 = vld [vmem:[%s931 + $0x24] sm:$0xf]
      %v942 = vld [vmem:[%s931 + $0x28] sm:$0xf]
      %v943 = vld [vmem:[%s931 + $0x2c] sm:$0xf]
      %v944 = vld [vmem:[%s931 + $0x30] sm:$0xf]
      %v945 = vld [vmem:[%s931 + $0x34] sm:$0xf]
      %v946 = vld [vmem:[%s931 + $0x38] sm:$0xf]
      %v947 = vld [vmem:[%s931 + $0x3c] sm:$0xf]
      %v964 = vunpack.c.l.b16 %v932
      %v965 = vunpack.c.l.b16 %v933
      %v966 = vunpack.c.l.b16 %v934
      %v967 = vunpack.c.l.b16 %v935
      %v968 = vunpack.c.l.b16 %v936
      %v969 = vunpack.c.l.b16 %v937
      %v970 = vunpack.c.l.b16 %v938
      %v971 = vunpack.c.l.b16 %v939
      %v972 = vunpack.c.l.b16 %v940
      %v973 = vunpack.c.l.b16 %v941
      %v974 = vunpack.c.l.b16 %v942
      %v975 = vunpack.c.l.b16 %v943
      %v976 = vunpack.c.l.b16 %v944
      %v977 = vunpack.c.l.b16 %v945
      %v978 = vunpack.c.l.b16 %v946
      %v979 = vunpack.c.l.b16 %v947
      %v980 = vpack.c.b16 %v965, %v964
      %v981 = vpack.c.b16 %v967, %v966
      %v982 = vpack.c.b16 %v969, %v968
      %v983 = vpack.c.b16 %v971, %v970
      %v984 = vpack.c.b16 %v973, %v972
      %v985 = vpack.c.b16 %v975, %v974
      %v986 = vpack.c.b16 %v977, %v976
      %v987 = vpack.c.b16 %v979, %v978
      %996 = vmatpush.bf16.msra.mxu0 %v987
      %997 = vmatpush.bf16.msra.mxu0 %v986
      %998 = vmatpush.bf16.msra.mxu0 %v985
      %999 = vmatpush.bf16.msra.mxu0 %v984
      %1000 = vmatpush.bf16.msra.mxu0 %v983
      %1001 = vmatpush.bf16.msra.mxu0 %v982
      %1002 = vmatpush.bf16.msra.mxu0 %v981
      %1003 = vmatpush.bf16.msra.mxu0 %v980
      %1004 = vmatmul.bf16.gmra.mxu0 %v915
      %v1005 = vpop.f32.mrf.mxu0
      %v1006 = vadd.f32 0.0, %v1005
      %v1007 = vpop.f32.mrf.mxu0
      %v1008 = vadd.f32 0.0, %v1007
      %1009 = vmatmul.bf16.gmra.mxu0 %v916
      %v1010 = vpop.f32.mrf.mxu0
      %v1011 = vadd.f32 0.0, %v1010
      %v1012 = vpop.f32.mrf.mxu0
      %v1013 = vadd.f32 0.0, %v1012
      %1014 = vmatmul.bf16.gmra.mxu0 %v917
      %v1015 = vpop.f32.mrf.mxu0
      %v1016 = vadd.f32 0.0, %v1015
      %v1017 = vpop.f32.mrf.mxu0
      %v1018 = vadd.f32 0.0, %v1017
      %1019 = vmatmul.bf16.gmra.mxu0 %v918
      %v1020 = vpop.f32.mrf.mxu0
      %v1021 = vadd.f32 0.0, %v1020
      %v1022 = vpop.f32.mrf.mxu0
      %v1023 = vadd.f32 0.0, %v1022
      %1024 = vmatmul.bf16.gmra.mxu0 %v919
      %v1025 = vpop.f32.mrf.mxu0
      %v1026 = vadd.f32 0.0, %v1025
      %v1027 = vpop.f32.mrf.mxu0
      %v1028 = vadd.f32 0.0, %v1027
      %1029 = vmatmul.bf16.gmra.mxu0 %v920
      %v1030 = vpop.f32.mrf.mxu0
      %v1031 = vadd.f32 0.0, %v1030
      %v1032 = vpop.f32.mrf.mxu0
      %v1033 = vadd.f32 0.0, %v1032
      %1034 = vmatmul.bf16.gmra.mxu0 %v921
      %v1035 = vpop.f32.mrf.mxu0
      %v1036 = vadd.f32 0.0, %v1035
      %v1037 = vpop.f32.mrf.mxu0
      %v1038 = vadd.f32 0.0, %v1037
      %1039 = vmatmul.bf16.gmra.mxu0 %v922
      %v1040 = vpop.f32.mrf.mxu0
      %v1041 = vadd.f32 0.0, %v1040
      %v1042 = vpop.f32.mrf.mxu0
      %v1043 = vadd.f32 0.0, %v1042
      %1044 = vmatmul.bf16.gmra.mxu0 %v923
      %v1045 = vpop.f32.mrf.mxu0
      %v1046 = vadd.f32 0.0, %v1045
      %v1047 = vpop.f32.mrf.mxu0
      %v1048 = vadd.f32 0.0, %v1047
      %1049 = vmatmul.bf16.gmra.mxu0 %v924
      %v1050 = vpop.f32.mrf.mxu0
      %v1051 = vadd.f32 0.0, %v1050
      %v1052 = vpop.f32.mrf.mxu0
      %v1053 = vadd.f32 0.0, %v1052
      %1054 = vmatmul.bf16.gmra.mxu0 %v925
      %v1055 = vpop.f32.mrf.mxu0
      %v1056 = vadd.f32 0.0, %v1055
      %v1057 = vpop.f32.mrf.mxu0
      %v1058 = vadd.f32 0.0, %v1057
      %1059 = vmatmul.bf16.gmra.mxu0 %v926
      %v1060 = vpop.f32.mrf.mxu0
      %v1061 = vadd.f32 0.0, %v1060
      %v1062 = vpop.f32.mrf.mxu0
      %v1063 = vadd.f32 0.0, %v1062
      %1064 = vmatmul.bf16.gmra.mxu0 %v927
      %v1065 = vpop.f32.mrf.mxu0
      %v1066 = vadd.f32 0.0, %v1065
      %v1067 = vpop.f32.mrf.mxu0
      %v1068 = vadd.f32 0.0, %v1067
      %1069 = vmatmul.bf16.gmra.mxu0 %v928
      %v1070 = vpop.f32.mrf.mxu0
      %v1071 = vadd.f32 0.0, %v1070
      %v1072 = vpop.f32.mrf.mxu0
      %v1073 = vadd.f32 0.0, %v1072
      %1074 = vmatmul.bf16.gmra.mxu0 %v929
      %v1075 = vpop.f32.mrf.mxu0
      %v1076 = vadd.f32 0.0, %v1075
      %v1077 = vpop.f32.mrf.mxu0
      %v1078 = vadd.f32 0.0, %v1077
      %1079 = vmatmul.bf16.gmra.mxu0 %v930
      %v1080 = vpop.f32.mrf.mxu0
      %v1081 = vadd.f32 0.0, %v1080
      %v1082 = vpop.f32.mrf.mxu0
      %v1083 = vadd.f32 0.0, %v1082
      %1084 = vdwg.mxu0
      %v1085 = vadd.f32 %v804, %v1006
      %v1086 = vadd.f32 %v806, %v1008
      %v1087 = vadd.f32 %v809, %v1011
      %v1088 = vadd.f32 %v811, %v1013
      %v1089 = vadd.f32 %v814, %v1016
      %v1090 = vadd.f32 %v816, %v1018
      %v1091 = vadd.f32 %v819, %v1021
      %v1092 = vadd.f32 %v821, %v1023
      %v1093 = vadd.f32 %v824, %v1026
      %v1094 = vadd.f32 %v826, %v1028
      %v1095 = vadd.f32 %v829, %v1031
      %v1096 = vadd.f32 %v831, %v1033
      %v1097 = vadd.f32 %v834, %v1036
      %v1098 = vadd.f32 %v836, %v1038
      %v1099 = vadd.f32 %v839, %v1041
      %v1100 = vadd.f32 %v841, %v1043
      %v1101 = vadd.f32 %v844, %v1046
      %v1102 = vadd.f32 %v846, %v1048
      %v1103 = vadd.f32 %v849, %v1051
      %v1104 = vadd.f32 %v851, %v1053
      %v1105 = vadd.f32 %v854, %v1056
      %v1106 = vadd.f32 %v856, %v1058
      %v1107 = vadd.f32 %v859, %v1061
      %v1108 = vadd.f32 %v861, %v1063
      %v1109 = vadd.f32 %v864, %v1066
      %v1110 = vadd.f32 %v866, %v1068
      %v1111 = vadd.f32 %v869, %v1071
      %v1112 = vadd.f32 %v871, %v1073
      %v1113 = vadd.f32 %v874, %v1076
      %v1114 = vadd.f32 %v876, %v1078
      %v1115 = vadd.f32 %v879, %v1081
      %v1116 = vadd.f32 %v881, %v1083
      %v1117 = vld [vmem:[%s447] sm:$0xff]
      %v1118 = vld [vmem:[%s447 + $0x8] sm:$0xff]
      %v1119 = vld [vmem:[%s447 + $0x18] sm:$0xff]
      %v1120 = vld [vmem:[%s447 + $0x20] sm:$0xff]
      %v1121 = vld [vmem:[%s447 + $0x30] sm:$0xff]
      %v1122 = vld [vmem:[%s447 + $0x38] sm:$0xff]
      %v1123 = vld [vmem:[%s447 + $0x48] sm:$0xff]
      %v1124 = vld [vmem:[%s447 + $0x50] sm:$0xff]
      %v1125 = vld [vmem:[%s447 + $0x60] sm:$0xff]
      %v1126 = vld [vmem:[%s447 + $0x68] sm:$0xff]
      %v1127 = vld [vmem:[%s447 + $0x78] sm:$0xff]
      %v1128 = vld [vmem:[%s447 + $0x80] sm:$0xff]
      %v1129 = vld [vmem:[%s447 + $0x90] sm:$0xff]
      %v1130 = vld [vmem:[%s447 + $0x98] sm:$0xff]
      %v1131 = vld [vmem:[%s447 + $0xa8] sm:$0xff]
      %v1132 = vld [vmem:[%s447 + $0xb0] sm:$0xff]
      %v1133 = vld [vmem:[%s447 + $0xc0] sm:$0xff]
      %v1134 = vld [vmem:[%s447 + $0xc8] sm:$0xff]
      %v1135 = vld [vmem:[%s447 + $0xd8] sm:$0xff]
      %v1136 = vld [vmem:[%s447 + $0xe0] sm:$0xff]
      %v1137 = vld [vmem:[%s447 + $0xf0] sm:$0xff]
      %v1138 = vld [vmem:[%s447 + $0xf8] sm:$0xff]
      %v1139 = vld [vmem:[%s447 + $0x108] sm:$0xff]
      %v1140 = vld [vmem:[%s447 + $0x110] sm:$0xff]
      %v1141 = vld [vmem:[%s447 + $0x120] sm:$0xff]
      %v1142 = vld [vmem:[%s447 + $0x128] sm:$0xff]
      %v1143 = vld [vmem:[%s447 + $0x138] sm:$0xff]
      %v1144 = vld [vmem:[%s447 + $0x140] sm:$0xff]
      %v1145 = vld [vmem:[%s447 + $0x150] sm:$0xff]
      %v1146 = vld [vmem:[%s447 + $0x158] sm:$0xff]
      %v1147 = vld [vmem:[%s447 + $0x168] sm:$0xff]
      %v1148 = vld [vmem:[%s447 + $0x170] sm:$0xff]
      %v1149 = vpack.c.bf16 %v1118, %v1117
      %v1150 = vpack.c.bf16 %v1120, %v1119
      %v1151 = vpack.c.bf16 %v1122, %v1121
      %v1152 = vpack.c.bf16 %v1124, %v1123
      %v1153 = vpack.c.bf16 %v1126, %v1125
      %v1154 = vpack.c.bf16 %v1128, %v1127
      %v1155 = vpack.c.bf16 %v1130, %v1129
      %v1156 = vpack.c.bf16 %v1132, %v1131
      %v1157 = vpack.c.bf16 %v1134, %v1133
      %v1158 = vpack.c.bf16 %v1136, %v1135
      %v1159 = vpack.c.bf16 %v1138, %v1137
      %v1160 = vpack.c.bf16 %v1140, %v1139
      %v1161 = vpack.c.bf16 %v1142, %v1141
      %v1162 = vpack.c.bf16 %v1144, %v1143
      %v1163 = vpack.c.bf16 %v1146, %v1145
      %v1164 = vpack.c.bf16 %v1148, %v1147
      %s1165 = scalar_lea.vmem %s3, 192
      %v1166 = vld [vmem:[%s1165] sm:$0xf]
      %v1167 = vld [vmem:[%s1165 + $0x4] sm:$0xf]
      %v1168 = vld [vmem:[%s1165 + $0x8] sm:$0xf]
      %v1169 = vld [vmem:[%s1165 + $0xc] sm:$0xf]
      %v1170 = vld [vmem:[%s1165 + $0x10] sm:$0xf]
      %v1171 = vld [vmem:[%s1165 + $0x14] sm:$0xf]
      %v1172 = vld [vmem:[%s1165 + $0x18] sm:$0xf]
      %v1173 = vld [vmem:[%s1165 + $0x1c] sm:$0xf]
      %v1174 = vld [vmem:[%s1165 + $0x20] sm:$0xf]
      %v1175 = vld [vmem:[%s1165 + $0x24] sm:$0xf]
      %v1176 = vld [vmem:[%s1165 + $0x28] sm:$0xf]
      %v1177 = vld [vmem:[%s1165 + $0x2c] sm:$0xf]
      %v1178 = vld [vmem:[%s1165 + $0x30] sm:$0xf]
      %v1179 = vld [vmem:[%s1165 + $0x34] sm:$0xf]
      %v1180 = vld [vmem:[%s1165 + $0x38] sm:$0xf]
      %v1181 = vld [vmem:[%s1165 + $0x3c] sm:$0xf]
      %v1198 = vunpack.c.l.b16 %v1166
      %v1199 = vunpack.c.l.b16 %v1167
      %v1200 = vunpack.c.l.b16 %v1168
      %v1201 = vunpack.c.l.b16 %v1169
      %v1202 = vunpack.c.l.b16 %v1170
      %v1203 = vunpack.c.l.b16 %v1171
      %v1204 = vunpack.c.l.b16 %v1172
      %v1205 = vunpack.c.l.b16 %v1173
      %v1206 = vunpack.c.l.b16 %v1174
      %v1207 = vunpack.c.l.b16 %v1175
      %v1208 = vunpack.c.l.b16 %v1176
      %v1209 = vunpack.c.l.b16 %v1177
      %v1210 = vunpack.c.l.b16 %v1178
      %v1211 = vunpack.c.l.b16 %v1179
      %v1212 = vunpack.c.l.b16 %v1180
      %v1213 = vunpack.c.l.b16 %v1181
      %v1214 = vpack.c.b16 %v1199, %v1198
      %v1215 = vpack.c.b16 %v1201, %v1200
      %v1216 = vpack.c.b16 %v1203, %v1202
      %v1217 = vpack.c.b16 %v1205, %v1204
      %v1218 = vpack.c.b16 %v1207, %v1206
      %v1219 = vpack.c.b16 %v1209, %v1208
      %v1220 = vpack.c.b16 %v1211, %v1210
      %v1221 = vpack.c.b16 %v1213, %v1212
      %1230 = vmatpush.bf16.msra.mxu0 %v1221
      %1231 = vmatpush.bf16.msra.mxu0 %v1220
      %1232 = vmatpush.bf16.msra.mxu0 %v1219
      %1233 = vmatpush.bf16.msra.mxu0 %v1218
      %1234 = vmatpush.bf16.msra.mxu0 %v1217
      %1235 = vmatpush.bf16.msra.mxu0 %v1216
      %1236 = vmatpush.bf16.msra.mxu0 %v1215
      %1237 = vmatpush.bf16.msra.mxu0 %v1214
      %1238 = vmatmul.bf16.gmra.mxu0 %v1149
      %v1239 = vpop.f32.mrf.mxu0
      %v1240 = vadd.f32 0.0, %v1239
      %v1241 = vpop.f32.mrf.mxu0
      %v1242 = vadd.f32 0.0, %v1241
      %1243 = vmatmul.bf16.gmra.mxu0 %v1150
      %v1244 = vpop.f32.mrf.mxu0
      %v1245 = vadd.f32 0.0, %v1244
      %v1246 = vpop.f32.mrf.mxu0
      %v1247 = vadd.f32 0.0, %v1246
      %1248 = vmatmul.bf16.gmra.mxu0 %v1151
      %v1249 = vpop.f32.mrf.mxu0
      %v1250 = vadd.f32 0.0, %v1249
      %v1251 = vpop.f32.mrf.mxu0
      %v1252 = vadd.f32 0.0, %v1251
      %1253 = vmatmul.bf16.gmra.mxu0 %v1152
      %v1254 = vpop.f32.mrf.mxu0
      %v1255 = vadd.f32 0.0, %v1254
      %v1256 = vpop.f32.mrf.mxu0
      %v1257 = vadd.f32 0.0, %v1256
      %1258 = vmatmul.bf16.gmra.mxu0 %v1153
      %v1259 = vpop.f32.mrf.mxu0
      %v1260 = vadd.f32 0.0, %v1259
      %v1261 = vpop.f32.mrf.mxu0
      %v1262 = vadd.f32 0.0, %v1261
      %1263 = vmatmul.bf16.gmra.mxu0 %v1154
      %v1264 = vpop.f32.mrf.mxu0
      %v1265 = vadd.f32 0.0, %v1264
      %v1266 = vpop.f32.mrf.mxu0
      %v1267 = vadd.f32 0.0, %v1266
      %1268 = vmatmul.bf16.gmra.mxu0 %v1155
      %v1269 = vpop.f32.mrf.mxu0
      %v1270 = vadd.f32 0.0, %v1269
      %v1271 = vpop.f32.mrf.mxu0
      %v1272 = vadd.f32 0.0, %v1271
      %1273 = vmatmul.bf16.gmra.mxu0 %v1156
      %v1274 = vpop.f32.mrf.mxu0
      %v1275 = vadd.f32 0.0, %v1274
      %v1276 = vpop.f32.mrf.mxu0
      %v1277 = vadd.f32 0.0, %v1276
      %1278 = vmatmul.bf16.gmra.mxu0 %v1157
      %v1279 = vpop.f32.mrf.mxu0
      %v1280 = vadd.f32 0.0, %v1279
      %v1281 = vpop.f32.mrf.mxu0
      %v1282 = vadd.f32 0.0, %v1281
      %1283 = vmatmul.bf16.gmra.mxu0 %v1158
      %v1284 = vpop.f32.mrf.mxu0
      %v1285 = vadd.f32 0.0, %v1284
      %v1286 = vpop.f32.mrf.mxu0
      %v1287 = vadd.f32 0.0, %v1286
      %1288 = vmatmul.bf16.gmra.mxu0 %v1159
      %v1289 = vpop.f32.mrf.mxu0
      %v1290 = vadd.f32 0.0, %v1289
      %v1291 = vpop.f32.mrf.mxu0
      %v1292 = vadd.f32 0.0, %v1291
      %1293 = vmatmul.bf16.gmra.mxu0 %v1160
      %v1294 = vpop.f32.mrf.mxu0
      %v1295 = vadd.f32 0.0, %v1294
      %v1296 = vpop.f32.mrf.mxu0
      %v1297 = vadd.f32 0.0, %v1296
      %1298 = vmatmul.bf16.gmra.mxu0 %v1161
      %v1299 = vpop.f32.mrf.mxu0
      %v1300 = vadd.f32 0.0, %v1299
      %v1301 = vpop.f32.mrf.mxu0
      %v1302 = vadd.f32 0.0, %v1301
      %1303 = vmatmul.bf16.gmra.mxu0 %v1162
      %v1304 = vpop.f32.mrf.mxu0
      %v1305 = vadd.f32 0.0, %v1304
      %v1306 = vpop.f32.mrf.mxu0
      %v1307 = vadd.f32 0.0, %v1306
      %1308 = vmatmul.bf16.gmra.mxu0 %v1163
      %v1309 = vpop.f32.mrf.mxu0
      %v1310 = vadd.f32 0.0, %v1309
      %v1311 = vpop.f32.mrf.mxu0
      %v1312 = vadd.f32 0.0, %v1311
      %1313 = vmatmul.bf16.gmra.mxu0 %v1164
      %v1314 = vpop.f32.mrf.mxu0
      %v1315 = vadd.f32 0.0, %v1314
      %v1316 = vpop.f32.mrf.mxu0
      %v1317 = vadd.f32 0.0, %v1316
      %1318 = vdwg.mxu0
      %v1319 = vadd.f32 %v1085, %v1240
      %v1320 = vadd.f32 %v1086, %v1242
      %v1321 = vadd.f32 %v1087, %v1245
      %v1322 = vadd.f32 %v1088, %v1247
      %v1323 = vadd.f32 %v1089, %v1250
      %v1324 = vadd.f32 %v1090, %v1252
      %v1325 = vadd.f32 %v1091, %v1255
      %v1326 = vadd.f32 %v1092, %v1257
      %v1327 = vadd.f32 %v1093, %v1260
      %v1328 = vadd.f32 %v1094, %v1262
      %v1329 = vadd.f32 %v1095, %v1265
      %v1330 = vadd.f32 %v1096, %v1267
      %v1331 = vadd.f32 %v1097, %v1270
      %v1332 = vadd.f32 %v1098, %v1272
      %v1333 = vadd.f32 %v1099, %v1275
      %v1334 = vadd.f32 %v1100, %v1277
      %v1335 = vadd.f32 %v1101, %v1280
      %v1336 = vadd.f32 %v1102, %v1282
      %v1337 = vadd.f32 %v1103, %v1285
      %v1338 = vadd.f32 %v1104, %v1287
      %v1339 = vadd.f32 %v1105, %v1290
      %v1340 = vadd.f32 %v1106, %v1292
      %v1341 = vadd.f32 %v1107, %v1295
      %v1342 = vadd.f32 %v1108, %v1297
      %v1343 = vadd.f32 %v1109, %v1300
      %v1344 = vadd.f32 %v1110, %v1302
      %v1345 = vadd.f32 %v1111, %v1305
      %v1346 = vadd.f32 %v1112, %v1307
      %v1347 = vadd.f32 %v1113, %v1310
      %v1348 = vadd.f32 %v1114, %v1312
      %v1349 = vadd.f32 %v1115, %v1315
      %v1350 = vadd.f32 %v1116, %v1317
      %v1351 = vld [vmem:[%s447 + $0x1] sm:$0xff]
      %v1352 = vld [vmem:[%s447 + $0x9] sm:$0xff]
      %v1353 = vld [vmem:[%s447 + $0x19] sm:$0xff]
      %v1354 = vld [vmem:[%s447 + $0x21] sm:$0xff]
      %v1355 = vld [vmem:[%s447 + $0x31] sm:$0xff]
      %v1356 = vld [vmem:[%s447 + $0x39] sm:$0xff]
      %v1357 = vld [vmem:[%s447 + $0x49] sm:$0xff]
      %v1358 = vld [vmem:[%s447 + $0x51] sm:$0xff]
      %v1359 = vld [vmem:[%s447 + $0x61] sm:$0xff]
      %v1360 = vld [vmem:[%s447 + $0x69] sm:$0xff]
      %v1361 = vld [vmem:[%s447 + $0x79] sm:$0xff]
      %v1362 = vld [vmem:[%s447 + $0x81] sm:$0xff]
      %v1363 = vld [vmem:[%s447 + $0x91] sm:$0xff]
      %v1364 = vld [vmem:[%s447 + $0x99] sm:$0xff]
      %v1365 = vld [vmem:[%s447 + $0xa9] sm:$0xff]
      %v1366 = vld [vmem:[%s447 + $0xb1] sm:$0xff]
      %v1367 = vld [vmem:[%s447 + $0xc1] sm:$0xff]
      %v1368 = vld [vmem:[%s447 + $0xc9] sm:$0xff]
      %v1369 = vld [vmem:[%s447 + $0xd9] sm:$0xff]
      %v1370 = vld [vmem:[%s447 + $0xe1] sm:$0xff]
      %v1371 = vld [vmem:[%s447 + $0xf1] sm:$0xff]
      %v1372 = vld [vmem:[%s447 + $0xf9] sm:$0xff]
      %v1373 = vld [vmem:[%s447 + $0x109] sm:$0xff]
      %v1374 = vld [vmem:[%s447 + $0x111] sm:$0xff]
      %v1375 = vld [vmem:[%s447 + $0x121] sm:$0xff]
      %v1376 = vld [vmem:[%s447 + $0x129] sm:$0xff]
      %v1377 = vld [vmem:[%s447 + $0x139] sm:$0xff]
      %v1378 = vld [vmem:[%s447 + $0x141] sm:$0xff]
      %v1379 = vld [vmem:[%s447 + $0x151] sm:$0xff]
      %v1380 = vld [vmem:[%s447 + $0x159] sm:$0xff]
      %v1381 = vld [vmem:[%s447 + $0x169] sm:$0xff]
      %v1382 = vld [vmem:[%s447 + $0x171] sm:$0xff]
      %v1383 = vpack.c.bf16 %v1352, %v1351
      %v1384 = vpack.c.bf16 %v1354, %v1353
      %v1385 = vpack.c.bf16 %v1356, %v1355
      %v1386 = vpack.c.bf16 %v1358, %v1357
      %v1387 = vpack.c.bf16 %v1360, %v1359
      %v1388 = vpack.c.bf16 %v1362, %v1361
      %v1389 = vpack.c.bf16 %v1364, %v1363
      %v1390 = vpack.c.bf16 %v1366, %v1365
      %v1391 = vpack.c.bf16 %v1368, %v1367
      %v1392 = vpack.c.bf16 %v1370, %v1369
      %v1393 = vpack.c.bf16 %v1372, %v1371
      %v1394 = vpack.c.bf16 %v1374, %v1373
      %v1395 = vpack.c.bf16 %v1376, %v1375
      %v1396 = vpack.c.bf16 %v1378, %v1377
      %v1397 = vpack.c.bf16 %v1380, %v1379
      %v1398 = vpack.c.bf16 %v1382, %v1381
      %s1399 = scalar_lea.vmem %s3, 256
      %v1400 = vld [vmem:[%s1399] sm:$0xf]
      %v1401 = vld [vmem:[%s1399 + $0x4] sm:$0xf]
      %v1402 = vld [vmem:[%s1399 + $0x8] sm:$0xf]
      %v1403 = vld [vmem:[%s1399 + $0xc] sm:$0xf]
      %v1404 = vld [vmem:[%s1399 + $0x10] sm:$0xf]
      %v1405 = vld [vmem:[%s1399 + $0x14] sm:$0xf]
      %v1406 = vld [vmem:[%s1399 + $0x18] sm:$0xf]
      %v1407 = vld [vmem:[%s1399 + $0x1c] sm:$0xf]
      %v1408 = vld [vmem:[%s1399 + $0x20] sm:$0xf]
      %v1409 = vld [vmem:[%s1399 + $0x24] sm:$0xf]
      %v1410 = vld [vmem:[%s1399 + $0x28] sm:$0xf]
      %v1411 = vld [vmem:[%s1399 + $0x2c] sm:$0xf]
      %v1412 = vld [vmem:[%s1399 + $0x30] sm:$0xf]
      %v1413 = vld [vmem:[%s1399 + $0x34] sm:$0xf]
      %v1414 = vld [vmem:[%s1399 + $0x38] sm:$0xf]
      %v1415 = vld [vmem:[%s1399 + $0x3c] sm:$0xf]
      %v1432 = vunpack.c.l.b16 %v1400
      %v1433 = vunpack.c.l.b16 %v1401
      %v1434 = vunpack.c.l.b16 %v1402
      %v1435 = vunpack.c.l.b16 %v1403
      %v1436 = vunpack.c.l.b16 %v1404
      %v1437 = vunpack.c.l.b16 %v1405
      %v1438 = vunpack.c.l.b16 %v1406
      %v1439 = vunpack.c.l.b16 %v1407
      %v1440 = vunpack.c.l.b16 %v1408
      %v1441 = vunpack.c.l.b16 %v1409
      %v1442 = vunpack.c.l.b16 %v1410
      %v1443 = vunpack.c.l.b16 %v1411
      %v1444 = vunpack.c.l.b16 %v1412
      %v1445 = vunpack.c.l.b16 %v1413
      %v1446 = vunpack.c.l.b16 %v1414
      %v1447 = vunpack.c.l.b16 %v1415
      %v1448 = vpack.c.b16 %v1433, %v1432
      %v1449 = vpack.c.b16 %v1435, %v1434
      %v1450 = vpack.c.b16 %v1437, %v1436
      %v1451 = vpack.c.b16 %v1439, %v1438
      %v1452 = vpack.c.b16 %v1441, %v1440
      %v1453 = vpack.c.b16 %v1443, %v1442
      %v1454 = vpack.c.b16 %v1445, %v1444
      %v1455 = vpack.c.b16 %v1447, %v1446
      %1464 = vmatpush.bf16.msra.mxu0 %v1455
      %1465 = vmatpush.bf16.msra.mxu0 %v1454
      %1466 = vmatpush.bf16.msra.mxu0 %v1453
      %1467 = vmatpush.bf16.msra.mxu0 %v1452
      %1468 = vmatpush.bf16.msra.mxu0 %v1451
      %1469 = vmatpush.bf16.msra.mxu0 %v1450
      %1470 = vmatpush.bf16.msra.mxu0 %v1449
      %1471 = vmatpush.bf16.msra.mxu0 %v1448
      %1472 = vmatmul.bf16.gmra.mxu0 %v1383
      %v1473 = vpop.f32.mrf.mxu0
      %v1474 = vadd.f32 0.0, %v1473
      %v1475 = vpop.f32.mrf.mxu0
      %v1476 = vadd.f32 0.0, %v1475
      %1477 = vmatmul.bf16.gmra.mxu0 %v1384
      %v1478 = vpop.f32.mrf.mxu0
      %v1479 = vadd.f32 0.0, %v1478
      %v1480 = vpop.f32.mrf.mxu0
      %v1481 = vadd.f32 0.0, %v1480
      %1482 = vmatmul.bf16.gmra.mxu0 %v1385
      %v1483 = vpop.f32.mrf.mxu0
      %v1484 = vadd.f32 0.0, %v1483
      %v1485 = vpop.f32.mrf.mxu0
      %v1486 = vadd.f32 0.0, %v1485
      %1487 = vmatmul.bf16.gmra.mxu0 %v1386
      %v1488 = vpop.f32.mrf.mxu0
      %v1489 = vadd.f32 0.0, %v1488
      %v1490 = vpop.f32.mrf.mxu0
      %v1491 = vadd.f32 0.0, %v1490
      %1492 = vmatmul.bf16.gmra.mxu0 %v1387
      %v1493 = vpop.f32.mrf.mxu0
      %v1494 = vadd.f32 0.0, %v1493
      %v1495 = vpop.f32.mrf.mxu0
      %v1496 = vadd.f32 0.0, %v1495
      %1497 = vmatmul.bf16.gmra.mxu0 %v1388
      %v1498 = vpop.f32.mrf.mxu0
      %v1499 = vadd.f32 0.0, %v1498
      %v1500 = vpop.f32.mrf.mxu0
      %v1501 = vadd.f32 0.0, %v1500
      %1502 = vmatmul.bf16.gmra.mxu0 %v1389
      %v1503 = vpop.f32.mrf.mxu0
      %v1504 = vadd.f32 0.0, %v1503
      %v1505 = vpop.f32.mrf.mxu0
      %v1506 = vadd.f32 0.0, %v1505
      %1507 = vmatmul.bf16.gmra.mxu0 %v1390
      %v1508 = vpop.f32.mrf.mxu0
      %v1509 = vadd.f32 0.0, %v1508
      %v1510 = vpop.f32.mrf.mxu0
      %v1511 = vadd.f32 0.0, %v1510
      %1512 = vmatmul.bf16.gmra.mxu0 %v1391
      %v1513 = vpop.f32.mrf.mxu0
      %v1514 = vadd.f32 0.0, %v1513
      %v1515 = vpop.f32.mrf.mxu0
      %v1516 = vadd.f32 0.0, %v1515
      %1517 = vmatmul.bf16.gmra.mxu0 %v1392
      %v1518 = vpop.f32.mrf.mxu0
      %v1519 = vadd.f32 0.0, %v1518
      %v1520 = vpop.f32.mrf.mxu0
      %v1521 = vadd.f32 0.0, %v1520
      %1522 = vmatmul.bf16.gmra.mxu0 %v1393
      %v1523 = vpop.f32.mrf.mxu0
      %v1524 = vadd.f32 0.0, %v1523
      %v1525 = vpop.f32.mrf.mxu0
      %v1526 = vadd.f32 0.0, %v1525
      %1527 = vmatmul.bf16.gmra.mxu0 %v1394
      %v1528 = vpop.f32.mrf.mxu0
      %v1529 = vadd.f32 0.0, %v1528
      %v1530 = vpop.f32.mrf.mxu0
      %v1531 = vadd.f32 0.0, %v1530
      %1532 = vmatmul.bf16.gmra.mxu0 %v1395
      %v1533 = vpop.f32.mrf.mxu0
      %v1534 = vadd.f32 0.0, %v1533
      %v1535 = vpop.f32.mrf.mxu0
      %v1536 = vadd.f32 0.0, %v1535
      %1537 = vmatmul.bf16.gmra.mxu0 %v1396
      %v1538 = vpop.f32.mrf.mxu0
      %v1539 = vadd.f32 0.0, %v1538
      %v1540 = vpop.f32.mrf.mxu0
      %v1541 = vadd.f32 0.0, %v1540
      %1542 = vmatmul.bf16.gmra.mxu0 %v1397
      %v1543 = vpop.f32.mrf.mxu0
      %v1544 = vadd.f32 0.0, %v1543
      %v1545 = vpop.f32.mrf.mxu0
      %v1546 = vadd.f32 0.0, %v1545
      %1547 = vmatmul.bf16.gmra.mxu0 %v1398
      %v1548 = vpop.f32.mrf.mxu0
      %v1549 = vadd.f32 0.0, %v1548
      %v1550 = vpop.f32.mrf.mxu0
      %v1551 = vadd.f32 0.0, %v1550
      %1552 = vdwg.mxu0
      %v1553 = vadd.f32 %v1319, %v1474
      %v1554 = vadd.f32 %v1320, %v1476
      %v1555 = vadd.f32 %v1321, %v1479
      %v1556 = vadd.f32 %v1322, %v1481
      %v1557 = vadd.f32 %v1323, %v1484
      %v1558 = vadd.f32 %v1324, %v1486
      %v1559 = vadd.f32 %v1325, %v1489
      %v1560 = vadd.f32 %v1326, %v1491
      %v1561 = vadd.f32 %v1327, %v1494
      %v1562 = vadd.f32 %v1328, %v1496
      %v1563 = vadd.f32 %v1329, %v1499
      %v1564 = vadd.f32 %v1330, %v1501
      %v1565 = vadd.f32 %v1331, %v1504
      %v1566 = vadd.f32 %v1332, %v1506
      %v1567 = vadd.f32 %v1333, %v1509
      %v1568 = vadd.f32 %v1334, %v1511
      %v1569 = vadd.f32 %v1335, %v1514
      %v1570 = vadd.f32 %v1336, %v1516
      %v1571 = vadd.f32 %v1337, %v1519
      %v1572 = vadd.f32 %v1338, %v1521
      %v1573 = vadd.f32 %v1339, %v1524
      %v1574 = vadd.f32 %v1340, %v1526
      %v1575 = vadd.f32 %v1341, %v1529
      %v1576 = vadd.f32 %v1342, %v1531
      %v1577 = vadd.f32 %v1343, %v1534
      %v1578 = vadd.f32 %v1344, %v1536
      %v1579 = vadd.f32 %v1345, %v1539
      %v1580 = vadd.f32 %v1346, %v1541
      %v1581 = vadd.f32 %v1347, %v1544
      %v1582 = vadd.f32 %v1348, %v1546
      %v1583 = vadd.f32 %v1349, %v1549
      %v1584 = vadd.f32 %v1350, %v1551
      %v1585 = vld [vmem:[%s447 + $0x2] sm:$0xff]
      %v1586 = vld [vmem:[%s447 + $0xa] sm:$0xff]
      %v1587 = vld [vmem:[%s447 + $0x1a] sm:$0xff]
      %v1588 = vld [vmem:[%s447 + $0x22] sm:$0xff]
      %v1589 = vld [vmem:[%s447 + $0x32] sm:$0xff]
      %v1590 = vld [vmem:[%s447 + $0x3a] sm:$0xff]
      %v1591 = vld [vmem:[%s447 + $0x4a] sm:$0xff]
      %v1592 = vld [vmem:[%s447 + $0x52] sm:$0xff]
      %v1593 = vld [vmem:[%s447 + $0x62] sm:$0xff]
      %v1594 = vld [vmem:[%s447 + $0x6a] sm:$0xff]
      %v1595 = vld [vmem:[%s447 + $0x7a] sm:$0xff]
      %v1596 = vld [vmem:[%s447 + $0x82] sm:$0xff]
      %v1597 = vld [vmem:[%s447 + $0x92] sm:$0xff]
      %v1598 = vld [vmem:[%s447 + $0x9a] sm:$0xff]
      %v1599 = vld [vmem:[%s447 + $0xaa] sm:$0xff]
      %v1600 = vld [vmem:[%s447 + $0xb2] sm:$0xff]
      %v1601 = vld [vmem:[%s447 + $0xc2] sm:$0xff]
      %v1602 = vld [vmem:[%s447 + $0xca] sm:$0xff]
      %v1603 = vld [vmem:[%s447 + $0xda] sm:$0xff]
      %v1604 = vld [vmem:[%s447 + $0xe2] sm:$0xff]
      %v1605 = vld [vmem:[%s447 + $0xf2] sm:$0xff]
      %v1606 = vld [vmem:[%s447 + $0xfa] sm:$0xff]
      %v1607 = vld [vmem:[%s447 + $0x10a] sm:$0xff]
      %v1608 = vld [vmem:[%s447 + $0x112] sm:$0xff]
      %v1609 = vld [vmem:[%s447 + $0x122] sm:$0xff]
      %v1610 = vld [vmem:[%s447 + $0x12a] sm:$0xff]
      %v1611 = vld [vmem:[%s447 + $0x13a] sm:$0xff]
      %v1612 = vld [vmem:[%s447 + $0x142] sm:$0xff]
      %v1613 = vld [vmem:[%s447 + $0x152] sm:$0xff]
      %v1614 = vld [vmem:[%s447 + $0x15a] sm:$0xff]
      %v1615 = vld [vmem:[%s447 + $0x16a] sm:$0xff]
      %v1616 = vld [vmem:[%s447 + $0x172] sm:$0xff]
      %v1617 = vpack.c.bf16 %v1586, %v1585
      %v1618 = vpack.c.bf16 %v1588, %v1587
      %v1619 = vpack.c.bf16 %v1590, %v1589
      %v1620 = vpack.c.bf16 %v1592, %v1591
      %v1621 = vpack.c.bf16 %v1594, %v1593
      %v1622 = vpack.c.bf16 %v1596, %v1595
      %v1623 = vpack.c.bf16 %v1598, %v1597
      %v1624 = vpack.c.bf16 %v1600, %v1599
      %v1625 = vpack.c.bf16 %v1602, %v1601
      %v1626 = vpack.c.bf16 %v1604, %v1603
      %v1627 = vpack.c.bf16 %v1606, %v1605
      %v1628 = vpack.c.bf16 %v1608, %v1607
      %v1629 = vpack.c.bf16 %v1610, %v1609
      %v1630 = vpack.c.bf16 %v1612, %v1611
      %v1631 = vpack.c.bf16 %v1614, %v1613
      %v1632 = vpack.c.bf16 %v1616, %v1615
      %s1633 = scalar_lea.vmem %s3, 320
      %v1634 = vld [vmem:[%s1633] sm:$0xf]
      %v1635 = vld [vmem:[%s1633 + $0x4] sm:$0xf]
      %v1636 = vld [vmem:[%s1633 + $0x8] sm:$0xf]
      %v1637 = vld [vmem:[%s1633 + $0xc] sm:$0xf]
      %v1638 = vld [vmem:[%s1633 + $0x10] sm:$0xf]
      %v1639 = vld [vmem:[%s1633 + $0x14] sm:$0xf]
      %v1640 = vld [vmem:[%s1633 + $0x18] sm:$0xf]
      %v1641 = vld [vmem:[%s1633 + $0x1c] sm:$0xf]
      %v1642 = vld [vmem:[%s1633 + $0x20] sm:$0xf]
      %v1643 = vld [vmem:[%s1633 + $0x24] sm:$0xf]
      %v1644 = vld [vmem:[%s1633 + $0x28] sm:$0xf]
      %v1645 = vld [vmem:[%s1633 + $0x2c] sm:$0xf]
      %v1646 = vld [vmem:[%s1633 + $0x30] sm:$0xf]
      %v1647 = vld [vmem:[%s1633 + $0x34] sm:$0xf]
      %v1648 = vld [vmem:[%s1633 + $0x38] sm:$0xf]
      %v1649 = vld [vmem:[%s1633 + $0x3c] sm:$0xf]
      %v1666 = vunpack.c.l.b16 %v1634
      %v1667 = vunpack.c.l.b16 %v1635
      %v1668 = vunpack.c.l.b16 %v1636
      %v1669 = vunpack.c.l.b16 %v1637
      %v1670 = vunpack.c.l.b16 %v1638
      %v1671 = vunpack.c.l.b16 %v1639
      %v1672 = vunpack.c.l.b16 %v1640
      %v1673 = vunpack.c.l.b16 %v1641
      %v1674 = vunpack.c.l.b16 %v1642
      %v1675 = vunpack.c.l.b16 %v1643
      %v1676 = vunpack.c.l.b16 %v1644
      %v1677 = vunpack.c.l.b16 %v1645
      %v1678 = vunpack.c.l.b16 %v1646
      %v1679 = vunpack.c.l.b16 %v1647
      %v1680 = vunpack.c.l.b16 %v1648
      %v1681 = vunpack.c.l.b16 %v1649
      %v1682 = vpack.c.b16 %v1667, %v1666
      %v1683 = vpack.c.b16 %v1669, %v1668
      %v1684 = vpack.c.b16 %v1671, %v1670
      %v1685 = vpack.c.b16 %v1673, %v1672
      %v1686 = vpack.c.b16 %v1675, %v1674
      %v1687 = vpack.c.b16 %v1677, %v1676
      %v1688 = vpack.c.b16 %v1679, %v1678
      %v1689 = vpack.c.b16 %v1681, %v1680
      %1698 = vmatpush.bf16.msra.mxu0 %v1689
      %1699 = vmatpush.bf16.msra.mxu0 %v1688
      %1700 = vmatpush.bf16.msra.mxu0 %v1687
      %1701 = vmatpush.bf16.msra.mxu0 %v1686
      %1702 = vmatpush.bf16.msra.mxu0 %v1685
      %1703 = vmatpush.bf16.msra.mxu0 %v1684
      %1704 = vmatpush.bf16.msra.mxu0 %v1683
      %1705 = vmatpush.bf16.msra.mxu0 %v1682
      %1706 = vmatmul.bf16.gmra.mxu0 %v1617
      %v1707 = vpop.f32.mrf.mxu0
      %v1708 = vadd.f32 0.0, %v1707
      %v1709 = vpop.f32.mrf.mxu0
      %v1710 = vadd.f32 0.0, %v1709
      %1711 = vmatmul.bf16.gmra.mxu0 %v1618
      %v1712 = vpop.f32.mrf.mxu0
      %v1713 = vadd.f32 0.0, %v1712
      %v1714 = vpop.f32.mrf.mxu0
      %v1715 = vadd.f32 0.0, %v1714
      %1716 = vmatmul.bf16.gmra.mxu0 %v1619
      %v1717 = vpop.f32.mrf.mxu0
      %v1718 = vadd.f32 0.0, %v1717
      %v1719 = vpop.f32.mrf.mxu0
      %v1720 = vadd.f32 0.0, %v1719
      %1721 = vmatmul.bf16.gmra.mxu0 %v1620
      %v1722 = vpop.f32.mrf.mxu0
      %v1723 = vadd.f32 0.0, %v1722
      %v1724 = vpop.f32.mrf.mxu0
      %v1725 = vadd.f32 0.0, %v1724
      %1726 = vmatmul.bf16.gmra.mxu0 %v1621
      %v1727 = vpop.f32.mrf.mxu0
      %v1728 = vadd.f32 0.0, %v1727
      %v1729 = vpop.f32.mrf.mxu0
      %v1730 = vadd.f32 0.0, %v1729
      %1731 = vmatmul.bf16.gmra.mxu0 %v1622
      %v1732 = vpop.f32.mrf.mxu0
      %v1733 = vadd.f32 0.0, %v1732
      %v1734 = vpop.f32.mrf.mxu0
      %v1735 = vadd.f32 0.0, %v1734
      %1736 = vmatmul.bf16.gmra.mxu0 %v1623
      %v1737 = vpop.f32.mrf.mxu0
      %v1738 = vadd.f32 0.0, %v1737
      %v1739 = vpop.f32.mrf.mxu0
      %v1740 = vadd.f32 0.0, %v1739
      %1741 = vmatmul.bf16.gmra.mxu0 %v1624
      %v1742 = vpop.f32.mrf.mxu0
      %v1743 = vadd.f32 0.0, %v1742
      %v1744 = vpop.f32.mrf.mxu0
      %v1745 = vadd.f32 0.0, %v1744
      %1746 = vmatmul.bf16.gmra.mxu0 %v1625
      %v1747 = vpop.f32.mrf.mxu0
      %v1748 = vadd.f32 0.0, %v1747
      %v1749 = vpop.f32.mrf.mxu0
      %v1750 = vadd.f32 0.0, %v1749
      %1751 = vmatmul.bf16.gmra.mxu0 %v1626
      %v1752 = vpop.f32.mrf.mxu0
      %v1753 = vadd.f32 0.0, %v1752
      %v1754 = vpop.f32.mrf.mxu0
      %v1755 = vadd.f32 0.0, %v1754
      %1756 = vmatmul.bf16.gmra.mxu0 %v1627
      %v1757 = vpop.f32.mrf.mxu0
      %v1758 = vadd.f32 0.0, %v1757
      %v1759 = vpop.f32.mrf.mxu0
      %v1760 = vadd.f32 0.0, %v1759
      %1761 = vmatmul.bf16.gmra.mxu0 %v1628
      %v1762 = vpop.f32.mrf.mxu0
      %v1763 = vadd.f32 0.0, %v1762
      %v1764 = vpop.f32.mrf.mxu0
      %v1765 = vadd.f32 0.0, %v1764
      %1766 = vmatmul.bf16.gmra.mxu0 %v1629
      %v1767 = vpop.f32.mrf.mxu0
      %v1768 = vadd.f32 0.0, %v1767
      %v1769 = vpop.f32.mrf.mxu0
      %v1770 = vadd.f32 0.0, %v1769
      %1771 = vmatmul.bf16.gmra.mxu0 %v1630
      %v1772 = vpop.f32.mrf.mxu0
      %v1773 = vadd.f32 0.0, %v1772
      %v1774 = vpop.f32.mrf.mxu0
      %v1775 = vadd.f32 0.0, %v1774
      %1776 = vmatmul.bf16.gmra.mxu0 %v1631
      %v1777 = vpop.f32.mrf.mxu0
      %v1778 = vadd.f32 0.0, %v1777
      %v1779 = vpop.f32.mrf.mxu0
      %v1780 = vadd.f32 0.0, %v1779
      %1781 = vmatmul.bf16.gmra.mxu0 %v1632
      %v1782 = vpop.f32.mrf.mxu0
      %v1783 = vadd.f32 0.0, %v1782
      %v1784 = vpop.f32.mrf.mxu0
      %v1785 = vadd.f32 0.0, %v1784
      %1786 = vdwg.mxu0
      %v1787 = vadd.f32 %v1553, %v1708
      %v1788 = vadd.f32 %v1554, %v1710
      %v1789 = vadd.f32 %v1555, %v1713
      %v1790 = vadd.f32 %v1556, %v1715
      %v1791 = vadd.f32 %v1557, %v1718
      %v1792 = vadd.f32 %v1558, %v1720
      %v1793 = vadd.f32 %v1559, %v1723
      %v1794 = vadd.f32 %v1560, %v1725
      %v1795 = vadd.f32 %v1561, %v1728
      %v1796 = vadd.f32 %v1562, %v1730
      %v1797 = vadd.f32 %v1563, %v1733
      %v1798 = vadd.f32 %v1564, %v1735
      %v1799 = vadd.f32 %v1565, %v1738
      %v1800 = vadd.f32 %v1566, %v1740
      %v1801 = vadd.f32 %v1567, %v1743
      %v1802 = vadd.f32 %v1568, %v1745
      %v1803 = vadd.f32 %v1569, %v1748
      %v1804 = vadd.f32 %v1570, %v1750
      %v1805 = vadd.f32 %v1571, %v1753
      %v1806 = vadd.f32 %v1572, %v1755
      %v1807 = vadd.f32 %v1573, %v1758
      %v1808 = vadd.f32 %v1574, %v1760
      %v1809 = vadd.f32 %v1575, %v1763
      %v1810 = vadd.f32 %v1576, %v1765
      %v1811 = vadd.f32 %v1577, %v1768
      %v1812 = vadd.f32 %v1578, %v1770
      %v1813 = vadd.f32 %v1579, %v1773
      %v1814 = vadd.f32 %v1580, %v1775
      %v1815 = vadd.f32 %v1581, %v1778
      %v1816 = vadd.f32 %v1582, %v1780
      %v1817 = vadd.f32 %v1583, %v1783
      %v1818 = vadd.f32 %v1584, %v1785
      %s1819 = scalar_lea.vmem [#allocation2], 48
      %v1820 = vld [vmem:[%s1819] sm:$0xff]
      %v1821 = vld [vmem:[%s1819 + $0x8] sm:$0xff]
      %v1822 = vld [vmem:[%s1819 + $0x18] sm:$0xff]
      %v1823 = vld [vmem:[%s1819 + $0x20] sm:$0xff]
      %v1824 = vld [vmem:[%s1819 + $0x30] sm:$0xff]
      %v1825 = vld [vmem:[%s1819 + $0x38] sm:$0xff]
      %v1826 = vld [vmem:[%s1819 + $0x48] sm:$0xff]
      %v1827 = vld [vmem:[%s1819 + $0x50] sm:$0xff]
      %v1828 = vld [vmem:[%s1819 + $0x60] sm:$0xff]
      %v1829 = vld [vmem:[%s1819 + $0x68] sm:$0xff]
      %v1830 = vld [vmem:[%s1819 + $0x78] sm:$0xff]
      %v1831 = vld [vmem:[%s1819 + $0x80] sm:$0xff]
      %v1832 = vld [vmem:[%s1819 + $0x90] sm:$0xff]
      %v1833 = vld [vmem:[%s1819 + $0x98] sm:$0xff]
      %v1834 = vld [vmem:[%s1819 + $0xa8] sm:$0xff]
      %v1835 = vld [vmem:[%s1819 + $0xb0] sm:$0xff]
      %v1836 = vld [vmem:[%s1819 + $0xc0] sm:$0xff]
      %v1837 = vld [vmem:[%s1819 + $0xc8] sm:$0xff]
      %v1838 = vld [vmem:[%s1819 + $0xd8] sm:$0xff]
      %v1839 = vld [vmem:[%s1819 + $0xe0] sm:$0xff]
      %v1840 = vld [vmem:[%s1819 + $0xf0] sm:$0xff]
      %v1841 = vld [vmem:[%s1819 + $0xf8] sm:$0xff]
      %v1842 = vld [vmem:[%s1819 + $0x108] sm:$0xff]
      %v1843 = vld [vmem:[%s1819 + $0x110] sm:$0xff]
      %v1844 = vld [vmem:[%s1819 + $0x120] sm:$0xff]
      %v1845 = vld [vmem:[%s1819 + $0x128] sm:$0xff]
      %v1846 = vld [vmem:[%s1819 + $0x138] sm:$0xff]
      %v1847 = vld [vmem:[%s1819 + $0x140] sm:$0xff]
      %v1848 = vld [vmem:[%s1819 + $0x150] sm:$0xff]
      %v1849 = vld [vmem:[%s1819 + $0x158] sm:$0xff]
      %v1850 = vld [vmem:[%s1819 + $0x168] sm:$0xff]
      %v1851 = vld [vmem:[%s1819 + $0x170] sm:$0xff]
      %v1852 = vpack.c.bf16 %v1821, %v1820
      %v1853 = vpack.c.bf16 %v1823, %v1822
      %v1854 = vpack.c.bf16 %v1825, %v1824
      %v1855 = vpack.c.bf16 %v1827, %v1826
      %v1856 = vpack.c.bf16 %v1829, %v1828
      %v1857 = vpack.c.bf16 %v1831, %v1830
      %v1858 = vpack.c.bf16 %v1833, %v1832
      %v1859 = vpack.c.bf16 %v1835, %v1834
      %v1860 = vpack.c.bf16 %v1837, %v1836
      %v1861 = vpack.c.bf16 %v1839, %v1838
      %v1862 = vpack.c.bf16 %v1841, %v1840
      %v1863 = vpack.c.bf16 %v1843, %v1842
      %v1864 = vpack.c.bf16 %v1845, %v1844
      %v1865 = vpack.c.bf16 %v1847, %v1846
      %v1866 = vpack.c.bf16 %v1849, %v1848
      %v1867 = vpack.c.bf16 %v1851, %v1850
      %s1868 = scalar_lea.vmem %s3, 384
      %v1869 = vld [vmem:[%s1868] sm:$0xf]
      %v1870 = vld [vmem:[%s1868 + $0x4] sm:$0xf]
      %v1871 = vld [vmem:[%s1868 + $0x8] sm:$0xf]
      %v1872 = vld [vmem:[%s1868 + $0xc] sm:$0xf]
      %v1873 = vld [vmem:[%s1868 + $0x10] sm:$0xf]
      %v1874 = vld [vmem:[%s1868 + $0x14] sm:$0xf]
      %v1875 = vld [vmem:[%s1868 + $0x18] sm:$0xf]
      %v1876 = vld [vmem:[%s1868 + $0x1c] sm:$0xf]
      %v1877 = vld [vmem:[%s1868 + $0x20] sm:$0xf]
      %v1878 = vld [vmem:[%s1868 + $0x24] sm:$0xf]
      %v1879 = vld [vmem:[%s1868 + $0x28] sm:$0xf]
      %v1880 = vld [vmem:[%s1868 + $0x2c] sm:$0xf]
      %v1881 = vld [vmem:[%s1868 + $0x30] sm:$0xf]
      %v1882 = vld [vmem:[%s1868 + $0x34] sm:$0xf]
      %v1883 = vld [vmem:[%s1868 + $0x38] sm:$0xf]
      %v1884 = vld [vmem:[%s1868 + $0x3c] sm:$0xf]
      %v1901 = vunpack.c.l.b16 %v1869
      %v1902 = vunpack.c.l.b16 %v1870
      %v1903 = vunpack.c.l.b16 %v1871
      %v1904 = vunpack.c.l.b16 %v1872
      %v1905 = vunpack.c.l.b16 %v1873
      %v1906 = vunpack.c.l.b16 %v1874
      %v1907 = vunpack.c.l.b16 %v1875
      %v1908 = vunpack.c.l.b16 %v1876
      %v1909 = vunpack.c.l.b16 %v1877
      %v1910 = vunpack.c.l.b16 %v1878
      %v1911 = vunpack.c.l.b16 %v1879
      %v1912 = vunpack.c.l.b16 %v1880
      %v1913 = vunpack.c.l.b16 %v1881
      %v1914 = vunpack.c.l.b16 %v1882
      %v1915 = vunpack.c.l.b16 %v1883
      %v1916 = vunpack.c.l.b16 %v1884
      %v1917 = vpack.c.b16 %v1902, %v1901
      %v1918 = vpack.c.b16 %v1904, %v1903
      %v1919 = vpack.c.b16 %v1906, %v1905
      %v1920 = vpack.c.b16 %v1908, %v1907
      %v1921 = vpack.c.b16 %v1910, %v1909
      %v1922 = vpack.c.b16 %v1912, %v1911
      %v1923 = vpack.c.b16 %v1914, %v1913
      %v1924 = vpack.c.b16 %v1916, %v1915
      %1933 = vmatpush.bf16.msra.mxu0 %v1924
      %1934 = vmatpush.bf16.msra.mxu0 %v1923
      %1935 = vmatpush.bf16.msra.mxu0 %v1922
      %1936 = vmatpush.bf16.msra.mxu0 %v1921
      %1937 = vmatpush.bf16.msra.mxu0 %v1920
      %1938 = vmatpush.bf16.msra.mxu0 %v1919
      %1939 = vmatpush.bf16.msra.mxu0 %v1918
      %1940 = vmatpush.bf16.msra.mxu0 %v1917
      %1941 = vmatmul.bf16.gmra.mxu0 %v1852
      %v1942 = vpop.f32.mrf.mxu0
      %v1943 = vadd.f32 0.0, %v1942
      %v1944 = vpop.f32.mrf.mxu0
      %v1945 = vadd.f32 0.0, %v1944
      %1946 = vmatmul.bf16.gmra.mxu0 %v1853
      %v1947 = vpop.f32.mrf.mxu0
      %v1948 = vadd.f32 0.0, %v1947
      %v1949 = vpop.f32.mrf.mxu0
      %v1950 = vadd.f32 0.0, %v1949
      %1951 = vmatmul.bf16.gmra.mxu0 %v1854
      %v1952 = vpop.f32.mrf.mxu0
      %v1953 = vadd.f32 0.0, %v1952
      %v1954 = vpop.f32.mrf.mxu0
      %v1955 = vadd.f32 0.0, %v1954
      %1956 = vmatmul.bf16.gmra.mxu0 %v1855
      %v1957 = vpop.f32.mrf.mxu0
      %v1958 = vadd.f32 0.0, %v1957
      %v1959 = vpop.f32.mrf.mxu0
      %v1960 = vadd.f32 0.0, %v1959
      %1961 = vmatmul.bf16.gmra.mxu0 %v1856
      %v1962 = vpop.f32.mrf.mxu0
      %v1963 = vadd.f32 0.0, %v1962
      %v1964 = vpop.f32.mrf.mxu0
      %v1965 = vadd.f32 0.0, %v1964
      %1966 = vmatmul.bf16.gmra.mxu0 %v1857
      %v1967 = vpop.f32.mrf.mxu0
      %v1968 = vadd.f32 0.0, %v1967
      %v1969 = vpop.f32.mrf.mxu0
      %v1970 = vadd.f32 0.0, %v1969
      %1971 = vmatmul.bf16.gmra.mxu0 %v1858
      %v1972 = vpop.f32.mrf.mxu0
      %v1973 = vadd.f32 0.0, %v1972
      %v1974 = vpop.f32.mrf.mxu0
      %v1975 = vadd.f32 0.0, %v1974
      %1976 = vmatmul.bf16.gmra.mxu0 %v1859
      %v1977 = vpop.f32.mrf.mxu0
      %v1978 = vadd.f32 0.0, %v1977
      %v1979 = vpop.f32.mrf.mxu0
      %v1980 = vadd.f32 0.0, %v1979
      %1981 = vmatmul.bf16.gmra.mxu0 %v1860
      %v1982 = vpop.f32.mrf.mxu0
      %v1983 = vadd.f32 0.0, %v1982
      %v1984 = vpop.f32.mrf.mxu0
      %v1985 = vadd.f32 0.0, %v1984
      %1986 = vmatmul.bf16.gmra.mxu0 %v1861
      %v1987 = vpop.f32.mrf.mxu0
      %v1988 = vadd.f32 0.0, %v1987
      %v1989 = vpop.f32.mrf.mxu0
      %v1990 = vadd.f32 0.0, %v1989
      %1991 = vmatmul.bf16.gmra.mxu0 %v1862
      %v1992 = vpop.f32.mrf.mxu0
      %v1993 = vadd.f32 0.0, %v1992
      %v1994 = vpop.f32.mrf.mxu0
      %v1995 = vadd.f32 0.0, %v1994
      %1996 = vmatmul.bf16.gmra.mxu0 %v1863
      %v1997 = vpop.f32.mrf.mxu0
      %v1998 = vadd.f32 0.0, %v1997
      %v1999 = vpop.f32.mrf.mxu0
      %v2000 = vadd.f32 0.0, %v1999
      %2001 = vmatmul.bf16.gmra.mxu0 %v1864
      %v2002 = vpop.f32.mrf.mxu0
      %v2003 = vadd.f32 0.0, %v2002
      %v2004 = vpop.f32.mrf.mxu0
      %v2005 = vadd.f32 0.0, %v2004
      %2006 = vmatmul.bf16.gmra.mxu0 %v1865
      %v2007 = vpop.f32.mrf.mxu0
      %v2008 = vadd.f32 0.0, %v2007
      %v2009 = vpop.f32.mrf.mxu0
      %v2010 = vadd.f32 0.0, %v2009
      %2011 = vmatmul.bf16.gmra.mxu0 %v1866
      %v2012 = vpop.f32.mrf.mxu0
      %v2013 = vadd.f32 0.0, %v2012
      %v2014 = vpop.f32.mrf.mxu0
      %v2015 = vadd.f32 0.0, %v2014
      %2016 = vmatmul.bf16.gmra.mxu0 %v1867
      %v2017 = vpop.f32.mrf.mxu0
      %v2018 = vadd.f32 0.0, %v2017
      %v2019 = vpop.f32.mrf.mxu0
      %v2020 = vadd.f32 0.0, %v2019
      %2021 = vdwg.mxu0
      %v2022 = vadd.f32 %v1787, %v1943
      %v2023 = vadd.f32 %v1788, %v1945
      %v2024 = vadd.f32 %v1789, %v1948
      %v2025 = vadd.f32 %v1790, %v1950
      %v2026 = vadd.f32 %v1791, %v1953
      %v2027 = vadd.f32 %v1792, %v1955
      %v2028 = vadd.f32 %v1793, %v1958
      %v2029 = vadd.f32 %v1794, %v1960
      %v2030 = vadd.f32 %v1795, %v1963
      %v2031 = vadd.f32 %v1796, %v1965
      %v2032 = vadd.f32 %v1797, %v1968
      %v2033 = vadd.f32 %v1798, %v1970
      %v2034 = vadd.f32 %v1799, %v1973
      %v2035 = vadd.f32 %v1800, %v1975
      %v2036 = vadd.f32 %v1801, %v1978
      %v2037 = vadd.f32 %v1802, %v1980
      %v2038 = vadd.f32 %v1803, %v1983
      %v2039 = vadd.f32 %v1804, %v1985
      %v2040 = vadd.f32 %v1805, %v1988
      %v2041 = vadd.f32 %v1806, %v1990
      %v2042 = vadd.f32 %v1807, %v1993
      %v2043 = vadd.f32 %v1808, %v1995
      %v2044 = vadd.f32 %v1809, %v1998
      %v2045 = vadd.f32 %v1810, %v2000
      %v2046 = vadd.f32 %v1811, %v2003
      %v2047 = vadd.f32 %v1812, %v2005
      %v2048 = vadd.f32 %v1813, %v2008
      %v2049 = vadd.f32 %v1814, %v2010
      %v2050 = vadd.f32 %v1815, %v2013
      %v2051 = vadd.f32 %v1816, %v2015
      %v2052 = vadd.f32 %v1817, %v2018
      %v2053 = vadd.f32 %v1818, %v2020
      %v2054 = vld [vmem:[%s1819 + $0x1] sm:$0xff]
      %v2055 = vld [vmem:[%s1819 + $0x9] sm:$0xff]
      %v2056 = vld [vmem:[%s1819 + $0x19] sm:$0xff]
      %v2057 = vld [vmem:[%s1819 + $0x21] sm:$0xff]
      %v2058 = vld [vmem:[%s1819 + $0x31] sm:$0xff]
      %v2059 = vld [vmem:[%s1819 + $0x39] sm:$0xff]
      %v2060 = vld [vmem:[%s1819 + $0x49] sm:$0xff]
      %v2061 = vld [vmem:[%s1819 + $0x51] sm:$0xff]
      %v2062 = vld [vmem:[%s1819 + $0x61] sm:$0xff]
      %v2063 = vld [vmem:[%s1819 + $0x69] sm:$0xff]
      %v2064 = vld [vmem:[%s1819 + $0x79] sm:$0xff]
      %v2065 = vld [vmem:[%s1819 + $0x81] sm:$0xff]
      %v2066 = vld [vmem:[%s1819 + $0x91] sm:$0xff]
      %v2067 = vld [vmem:[%s1819 + $0x99] sm:$0xff]
      %v2068 = vld [vmem:[%s1819 + $0xa9] sm:$0xff]
      %v2069 = vld [vmem:[%s1819 + $0xb1] sm:$0xff]
      %v2070 = vld [vmem:[%s1819 + $0xc1] sm:$0xff]
      %v2071 = vld [vmem:[%s1819 + $0xc9] sm:$0xff]
      %v2072 = vld [vmem:[%s1819 + $0xd9] sm:$0xff]
      %v2073 = vld [vmem:[%s1819 + $0xe1] sm:$0xff]
      %v2074 = vld [vmem:[%s1819 + $0xf1] sm:$0xff]
      %v2075 = vld [vmem:[%s1819 + $0xf9] sm:$0xff]
      %v2076 = vld [vmem:[%s1819 + $0x109] sm:$0xff]
      %v2077 = vld [vmem:[%s1819 + $0x111] sm:$0xff]
      %v2078 = vld [vmem:[%s1819 + $0x121] sm:$0xff]
      %v2079 = vld [vmem:[%s1819 + $0x129] sm:$0xff]
      %v2080 = vld [vmem:[%s1819 + $0x139] sm:$0xff]
      %v2081 = vld [vmem:[%s1819 + $0x141] sm:$0xff]
      %v2082 = vld [vmem:[%s1819 + $0x151] sm:$0xff]
      %v2083 = vld [vmem:[%s1819 + $0x159] sm:$0xff]
      %v2084 = vld [vmem:[%s1819 + $0x169] sm:$0xff]
      %v2085 = vld [vmem:[%s1819 + $0x171] sm:$0xff]
      %v2086 = vpack.c.bf16 %v2055, %v2054
      %v2087 = vpack.c.bf16 %v2057, %v2056
      %v2088 = vpack.c.bf16 %v2059, %v2058
      %v2089 = vpack.c.bf16 %v2061, %v2060
      %v2090 = vpack.c.bf16 %v2063, %v2062
      %v2091 = vpack.c.bf16 %v2065, %v2064
      %v2092 = vpack.c.bf16 %v2067, %v2066
      %v2093 = vpack.c.bf16 %v2069, %v2068
      %v2094 = vpack.c.bf16 %v2071, %v2070
      %v2095 = vpack.c.bf16 %v2073, %v2072
      %v2096 = vpack.c.bf16 %v2075, %v2074
      %v2097 = vpack.c.bf16 %v2077, %v2076
      %v2098 = vpack.c.bf16 %v2079, %v2078
      %v2099 = vpack.c.bf16 %v2081, %v2080
      %v2100 = vpack.c.bf16 %v2083, %v2082
      %v2101 = vpack.c.bf16 %v2085, %v2084
      %s2102 = scalar_lea.vmem %s3, 448
      %v2103 = vld [vmem:[%s2102] sm:$0xf]
      %v2104 = vld [vmem:[%s2102 + $0x4] sm:$0xf]
      %v2105 = vld [vmem:[%s2102 + $0x8] sm:$0xf]
      %v2106 = vld [vmem:[%s2102 + $0xc] sm:$0xf]
      %v2107 = vld [vmem:[%s2102 + $0x10] sm:$0xf]
      %v2108 = vld [vmem:[%s2102 + $0x14] sm:$0xf]
      %v2109 = vld [vmem:[%s2102 + $0x18] sm:$0xf]
      %v2110 = vld [vmem:[%s2102 + $0x1c] sm:$0xf]
      %v2111 = vld [vmem:[%s2102 + $0x20] sm:$0xf]
      %v2112 = vld [vmem:[%s2102 + $0x24] sm:$0xf]
      %v2113 = vld [vmem:[%s2102 + $0x28] sm:$0xf]
      %v2114 = vld [vmem:[%s2102 + $0x2c] sm:$0xf]
      %v2115 = vld [vmem:[%s2102 + $0x30] sm:$0xf]
      %v2116 = vld [vmem:[%s2102 + $0x34] sm:$0xf]
      %v2117 = vld [vmem:[%s2102 + $0x38] sm:$0xf]
      %v2118 = vld [vmem:[%s2102 + $0x3c] sm:$0xf]
      %v2135 = vunpack.c.l.b16 %v2103
      %v2136 = vunpack.c.l.b16 %v2104
      %v2137 = vunpack.c.l.b16 %v2105
      %v2138 = vunpack.c.l.b16 %v2106
      %v2139 = vunpack.c.l.b16 %v2107
      %v2140 = vunpack.c.l.b16 %v2108
      %v2141 = vunpack.c.l.b16 %v2109
      %v2142 = vunpack.c.l.b16 %v2110
      %v2143 = vunpack.c.l.b16 %v2111
      %v2144 = vunpack.c.l.b16 %v2112
      %v2145 = vunpack.c.l.b16 %v2113
      %v2146 = vunpack.c.l.b16 %v2114
      %v2147 = vunpack.c.l.b16 %v2115
      %v2148 = vunpack.c.l.b16 %v2116
      %v2149 = vunpack.c.l.b16 %v2117
      %v2150 = vunpack.c.l.b16 %v2118
      %v2151 = vpack.c.b16 %v2136, %v2135
      %v2152 = vpack.c.b16 %v2138, %v2137
      %v2153 = vpack.c.b16 %v2140, %v2139
      %v2154 = vpack.c.b16 %v2142, %v2141
      %v2155 = vpack.c.b16 %v2144, %v2143
      %v2156 = vpack.c.b16 %v2146, %v2145
      %v2157 = vpack.c.b16 %v2148, %v2147
      %v2158 = vpack.c.b16 %v2150, %v2149
      %2167 = vmatpush.bf16.msra.mxu0 %v2158
      %2168 = vmatpush.bf16.msra.mxu0 %v2157
      %2169 = vmatpush.bf16.msra.mxu0 %v2156
      %2170 = vmatpush.bf16.msra.mxu0 %v2155
      %2171 = vmatpush.bf16.msra.mxu0 %v2154
      %2172 = vmatpush.bf16.msra.mxu0 %v2153
      %2173 = vmatpush.bf16.msra.mxu0 %v2152
      %2174 = vmatpush.bf16.msra.mxu0 %v2151
      %2175 = vmatmul.bf16.gmra.mxu0 %v2086
      %v2176 = vpop.f32.mrf.mxu0
      %v2177 = vadd.f32 0.0, %v2176
      %v2178 = vpop.f32.mrf.mxu0
      %v2179 = vadd.f32 0.0, %v2178
      %2180 = vmatmul.bf16.gmra.mxu0 %v2087
      %v2181 = vpop.f32.mrf.mxu0
      %v2182 = vadd.f32 0.0, %v2181
      %v2183 = vpop.f32.mrf.mxu0
      %v2184 = vadd.f32 0.0, %v2183
      %2185 = vmatmul.bf16.gmra.mxu0 %v2088
      %v2186 = vpop.f32.mrf.mxu0
      %v2187 = vadd.f32 0.0, %v2186
      %v2188 = vpop.f32.mrf.mxu0
      %v2189 = vadd.f32 0.0, %v2188
      %2190 = vmatmul.bf16.gmra.mxu0 %v2089
      %v2191 = vpop.f32.mrf.mxu0
      %v2192 = vadd.f32 0.0, %v2191
      %v2193 = vpop.f32.mrf.mxu0
      %v2194 = vadd.f32 0.0, %v2193
      %2195 = vmatmul.bf16.gmra.mxu0 %v2090
      %v2196 = vpop.f32.mrf.mxu0
      %v2197 = vadd.f32 0.0, %v2196
      %v2198 = vpop.f32.mrf.mxu0
      %v2199 = vadd.f32 0.0, %v2198
      %2200 = vmatmul.bf16.gmra.mxu0 %v2091
      %v2201 = vpop.f32.mrf.mxu0
      %v2202 = vadd.f32 0.0, %v2201
      %v2203 = vpop.f32.mrf.mxu0
      %v2204 = vadd.f32 0.0, %v2203
      %2205 = vmatmul.bf16.gmra.mxu0 %v2092
      %v2206 = vpop.f32.mrf.mxu0
      %v2207 = vadd.f32 0.0, %v2206
      %v2208 = vpop.f32.mrf.mxu0
      %v2209 = vadd.f32 0.0, %v2208
      %2210 = vmatmul.bf16.gmra.mxu0 %v2093
      %v2211 = vpop.f32.mrf.mxu0
      %v2212 = vadd.f32 0.0, %v2211
      %v2213 = vpop.f32.mrf.mxu0
      %v2214 = vadd.f32 0.0, %v2213
      %2215 = vmatmul.bf16.gmra.mxu0 %v2094
      %v2216 = vpop.f32.mrf.mxu0
      %v2217 = vadd.f32 0.0, %v2216
      %v2218 = vpop.f32.mrf.mxu0
      %v2219 = vadd.f32 0.0, %v2218
      %2220 = vmatmul.bf16.gmra.mxu0 %v2095
      %v2221 = vpop.f32.mrf.mxu0
      %v2222 = vadd.f32 0.0, %v2221
      %v2223 = vpop.f32.mrf.mxu0
      %v2224 = vadd.f32 0.0, %v2223
      %2225 = vmatmul.bf16.gmra.mxu0 %v2096
      %v2226 = vpop.f32.mrf.mxu0
      %v2227 = vadd.f32 0.0, %v2226
      %v2228 = vpop.f32.mrf.mxu0
      %v2229 = vadd.f32 0.0, %v2228
      %2230 = vmatmul.bf16.gmra.mxu0 %v2097
      %v2231 = vpop.f32.mrf.mxu0
      %v2232 = vadd.f32 0.0, %v2231
      %v2233 = vpop.f32.mrf.mxu0
      %v2234 = vadd.f32 0.0, %v2233
      %2235 = vmatmul.bf16.gmra.mxu0 %v2098
      %v2236 = vpop.f32.mrf.mxu0
      %v2237 = vadd.f32 0.0, %v2236
      %v2238 = vpop.f32.mrf.mxu0
      %v2239 = vadd.f32 0.0, %v2238
      %2240 = vmatmul.bf16.gmra.mxu0 %v2099
      %v2241 = vpop.f32.mrf.mxu0
      %v2242 = vadd.f32 0.0, %v2241
      %v2243 = vpop.f32.mrf.mxu0
      %v2244 = vadd.f32 0.0, %v2243
      %2245 = vmatmul.bf16.gmra.mxu0 %v2100
      %v2246 = vpop.f32.mrf.mxu0
      %v2247 = vadd.f32 0.0, %v2246
      %v2248 = vpop.f32.mrf.mxu0
      %v2249 = vadd.f32 0.0, %v2248
      %2250 = vmatmul.bf16.gmra.mxu0 %v2101
      %v2251 = vpop.f32.mrf.mxu0
      %v2252 = vadd.f32 0.0, %v2251
      %v2253 = vpop.f32.mrf.mxu0
      %v2254 = vadd.f32 0.0, %v2253
      %2255 = vdwg.mxu0
      %v2256 = vadd.f32 %v2022, %v2177
      %v2257 = vadd.f32 %v2023, %v2179
      %v2258 = vadd.f32 %v2024, %v2182
      %v2259 = vadd.f32 %v2025, %v2184
      %v2260 = vadd.f32 %v2026, %v2187
      %v2261 = vadd.f32 %v2027, %v2189
      %v2262 = vadd.f32 %v2028, %v2192
      %v2263 = vadd.f32 %v2029, %v2194
      %v2264 = vadd.f32 %v2030, %v2197
      %v2265 = vadd.f32 %v2031, %v2199
      %v2266 = vadd.f32 %v2032, %v2202
      %v2267 = vadd.f32 %v2033, %v2204
      %v2268 = vadd.f32 %v2034, %v2207
      %v2269 = vadd.f32 %v2035, %v2209
      %v2270 = vadd.f32 %v2036, %v2212
      %v2271 = vadd.f32 %v2037, %v2214
      %v2272 = vadd.f32 %v2038, %v2217
      %v2273 = vadd.f32 %v2039, %v2219
      %v2274 = vadd.f32 %v2040, %v2222
      %v2275 = vadd.f32 %v2041, %v2224
      %v2276 = vadd.f32 %v2042, %v2227
      %v2277 = vadd.f32 %v2043, %v2229
      %v2278 = vadd.f32 %v2044, %v2232
      %v2279 = vadd.f32 %v2045, %v2234
      %v2280 = vadd.f32 %v2046, %v2237
      %v2281 = vadd.f32 %v2047, %v2239
      %v2282 = vadd.f32 %v2048, %v2242
      %v2283 = vadd.f32 %v2049, %v2244
      %v2284 = vadd.f32 %v2050, %v2247
      %v2285 = vadd.f32 %v2051, %v2249
      %v2286 = vadd.f32 %v2052, %v2252
      %v2287 = vadd.f32 %v2053, %v2254
      %v2288 = vld [vmem:[%s1819 + $0x2] sm:$0xff]
      %v2289 = vld [vmem:[%s1819 + $0xa] sm:$0xff]
      %v2290 = vld [vmem:[%s1819 + $0x1a] sm:$0xff]
      %v2291 = vld [vmem:[%s1819 + $0x22] sm:$0xff]
      %v2292 = vld [vmem:[%s1819 + $0x32] sm:$0xff]
      %v2293 = vld [vmem:[%s1819 + $0x3a] sm:$0xff]
      %v2294 = vld [vmem:[%s1819 + $0x4a] sm:$0xff]
      %v2295 = vld [vmem:[%s1819 + $0x52] sm:$0xff]
      %v2296 = vld [vmem:[%s1819 + $0x62] sm:$0xff]
      %v2297 = vld [vmem:[%s1819 + $0x6a] sm:$0xff]
      %v2298 = vld [vmem:[%s1819 + $0x7a] sm:$0xff]
      %v2299 = vld [vmem:[%s1819 + $0x82] sm:$0xff]
      %v2300 = vld [vmem:[%s1819 + $0x92] sm:$0xff]
      %v2301 = vld [vmem:[%s1819 + $0x9a] sm:$0xff]
      %v2302 = vld [vmem:[%s1819 + $0xaa] sm:$0xff]
      %v2303 = vld [vmem:[%s1819 + $0xb2] sm:$0xff]
      %v2304 = vld [vmem:[%s1819 + $0xc2] sm:$0xff]
      %v2305 = vld [vmem:[%s1819 + $0xca] sm:$0xff]
      %v2306 = vld [vmem:[%s1819 + $0xda] sm:$0xff]
      %v2307 = vld [vmem:[%s1819 + $0xe2] sm:$0xff]
      %v2308 = vld [vmem:[%s1819 + $0xf2] sm:$0xff]
      %v2309 = vld [vmem:[%s1819 + $0xfa] sm:$0xff]
      %v2310 = vld [vmem:[%s1819 + $0x10a] sm:$0xff]
      %v2311 = vld [vmem:[%s1819 + $0x112] sm:$0xff]
      %v2312 = vld [vmem:[%s1819 + $0x122] sm:$0xff]
      %v2313 = vld [vmem:[%s1819 + $0x12a] sm:$0xff]
      %v2314 = vld [vmem:[%s1819 + $0x13a] sm:$0xff]
      %v2315 = vld [vmem:[%s1819 + $0x142] sm:$0xff]
      %v2316 = vld [vmem:[%s1819 + $0x152] sm:$0xff]
      %v2317 = vld [vmem:[%s1819 + $0x15a] sm:$0xff]
      %v2318 = vld [vmem:[%s1819 + $0x16a] sm:$0xff]
      %v2319 = vld [vmem:[%s1819 + $0x172] sm:$0xff]
      %v2320 = vpack.c.bf16 %v2289, %v2288
      %v2321 = vpack.c.bf16 %v2291, %v2290
      %v2322 = vpack.c.bf16 %v2293, %v2292
      %v2323 = vpack.c.bf16 %v2295, %v2294
      %v2324 = vpack.c.bf16 %v2297, %v2296
      %v2325 = vpack.c.bf16 %v2299, %v2298
      %v2326 = vpack.c.bf16 %v2301, %v2300
      %v2327 = vpack.c.bf16 %v2303, %v2302
      %v2328 = vpack.c.bf16 %v2305, %v2304
      %v2329 = vpack.c.bf16 %v2307, %v2306
      %v2330 = vpack.c.bf16 %v2309, %v2308
      %v2331 = vpack.c.bf16 %v2311, %v2310
      %v2332 = vpack.c.bf16 %v2313, %v2312
      %v2333 = vpack.c.bf16 %v2315, %v2314
      %v2334 = vpack.c.bf16 %v2317, %v2316
      %v2335 = vpack.c.bf16 %v2319, %v2318
      %s2336 = scalar_lea.vmem %s3, 512
      %v2337 = vld [vmem:[%s2336] sm:$0xf]
      %v2338 = vld [vmem:[%s2336 + $0x4] sm:$0xf]
      %v2339 = vld [vmem:[%s2336 + $0x8] sm:$0xf]
      %v2340 = vld [vmem:[%s2336 + $0xc] sm:$0xf]
      %v2341 = vld [vmem:[%s2336 + $0x10] sm:$0xf]
      %v2342 = vld [vmem:[%s2336 + $0x14] sm:$0xf]
      %v2343 = vld [vmem:[%s2336 + $0x18] sm:$0xf]
      %v2344 = vld [vmem:[%s2336 + $0x1c] sm:$0xf]
      %v2345 = vld [vmem:[%s2336 + $0x20] sm:$0xf]
      %v2346 = vld [vmem:[%s2336 + $0x24] sm:$0xf]
      %v2347 = vld [vmem:[%s2336 + $0x28] sm:$0xf]
      %v2348 = vld [vmem:[%s2336 + $0x2c] sm:$0xf]
      %v2349 = vld [vmem:[%s2336 + $0x30] sm:$0xf]
      %v2350 = vld [vmem:[%s2336 + $0x34] sm:$0xf]
      %v2351 = vld [vmem:[%s2336 + $0x38] sm:$0xf]
      %v2352 = vld [vmem:[%s2336 + $0x3c] sm:$0xf]
      %v2369 = vunpack.c.l.b16 %v2337
      %v2370 = vunpack.c.l.b16 %v2338
      %v2371 = vunpack.c.l.b16 %v2339
      %v2372 = vunpack.c.l.b16 %v2340
      %v2373 = vunpack.c.l.b16 %v2341
      %v2374 = vunpack.c.l.b16 %v2342
      %v2375 = vunpack.c.l.b16 %v2343
      %v2376 = vunpack.c.l.b16 %v2344
      %v2377 = vunpack.c.l.b16 %v2345
      %v2378 = vunpack.c.l.b16 %v2346
      %v2379 = vunpack.c.l.b16 %v2347
      %v2380 = vunpack.c.l.b16 %v2348
      %v2381 = vunpack.c.l.b16 %v2349
      %v2382 = vunpack.c.l.b16 %v2350
      %v2383 = vunpack.c.l.b16 %v2351
      %v2384 = vunpack.c.l.b16 %v2352
      %v2385 = vpack.c.b16 %v2370, %v2369
      %v2386 = vpack.c.b16 %v2372, %v2371
      %v2387 = vpack.c.b16 %v2374, %v2373
      %v2388 = vpack.c.b16 %v2376, %v2375
      %v2389 = vpack.c.b16 %v2378, %v2377
      %v2390 = vpack.c.b16 %v2380, %v2379
      %v2391 = vpack.c.b16 %v2382, %v2381
      %v2392 = vpack.c.b16 %v2384, %v2383
      %2401 = vmatpush.bf16.msra.mxu0 %v2392
      %2402 = vmatpush.bf16.msra.mxu0 %v2391
      %2403 = vmatpush.bf16.msra.mxu0 %v2390
      %2404 = vmatpush.bf16.msra.mxu0 %v2389
      %2405 = vmatpush.bf16.msra.mxu0 %v2388
      %2406 = vmatpush.bf16.msra.mxu0 %v2387
      %2407 = vmatpush.bf16.msra.mxu0 %v2386
      %2408 = vmatpush.bf16.msra.mxu0 %v2385
      %2409 = vmatmul.bf16.gmra.mxu0 %v2320
      %v2410 = vpop.f32.mrf.mxu0
      %v2411 = vadd.f32 0.0, %v2410
      %v2412 = vpop.f32.mrf.mxu0
      %v2413 = vadd.f32 0.0, %v2412
      %2414 = vmatmul.bf16.gmra.mxu0 %v2321
      %v2415 = vpop.f32.mrf.mxu0
      %v2416 = vadd.f32 0.0, %v2415
      %v2417 = vpop.f32.mrf.mxu0
      %v2418 = vadd.f32 0.0, %v2417
      %2419 = vmatmul.bf16.gmra.mxu0 %v2322
      %v2420 = vpop.f32.mrf.mxu0
      %v2421 = vadd.f32 0.0, %v2420
      %v2422 = vpop.f32.mrf.mxu0
      %v2423 = vadd.f32 0.0, %v2422
      %2424 = vmatmul.bf16.gmra.mxu0 %v2323
      %v2425 = vpop.f32.mrf.mxu0
      %v2426 = vadd.f32 0.0, %v2425
      %v2427 = vpop.f32.mrf.mxu0
      %v2428 = vadd.f32 0.0, %v2427
      %2429 = vmatmul.bf16.gmra.mxu0 %v2324
      %v2430 = vpop.f32.mrf.mxu0
      %v2431 = vadd.f32 0.0, %v2430
      %v2432 = vpop.f32.mrf.mxu0
      %v2433 = vadd.f32 0.0, %v2432
      %2434 = vmatmul.bf16.gmra.mxu0 %v2325
      %v2435 = vpop.f32.mrf.mxu0
      %v2436 = vadd.f32 0.0, %v2435
      %v2437 = vpop.f32.mrf.mxu0
      %v2438 = vadd.f32 0.0, %v2437
      %2439 = vmatmul.bf16.gmra.mxu0 %v2326
      %v2440 = vpop.f32.mrf.mxu0
      %v2441 = vadd.f32 0.0, %v2440
      %v2442 = vpop.f32.mrf.mxu0
      %v2443 = vadd.f32 0.0, %v2442
      %2444 = vmatmul.bf16.gmra.mxu0 %v2327
      %v2445 = vpop.f32.mrf.mxu0
      %v2446 = vadd.f32 0.0, %v2445
      %v2447 = vpop.f32.mrf.mxu0
      %v2448 = vadd.f32 0.0, %v2447
      %2449 = vmatmul.bf16.gmra.mxu0 %v2328
      %v2450 = vpop.f32.mrf.mxu0
      %v2451 = vadd.f32 0.0, %v2450
      %v2452 = vpop.f32.mrf.mxu0
      %v2453 = vadd.f32 0.0, %v2452
      %2454 = vmatmul.bf16.gmra.mxu0 %v2329
      %v2455 = vpop.f32.mrf.mxu0
      %v2456 = vadd.f32 0.0, %v2455
      %v2457 = vpop.f32.mrf.mxu0
      %v2458 = vadd.f32 0.0, %v2457
      %2459 = vmatmul.bf16.gmra.mxu0 %v2330
      %v2460 = vpop.f32.mrf.mxu0
      %v2461 = vadd.f32 0.0, %v2460
      %v2462 = vpop.f32.mrf.mxu0
      %v2463 = vadd.f32 0.0, %v2462
      %2464 = vmatmul.bf16.gmra.mxu0 %v2331
      %v2465 = vpop.f32.mrf.mxu0
      %v2466 = vadd.f32 0.0, %v2465
      %v2467 = vpop.f32.mrf.mxu0
      %v2468 = vadd.f32 0.0, %v2467
      %2469 = vmatmul.bf16.gmra.mxu0 %v2332
      %v2470 = vpop.f32.mrf.mxu0
      %v2471 = vadd.f32 0.0, %v2470
      %v2472 = vpop.f32.mrf.mxu0
      %v2473 = vadd.f32 0.0, %v2472
      %2474 = vmatmul.bf16.gmra.mxu0 %v2333
      %v2475 = vpop.f32.mrf.mxu0
      %v2476 = vadd.f32 0.0, %v2475
      %v2477 = vpop.f32.mrf.mxu0
      %v2478 = vadd.f32 0.0, %v2477
      %2479 = vmatmul.bf16.gmra.mxu0 %v2334
      %v2480 = vpop.f32.mrf.mxu0
      %v2481 = vadd.f32 0.0, %v2480
      %v2482 = vpop.f32.mrf.mxu0
      %v2483 = vadd.f32 0.0, %v2482
      %2484 = vmatmul.bf16.gmra.mxu0 %v2335
      %v2485 = vpop.f32.mrf.mxu0
      %v2486 = vadd.f32 0.0, %v2485
      %v2487 = vpop.f32.mrf.mxu0
      %v2488 = vadd.f32 0.0, %v2487
      %2489 = vdwg.mxu0
      %v2490 = vadd.f32 %v2256, %v2411
      %v2491 = vadd.f32 %v2257, %v2413
      %v2492 = vadd.f32 %v2258, %v2416
      %v2493 = vadd.f32 %v2259, %v2418
      %v2494 = vadd.f32 %v2260, %v2421
      %v2495 = vadd.f32 %v2261, %v2423
      %v2496 = vadd.f32 %v2262, %v2426
      %v2497 = vadd.f32 %v2263, %v2428
      %v2498 = vadd.f32 %v2264, %v2431
      %v2499 = vadd.f32 %v2265, %v2433
      %v2500 = vadd.f32 %v2266, %v2436
      %v2501 = vadd.f32 %v2267, %v2438
      %v2502 = vadd.f32 %v2268, %v2441
      %v2503 = vadd.f32 %v2269, %v2443
      %v2504 = vadd.f32 %v2270, %v2446
      %v2505 = vadd.f32 %v2271, %v2448
      %v2506 = vadd.f32 %v2272, %v2451
      %v2507 = vadd.f32 %v2273, %v2453
      %v2508 = vadd.f32 %v2274, %v2456
      %v2509 = vadd.f32 %v2275, %v2458
      %v2510 = vadd.f32 %v2276, %v2461
      %v2511 = vadd.f32 %v2277, %v2463
      %v2512 = vadd.f32 %v2278, %v2466
      %v2513 = vadd.f32 %v2279, %v2468
      %v2514 = vadd.f32 %v2280, %v2471
      %v2515 = vadd.f32 %v2281, %v2473
      %v2516 = vadd.f32 %v2282, %v2476
      %v2517 = vadd.f32 %v2283, %v2478
      %v2518 = vadd.f32 %v2284, %v2481
      %v2519 = vadd.f32 %v2285, %v2483
      %v2520 = vadd.f32 %v2286, %v2486
      %v2521 = vadd.f32 %v2287, %v2488
      %v2522 = vpack.c.bf16 %v2490, %v2490
      %v2523 = vpack.c.bf16 %v2491, %v2491
      %v2524 = vpack.c.bf16 %v2492, %v2492
      %v2525 = vpack.c.bf16 %v2493, %v2493
      %v2526 = vpack.c.bf16 %v2494, %v2494
      %v2527 = vpack.c.bf16 %v2495, %v2495
      %v2528 = vpack.c.bf16 %v2496, %v2496
      %v2529 = vpack.c.bf16 %v2497, %v2497
      %v2530 = vpack.c.bf16 %v2498, %v2498
      %v2531 = vpack.c.bf16 %v2499, %v2499
      %v2532 = vpack.c.bf16 %v2500, %v2500
      %v2533 = vpack.c.bf16 %v2501, %v2501
      %v2534 = vpack.c.bf16 %v2502, %v2502
      %v2535 = vpack.c.bf16 %v2503, %v2503
      %v2536 = vpack.c.bf16 %v2504, %v2504
      %v2537 = vpack.c.bf16 %v2505, %v2505
      %v2538 = vpack.c.bf16 %v2506, %v2506
      %v2539 = vpack.c.bf16 %v2507, %v2507
      %v2540 = vpack.c.bf16 %v2508, %v2508
      %v2541 = vpack.c.bf16 %v2509, %v2509
      %v2542 = vpack.c.bf16 %v2510, %v2510
      %v2543 = vpack.c.bf16 %v2511, %v2511
      %v2544 = vpack.c.bf16 %v2512, %v2512
      %v2545 = vpack.c.bf16 %v2513, %v2513
      %v2546 = vpack.c.bf16 %v2514, %v2514
      %v2547 = vpack.c.bf16 %v2515, %v2515
      %v2548 = vpack.c.bf16 %v2516, %v2516
      %v2549 = vpack.c.bf16 %v2517, %v2517
      %v2550 = vpack.c.bf16 %v2518, %v2518
      %v2551 = vpack.c.bf16 %v2519, %v2519
      %v2552 = vpack.c.bf16 %v2520, %v2520
      %v2553 = vpack.c.bf16 %v2521, %v2521
      %2554 = vst [vmem:[%s231] sm:$0xf] %v2522
      %2555 = vst [vmem:[%s231 + $0x4] sm:$0xf] %v2523
      %2556 = vst [vmem:[%s231 + $0x8] sm:$0xf] %v2524
      %2557 = vst [vmem:[%s231 + $0xc] sm:$0xf] %v2525
      %2558 = vst [vmem:[%s231 + $0x10] sm:$0xf] %v2526
      %2559 = vst [vmem:[%s231 + $0x14] sm:$0xf] %v2527
      %2560 = vst [vmem:[%s231 + $0x18] sm:$0xf] %v2528
      %2561 = vst [vmem:[%s231 + $0x1c] sm:$0xf] %v2529
      %2562 = vst [vmem:[%s231 + $0x20] sm:$0xf] %v2530
      %2563 = vst [vmem:[%s231 + $0x24] sm:$0xf] %v2531
      %2564 = vst [vmem:[%s231 + $0x28] sm:$0xf] %v2532
      %2565 = vst [vmem:[%s231 + $0x2c] sm:$0xf] %v2533
      %2566 = vst [vmem:[%s231 + $0x30] sm:$0xf] %v2534
      %2567 = vst [vmem:[%s231 + $0x34] sm:$0xf] %v2535
      %2568 = vst [vmem:[%s231 + $0x38] sm:$0xf] %v2536
      %2569 = vst [vmem:[%s231 + $0x3c] sm:$0xf] %v2537
      %2570 = vst [vmem:[%s231 + $0x40] sm:$0xf] %v2538
      %2571 = vst [vmem:[%s231 + $0x44] sm:$0xf] %v2539
      %2572 = vst [vmem:[%s231 + $0x48] sm:$0xf] %v2540
      %2573 = vst [vmem:[%s231 + $0x4c] sm:$0xf] %v2541
      %2574 = vst [vmem:[%s231 + $0x50] sm:$0xf] %v2542
      %2575 = vst [vmem:[%s231 + $0x54] sm:$0xf] %v2543
      %2576 = vst [vmem:[%s231 + $0x58] sm:$0xf] %v2544
      %2577 = vst [vmem:[%s231 + $0x5c] sm:$0xf] %v2545
      %2578 = vst [vmem:[%s231 + $0x60] sm:$0xf] %v2546
      %2579 = vst [vmem:[%s231 + $0x64] sm:$0xf] %v2547
      %2580 = vst [vmem:[%s231 + $0x68] sm:$0xf] %v2548
      %2581 = vst [vmem:[%s231 + $0x6c] sm:$0xf] %v2549
      %2582 = vst [vmem:[%s231 + $0x70] sm:$0xf] %v2550
      %2583 = vst [vmem:[%s231 + $0x74] sm:$0xf] %v2551
      %2584 = vst [vmem:[%s231 + $0x78] sm:$0xf] %v2552
      %2585 = vst [vmem:[%s231 + $0x7c] sm:$0xf] %v2553
      %v2586 = vadd.f32 %v2490, %v2491
      %v2587 = vadd.f32 %v2586, %v2492
      %v2588 = vadd.f32 %v2587, %v2493
      %v2589 = vadd.f32 %v2588, %v2494
      %v2590 = vadd.f32 %v2589, %v2495
      %v2591 = vadd.f32 %v2590, %v2496
      %v2592 = vadd.f32 %v2591, %v2497
      %v2593 = vadd.f32 %v2592, %v2498
      %v2594 = vadd.f32 %v2593, %v2499
      %v2595 = vadd.f32 %v2594, %v2500
      %v2596 = vadd.f32 %v2595, %v2501
      %v2597 = vadd.f32 %v2596, %v2502
      %v2598 = vadd.f32 %v2597, %v2503
      %v2599 = vadd.f32 %v2598, %v2504
      %v2600 = vadd.f32 %v2599, %v2505
      %v2601 = vadd.f32 %v2600, %v2506
      %v2602 = vadd.f32 %v2601, %v2507
      %v2603 = vadd.f32 %v2602, %v2508
      %v2604 = vadd.f32 %v2603, %v2509
      %v2605 = vadd.f32 %v2604, %v2510
      %v2606 = vadd.f32 %v2605, %v2511
      %v2607 = vadd.f32 %v2606, %v2512
      %v2608 = vadd.f32 %v2607, %v2513
      %v2609 = vadd.f32 %v2608, %v2514
      %v2610 = vadd.f32 %v2609, %v2515
      %v2611 = vadd.f32 %v2610, %v2516
      %v2612 = vadd.f32 %v2611, %v2517
      %v2613 = vadd.f32 %v2612, %v2518
      %v2614 = vadd.f32 %v2613, %v2519
      %v2615 = vadd.f32 %v2614, %v2520
      %v2616 = vadd.f32 %v2615, %v2521
      %v2617 = vrot.slane %v2616, 4
      %v2618 = vadd.f32 %v2616, %v2617
      %v2619 = vrot.slane %v2618, 2
      %v2620 = vadd.f32 %v2618, %v2619
      %v2621 = vrot.slane %v2620, 1
      %v2622 = vadd.f32 %v2620, %v2621
      %v2623 = vmul.f32 %v2490, %v2490
      %v2624 = vmul.f32 %v2491, %v2491
      %v2625 = vmul.f32 %v2492, %v2492
      %v2626 = vmul.f32 %v2493, %v2493
      %v2627 = vmul.f32 %v2494, %v2494
      %v2628 = vmul.f32 %v2495, %v2495
      %v2629 = vmul.f32 %v2496, %v2496
      %v2630 = vmul.f32 %v2497, %v2497
      %v2631 = vmul.f32 %v2498, %v2498
      %v2632 = vmul.f32 %v2499, %v2499
      %v2633 = vmul.f32 %v2500, %v2500
      %v2634 = vmul.f32 %v2501, %v2501
      %v2635 = vmul.f32 %v2502, %v2502
      %v2636 = vmul.f32 %v2503, %v2503
      %v2637 = vmul.f32 %v2504, %v2504
      %v2638 = vmul.f32 %v2505, %v2505
      %v2639 = vmul.f32 %v2506, %v2506
      %v2640 = vmul.f32 %v2507, %v2507
      %v2641 = vmul.f32 %v2508, %v2508
      %v2642 = vmul.f32 %v2509, %v2509
      %v2643 = vmul.f32 %v2510, %v2510
      %v2644 = vmul.f32 %v2511, %v2511
      %v2645 = vmul.f32 %v2512, %v2512
      %v2646 = vmul.f32 %v2513, %v2513
      %v2647 = vmul.f32 %v2514, %v2514
      %v2648 = vmul.f32 %v2515, %v2515
      %v2649 = vmul.f32 %v2516, %v2516
      %v2650 = vmul.f32 %v2517, %v2517
      %v2651 = vmul.f32 %v2518, %v2518
      %v2652 = vmul.f32 %v2519, %v2519
      %v2653 = vmul.f32 %v2520, %v2520
      %v2654 = vmul.f32 %v2521, %v2521
      %v2655 = vadd.f32 %v2623, %v2624
      %v2656 = vadd.f32 %v2655, %v2625
      %v2657 = vadd.f32 %v2656, %v2626
      %v2658 = vadd.f32 %v2657, %v2627
      %v2659 = vadd.f32 %v2658, %v2628
      %v2660 = vadd.f32 %v2659, %v2629
      %v2661 = vadd.f32 %v2660, %v2630
      %v2662 = vadd.f32 %v2661, %v2631
      %v2663 = vadd.f32 %v2662, %v2632
      %v2664 = vadd.f32 %v2663, %v2633
      %v2665 = vadd.f32 %v2664, %v2634
      %v2666 = vadd.f32 %v2665, %v2635
      %v2667 = vadd.f32 %v2666, %v2636
      %v2668 = vadd.f32 %v2667, %v2637
      %v2669 = vadd.f32 %v2668, %v2638
      %v2670 = vadd.f32 %v2669, %v2639
      %v2671 = vadd.f32 %v2670, %v2640
      %v2672 = vadd.f32 %v2671, %v2641
      %v2673 = vadd.f32 %v2672, %v2642
      %v2674 = vadd.f32 %v2673, %v2643
      %v2675 = vadd.f32 %v2674, %v2644
      %v2676 = vadd.f32 %v2675, %v2645
      %v2677 = vadd.f32 %v2676, %v2646
      %v2678 = vadd.f32 %v2677, %v2647
      %v2679 = vadd.f32 %v2678, %v2648
      %v2680 = vadd.f32 %v2679, %v2649
      %v2681 = vadd.f32 %v2680, %v2650
      %v2682 = vadd.f32 %v2681, %v2651
      %v2683 = vadd.f32 %v2682, %v2652
      %v2684 = vadd.f32 %v2683, %v2653
      %v2685 = vadd.f32 %v2684, %v2654
      %v2686 = vrot.slane %v2685, 4
      %v2687 = vadd.f32 %v2685, %v2686
      %v2688 = vrot.slane %v2687, 2
      %v2689 = vadd.f32 %v2687, %v2688
      %v2690 = vrot.slane %v2689, 1
      %v2691 = vadd.f32 %v2689, %v2690
      %vm2692 = vcmask 1040384
      %v2693 = vsel %vm2692, %v2622, %v2691
      %2694 = vst [vmem:[%s235] sm:$0x3] %v2693
      %p2695 = scmp.lt.s32.totalorder %s17, 1
      %s2696 = scalar_select %p2695, %s17, 1
      %s2697 = smul.addr %s2696, 32
      %s2698 = smul.addr %s2697, 4
      %s2699 = scalar_lea.vmem %s4, %s2698
      %p2700 = scmp.lt.s32.totalorder %s17, 1
      %s2701 = scalar_select %p2700, %s17, 1
      %s2702 = smul.addr %s2701, 2
      %s2703 = scalar_lea.vmem %s5, %s2702
      // Predicated region
      $region37: #{spp_se_preact_bottleneck.8} parent=35 // pred_check
        %p2704 = pneg %p124
      $region38: #{spp_se_preact_bottleneck.8} parent=35 // pred_check_branch
        %2706 = sbr.rel (%p2704) target = $region40
      $region39: #{spp_se_preact_bottleneck.8} parent=35 // pred_region
        _
      $region40: #{spp_se_preact_bottleneck.8} parent=35 // pred_fallthru
        _
      // Predicated region
      $region41: #{spp_se_preact_bottleneck.8} parent=35 // pred_check
        %p2707 = pneg %p150
      $region42: #{spp_se_preact_bottleneck.8} parent=35 // pred_check_branch
        %2709 = sbr.rel (%p2707) target = $region44
      $region43: #{spp_se_preact_bottleneck.8} parent=35 // pred_region
        _
      $region44: #{spp_se_preact_bottleneck.8} parent=35 // pred_fallthru
        _
    $region36: #{spp_se_preact_bottleneck.8} parent=5 // pred_fallthru
      _
    %p2710 = scmp.le.s32.totalorder 2, %s12
    // Predicated region
    $region45: #{spp_se_preact_bottleneck.8} parent=5 // pred_check
      %p2711 = pneg %p2710
    $region46: #{spp_se_preact_bottleneck.8} parent=5 // pred_check_branch
      %2713 = sbr.rel (%p2711) target = $region48
    $region47: #{spp_se_preact_bottleneck.8} parent=5 // pred_region
      %s2714 = ssub.s32 %s12, 2
      // Predicated region
      $region49: #{spp_se_preact_bottleneck.8} parent=47 // pred_check
        %p2715 = pneg %p130
      $region50: #{spp_se_preact_bottleneck.8} parent=47 // pred_check_branch
        %2717 = sbr.rel (%p2715) target = $region52
      $region51: #{spp_se_preact_bottleneck.8} parent=47 // pred_region
        %p2718 = scmp.lt.s32.totalorder %s18, 1
        %s2719 = scalar_select %p2718, %s18, 1
        %s2720 = smul.addr %s2719, 32
        %s2721 = smul.addr %s2720, 4
        %s2722 = scalar_lea.vmem %s4, %s2721
      $region52: #{spp_se_preact_bottleneck.8} parent=47 // pred_fallthru
        _
      // Predicated region
      $region53: #{spp_se_preact_bottleneck.8} parent=47 // pred_check
        %p2723 = pneg %p156
      $region54: #{spp_se_preact_bottleneck.8} parent=47 // pred_check_branch
        %2725 = sbr.rel (%p2723) target = $region56
      $region55: #{spp_se_preact_bottleneck.8} parent=47 // pred_region
        %p2726 = scmp.lt.s32.totalorder %s18, 1
        %s2727 = scalar_select %p2726, %s18, 1
        %s2728 = smul.addr %s2727, 2
        %s2729 = scalar_lea.vmem %s5, %s2728
      $region56: #{spp_se_preact_bottleneck.8} parent=47 // pred_fallthru
        _
    $region48: #{spp_se_preact_bottleneck.8} parent=5 // pred_fallthru
      _
  $region6: #{spp_se_preact_bottleneck.8} parent=0 // loop_footer
    %s16 = sadd.s32 1, %s12
  $region7: #{spp_se_preact_bottleneck.8} parent=0 // loop_footer_branch
    %11 = sbr.rel target = $region3
  $region8: #{spp_se_preact_bottleneck.8} parent=0 // loop_exit
    _

// kernel: spp_se_preact_bottleneck.10
$region0: #{spp_se_preact_bottleneck.10}
  #allocation0 [shape = 'u32[]', space=smem, size = 0x4, offset = 0x4, fixed_abs, tag = 'smem constant byte address 0x4 - core index']
  #allocation1 [shape = 'u32[72,128]{1,0:T(1,128)}', space=vmem, size = 0x9000, scoped, tag = 'internal scratch']
  %s0 = inlined_call_operand.vmem [shape: bf16[2,16,16,128], index: 0, kind: input, shape index: {}]
  %s1 = inlined_call_operand.vmem [shape: f32[2,16,128], index: 1, kind: output, shape index: {}]
  %s2 = sld [smem:[#allocation0]]
  $region37: #{spp_se_preact_bottleneck.10} parent=0
    _
  %s4 = ssub.s32 1, %s2
  %s5 = scalar_select 0, %s4, %s2
  loop: start=0, step=1, limit=4
  $region2: #{spp_se_preact_bottleneck.10} parent=0 // loop_pre_header
    _
  $region3: #{spp_se_preact_bottleneck.10} parent=0 // loop_header
    %s7 = sphi 0, %s11
    %p8 = scmp.ge.s32.totalorder %s7, 4
    %s17 = sphi 0, %s19
    %s20 = sphi 0, %s17
    %s21 = sphi 0, %s20
    %s37 = sphi 0, %s21
    %s43 = sphi 0, %s45
    %s46 = sphi 0, %s43
    %s47 = sphi 0, %s46
    %s63 = sphi 0, %s47
  $region4: #{spp_se_preact_bottleneck.10} parent=0 // loop_header_branch
    %10 = sbr.rel (%p8) target = $region8
  $region5: #{spp_se_preact_bottleneck.10} parent=0 // loop_body
    %s12 = ssub.s32 %s7, 1
    %s13 = ssub.s32 %s7, 2
    %s14 = sadd.s32 %s7, 1
    %s15 = ssub.s32 %s7, %s14
    %p16 = scmp.eq.s32.totalorder %s15, 0
    %s18 = sadd.s32 %s17, 1
    %s19 = scalar_select %p16, %s17, %s18
    %p22 = pneg %p16
    %p23 = scmp.eq.s32.totalorder %s7, 1
    %p24 = por %p22, %p23
    %p25 = scmp.ne.s32.totalorder %s17, %s20
    %p26 = scmp.eq.s32.totalorder %s7, 0
    %p27 = por %p25, %p26
    %p28 = scmp.ne.s32.totalorder %s17, %s20
    %p29 = scmp.eq.s32.totalorder %s12, 1
    %p30 = por %p28, %p29
    %p31 = scmp.ne.s32.totalorder %s20, %s21
    %p32 = scmp.eq.s32.totalorder %s12, 0
    %p33 = por %p31, %p32
    %p34 = scmp.ne.s32.totalorder %s20, %s21
    %p35 = scmp.eq.s32.totalorder %s13, 1
    %p36 = por %p34, %p35
    %p38 = scmp.ne.s32.totalorder %s21, %s37
    %p39 = scmp.eq.s32.totalorder %s13, 0
    %p40 = por %p38, %p39
    %s41 = ssub.s32 %s7, %s14
    %p42 = scmp.eq.s32.totalorder %s41, 0
    %s44 = sadd.s32 %s43, 1
    %s45 = scalar_select %p42, %s43, %s44
    %p48 = pneg %p42
    %p49 = scmp.eq.s32.totalorder %s7, 1
    %p50 = por %p48, %p49
    %p51 = scmp.ne.s32.totalorder %s43, %s46
    %p52 = scmp.eq.s32.totalorder %s7, 0
    %p53 = por %p51, %p52
    %p54 = scmp.ne.s32.totalorder %s43, %s46
    %p55 = scmp.eq.s32.totalorder %s12, 1
    %p56 = por %p54, %p55
    %p57 = scmp.ne.s32.totalorder %s46, %s47
    %p58 = scmp.eq.s32.totalorder %s12, 0
    %p59 = por %p57, %p58
    %p60 = scmp.ne.s32.totalorder %s46, %s47
    %p61 = scmp.eq.s32.totalorder %s13, 1
    %p62 = por %p60, %p61
    %p64 = scmp.ne.s32.totalorder %s47, %s63
    %p65 = scmp.eq.s32.totalorder %s13, 0
    %p66 = por %p64, %p65
    %p67 = scmp.le.s32.totalorder 1, %s7
    %p68 = scmp.lt.s32.totalorder %s7, 3
    %p69 = pnand %p67, %p68
    %p70 = pneg %p69
    // Predicated region
    $region9: #{spp_se_preact_bottleneck.10} parent=5 // pred_check
      _
    $region10: #{spp_se_preact_bottleneck.10} parent=5 // pred_check_branch
      %72 = sbr.rel (%p69) target = $region12
    $region11: #{spp_se_preact_bottleneck.10} parent=5 // pred_region
      %s73 = ssub.s32 %s7, 1
    $region12: #{spp_se_preact_bottleneck.10} parent=5 // pred_fallthru
      _
    %p74 = scmp.lt.s32.totalorder %s7, 2
    // Predicated region
    $region13: #{spp_se_preact_bottleneck.10} parent=5 // pred_check
      %p75 = pneg %p74
    $region14: #{spp_se_preact_bottleneck.10} parent=5 // pred_check_branch
      %77 = sbr.rel (%p75) target = $region16
    $region15: #{spp_se_preact_bottleneck.10} parent=5 // pred_region
      // Predicated region
      $region17: #{spp_se_preact_bottleneck.10} parent=15 // pred_check
        %p78 = pneg %p27
      $region18: #{spp_se_preact_bottleneck.10} parent=15 // pred_check_branch
        %80 = sbr.rel (%p78) target = $region20
      $region19: #{spp_se_preact_bottleneck.10} parent=15 // pred_region
        %p81 = scmp.lt.s32.totalorder %s7, 1
        %s82 = scalar_select %p81, %s7, 1
        %s83 = smul.addr %s82, 32
        %s84 = smul.addr %s83, 4
        %s85 = scalar_lea.vmem %s0, %s84
      $region20: #{spp_se_preact_bottleneck.10} parent=15 // pred_fallthru
        _
    $region16: #{spp_se_preact_bottleneck.10} parent=5 // pred_fallthru
      _
    %p86 = scmp.le.s32.totalorder 1, %s7
    %p87 = scmp.lt.s32.totalorder %s7, 3
    %p88 = pnand %p86, %p87
    %p89 = pneg %p88
    // Predicated region
    $region21: #{spp_se_preact_bottleneck.10} parent=5 // pred_check
      _
    $region22: #{spp_se_preact_bottleneck.10} parent=5 // pred_check_branch
      %91 = sbr.rel (%p88) target = $region24
    $region23: #{spp_se_preact_bottleneck.10} parent=5 // pred_region
      %s92 = ssub.s32 %s7, 1
      %p93 = scmp.lt.s32.totalorder %s12, 1
      %s94 = scalar_select %p93, %s12, 1
      %s95 = smul.addr %s94, 32
      %s96 = smul.addr %s95, 4
      %s97 = scalar_lea.vmem %s0, %s96
      %p98 = pneg %p33
      %p99 = pneg %p30
      %p100 = pneg %p59
      %p101 = pneg %p56
      %p102 = scmp.lt.s32.totalorder %s12, 1
      %s103 = scalar_select %p102, %s12, 1
      %s104 = smul.addr %s103, 2
      %s105 = smul.addr %s104, 8
      %s106 = scalar_lea.vmem %s1, %s105
      %p107 = scmp.lt.s32.totalorder %s12, 1
      %s108 = scalar_select %p107, %s12, 1
      %s109 = smul.addr %s108, 32
      %s110 = smul.addr %s109, 4
      %s111 = scalar_lea.vmem %s0, %s110
      %p112 = scmp.lt.s32.totalorder %s12, 1
      %s113 = scalar_select %p112, %s12, 1
      %s114 = smul.addr %s113, 2
      %s115 = smul.addr %s114, 8
      %s116 = scalar_lea.vmem %s1, %s115
      %v117 = vld [vmem:[%s111] sm:$0xf]
      %v118 = vld [vmem:[%s111 + $0x4] sm:$0xf]
      %v119 = vld [vmem:[%s111 + $0x8] sm:$0xf]
      %v120 = vld [vmem:[%s111 + $0xc] sm:$0xf]
      %v121 = vld [vmem:[%s111 + $0x10] sm:$0xf]
      %v122 = vld [vmem:[%s111 + $0x14] sm:$0xf]
      %v123 = vld [vmem:[%s111 + $0x18] sm:$0xf]
      %v124 = vld [vmem:[%s111 + $0x1c] sm:$0xf]
      %v125 = vld [vmem:[%s111 + $0x20] sm:$0xf]
      %v126 = vld [vmem:[%s111 + $0x24] sm:$0xf]
      %v127 = vld [vmem:[%s111 + $0x28] sm:$0xf]
      %v128 = vld [vmem:[%s111 + $0x2c] sm:$0xf]
      %v129 = vld [vmem:[%s111 + $0x30] sm:$0xf]
      %v130 = vld [vmem:[%s111 + $0x34] sm:$0xf]
      %v131 = vld [vmem:[%s111 + $0x38] sm:$0xf]
      %v132 = vld [vmem:[%s111 + $0x3c] sm:$0xf]
      %v133 = vld [vmem:[%s111 + $0x40] sm:$0xf]
      %v134 = vld [vmem:[%s111 + $0x44] sm:$0xf]
      %v135 = vld [vmem:[%s111 + $0x48] sm:$0xf]
      %v136 = vld [vmem:[%s111 + $0x4c] sm:$0xf]
      %v137 = vld [vmem:[%s111 + $0x50] sm:$0xf]
      %v138 = vld [vmem:[%s111 + $0x54] sm:$0xf]
      %v139 = vld [vmem:[%s111 + $0x58] sm:$0xf]
      %v140 = vld [vmem:[%s111 + $0x5c] sm:$0xf]
      %v141 = vld [vmem:[%s111 + $0x60] sm:$0xf]
      %v142 = vld [vmem:[%s111 + $0x64] sm:$0xf]
      %v143 = vld [vmem:[%s111 + $0x68] sm:$0xf]
      %v144 = vld [vmem:[%s111 + $0x6c] sm:$0xf]
      %v145 = vld [vmem:[%s111 + $0x70] sm:$0xf]
      %v146 = vld [vmem:[%s111 + $0x74] sm:$0xf]
      %v147 = vld [vmem:[%s111 + $0x78] sm:$0xf]
      %v148 = vld [vmem:[%s111 + $0x7c] sm:$0xf]
      %v149 = vunpack.c.l.bf16 %v117
      %v150 = vunpack.c.l.bf16 %v118
      %v151 = vunpack.c.l.bf16 %v119
      %v152 = vunpack.c.l.bf16 %v120
      %v153 = vunpack.c.l.bf16 %v121
      %v154 = vunpack.c.l.bf16 %v122
      %v155 = vunpack.c.l.bf16 %v123
      %v156 = vunpack.c.l.bf16 %v124
      %v157 = vunpack.c.l.bf16 %v125
      %v158 = vunpack.c.l.bf16 %v126
      %v159 = vunpack.c.l.bf16 %v127
      %v160 = vunpack.c.l.bf16 %v128
      %v161 = vunpack.c.l.bf16 %v129
      %v162 = vunpack.c.l.bf16 %v130
      %v163 = vunpack.c.l.bf16 %v131
      %v164 = vunpack.c.l.bf16 %v132
      %v165 = vunpack.c.l.bf16 %v133
      %v166 = vunpack.c.l.bf16 %v134
      %v167 = vunpack.c.l.bf16 %v135
      %v168 = vunpack.c.l.bf16 %v136
      %v169 = vunpack.c.l.bf16 %v137
      %v170 = vunpack.c.l.bf16 %v138
      %v171 = vunpack.c.l.bf16 %v139
      %v172 = vunpack.c.l.bf16 %v140
      %v173 = vunpack.c.l.bf16 %v141
      %v174 = vunpack.c.l.bf16 %v142
      %v175 = vunpack.c.l.bf16 %v143
      %v176 = vunpack.c.l.bf16 %v144
      %v177 = vunpack.c.l.bf16 %v145
      %v178 = vunpack.c.l.bf16 %v146
      %v179 = vunpack.c.l.bf16 %v147
      %v180 = vunpack.c.l.bf16 %v148
      %v181 = vadd.f32 %v149, %v151
      %v182 = vadd.f32 %v181, %v153
      %v183 = vadd.f32 %v182, %v155
      %v184 = vadd.f32 %v183, %v157
      %v185 = vadd.f32 %v184, %v159
      %v186 = vadd.f32 %v185, %v161
      %v187 = vadd.f32 %v186, %v163
      %v188 = vrot.slane %v187, 4
      %v189 = vadd.f32 %v187, %v188
      %v190 = vrot.slane %v189, 2
      %v191 = vadd.f32 %v189, %v190
      %v192 = vrot.slane %v191, 1
      %v193 = vadd.f32 %v191, %v192
      %v194 = vmax.f32 %v149, %v157
      %v195 = vmax.f32 %v151, %v159
      %v196 = vmax.f32 %v153, %v161
      %v197 = vmax.f32 %v155, %v163
      %v198 = vmax.f32 %v194, %v195
      %v199 = vmax.f32 %v196, %v197
      %v200 = vmax.f32 %v198, %v199
      %v201 = vrot.slane %v200, 4
      %v202 = vmax.f32 %v200, %v201
      %v203 = vrot.slane %v202, 2
      %v204 = vmax.f32 %v202, %v203
      %v205 = vrot.slane %v204, 1
      %v206 = vmax.f32 %v204, %v205
      %v207 = vadd.f32 %v150, %v152
      %v208 = vadd.f32 %v207, %v154
      %v209 = vadd.f32 %v208, %v156
      %v210 = vadd.f32 %v209, %v158
      %v211 = vadd.f32 %v210, %v160
      %v212 = vadd.f32 %v211, %v162
      %v213 = vadd.f32 %v212, %v164
      %v214 = vrot.slane %v213, 4
      %v215 = vadd.f32 %v213, %v214
      %v216 = vrot.slane %v215, 2
      %v217 = vadd.f32 %v215, %v216
      %v218 = vrot.slane %v217, 1
      %v219 = vadd.f32 %v217, %v218
      %v220 = vmax.f32 %v150, %v158
      %v221 = vmax.f32 %v152, %v160
      %v222 = vmax.f32 %v154, %v162
      %v223 = vmax.f32 %v156, %v164
      %v224 = vmax.f32 %v220, %v221
      %v225 = vmax.f32 %v222, %v223
      %v226 = vmax.f32 %v224, %v225
      %v227 = vrot.slane %v226, 4
      %v228 = vmax.f32 %v226, %v227
      %v229 = vrot.slane %v228, 2
      %v230 = vmax.f32 %v228, %v229
      %v231 = vrot.slane %v230, 1
      %v232 = vmax.f32 %v230, %v231
      %v233 = vadd.f32 %v165, %v167
      %v234 = vadd.f32 %v233, %v169
      %v235 = vadd.f32 %v234, %v171
      %v236 = vadd.f32 %v235, %v173
      %v237 = vadd.f32 %v236, %v175
      %v238 = vadd.f32 %v237, %v177
      %v239 = vadd.f32 %v238, %v179
      %v240 = vrot.slane %v239, 4
      %v241 = vadd.f32 %v239, %v240
      %v242 = vrot.slane %v241, 2
      %v243 = vadd.f32 %v241, %v242
      %v244 = vrot.slane %v243, 1
      %v245 = vadd.f32 %v243, %v244
      %v246 = vmax.f32 %v165, %v173
      %v247 = vmax.f32 %v167, %v175
      %v248 = vmax.f32 %v169, %v177
      %v249 = vmax.f32 %v171, %v179
      %v250 = vmax.f32 %v246, %v247
      %v251 = vmax.f32 %v248, %v249
      %v252 = vmax.f32 %v250, %v251
      %v253 = vrot.slane %v252, 4
      %v254 = vmax.f32 %v252, %v253
      %v255 = vrot.slane %v254, 2
      %v256 = vmax.f32 %v254, %v255
      %v257 = vrot.slane %v256, 1
      %v258 = vmax.f32 %v256, %v257
      %v259 = vadd.f32 %v166, %v168
      %v260 = vadd.f32 %v259, %v170
      %v261 = vadd.f32 %v260, %v172
      %v262 = vadd.f32 %v261, %v174
      %v263 = vadd.f32 %v262, %v176
      %v264 = vadd.f32 %v263, %v178
      %v265 = vadd.f32 %v264, %v180
      %v266 = vrot.slane %v265, 4
      %v267 = vadd.f32 %v265, %v266
      %v268 = vrot.slane %v267, 2
      %v269 = vadd.f32 %v267, %v268
      %v270 = vrot.slane %v269, 1
      %v271 = vadd.f32 %v269, %v270
      %v272 = vmax.f32 %v166, %v174
      %v273 = vmax.f32 %v168, %v176
      %v274 = vmax.f32 %v170, %v178
      %v275 = vmax.f32 %v172, %v180
      %v276 = vmax.f32 %v272, %v273
      %v277 = vmax.f32 %v274, %v275
      %v278 = vmax.f32 %v276, %v277
      %v279 = vrot.slane %v278, 4
      %v280 = vmax.f32 %v278, %v279
      %v281 = vrot.slane %v280, 2
      %v282 = vmax.f32 %v280, %v281
      %v283 = vrot.slane %v282, 1
      %v284 = vmax.f32 %v282, %v283
      %vm285 = vcmask 1040384
      %v286 = vsel %vm285, %v193, %v219
      %vm287 = vcmask 1041408
      %v288 = vsel %vm287, %v286, %v245
      %vm289 = vcmask 1042432
      %v290 = vsel %vm289, %v288, %v271
      %v291 = vsel %vm285, %v206, %v232
      %v292 = vsel %vm287, %v291, %v258
      %v293 = vsel %vm289, %v292, %v284
      %v294 = vmul.f32 %v290, 0.015625
      %vm295 = vcmask 1043456
      %v296 = vsel %vm295, %v294, 0.0
      %v297 = vrot.slane %v296, 4
      %v298 = vadd.f32 %v296, %v297
      %v299 = vrot.slane %v298, 2
      %v300 = vadd.f32 %v298, %v299
      %v301 = vrot.slane %v300, 1
      %v302 = vadd.f32 %v300, %v301
      %v303 = vrcp.pop 4.0
      %v304 = vmul.f32 4.0, %v303
      %v305 = vsub.f32 1.0, %v304
      %v306 = vmul.f32 %v303, %v305
      %v307 = vadd.f32 %v303, %v306
      %vm308 = vweird.f32 %v303
      %v309 = vsel %vm308, %v303, %v307
      %v310 = vmul.f32 %v302, %v309
      %v311 = vsel %vm295, %v293, -inf
      %v312 = vrot.slane %v311, 4
      %v313 = vmax.f32 %v311, %v312
      %v314 = vrot.slane %v313, 2
      %v315 = vmax.f32 %v313, %v314
      %v316 = vrot.slane %v315, 1
      %v317 = vmax.f32 %v315, %v316
      %v319 = vrot.slane %v294, 7
      %v322 = vrot.slane %v293, 2
      %v324 = vsel %vm285, %v310, %v319
      %vm325 = vcmask 1044480
      %v326 = vsel %vm325, %v324, %v317
      %vm327 = vcmask 1045504
      %v328 = vsel %vm327, %v326, %v322
      %v329 = vsel %vm287, %v322, 0.0
      %330 = vst [vmem:[%s116] sm:$0xff] %v328
      %331 = vst [vmem:[%s116 + $0x8] sm:$0xff] %v329
      %p332 = scmp.lt.s32.totalorder %s12, 1
      %s333 = scalar_select %p332, %s12, 1
      %s334 = smul.addr %s333, 2
      %s335 = smul.addr %s334, 8
      %s336 = scalar_lea.vmem %s1, %s335
      // Predicated region
      $region25: #{spp_se_preact_bottleneck.10} parent=23 // pred_check
        %p337 = pneg %p56
      $region26: #{spp_se_preact_bottleneck.10} parent=23 // pred_check_branch
        %339 = sbr.rel (%p337) target = $region28
      $region27: #{spp_se_preact_bottleneck.10} parent=23 // pred_region
        _
      $region28: #{spp_se_preact_bottleneck.10} parent=23 // pred_fallthru
        _
    $region24: #{spp_se_preact_bottleneck.10} parent=5 // pred_fallthru
      _
    %p340 = scmp.le.s32.totalorder 2, %s7
    // Predicated region
    $region29: #{spp_se_preact_bottleneck.10} parent=5 // pred_check
      %p341 = pneg %p340
    $region30: #{spp_se_preact_bottleneck.10} parent=5 // pred_check_branch
      %343 = sbr.rel (%p341) target = $region32
    $region31: #{spp_se_preact_bottleneck.10} parent=5 // pred_region
      %s344 = ssub.s32 %s7, 2
      // Predicated region
      $region33: #{spp_se_preact_bottleneck.10} parent=31 // pred_check
        %p345 = pneg %p62
      $region34: #{spp_se_preact_bottleneck.10} parent=31 // pred_check_branch
        %347 = sbr.rel (%p345) target = $region36
      $region35: #{spp_se_preact_bottleneck.10} parent=31 // pred_region
        %p348 = scmp.lt.s32.totalorder %s13, 1
        %s349 = scalar_select %p348, %s13, 1
        %s350 = smul.addr %s349, 2
        %s351 = smul.addr %s350, 8
        %s352 = scalar_lea.vmem %s1, %s351
      $region36: #{spp_se_preact_bottleneck.10} parent=31 // pred_fallthru
        _
    $region32: #{spp_se_preact_bottleneck.10} parent=5 // pred_fallthru
      _
  $region6: #{spp_se_preact_bottleneck.10} parent=0 // loop_footer
    %s11 = sadd.s32 1, %s7
  $region7: #{spp_se_preact_bottleneck.10} parent=0 // loop_footer_branch
    %6 = sbr.rel target = $region3
  $region8: #{spp_se_preact_bottleneck.10} parent=0 // loop_exit
    _

// kernel: spp_se_preact_bottleneck.11
$region0: #{spp_se_preact_bottleneck.11}
  #allocation0 [shape = 'u32[]', space=smem, size = 0x4, offset = 0x4, fixed_abs, tag = 'smem constant byte address 0x4 - core index']
  #allocation1 [shape = 'u32[72,128]{1,0:T(1,128)}', space=vmem, size = 0x9000, scoped, tag = 'internal scratch']
  %s0 = inlined_call_operand.vmem [shape: bf16[2,256,128], index: 0, kind: input, shape index: {}]
  %s1 = inlined_call_operand.vmem [shape: f32[2,1,128], index: 1, kind: input, shape index: {}]
  %s2 = inlined_call_operand.vmem [shape: bf16[2,256,128], index: 2, kind: input, shape index: {}]
  %s3 = inlined_call_operand.vmem [shape: f32[2,256,128], index: 3, kind: output, shape index: {}]
  %s4 = sld [smem:[#allocation0]]
  $region45: #{spp_se_preact_bottleneck.11} parent=0
    _
  %s6 = ssub.s32 1, %s4
  %s7 = scalar_select 0, %s6, %s4
  loop: start=0, step=1, limit=4
  $region2: #{spp_se_preact_bottleneck.11} parent=0 // loop_pre_header
    _
  $region3: #{spp_se_preact_bottleneck.11} parent=0 // loop_header
    %s9 = sphi 0, %s13
    %p10 = scmp.ge.s32.totalorder %s9, 4
    %s16 = sphi 0, %s28
    %s17 = sphi 0, %s24
    %s18 = sphi 0, %s16
    %s19 = sphi 0, %s17
    %s20 = sphi 0, %s18
    %s21 = sphi 0, %s19
    %s33 = sphi 0, %s35
    %s36 = sphi 0, %s33
    %s37 = sphi 0, %s36
    %s53 = sphi 0, %s37
    %s59 = sphi 0, %s61
    %s62 = sphi 0, %s59
    %s63 = sphi 0, %s62
    %s79 = sphi 0, %s63
    %s87 = sphi 0, %s89
    %s90 = sphi 0, %s87
    %s91 = sphi 0, %s90
    %s107 = sphi 0, %s91
    %s115 = sphi 0, %s117
    %s118 = sphi 0, %s115
    %s119 = sphi 0, %s118
    %s135 = sphi 0, %s119
  $region4: #{spp_se_preact_bottleneck.11} parent=0 // loop_header_branch
    %12 = sbr.rel (%p10) target = $region8
  $region5: #{spp_se_preact_bottleneck.11} parent=0 // loop_body
    %s14 = ssub.s32 %s9, 1
    %s15 = ssub.s32 %s9, 2
    %s22 = sadd.s32 1, %s17
    %p23 = scmp.ge.s32.totalorder %s22, 1
    %s24 = scalar_select %p23, 0, %s22
    %s25 = sadd.s32 1, %s16
    %s26 = scalar_select %p23, %s25, %s16
    %p27 = scmp.ge.s32.totalorder %s26, 2
    %s28 = scalar_select %p27, 0, %s26
    %s29 = ssub.s32 %s16, %s28
    %s30 = ssub.s32 %s17, %s24
    %s31 = sor.u32 %s29, %s30
    %p32 = scmp.eq.s32.totalorder %s31, 0
    %s34 = sadd.s32 %s33, 1
    %s35 = scalar_select %p32, %s33, %s34
    %p38 = pneg %p32
    %p39 = scmp.eq.s32.totalorder %s9, 1
    %p40 = por %p38, %p39
    %p41 = scmp.ne.s32.totalorder %s33, %s36
    %p42 = scmp.eq.s32.totalorder %s9, 0
    %p43 = por %p41, %p42
    %p44 = scmp.ne.s32.totalorder %s33, %s36
    %p45 = scmp.eq.s32.totalorder %s14, 1
    %p46 = por %p44, %p45
    %p47 = scmp.ne.s32.totalorder %s36, %s37
    %p48 = scmp.eq.s32.totalorder %s14, 0
    %p49 = por %p47, %p48
    %p50 = scmp.ne.s32.totalorder %s36, %s37
    %p51 = scmp.eq.s32.totalorder %s15, 1
    %p52 = por %p50, %p51
    %p54 = scmp.ne.s32.totalorder %s37, %s53
    %p55 = scmp.eq.s32.totalorder %s15, 0
    %p56 = por %p54, %p55
    %s57 = ssub.s32 %s16, %s28
    %p58 = scmp.eq.s32.totalorder %s57, 0
    %s60 = sadd.s32 %s59, 1
    %s61 = scalar_select %p58, %s59, %s60
    %p64 = pneg %p58
    %p65 = scmp.eq.s32.totalorder %s9, 1
    %p66 = por %p64, %p65
    %p67 = scmp.ne.s32.totalorder %s59, %s62
    %p68 = scmp.eq.s32.totalorder %s9, 0
    %p69 = por %p67, %p68
    %p70 = scmp.ne.s32.totalorder %s59, %s62
    %p71 = scmp.eq.s32.totalorder %s14, 1
    %p72 = por %p70, %p71
    %p73 = scmp.ne.s32.totalorder %s62, %s63
    %p74 = scmp.eq.s32.totalorder %s14, 0
    %p75 = por %p73, %p74
    %p76 = scmp.ne.s32.totalorder %s62, %s63
    %p77 = scmp.eq.s32.totalorder %s15, 1
    %p78 = por %p76, %p77
    %p80 = scmp.ne.s32.totalorder %s63, %s79
    %p81 = scmp.eq.s32.totalorder %s15, 0
    %p82 = por %p80, %p81
    %s83 = ssub.s32 %s16, %s28
    %s84 = ssub.s32 %s17, %s24
    %s85 = sor.u32 %s83, %s84
    %p86 = scmp.eq.s32.totalorder %s85, 0
    %s88 = sadd.s32 %s87, 1
    %s89 = scalar_select %p86, %s87, %s88
    %p92 = pneg %p86
    %p93 = scmp.eq.s32.totalorder %s9, 1
    %p94 = por %p92, %p93
    %p95 = scmp.ne.s32.totalorder %s87, %s90
    %p96 = scmp.eq.s32.totalorder %s9, 0
    %p97 = por %p95, %p96
    %p98 = scmp.ne.s32.totalorder %s87, %s90
    %p99 = scmp.eq.s32.totalorder %s14, 1
    %p100 = por %p98, %p99
    %p101 = scmp.ne.s32.totalorder %s90, %s91
    %p102 = scmp.eq.s32.totalorder %s14, 0
    %p103 = por %p101, %p102
    %p104 = scmp.ne.s32.totalorder %s90, %s91
    %p105 = scmp.eq.s32.totalorder %s15, 1
    %p106 = por %p104, %p105
    %p108 = scmp.ne.s32.totalorder %s91, %s107
    %p109 = scmp.eq.s32.totalorder %s15, 0
    %p110 = por %p108, %p109
    %s111 = ssub.s32 %s16, %s28
    %s112 = ssub.s32 %s17, %s24
    %s113 = sor.u32 %s111, %s112
    %p114 = scmp.eq.s32.totalorder %s113, 0
    %s116 = sadd.s32 %s115, 1
    %s117 = scalar_select %p114, %s115, %s116
    %p120 = pneg %p114
    %p121 = scmp.eq.s32.totalorder %s9, 1
    %p122 = por %p120, %p121
    %p123 = scmp.ne.s32.totalorder %s115, %s118
    %p124 = scmp.eq.s32.totalorder %s9, 0
    %p125 = por %p123, %p124
    %p126 = scmp.ne.s32.totalorder %s115, %s118
    %p127 = scmp.eq.s32.totalorder %s14, 1
    %p128 = por %p126, %p127
    %p129 = scmp.ne.s32.totalorder %s118, %s119
    %p130 = scmp.eq.s32.totalorder %s14, 0
    %p131 = por %p129, %p130
    %p132 = scmp.ne.s32.totalorder %s118, %s119
    %p133 = scmp.eq.s32.totalorder %s15, 1
    %p134 = por %p132, %p133
    %p136 = scmp.ne.s32.totalorder %s119, %s135
    %p137 = scmp.eq.s32.totalorder %s15, 0
    %p138 = por %p136, %p137
    %p139 = scmp.le.s32.totalorder 1, %s9
    %p140 = scmp.lt.s32.totalorder %s9, 3
    %p141 = pnand %p139, %p140
    %p142 = pneg %p141
    // Predicated region
    $region9: #{spp_se_preact_bottleneck.11} parent=5 // pred_check
      _
    $region10: #{spp_se_preact_bottleneck.11} parent=5 // pred_check_branch
      %144 = sbr.rel (%p141) target = $region12
    $region11: #{spp_se_preact_bottleneck.11} parent=5 // pred_region
      %s145 = ssub.s32 %s9, 1
    $region12: #{spp_se_preact_bottleneck.11} parent=5 // pred_fallthru
      _
    %p146 = scmp.lt.s32.totalorder %s9, 2
    // Predicated region
    $region13: #{spp_se_preact_bottleneck.11} parent=5 // pred_check
      %p147 = pneg %p146
    $region14: #{spp_se_preact_bottleneck.11} parent=5 // pred_check_branch
      %149 = sbr.rel (%p147) target = $region16
    $region15: #{spp_se_preact_bottleneck.11} parent=5 // pred_region
      // Predicated region
      $region17: #{spp_se_preact_bottleneck.11} parent=15 // pred_check
        %p150 = pneg %p43
      $region18: #{spp_se_preact_bottleneck.11} parent=15 // pred_check_branch
        %152 = sbr.rel (%p150) target = $region20
      $region19: #{spp_se_preact_bottleneck.11} parent=15 // pred_region
        %s153 = smul.u32 32, %s17
        %p154 = scmp.lt.s32.totalorder %s16, 1
        %s155 = scalar_select %p154, %s16, 1
        %p156 = scmp.lt.s32.totalorder %s153, 31
        %s157 = scalar_select %p156, %s153, 31
        %s158 = smul.addr %s155, 32
        %s159 = sadd.s32 %s157, %s158
        %s160 = smul.addr %s159, 4
        %s161 = scalar_lea.vmem %s0, %s160
        %s162 = smul.u32 32, %s17
      $region20: #{spp_se_preact_bottleneck.11} parent=15 // pred_fallthru
        _
      // Predicated region
      $region21: #{spp_se_preact_bottleneck.11} parent=15 // pred_check
        %p163 = pneg %p69
      $region22: #{spp_se_preact_bottleneck.11} parent=15 // pred_check_branch
        %165 = sbr.rel (%p163) target = $region24
      $region23: #{spp_se_preact_bottleneck.11} parent=15 // pred_region
        %p166 = scmp.lt.s32.totalorder %s16, 1
        %s167 = scalar_select %p166, %s16, 1
        %s168 = scalar_lea.vmem %s1, %s167
      $region24: #{spp_se_preact_bottleneck.11} parent=15 // pred_fallthru
        _
      // Predicated region
      $region25: #{spp_se_preact_bottleneck.11} parent=15 // pred_check
        %p169 = pneg %p97
      $region26: #{spp_se_preact_bottleneck.11} parent=15 // pred_check_branch
        %171 = sbr.rel (%p169) target = $region28
      $region27: #{spp_se_preact_bottleneck.11} parent=15 // pred_region
        %s172 = smul.u32 32, %s17
        %p173 = scmp.lt.s32.totalorder %s16, 1
        %s174 = scalar_select %p173, %s16, 1
        %p175 = scmp.lt.s32.totalorder %s172, 31
        %s176 = scalar_select %p175, %s172, 31
        %s177 = smul.addr %s174, 32
        %s178 = sadd.s32 %s176, %s177
        %s179 = smul.addr %s178, 4
        %s180 = scalar_lea.vmem %s2, %s179
        %s181 = smul.u32 32, %s17
      $region28: #{spp_se_preact_bottleneck.11} parent=15 // pred_fallthru
        _
    $region16: #{spp_se_preact_bottleneck.11} parent=5 // pred_fallthru
      _
    %p182 = scmp.le.s32.totalorder 1, %s9
    %p183 = scmp.lt.s32.totalorder %s9, 3
    %p184 = pnand %p182, %p183
    %p185 = pneg %p184
    // Predicated region
    $region29: #{spp_se_preact_bottleneck.11} parent=5 // pred_check
      _
    $region30: #{spp_se_preact_bottleneck.11} parent=5 // pred_check_branch
      %187 = sbr.rel (%p184) target = $region32
    $region31: #{spp_se_preact_bottleneck.11} parent=5 // pred_region
      %s188 = ssub.s32 %s9, 1
      %s189 = smul.u32 32, %s19
      %p190 = scmp.lt.s32.totalorder %s18, 1
      %s191 = scalar_select %p190, %s18, 1
      %p192 = scmp.lt.s32.totalorder %s189, 31
      %s193 = scalar_select %p192, %s189, 31
      %s194 = smul.addr %s191, 32
      %s195 = sadd.s32 %s193, %s194
      %s196 = smul.addr %s195, 4
      %s197 = scalar_lea.vmem %s0, %s196
      %p198 = pneg %p49
      %p199 = pneg %p46
      %p200 = scmp.lt.s32.totalorder %s18, 1
      %s201 = scalar_select %p200, %s18, 1
      %s202 = scalar_lea.vmem %s1, %s201
      %p203 = pneg %p75
      %p204 = pneg %p72
      %s205 = smul.u32 32, %s19
      %p206 = scmp.lt.s32.totalorder %s18, 1
      %s207 = scalar_select %p206, %s18, 1
      %p208 = scmp.lt.s32.totalorder %s205, 31
      %s209 = scalar_select %p208, %s205, 31
      %s210 = smul.addr %s207, 32
      %s211 = sadd.s32 %s209, %s210
      %s212 = smul.addr %s211, 4
      %s213 = scalar_lea.vmem %s2, %s212
      %p214 = pneg %p103
      %p215 = pneg %p100
      %p216 = pneg %p131
      %p217 = pneg %p128
      %s218 = smul.u32 32, %s19
      %p219 = scmp.lt.s32.totalorder %s18, 1
      %s220 = scalar_select %p219, %s18, 1
      %p221 = scmp.lt.s32.totalorder %s218, 31
      %s222 = scalar_select %p221, %s218, 31
      %s223 = smul.addr %s220, 32
      %s224 = sadd.s32 %s222, %s223
      %s225 = smul.addr %s224, 8
      %s226 = scalar_lea.vmem %s3, %s225
      %s227 = smul.u32 32, %s19
      %p228 = scmp.lt.s32.totalorder %s18, 1
      %s229 = scalar_select %p228, %s18, 1
      %p230 = scmp.lt.s32.totalorder %s227, 31
      %s231 = scalar_select %p230, %s227, 31
      %s232 = smul.addr %s229, 32
      %s233 = sadd.s32 %s231, %s232
      %s234 = smul.addr %s233, 4
      %s235 = scalar_lea.vmem %s0, %s234
      %s236 = smul.u32 32, %s19
      %p237 = scmp.lt.s32.totalorder %s18, 1
      %s238 = scalar_select %p237, %s18, 1
      %s239 = scalar_lea.vmem %s1, %s238
      %s240 = smul.u32 32, %s19
      %p241 = scmp.lt.s32.totalorder %s18, 1
      %s242 = scalar_select %p241, %s18, 1
      %p243 = scmp.lt.s32.totalorder %s240, 31
      %s244 = scalar_select %p243, %s240, 31
      %s245 = smul.addr %s242, 32
      %s246 = sadd.s32 %s244, %s245
      %s247 = smul.addr %s246, 4
      %s248 = scalar_lea.vmem %s2, %s247
      %s249 = smul.u32 32, %s19
      %s250 = smul.u32 32, %s19
      %p251 = scmp.lt.s32.totalorder %s18, 1
      %s252 = scalar_select %p251, %s18, 1
      %p253 = scmp.lt.s32.totalorder %s250, 31
      %s254 = scalar_select %p253, %s250, 31
      %s255 = smul.addr %s252, 32
      %s256 = sadd.s32 %s254, %s255
      %s257 = smul.addr %s256, 8
      %s258 = scalar_lea.vmem %s3, %s257
      %s259 = smul.u32 32, %s19
      %v260 = vld [vmem:[%s235] sm:$0xf]
      %v261 = vld [vmem:[%s235 + $0x4] sm:$0xf]
      %v262 = vld [vmem:[%s235 + $0x8] sm:$0xf]
      %v263 = vld [vmem:[%s235 + $0xc] sm:$0xf]
      %v264 = vld [vmem:[%s235 + $0x10] sm:$0xf]
      %v265 = vld [vmem:[%s235 + $0x14] sm:$0xf]
      %v266 = vld [vmem:[%s235 + $0x18] sm:$0xf]
      %v267 = vld [vmem:[%s235 + $0x1c] sm:$0xf]
      %v268 = vld [vmem:[%s235 + $0x20] sm:$0xf]
      %v269 = vld [vmem:[%s235 + $0x24] sm:$0xf]
      %v270 = vld [vmem:[%s235 + $0x28] sm:$0xf]
      %v271 = vld [vmem:[%s235 + $0x2c] sm:$0xf]
      %v272 = vld [vmem:[%s235 + $0x30] sm:$0xf]
      %v273 = vld [vmem:[%s235 + $0x34] sm:$0xf]
      %v274 = vld [vmem:[%s235 + $0x38] sm:$0xf]
      %v275 = vld [vmem:[%s235 + $0x3c] sm:$0xf]
      %v276 = vld [vmem:[%s235 + $0x40] sm:$0xf]
      %v277 = vld [vmem:[%s235 + $0x44] sm:$0xf]
      %v278 = vld [vmem:[%s235 + $0x48] sm:$0xf]
      %v279 = vld [vmem:[%s235 + $0x4c] sm:$0xf]
      %v280 = vld [vmem:[%s235 + $0x50] sm:$0xf]
      %v281 = vld [vmem:[%s235 + $0x54] sm:$0xf]
      %v282 = vld [vmem:[%s235 + $0x58] sm:$0xf]
      %v283 = vld [vmem:[%s235 + $0x5c] sm:$0xf]
      %v284 = vld [vmem:[%s235 + $0x60] sm:$0xf]
      %v285 = vld [vmem:[%s235 + $0x64] sm:$0xf]
      %v286 = vld [vmem:[%s235 + $0x68] sm:$0xf]
      %v287 = vld [vmem:[%s235 + $0x6c] sm:$0xf]
      %v288 = vld [vmem:[%s235 + $0x70] sm:$0xf]
      %v289 = vld [vmem:[%s235 + $0x74] sm:$0xf]
      %v290 = vld [vmem:[%s235 + $0x78] sm:$0xf]
      %v291 = vld [vmem:[%s235 + $0x7c] sm:$0xf]
      %v292 = vunpack.c.l.bf16 %v260
      %v293 = vunpack.c.l.bf16 %v261
      %v294 = vunpack.c.l.bf16 %v262
      %v295 = vunpack.c.l.bf16 %v263
      %v296 = vunpack.c.l.bf16 %v264
      %v297 = vunpack.c.l.bf16 %v265
      %v298 = vunpack.c.l.bf16 %v266
      %v299 = vunpack.c.l.bf16 %v267
      %v300 = vunpack.c.l.bf16 %v268
      %v301 = vunpack.c.l.bf16 %v269
      %v302 = vunpack.c.l.bf16 %v270
      %v303 = vunpack.c.l.bf16 %v271
      %v304 = vunpack.c.l.bf16 %v272
      %v305 = vunpack.c.l.bf16 %v273
      %v306 = vunpack.c.l.bf16 %v274
      %v307 = vunpack.c.l.bf16 %v275
      %v308 = vunpack.c.l.bf16 %v276
      %v309 = vunpack.c.l.bf16 %v277
      %v310 = vunpack.c.l.bf16 %v278
      %v311 = vunpack.c.l.bf16 %v279
      %v312 = vunpack.c.l.bf16 %v280
      %v313 = vunpack.c.l.bf16 %v281
      %v314 = vunpack.c.l.bf16 %v282
      %v315 = vunpack.c.l.bf16 %v283
      %v316 = vunpack.c.l.bf16 %v284
      %v317 = vunpack.c.l.bf16 %v285
      %v318 = vunpack.c.l.bf16 %v286
      %v319 = vunpack.c.l.bf16 %v287
      %v320 = vunpack.c.l.bf16 %v288
      %v321 = vunpack.c.l.bf16 %v289
      %v322 = vunpack.c.l.bf16 %v290
      %v323 = vunpack.c.l.bf16 %v291
      %v324 = vld [vmem:[%s239] sm:$0x1]
      %v326 = vperm.slane %v324, 0
      %v328 = vmul.f32 %v292, %v326
      %v329 = vmul.f32 %v293, %v326
      %v330 = vmul.f32 %v294, %v326
      %v331 = vmul.f32 %v295, %v326
      %v332 = vmul.f32 %v296, %v326
      %v333 = vmul.f32 %v297, %v326
      %v334 = vmul.f32 %v298, %v326
      %v335 = vmul.f32 %v299, %v326
      %v336 = vmul.f32 %v300, %v326
      %v337 = vmul.f32 %v301, %v326
      %v338 = vmul.f32 %v302, %v326
      %v339 = vmul.f32 %v303, %v326
      %v340 = vmul.f32 %v304, %v326
      %v341 = vmul.f32 %v305, %v326
      %v342 = vmul.f32 %v306, %v326
      %v343 = vmul.f32 %v307, %v326
      %v344 = vmul.f32 %v308, %v326
      %v345 = vmul.f32 %v309, %v326
      %v346 = vmul.f32 %v310, %v326
      %v347 = vmul.f32 %v311, %v326
      %v348 = vmul.f32 %v312, %v326
      %v349 = vmul.f32 %v313, %v326
      %v350 = vmul.f32 %v314, %v326
      %v351 = vmul.f32 %v315, %v326
      %v352 = vmul.f32 %v316, %v326
      %v353 = vmul.f32 %v317, %v326
      %v354 = vmul.f32 %v318, %v326
      %v355 = vmul.f32 %v319, %v326
      %v356 = vmul.f32 %v320, %v326
      %v357 = vmul.f32 %v321, %v326
      %v358 = vmul.f32 %v322, %v326
      %v359 = vmul.f32 %v323, %v326
      %v360 = vld [vmem:[%s248] sm:$0xf]
      %v361 = vld [vmem:[%s248 + $0x4] sm:$0xf]
      %v362 = vld [vmem:[%s248 + $0x8] sm:$0xf]
      %v363 = vld [vmem:[%s248 + $0xc] sm:$0xf]
      %v364 = vld [vmem:[%s248 + $0x10] sm:$0xf]
      %v365 = vld [vmem:[%s248 + $0x14] sm:$0xf]
      %v366 = vld [vmem:[%s248 + $0x18] sm:$0xf]
      %v367 = vld [vmem:[%s248 + $0x1c] sm:$0xf]
      %v368 = vld [vmem:[%s248 + $0x20] sm:$0xf]
      %v369 = vld [vmem:[%s248 + $0x24] sm:$0xf]
      %v370 = vld [vmem:[%s248 + $0x28] sm:$0xf]
      %v371 = vld [vmem:[%s248 + $0x2c] sm:$0xf]
      %v372 = vld [vmem:[%s248 + $0x30] sm:$0xf]
      %v373 = vld [vmem:[%s248 + $0x34] sm:$0xf]
      %v374 = vld [vmem:[%s248 + $0x38] sm:$0xf]
      %v375 = vld [vmem:[%s248 + $0x3c] sm:$0xf]
      %v376 = vld [vmem:[%s248 + $0x40] sm:$0xf]
      %v377 = vld [vmem:[%s248 + $0x44] sm:$0xf]
      %v378 = vld [vmem:[%s248 + $0x48] sm:$0xf]
      %v379 = vld [vmem:[%s248 + $0x4c] sm:$0xf]
      %v380 = vld [vmem:[%s248 + $0x50] sm:$0xf]
      %v381 = vld [vmem:[%s248 + $0x54] sm:$0xf]
      %v382 = vld [vmem:[%s248 + $0x58] sm:$0xf]
      %v383 = vld [vmem:[%s248 + $0x5c] sm:$0xf]
      %v384 = vld [vmem:[%s248 + $0x60] sm:$0xf]
      %v385 = vld [vmem:[%s248 + $0x64] sm:$0xf]
      %v386 = vld [vmem:[%s248 + $0x68] sm:$0xf]
      %v387 = vld [vmem:[%s248 + $0x6c] sm:$0xf]
      %v388 = vld [vmem:[%s248 + $0x70] sm:$0xf]
      %v389 = vld [vmem:[%s248 + $0x74] sm:$0xf]
      %v390 = vld [vmem:[%s248 + $0x78] sm:$0xf]
      %v391 = vld [vmem:[%s248 + $0x7c] sm:$0xf]
      %v392 = vunpack.c.l.bf16 %v360
      %v393 = vunpack.c.l.bf16 %v361
      %v394 = vunpack.c.l.bf16 %v362
      %v395 = vunpack.c.l.bf16 %v363
      %v396 = vunpack.c.l.bf16 %v364
      %v397 = vunpack.c.l.bf16 %v365
      %v398 = vunpack.c.l.bf16 %v366
      %v399 = vunpack.c.l.bf16 %v367
      %v400 = vunpack.c.l.bf16 %v368
      %v401 = vunpack.c.l.bf16 %v369
      %v402 = vunpack.c.l.bf16 %v370
      %v403 = vunpack.c.l.bf16 %v371
      %v404 = vunpack.c.l.bf16 %v372
      %v405 = vunpack.c.l.bf16 %v373
      %v406 = vunpack.c.l.bf16 %v374
      %v407 = vunpack.c.l.bf16 %v375
      %v408 = vunpack.c.l.bf16 %v376
      %v409 = vunpack.c.l.bf16 %v377
      %v410 = vunpack.c.l.bf16 %v378
      %v411 = vunpack.c.l.bf16 %v379
      %v412 = vunpack.c.l.bf16 %v380
      %v413 = vunpack.c.l.bf16 %v381
      %v414 = vunpack.c.l.bf16 %v382
      %v415 = vunpack.c.l.bf16 %v383
      %v416 = vunpack.c.l.bf16 %v384
      %v417 = vunpack.c.l.bf16 %v385
      %v418 = vunpack.c.l.bf16 %v386
      %v419 = vunpack.c.l.bf16 %v387
      %v420 = vunpack.c.l.bf16 %v388
      %v421 = vunpack.c.l.bf16 %v389
      %v422 = vunpack.c.l.bf16 %v390
      %v423 = vunpack.c.l.bf16 %v391
      %v424 = vadd.f32 %v328, %v392
      %v425 = vadd.f32 %v329, %v393
      %v426 = vadd.f32 %v330, %v394
      %v427 = vadd.f32 %v331, %v395
      %v428 = vadd.f32 %v332, %v396
      %v429 = vadd.f32 %v333, %v397
      %v430 = vadd.f32 %v334, %v398
      %v431 = vadd.f32 %v335, %v399
      %v432 = vadd.f32 %v336, %v400
      %v433 = vadd.f32 %v337, %v401
      %v434 = vadd.f32 %v338, %v402
      %v435 = vadd.f32 %v339, %v403
      %v436 = vadd.f32 %v340, %v404
      %v437 = vadd.f32 %v341, %v405
      %v438 = vadd.f32 %v342, %v406
      %v439 = vadd.f32 %v343, %v407
      %v440 = vadd.f32 %v344, %v408
      %v441 = vadd.f32 %v345, %v409
      %v442 = vadd.f32 %v346, %v410
      %v443 = vadd.f32 %v347, %v411
      %v444 = vadd.f32 %v348, %v412
      %v445 = vadd.f32 %v349, %v413
      %v446 = vadd.f32 %v350, %v414
      %v447 = vadd.f32 %v351, %v415
      %v448 = vadd.f32 %v352, %v416
      %v449 = vadd.f32 %v353, %v417
      %v450 = vadd.f32 %v354, %v418
      %v451 = vadd.f32 %v355, %v419
      %v452 = vadd.f32 %v356, %v420
      %v453 = vadd.f32 %v357, %v421
      %v454 = vadd.f32 %v358, %v422
      %v455 = vadd.f32 %v359, %v423
      %456 = vst [vmem:[%s258] sm:$0xff] %v424
      %457 = vst [vmem:[%s258 + $0x8] sm:$0xff] %v425
      %458 = vst [vmem:[%s258 + $0x10] sm:$0xff] %v426
      %459 = vst [vmem:[%s258 + $0x18] sm:$0xff] %v427
      %460 = vst [vmem:[%s258 + $0x20] sm:$0xff] %v428
      %461 = vst [vmem:[%s258 + $0x28] sm:$0xff] %v429
      %462 = vst [vmem:[%s258 + $0x30] sm:$0xff] %v430
      %463 = vst [vmem:[%s258 + $0x38] sm:$0xff] %v431
      %464 = vst [vmem:[%s258 + $0x40] sm:$0xff] %v432
      %465 = vst [vmem:[%s258 + $0x48] sm:$0xff] %v433
      %466 = vst [vmem:[%s258 + $0x50] sm:$0xff] %v434
      %467 = vst [vmem:[%s258 + $0x58] sm:$0xff] %v435
      %468 = vst [vmem:[%s258 + $0x60] sm:$0xff] %v436
      %469 = vst [vmem:[%s258 + $0x68] sm:$0xff] %v437
      %470 = vst [vmem:[%s258 + $0x70] sm:$0xff] %v438
      %471 = vst [vmem:[%s258 + $0x78] sm:$0xff] %v439
      %472 = vst [vmem:[%s258 + $0x80] sm:$0xff] %v440
      %473 = vst [vmem:[%s258 + $0x88] sm:$0xff] %v441
      %474 = vst [vmem:[%s258 + $0x90] sm:$0xff] %v442
      %475 = vst [vmem:[%s258 + $0x98] sm:$0xff] %v443
      %476 = vst [vmem:[%s258 + $0xa0] sm:$0xff] %v444
      %477 = vst [vmem:[%s258 + $0xa8] sm:$0xff] %v445
      %478 = vst [vmem:[%s258 + $0xb0] sm:$0xff] %v446
      %479 = vst [vmem:[%s258 + $0xb8] sm:$0xff] %v447
      %480 = vst [vmem:[%s258 + $0xc0] sm:$0xff] %v448
      %481 = vst [vmem:[%s258 + $0xc8] sm:$0xff] %v449
      %482 = vst [vmem:[%s258 + $0xd0] sm:$0xff] %v450
      %483 = vst [vmem:[%s258 + $0xd8] sm:$0xff] %v451
      %484 = vst [vmem:[%s258 + $0xe0] sm:$0xff] %v452
      %485 = vst [vmem:[%s258 + $0xe8] sm:$0xff] %v453
      %486 = vst [vmem:[%s258 + $0xf0] sm:$0xff] %v454
      %487 = vst [vmem:[%s258 + $0xf8] sm:$0xff] %v455
      %s488 = smul.u32 32, %s19
      %p489 = scmp.lt.s32.totalorder %s18, 1
      %s490 = scalar_select %p489, %s18, 1
      %p491 = scmp.lt.s32.totalorder %s488, 31
      %s492 = scalar_select %p491, %s488, 31
      %s493 = smul.addr %s490, 32
      %s494 = sadd.s32 %s492, %s493
      %s495 = smul.addr %s494, 8
      %s496 = scalar_lea.vmem %s3, %s495
      // Predicated region
      $region33: #{spp_se_preact_bottleneck.11} parent=31 // pred_check
        %p497 = pneg %p128
      $region34: #{spp_se_preact_bottleneck.11} parent=31 // pred_check_branch
        %499 = sbr.rel (%p497) target = $region36
      $region35: #{spp_se_preact_bottleneck.11} parent=31 // pred_region
        %s500 = smul.u32 32, %s19
      $region36: #{spp_se_preact_bottleneck.11} parent=31 // pred_fallthru
        _
    $region32: #{spp_se_preact_bottleneck.11} parent=5 // pred_fallthru
      _
    %p501 = scmp.le.s32.totalorder 2, %s9
    // Predicated region
    $region37: #{spp_se_preact_bottleneck.11} parent=5 // pred_check
      %p502 = pneg %p501
    $region38: #{spp_se_preact_bottleneck.11} parent=5 // pred_check_branch
      %504 = sbr.rel (%p502) target = $region40
    $region39: #{spp_se_preact_bottleneck.11} parent=5 // pred_region
      %s505 = ssub.s32 %s9, 2
      // Predicated region
      $region41: #{spp_se_preact_bottleneck.11} parent=39 // pred_check
        %p506 = pneg %p134
      $region42: #{spp_se_preact_bottleneck.11} parent=39 // pred_check_branch
        %508 = sbr.rel (%p506) target = $region44
      $region43: #{spp_se_preact_bottleneck.11} parent=39 // pred_region
        %s509 = smul.u32 32, %s21
        %p510 = scmp.lt.s32.totalorder %s20, 1
        %s511 = scalar_select %p510, %s20, 1
        %p512 = scmp.lt.s32.totalorder %s509, 31
        %s513 = scalar_select %p512, %s509, 31
        %s514 = smul.addr %s511, 32
        %s515 = sadd.s32 %s513, %s514
        %s516 = smul.addr %s515, 8
        %s517 = scalar_lea.vmem %s3, %s516
      $region44: #{spp_se_preact_bottleneck.11} parent=39 // pred_fallthru
        _
    $region40: #{spp_se_preact_bottleneck.11} parent=5 // pred_fallthru
      _
  $region6: #{spp_se_preact_bottleneck.11} parent=0 // loop_footer
    %s13 = sadd.s32 1, %s9
  $region7: #{spp_se_preact_bottleneck.11} parent=0 // loop_footer_branch
    %8 = sbr.rel target = $region3
  $region8: #{spp_se_preact_bottleneck.11} parent=0 // loop_exit
    _

</llo_original>
